<compile_context>
chip_gen: v7x
topology: tpu7x:2x2x1
jax: 0.10.0
libtpu: 0.0.40
codegen_flags: <defaults>
</compile_context>

<pallas_src>
import functools

import numpy as np
import jax
import jax.numpy as jnp
from jax import lax
from jax.experimental import pallas as pl
from jax.experimental.pallas import tpu as pltpu

NEG_SLOPE = 0.01   # nn.LeakyReLU default negative_slope
EPS = 1e-5         # nn.InstanceNorm2d default eps


# ----------------------------------------------------------------------------
# Host-side constants (trace-time numpy; shapes are static under jit)
# ----------------------------------------------------------------------------
def _interp_matrix(out_size, in_size):
    """Bilinear interpolation matrix, half-pixel centers (align_corners=False)."""
    o = np.arange(out_size, dtype=np.float64)
    coord = (o + 0.5) * (in_size / out_size) - 0.5
    coord = np.maximum(coord, 0.0)
    i0 = np.minimum(np.floor(coord).astype(np.int64), in_size - 1)
    i1 = np.minimum(i0 + 1, in_size - 1)
    w1 = coord - i0
    w0 = 1.0 - w1
    A = np.zeros((out_size, in_size), dtype=np.float32)
    A[np.arange(out_size), i0] += w0
    A[np.arange(out_size), i1] += w1
    return A


def _tap_masks(H, W):
    """(9, 1, H*W) f32 validity masks for the 9 taps of a pad-1 3x3 conv."""
    r = np.repeat(np.arange(H), W)
    c = np.tile(np.arange(W), H)
    m = np.zeros((9, 1, H * W), np.float32)
    k = 0
    for dy in (-1, 0, 1):
        for dx in (-1, 0, 1):
            valid = (r + dy >= 0) & (r + dy < H) & (c + dx >= 0) & (c + dx < W)
            m[k, 0] = valid.astype(np.float32)
            k += 1
    return m


def _pack_conv(w_hwio, b):
    """HWIO (3,3,Cin,Cout) -> tap-major (9, Cout, Cin) weights, bias -> (Cout, 1)."""
    _, _, cin, cout = w_hwio.shape
    w_taps = jnp.transpose(w_hwio, (0, 1, 3, 2)).reshape(9, cout, cin)
    return w_taps, b.reshape(cout, 1)


# ----------------------------------------------------------------------------
# Fused SPADEResBlk kernel (one grid step == one batch element)
# ----------------------------------------------------------------------------
def _resblk_kernel(x_ref, c_ref, mct_ref, mupt_ref, masks_ref,
                   w_sh0_ref, b_sh0_ref, w_gb0_ref, b_gb0_ref,
                   w_sh1_ref, b_sh1_ref, w_gb1_ref, b_gb1_ref,
                   w_c0_ref, b_c0_ref, w_c1_ref, b_c1_ref,
                   o_ref, *, H, W):
    f32 = jnp.float32
    S = H * W
    CENTER = 4  # tap index (dy=0, dx=0): always valid, no mask needed

    x = x_ref[0].astype(f32)                      # (C, S)  channels on sublanes, pixels on lanes
    cm = c_ref[0].astype(f32)                     # (C, Sc)

    # Hoist the 8 halo masks (shared by every conv in the block).
    tap_masks = [None if k == CENTER else masks_ref[k] for k in range(9)]  # each (1, S)

    def lrelu(v):
        return jnp.maximum(v, v * NEG_SLOPE)      # slope < 1 -> identical to LeakyReLU

    def conv3x3(inp, w_ref, b_ref, act=False):
        """3x3 / stride 1 / pad 1 conv on a (Cin, S) slab -> (Cout, S)."""
        cin = inp.shape[0]
        pad = jnp.zeros((cin, W + 1), f32)
        xpad = jnp.concatenate([pad, inp, pad], axis=1)        # (cin, S + 2W + 2)
        acc = None
        k = 0
        for dy in (-1, 0, 1):
            for dx in (-1, 0, 1):
                start = (W + 1) + dy * W + dx                  # static lane offset
                tap = xpad[:, start:start + S]
                if tap_masks[k] is not None:
                    tap = tap * tap_masks[k]
                term = jnp.dot(w_ref[k].astype(f32), tap,
                               preferred_element_type=f32)
                acc = term if acc is None else acc + term
                k += 1
        out = acc + b_ref[...].astype(f32)                     # (cout, 1) lane-broadcast
        return lrelu(out) if act else out

    def instance_norm(v):                                      # biased var, per channel
        mean = jnp.mean(v, axis=1, keepdims=True)
        var = jnp.mean(jnp.square(v - mean), axis=1, keepdims=True)
        return (v - mean) * lax.rsqrt(var + EPS)

    # Conditioning map resized ONCE (shared by norm0 and norm1):  (C, Sc) @ (Sc, S)
    c_r = jnp.dot(cm, mct_ref[...].astype(f32), preferred_element_type=f32)

    def spade_lrelu(v, w_sh, b_sh, w_gb, b_gb):
        xch = v.shape[0]
        share = conv3x3(c_r, w_sh, b_sh, act=True)             # c_share + LeakyReLU
        gb = conv3x3(share, w_gb, b_gb)                        # fused c_gamma / c_beta
        gamma1, beta = gb[:xch], gb[xch:]                      # gamma bias already has the +1 folded in
        out = instance_norm(v) * gamma1 + beta
        return lrelu(out)                                      # ResBlk LeakyReLU

    h = spade_lrelu(x, w_sh0_ref, b_sh0_ref, w_gb0_ref, b_gb0_ref)
    h = conv3x3(h, w_c0_ref, b_c0_ref)                         # c0
    h = spade_lrelu(h, w_sh1_ref, b_sh1_ref, w_gb1_ref, b_gb1_ref)
    h = conv3x3(h, w_c1_ref, b_c1_ref)                         # c1
    h = h + x                                                  # residual (shortcut=False)

    # 2x bilinear upsample as one lane-dense matmul: (C, S) @ (S, 4S)
    up = jnp.dot(h, mupt_ref[...].astype(f32), preferred_element_type=f32)
    o_ref[0] = up.astype(o_ref.dtype)


# ----------------------------------------------------------------------------
# Public wrapper: NCHW in -> NCHW out
# ----------------------------------------------------------------------------
def spade_resblk_forward(x_nchw, c_nchw, params):
    """SPADEResBlk(in_ch, out_ch, shortcut=False).forward — NCHW in, NCHW out."""
    N, C, H, W = x_nchw.shape
    _, Cc, Hc, Wc = c_nchw.shape
    S, Sc, Sup = H * W, Hc * Wc, 4 * H * W

    x3 = x_nchw.reshape(N, C, S)
    c3 = c_nchw.reshape(N, Cc, Sc)

    # Spatial resampling operators, transposed so the in-kernel matmul is
    # (C, S_in) @ (S_in, S_out) -> lane-dense output.
    mct = jnp.asarray(np.kron(_interp_matrix(H, Hc), _interp_matrix(W, Wc)).T)        # (Sc, S)
    mupt = jnp.asarray(np.kron(_interp_matrix(2 * H, H), _interp_matrix(2 * W, W)).T)  # (S, 4S)
    masks = jnp.asarray(_tap_masks(H, W))                                              # (9, 1, S)

    p0, p1 = params['norm0'], params['norm1']
    w_sh0, b_sh0 = _pack_conv(p0['w_share'], p0['b_share'])
    # Fused gamma/beta conv; fold the "+1" of (1 + gamma) into the gamma bias.
    w_gb0, b_gb0 = _pack_conv(jnp.concatenate([p0['w_gamma'], p0['w_beta']], axis=-1),
                              jnp.concatenate([p0['b_gamma'] + 1.0, p0['b_beta']], axis=0))
    w_sh1, b_sh1 = _pack_conv(p1['w_share'], p1['b_share'])
    w_gb1, b_gb1 = _pack_conv(jnp.concatenate([p1['w_gamma'], p1['w_beta']], axis=-1),
                              jnp.concatenate([p1['b_gamma'] + 1.0, p1['b_beta']], axis=0))
    w_c0, b_c0 = _pack_conv(params['w_c0'], params['b_c0'])
    w_c1, b_c1 = _pack_conv(params['w_c1'], params['b_c1'])

    def fixed(arr):
        nd = arr.ndim
        return pl.BlockSpec(arr.shape, lambda n, _nd=nd: (0,) * _nd)

    kern = functools.partial(_resblk_kernel, H=H, W=W)
    out = pl.pallas_call(
        kern,
        out_shape=jax.ShapeDtypeStruct((N, C, Sup), x_nchw.dtype),
        grid=(N,),
        in_specs=[
            pl.BlockSpec((1, C, S), lambda n: (n, 0, 0)),
            pl.BlockSpec((1, Cc, Sc), lambda n: (n, 0, 0)),
            fixed(mct), fixed(mupt), fixed(masks),
            fixed(w_sh0), fixed(b_sh0), fixed(w_gb0), fixed(b_gb0),
            fixed(w_sh1), fixed(b_sh1), fixed(w_gb1), fixed(b_gb1),
            fixed(w_c0), fixed(b_c0), fixed(w_c1), fixed(b_c1),
        ],
        out_specs=pl.BlockSpec((1, C, Sup), lambda n: (n, 0, 0)),
        compiler_params=pltpu.CompilerParams(
            dimension_semantics=("parallel",),
            vmem_limit_bytes=32 * 1024 * 1024),
    )(x3, c3, mct, mupt, masks,
      w_sh0, b_sh0, w_gb0, b_gb0, w_sh1, b_sh1, w_gb1, b_gb1,
      w_c0, b_c0, w_c1, b_c1)

    return out.reshape(N, C, 2 * H, 2 * W)


# ----------------------------------------------------------------------------
# Deterministic parameter init (synthetic weights, HWIO layout)
# ----------------------------------------------------------------------------
def init_params(key, in_ch, out_ch):
    ks = list(jax.random.split(key, 16))

    def conv_p(kw, kb, cin, cout):
        w = jax.random.normal(kw, (3, 3, cin, cout), jnp.float32) / np.sqrt(9.0 * cin)
        b = jax.random.normal(kb, (cout,), jnp.float32) * 0.05
        return w, b

    def spade_p(k0, k1, k2, k3, k4, k5, c_ch, x_ch):
        d = {}
        d['w_share'], d['b_share'] = conv_p(k0, k1, c_ch, x_ch)
        d['w_gamma'], d['b_gamma'] = conv_p(k2, k3, x_ch, x_ch)
        d['w_beta'], d['b_beta'] = conv_p(k4, k5, x_ch, x_ch)
        return d

    p = {}
    p['w_c0'], p['b_c0'] = conv_p(ks[0], ks[1], in_ch, out_ch)
    p['w_c1'], p['b_c1'] = conv_p(ks[2], ks[3], out_ch, out_ch)
    p['norm0'] = spade_p(*ks[4:10], in_ch, in_ch)     # SPADE(in_ch, in_ch)
    p['norm1'] = spade_p(*ks[10:16], in_ch, out_ch)   # SPADE(in_ch, out_ch)
    return p


# ----------------------------------------------------------------------------
# Pure-JAX reference (full f32 precision) for correctness checking
# ----------------------------------------------------------------------------
def _lrelu(v):
    return jnp.where(v >= 0, v, v * NEG_SLOPE)


def ref_conv3x3(x, w, b, relu=False):
    y = lax.conv_general_dilated(x, w, (1, 1), ((1, 1), (1, 1)),
                                 dimension_numbers=('NHWC', 'HWIO', 'NHWC'),
                                 precision=lax.Precision.HIGHEST) + b
    return _lrelu(y) if relu else y


def ref_resize(x, out_h, out_w):
    N, Hin, Win, C = x.shape
    M = jnp.asarray(np.kron(_interp_matrix(out_h, Hin), _interp_matrix(out_w, Win)))
    out = jnp.einsum('oi,nic->noc', M, x.reshape(N, Hin * Win, C),
                     precision=lax.Precision.HIGHEST)
    return out.reshape(N, out_h, out_w, C)


def ref_spade(x, c, p):
    mean = jnp.mean(x, axis=(1, 2), keepdims=True)
    var = jnp.mean(jnp.square(x - mean), axis=(1, 2), keepdims=True)
    norm = (x - mean) * lax.rsqrt(var + EPS)
    c_r = ref_resize(c, x.shape[1], x.shape[2])
    share = ref_conv3x3(c_r, p['w_share'], p['b_share'], relu=True)
    gamma = ref_conv3x3(share, p['w_gamma'], p['b_gamma'])
    beta = ref_conv3x3(share, p['w_beta'], p['b_beta'])
    return norm * (1.0 + gamma) + beta


def ref_resblk(x_nchw, c_nchw, params):
    x = jnp.transpose(x_nchw, (0, 2, 3, 1))
    c = jnp.transpose(c_nchw, (0, 2, 3, 1))
    h = ref_conv3x3(_lrelu(ref_spade(x, c, params['norm0'])), params['w_c0'], params['b_c0'])
    h = ref_conv3x3(_lrelu(ref_spade(h, c, params['norm1'])), params['w_c1'], params['b_c1'])
    h = h + x
    h = ref_resize(h, 2 * h.shape[1], 2 * h.shape[2])
    return jnp.transpose(h, (0, 3, 1, 2))


# ----------------------------------------------------------------------------
if __name__ == "__main__":
    key = jax.random.PRNGKey(0)
    k_x, k_c, k_p = jax.random.split(key, 3)

    N, C, H, W = 2, 4, 16, 16     # in_ch == out_ch == 4 (shortcut=False requires this)
    Hc, Wc = 8, 8                 # conditioning map (bilinearly resized to HxW)

    x = jax.random.normal(k_x, (N, C, H, W), jnp.float32)
    c = jax.random.normal(k_c, (N, C, Hc, Wc), jnp.float32)
    params = init_params(k_p, C, C)

    fwd = jax.jit(spade_resblk_forward)
    out = jax.block_until_ready(fwd(x, c, params))
    assert out.shape == (N, C, 2 * H, 2 * W), out.shape

    ref = jax.block_until_ready(ref_resblk(x, c, params))
    err = float(jnp.max(jnp.abs(out - ref)))
    scale = float(jnp.max(jnp.abs(ref)))
    # Kernel matmuls run at default (non-HIGHEST) MXU precision, so allow bf16-pass
    # level deviation from the full-f32 reference.
    assert err <= 3e-2 * scale + 1e-3, f"max abs err {err} (ref scale {scale})"

    print("KERNEL_OK")
</pallas_src>

<mosaic_0001>
module attributes {stable_mosaic.version = 11 : i64} {
  func.func @_resblk_kernel(%arg0: i32, %arg1: memref<1x4x256xf32, #tpu.memory_space<vmem>>, %arg2: memref<1x4x64xf32, #tpu.memory_space<vmem>>, %arg3: memref<64x256xf32, #tpu.memory_space<vmem>>, %arg4: memref<256x1024xf32, #tpu.memory_space<vmem>>, %arg5: memref<9x1x256xf32, #tpu.memory_space<vmem>>, %arg6: memref<9x4x4xf32, #tpu.memory_space<vmem>>, %arg7: memref<4x1xf32, #tpu.memory_space<vmem>>, %arg8: memref<9x8x4xf32, #tpu.memory_space<vmem>>, %arg9: memref<8x1xf32, #tpu.memory_space<vmem>>, %arg10: memref<9x4x4xf32, #tpu.memory_space<vmem>>, %arg11: memref<4x1xf32, #tpu.memory_space<vmem>>, %arg12: memref<9x8x4xf32, #tpu.memory_space<vmem>>, %arg13: memref<8x1xf32, #tpu.memory_space<vmem>>, %arg14: memref<9x4x4xf32, #tpu.memory_space<vmem>>, %arg15: memref<4x1xf32, #tpu.memory_space<vmem>>, %arg16: memref<9x4x4xf32, #tpu.memory_space<vmem>>, %arg17: memref<4x1xf32, #tpu.memory_space<vmem>>, %arg18: memref<1x4x1024xf32, #tpu.memory_space<vmem>>) attributes {dimension_semantics = [#tpu.dimension_semantics<parallel>], iteration_bounds = array<i64: 2>, scalar_prefetch = 0 : i64, scratch_operands = 0 : i64, tpu.core_type = #tpu.core_type<tc>, window_params = [{transform_indices = @transform_0, window_bounds = array<i64: 1, 4, 256>}, {transform_indices = @transform_1, window_bounds = array<i64: 1, 4, 64>}, {pipeline_mode = #tpu.pipeline_mode<synchronous>, transform_indices = @transform_2, window_bounds = array<i64: 64, 256>}, {pipeline_mode = #tpu.pipeline_mode<synchronous>, transform_indices = @transform_3, window_bounds = array<i64: 256, 1024>}, {pipeline_mode = #tpu.pipeline_mode<synchronous>, transform_indices = @transform_4, window_bounds = array<i64: 9, 1, 256>}, {pipeline_mode = #tpu.pipeline_mode<synchronous>, transform_indices = @transform_5, window_bounds = array<i64: 9, 4, 4>}, {pipeline_mode = #tpu.pipeline_mode<synchronous>, transform_indices = @transform_6, window_bounds = array<i64: 4, 1>}, {pipeline_mode = #tpu.pipeline_mode<synchronous>, transform_indices = @transform_7, window_bounds = array<i64: 9, 8, 4>}, {pipeline_mode = #tpu.pipeline_mode<synchronous>, transform_indices = @transform_8, window_bounds = array<i64: 8, 1>}, {pipeline_mode = #tpu.pipeline_mode<synchronous>, transform_indices = @transform_9, window_bounds = array<i64: 9, 4, 4>}, {pipeline_mode = #tpu.pipeline_mode<synchronous>, transform_indices = @transform_10, window_bounds = array<i64: 4, 1>}, {pipeline_mode = #tpu.pipeline_mode<synchronous>, transform_indices = @transform_11, window_bounds = array<i64: 9, 8, 4>}, {pipeline_mode = #tpu.pipeline_mode<synchronous>, transform_indices = @transform_12, window_bounds = array<i64: 8, 1>}, {pipeline_mode = #tpu.pipeline_mode<synchronous>, transform_indices = @transform_13, window_bounds = array<i64: 9, 4, 4>}, {pipeline_mode = #tpu.pipeline_mode<synchronous>, transform_indices = @transform_14, window_bounds = array<i64: 4, 1>}, {pipeline_mode = #tpu.pipeline_mode<synchronous>, transform_indices = @transform_15, window_bounds = array<i64: 9, 4, 4>}, {pipeline_mode = #tpu.pipeline_mode<synchronous>, transform_indices = @transform_16, window_bounds = array<i64: 4, 1>}, {transform_indices = @transform_17, window_bounds = array<i64: 1, 4, 1024>}]} {
    %c0 = arith.constant 0 : index
    %c0_0 = arith.constant 0 : index
    %c0_1 = arith.constant 0 : index
    %0 = vector.load %arg1[%c0, %c0_0, %c0_1] : memref<1x4x256xf32, #tpu.memory_space<vmem>>, vector<1x4x256xf32>
    %1 = vector.shape_cast %0 : vector<1x4x256xf32> to vector<4x256xf32>
    %c0_2 = arith.constant 0 : index
    %c0_3 = arith.constant 0 : index
    %c0_4 = arith.constant 0 : index
    %2 = vector.load %arg2[%c0_2, %c0_3, %c0_4] : memref<1x4x64xf32, #tpu.memory_space<vmem>>, vector<1x4x64xf32>
    %3 = vector.shape_cast %2 : vector<1x4x64xf32> to vector<4x64xf32>
    %c0_5 = arith.constant 0 : index
    %c0_6 = arith.constant 0 : index
    %c0_7 = arith.constant 0 : index
    %4 = vector.load %arg5[%c0_5, %c0_6, %c0_7] : memref<9x1x256xf32, #tpu.memory_space<vmem>>, vector<1x1x256xf32>
    %5 = vector.shape_cast %4 : vector<1x1x256xf32> to vector<1x256xf32>
    %c1 = arith.constant 1 : index
    %c0_8 = arith.constant 0 : index
    %c0_9 = arith.constant 0 : index
    %6 = vector.load %arg5[%c1, %c0_8, %c0_9] : memref<9x1x256xf32, #tpu.memory_space<vmem>>, vector<1x1x256xf32>
    %7 = vector.shape_cast %6 : vector<1x1x256xf32> to vector<1x256xf32>
    %c2 = arith.constant 2 : index
    %c0_10 = arith.constant 0 : index
    %c0_11 = arith.constant 0 : index
    %8 = vector.load %arg5[%c2, %c0_10, %c0_11] : memref<9x1x256xf32, #tpu.memory_space<vmem>>, vector<1x1x256xf32>
    %9 = vector.shape_cast %8 : vector<1x1x256xf32> to vector<1x256xf32>
    %c3 = arith.constant 3 : index
    %c0_12 = arith.constant 0 : index
    %c0_13 = arith.constant 0 : index
    %10 = vector.load %arg5[%c3, %c0_12, %c0_13] : memref<9x1x256xf32, #tpu.memory_space<vmem>>, vector<1x1x256xf32>
    %11 = vector.shape_cast %10 : vector<1x1x256xf32> to vector<1x256xf32>
    %c5 = arith.constant 5 : index
    %c0_14 = arith.constant 0 : index
    %c0_15 = arith.constant 0 : index
    %12 = vector.load %arg5[%c5, %c0_14, %c0_15] : memref<9x1x256xf32, #tpu.memory_space<vmem>>, vector<1x1x256xf32>
    %13 = vector.shape_cast %12 : vector<1x1x256xf32> to vector<1x256xf32>
    %c6 = arith.constant 6 : index
    %c0_16 = arith.constant 0 : index
    %c0_17 = arith.constant 0 : index
    %14 = vector.load %arg5[%c6, %c0_16, %c0_17] : memref<9x1x256xf32, #tpu.memory_space<vmem>>, vector<1x1x256xf32>
    %15 = vector.shape_cast %14 : vector<1x1x256xf32> to vector<1x256xf32>
    %c7 = arith.constant 7 : index
    %c0_18 = arith.constant 0 : index
    %c0_19 = arith.constant 0 : index
    %16 = vector.load %arg5[%c7, %c0_18, %c0_19] : memref<9x1x256xf32, #tpu.memory_space<vmem>>, vector<1x1x256xf32>
    %17 = vector.shape_cast %16 : vector<1x1x256xf32> to vector<1x256xf32>
    %c8 = arith.constant 8 : index
    %c0_20 = arith.constant 0 : index
    %c0_21 = arith.constant 0 : index
    %18 = vector.load %arg5[%c8, %c0_20, %c0_21] : memref<9x1x256xf32, #tpu.memory_space<vmem>>, vector<1x1x256xf32>
    %19 = vector.shape_cast %18 : vector<1x1x256xf32> to vector<1x256xf32>
    %c0_22 = arith.constant 0 : index
    %c0_23 = arith.constant 0 : index
    %20 = vector.load %arg3[%c0_22, %c0_23] : memref<64x256xf32, #tpu.memory_space<vmem>>, vector<64x256xf32>
    %cst = arith.constant dense<0.000000e+00> : vector<4x256xf32>
    %21 = tpu.matmul %3, %20, %cst {dimension_numbers = #tpu.dot_dimension_numbers<[1], [0], [0], [1], [0, 0, 1, 1], [], []>} : vector<4x64xf32>, vector<64x256xf32>, vector<4x256xf32> -> vector<4x256xf32>
    %cst_24 = arith.constant 0.000000e+00 : f32
    %22 = vector.broadcast %cst_24 : f32 to vector<4x17xf32>
    %23 = tpu.concatenate %22, %21, %22 in 1 : vector<4x17xf32>, vector<4x256xf32>, vector<4x17xf32> -> vector<4x290xf32>
    %24 = vector.extract_strided_slice %23 {offsets = [0, 0], sizes = [4, 256], strides = [1, 1]} : vector<4x290xf32> to vector<4x256xf32>
    %25 = vector.broadcast %5 : vector<1x256xf32> to vector<4x256xf32>
    %26 = arith.mulf %24, %25 : vector<4x256xf32>
    %c0_25 = arith.constant 0 : index
    %c0_26 = arith.constant 0 : index
    %c0_27 = arith.constant 0 : index
    %27 = vector.load %arg6[%c0_25, %c0_26, %c0_27] : memref<9x4x4xf32, #tpu.memory_space<vmem>>, vector<1x4x4xf32>
    %28 = vector.shape_cast %27 : vector<1x4x4xf32> to vector<4x4xf32>
    %cst_28 = arith.constant dense<0.000000e+00> : vector<4x256xf32>
    %29 = tpu.matmul %28, %26, %cst_28 {dimension_numbers = #tpu.dot_dimension_numbers<[1], [0], [0], [1], [0, 0, 1, 1], [], []>} : vector<4x4xf32>, vector<4x256xf32>, vector<4x256xf32> -> vector<4x256xf32>
    %30 = vector.extract_strided_slice %23 {offsets = [0, 1], sizes = [4, 256], strides = [1, 1]} : vector<4x290xf32> to vector<4x256xf32>
    %31 = vector.broadcast %7 : vector<1x256xf32> to vector<4x256xf32>
    %32 = arith.mulf %30, %31 : vector<4x256xf32>
    %c1_29 = arith.constant 1 : index
    %c0_30 = arith.constant 0 : index
    %c0_31 = arith.constant 0 : index
    %33 = vector.load %arg6[%c1_29, %c0_30, %c0_31] : memref<9x4x4xf32, #tpu.memory_space<vmem>>, vector<1x4x4xf32>
    %34 = vector.shape_cast %33 : vector<1x4x4xf32> to vector<4x4xf32>
    %cst_32 = arith.constant dense<0.000000e+00> : vector<4x256xf32>
    %35 = tpu.matmul %34, %32, %cst_32 {dimension_numbers = #tpu.dot_dimension_numbers<[1], [0], [0], [1], [0, 0, 1, 1], [], []>} : vector<4x4xf32>, vector<4x256xf32>, vector<4x256xf32> -> vector<4x256xf32>
    %36 = arith.addf %29, %35 : vector<4x256xf32>
    %37 = vector.extract_strided_slice %23 {offsets = [0, 2], sizes = [4, 256], strides = [1, 1]} : vector<4x290xf32> to vector<4x256xf32>
    %38 = vector.broadcast %9 : vector<1x256xf32> to vector<4x256xf32>
    %39 = arith.mulf %37, %38 : vector<4x256xf32>
    %c2_33 = arith.constant 2 : index
    %c0_34 = arith.constant 0 : index
    %c0_35 = arith.constant 0 : index
    %40 = vector.load %arg6[%c2_33, %c0_34, %c0_35] : memref<9x4x4xf32, #tpu.memory_space<vmem>>, vector<1x4x4xf32>
    %41 = vector.shape_cast %40 : vector<1x4x4xf32> to vector<4x4xf32>
    %cst_36 = arith.constant dense<0.000000e+00> : vector<4x256xf32>
    %42 = tpu.matmul %41, %39, %cst_36 {dimension_numbers = #tpu.dot_dimension_numbers<[1], [0], [0], [1], [0, 0, 1, 1], [], []>} : vector<4x4xf32>, vector<4x256xf32>, vector<4x256xf32> -> vector<4x256xf32>
    %43 = arith.addf %36, %42 : vector<4x256xf32>
    %44 = vector.extract_strided_slice %23 {offsets = [0, 16], sizes = [4, 256], strides = [1, 1]} : vector<4x290xf32> to vector<4x256xf32>
    %45 = vector.broadcast %11 : vector<1x256xf32> to vector<4x256xf32>
    %46 = arith.mulf %44, %45 : vector<4x256xf32>
    %c3_37 = arith.constant 3 : index
    %c0_38 = arith.constant 0 : index
    %c0_39 = arith.constant 0 : index
    %47 = vector.load %arg6[%c3_37, %c0_38, %c0_39] : memref<9x4x4xf32, #tpu.memory_space<vmem>>, vector<1x4x4xf32>
    %48 = vector.shape_cast %47 : vector<1x4x4xf32> to vector<4x4xf32>
    %cst_40 = arith.constant dense<0.000000e+00> : vector<4x256xf32>
    %49 = tpu.matmul %48, %46, %cst_40 {dimension_numbers = #tpu.dot_dimension_numbers<[1], [0], [0], [1], [0, 0, 1, 1], [], []>} : vector<4x4xf32>, vector<4x256xf32>, vector<4x256xf32> -> vector<4x256xf32>
    %50 = arith.addf %43, %49 : vector<4x256xf32>
    %51 = vector.extract_strided_slice %23 {offsets = [0, 17], sizes = [4, 256], strides = [1, 1]} : vector<4x290xf32> to vector<4x256xf32>
    %c4 = arith.constant 4 : index
    %c0_41 = arith.constant 0 : index
    %c0_42 = arith.constant 0 : index
    %52 = vector.load %arg6[%c4, %c0_41, %c0_42] : memref<9x4x4xf32, #tpu.memory_space<vmem>>, vector<1x4x4xf32>
    %53 = vector.shape_cast %52 : vector<1x4x4xf32> to vector<4x4xf32>
    %cst_43 = arith.constant dense<0.000000e+00> : vector<4x256xf32>
    %54 = tpu.matmul %53, %51, %cst_43 {dimension_numbers = #tpu.dot_dimension_numbers<[1], [0], [0], [1], [0, 0, 1, 1], [], []>} : vector<4x4xf32>, vector<4x256xf32>, vector<4x256xf32> -> vector<4x256xf32>
    %55 = arith.addf %50, %54 : vector<4x256xf32>
    %56 = vector.extract_strided_slice %23 {offsets = [0, 18], sizes = [4, 256], strides = [1, 1]} : vector<4x290xf32> to vector<4x256xf32>
    %57 = vector.broadcast %13 : vector<1x256xf32> to vector<4x256xf32>
    %58 = arith.mulf %56, %57 : vector<4x256xf32>
    %c5_44 = arith.constant 5 : index
    %c0_45 = arith.constant 0 : index
    %c0_46 = arith.constant 0 : index
    %59 = vector.load %arg6[%c5_44, %c0_45, %c0_46] : memref<9x4x4xf32, #tpu.memory_space<vmem>>, vector<1x4x4xf32>
    %60 = vector.shape_cast %59 : vector<1x4x4xf32> to vector<4x4xf32>
    %cst_47 = arith.constant dense<0.000000e+00> : vector<4x256xf32>
    %61 = tpu.matmul %60, %58, %cst_47 {dimension_numbers = #tpu.dot_dimension_numbers<[1], [0], [0], [1], [0, 0, 1, 1], [], []>} : vector<4x4xf32>, vector<4x256xf32>, vector<4x256xf32> -> vector<4x256xf32>
    %62 = arith.addf %55, %61 : vector<4x256xf32>
    %63 = vector.extract_strided_slice %23 {offsets = [0, 32], sizes = [4, 256], strides = [1, 1]} : vector<4x290xf32> to vector<4x256xf32>
    %64 = vector.broadcast %15 : vector<1x256xf32> to vector<4x256xf32>
    %65 = arith.mulf %63, %64 : vector<4x256xf32>
    %c6_48 = arith.constant 6 : index
    %c0_49 = arith.constant 0 : index
    %c0_50 = arith.constant 0 : index
    %66 = vector.load %arg6[%c6_48, %c0_49, %c0_50] : memref<9x4x4xf32, #tpu.memory_space<vmem>>, vector<1x4x4xf32>
    %67 = vector.shape_cast %66 : vector<1x4x4xf32> to vector<4x4xf32>
    %cst_51 = arith.constant dense<0.000000e+00> : vector<4x256xf32>
    %68 = tpu.matmul %67, %65, %cst_51 {dimension_numbers = #tpu.dot_dimension_numbers<[1], [0], [0], [1], [0, 0, 1, 1], [], []>} : vector<4x4xf32>, vector<4x256xf32>, vector<4x256xf32> -> vector<4x256xf32>
    %69 = arith.addf %62, %68 : vector<4x256xf32>
    %70 = vector.extract_strided_slice %23 {offsets = [0, 33], sizes = [4, 256], strides = [1, 1]} : vector<4x290xf32> to vector<4x256xf32>
    %71 = vector.broadcast %17 : vector<1x256xf32> to vector<4x256xf32>
    %72 = arith.mulf %70, %71 : vector<4x256xf32>
    %c7_52 = arith.constant 7 : index
    %c0_53 = arith.constant 0 : index
    %c0_54 = arith.constant 0 : index
    %73 = vector.load %arg6[%c7_52, %c0_53, %c0_54] : memref<9x4x4xf32, #tpu.memory_space<vmem>>, vector<1x4x4xf32>
    %74 = vector.shape_cast %73 : vector<1x4x4xf32> to vector<4x4xf32>
    %cst_55 = arith.constant dense<0.000000e+00> : vector<4x256xf32>
    %75 = tpu.matmul %74, %72, %cst_55 {dimension_numbers = #tpu.dot_dimension_numbers<[1], [0], [0], [1], [0, 0, 1, 1], [], []>} : vector<4x4xf32>, vector<4x256xf32>, vector<4x256xf32> -> vector<4x256xf32>
    %76 = arith.addf %69, %75 : vector<4x256xf32>
    %77 = vector.extract_strided_slice %23 {offsets = [0, 34], sizes = [4, 256], strides = [1, 1]} : vector<4x290xf32> to vector<4x256xf32>
    %78 = vector.broadcast %19 : vector<1x256xf32> to vector<4x256xf32>
    %79 = arith.mulf %77, %78 : vector<4x256xf32>
    %c8_56 = arith.constant 8 : index
    %c0_57 = arith.constant 0 : index
    %c0_58 = arith.constant 0 : index
    %80 = vector.load %arg6[%c8_56, %c0_57, %c0_58] : memref<9x4x4xf32, #tpu.memory_space<vmem>>, vector<1x4x4xf32>
    %81 = vector.shape_cast %80 : vector<1x4x4xf32> to vector<4x4xf32>
    %cst_59 = arith.constant dense<0.000000e+00> : vector<4x256xf32>
    %82 = tpu.matmul %81, %79, %cst_59 {dimension_numbers = #tpu.dot_dimension_numbers<[1], [0], [0], [1], [0, 0, 1, 1], [], []>} : vector<4x4xf32>, vector<4x256xf32>, vector<4x256xf32> -> vector<4x256xf32>
    %83 = arith.addf %76, %82 : vector<4x256xf32>
    %c0_60 = arith.constant 0 : index
    %c0_61 = arith.constant 0 : index
    %84 = vector.load %arg7[%c0_60, %c0_61] : memref<4x1xf32, #tpu.memory_space<vmem>>, vector<4x1xf32>
    %85 = vector.broadcast %84 : vector<4x1xf32> to vector<4x256xf32>
    %86 = arith.addf %83, %85 : vector<4x256xf32>
    %cst_62 = arith.constant 0.00999999977 : f32
    %87 = vector.broadcast %cst_62 : f32 to vector<4x256xf32>
    %88 = arith.mulf %86, %87 : vector<4x256xf32>
    %89 = arith.maximumf %86, %88 : vector<4x256xf32>
    %cst_63 = arith.constant 0.000000e+00 : f32
    %90 = vector.broadcast %cst_63 : f32 to vector<4x17xf32>
    %91 = tpu.concatenate %90, %89, %90 in 1 : vector<4x17xf32>, vector<4x256xf32>, vector<4x17xf32> -> vector<4x290xf32>
    %92 = vector.extract_strided_slice %91 {offsets = [0, 0], sizes = [4, 256], strides = [1, 1]} : vector<4x290xf32> to vector<4x256xf32>
    %93 = vector.broadcast %5 : vector<1x256xf32> to vector<4x256xf32>
    %94 = arith.mulf %92, %93 : vector<4x256xf32>
    %c0_64 = arith.constant 0 : index
    %c0_65 = arith.constant 0 : index
    %c0_66 = arith.constant 0 : index
    %95 = vector.load %arg8[%c0_64, %c0_65, %c0_66] : memref<9x8x4xf32, #tpu.memory_space<vmem>>, vector<1x8x4xf32>
    %96 = vector.shape_cast %95 : vector<1x8x4xf32> to vector<8x4xf32>
    %cst_67 = arith.constant dense<0.000000e+00> : vector<8x256xf32>
    %97 = tpu.matmul %96, %94, %cst_67 {dimension_numbers = #tpu.dot_dimension_numbers<[1], [0], [0], [1], [0, 0, 1, 1], [], []>} : vector<8x4xf32>, vector<4x256xf32>, vector<8x256xf32> -> vector<8x256xf32>
    %98 = vector.extract_strided_slice %91 {offsets = [0, 1], sizes = [4, 256], strides = [1, 1]} : vector<4x290xf32> to vector<4x256xf32>
    %99 = vector.broadcast %7 : vector<1x256xf32> to vector<4x256xf32>
    %100 = arith.mulf %98, %99 : vector<4x256xf32>
    %c1_68 = arith.constant 1 : index
    %c0_69 = arith.constant 0 : index
    %c0_70 = arith.constant 0 : index
    %101 = vector.load %arg8[%c1_68, %c0_69, %c0_70] : memref<9x8x4xf32, #tpu.memory_space<vmem>>, vector<1x8x4xf32>
    %102 = vector.shape_cast %101 : vector<1x8x4xf32> to vector<8x4xf32>
    %cst_71 = arith.constant dense<0.000000e+00> : vector<8x256xf32>
    %103 = tpu.matmul %102, %100, %cst_71 {dimension_numbers = #tpu.dot_dimension_numbers<[1], [0], [0], [1], [0, 0, 1, 1], [], []>} : vector<8x4xf32>, vector<4x256xf32>, vector<8x256xf32> -> vector<8x256xf32>
    %104 = arith.addf %97, %103 : vector<8x256xf32>
    %105 = vector.extract_strided_slice %91 {offsets = [0, 2], sizes = [4, 256], strides = [1, 1]} : vector<4x290xf32> to vector<4x256xf32>
    %106 = vector.broadcast %9 : vector<1x256xf32> to vector<4x256xf32>
    %107 = arith.mulf %105, %106 : vector<4x256xf32>
    %c2_72 = arith.constant 2 : index
    %c0_73 = arith.constant 0 : index
    %c0_74 = arith.constant 0 : index
    %108 = vector.load %arg8[%c2_72, %c0_73, %c0_74] : memref<9x8x4xf32, #tpu.memory_space<vmem>>, vector<1x8x4xf32>
    %109 = vector.shape_cast %108 : vector<1x8x4xf32> to vector<8x4xf32>
    %cst_75 = arith.constant dense<0.000000e+00> : vector<8x256xf32>
    %110 = tpu.matmul %109, %107, %cst_75 {dimension_numbers = #tpu.dot_dimension_numbers<[1], [0], [0], [1], [0, 0, 1, 1], [], []>} : vector<8x4xf32>, vector<4x256xf32>, vector<8x256xf32> -> vector<8x256xf32>
    %111 = arith.addf %104, %110 : vector<8x256xf32>
    %112 = vector.extract_strided_slice %91 {offsets = [0, 16], sizes = [4, 256], strides = [1, 1]} : vector<4x290xf32> to vector<4x256xf32>
    %113 = vector.broadcast %11 : vector<1x256xf32> to vector<4x256xf32>
    %114 = arith.mulf %112, %113 : vector<4x256xf32>
    %c3_76 = arith.constant 3 : index
    %c0_77 = arith.constant 0 : index
    %c0_78 = arith.constant 0 : index
    %115 = vector.load %arg8[%c3_76, %c0_77, %c0_78] : memref<9x8x4xf32, #tpu.memory_space<vmem>>, vector<1x8x4xf32>
    %116 = vector.shape_cast %115 : vector<1x8x4xf32> to vector<8x4xf32>
    %cst_79 = arith.constant dense<0.000000e+00> : vector<8x256xf32>
    %117 = tpu.matmul %116, %114, %cst_79 {dimension_numbers = #tpu.dot_dimension_numbers<[1], [0], [0], [1], [0, 0, 1, 1], [], []>} : vector<8x4xf32>, vector<4x256xf32>, vector<8x256xf32> -> vector<8x256xf32>
    %118 = arith.addf %111, %117 : vector<8x256xf32>
    %119 = vector.extract_strided_slice %91 {offsets = [0, 17], sizes = [4, 256], strides = [1, 1]} : vector<4x290xf32> to vector<4x256xf32>
    %c4_80 = arith.constant 4 : index
    %c0_81 = arith.constant 0 : index
    %c0_82 = arith.constant 0 : index
    %120 = vector.load %arg8[%c4_80, %c0_81, %c0_82] : memref<9x8x4xf32, #tpu.memory_space<vmem>>, vector<1x8x4xf32>
    %121 = vector.shape_cast %120 : vector<1x8x4xf32> to vector<8x4xf32>
    %cst_83 = arith.constant dense<0.000000e+00> : vector<8x256xf32>
    %122 = tpu.matmul %121, %119, %cst_83 {dimension_numbers = #tpu.dot_dimension_numbers<[1], [0], [0], [1], [0, 0, 1, 1], [], []>} : vector<8x4xf32>, vector<4x256xf32>, vector<8x256xf32> -> vector<8x256xf32>
    %123 = arith.addf %118, %122 : vector<8x256xf32>
    %124 = vector.extract_strided_slice %91 {offsets = [0, 18], sizes = [4, 256], strides = [1, 1]} : vector<4x290xf32> to vector<4x256xf32>
    %125 = vector.broadcast %13 : vector<1x256xf32> to vector<4x256xf32>
    %126 = arith.mulf %124, %125 : vector<4x256xf32>
    %c5_84 = arith.constant 5 : index
    %c0_85 = arith.constant 0 : index
    %c0_86 = arith.constant 0 : index
    %127 = vector.load %arg8[%c5_84, %c0_85, %c0_86] : memref<9x8x4xf32, #tpu.memory_space<vmem>>, vector<1x8x4xf32>
    %128 = vector.shape_cast %127 : vector<1x8x4xf32> to vector<8x4xf32>
    %cst_87 = arith.constant dense<0.000000e+00> : vector<8x256xf32>
    %129 = tpu.matmul %128, %126, %cst_87 {dimension_numbers = #tpu.dot_dimension_numbers<[1], [0], [0], [1], [0, 0, 1, 1], [], []>} : vector<8x4xf32>, vector<4x256xf32>, vector<8x256xf32> -> vector<8x256xf32>
    %130 = arith.addf %123, %129 : vector<8x256xf32>
    %131 = vector.extract_strided_slice %91 {offsets = [0, 32], sizes = [4, 256], strides = [1, 1]} : vector<4x290xf32> to vector<4x256xf32>
    %132 = vector.broadcast %15 : vector<1x256xf32> to vector<4x256xf32>
    %133 = arith.mulf %131, %132 : vector<4x256xf32>
    %c6_88 = arith.constant 6 : index
    %c0_89 = arith.constant 0 : index
    %c0_90 = arith.constant 0 : index
    %134 = vector.load %arg8[%c6_88, %c0_89, %c0_90] : memref<9x8x4xf32, #tpu.memory_space<vmem>>, vector<1x8x4xf32>
    %135 = vector.shape_cast %134 : vector<1x8x4xf32> to vector<8x4xf32>
    %cst_91 = arith.constant dense<0.000000e+00> : vector<8x256xf32>
    %136 = tpu.matmul %135, %133, %cst_91 {dimension_numbers = #tpu.dot_dimension_numbers<[1], [0], [0], [1], [0, 0, 1, 1], [], []>} : vector<8x4xf32>, vector<4x256xf32>, vector<8x256xf32> -> vector<8x256xf32>
    %137 = arith.addf %130, %136 : vector<8x256xf32>
    %138 = vector.extract_strided_slice %91 {offsets = [0, 33], sizes = [4, 256], strides = [1, 1]} : vector<4x290xf32> to vector<4x256xf32>
    %139 = vector.broadcast %17 : vector<1x256xf32> to vector<4x256xf32>
    %140 = arith.mulf %138, %139 : vector<4x256xf32>
    %c7_92 = arith.constant 7 : index
    %c0_93 = arith.constant 0 : index
    %c0_94 = arith.constant 0 : index
    %141 = vector.load %arg8[%c7_92, %c0_93, %c0_94] : memref<9x8x4xf32, #tpu.memory_space<vmem>>, vector<1x8x4xf32>
    %142 = vector.shape_cast %141 : vector<1x8x4xf32> to vector<8x4xf32>
    %cst_95 = arith.constant dense<0.000000e+00> : vector<8x256xf32>
    %143 = tpu.matmul %142, %140, %cst_95 {dimension_numbers = #tpu.dot_dimension_numbers<[1], [0], [0], [1], [0, 0, 1, 1], [], []>} : vector<8x4xf32>, vector<4x256xf32>, vector<8x256xf32> -> vector<8x256xf32>
    %144 = arith.addf %137, %143 : vector<8x256xf32>
    %145 = vector.extract_strided_slice %91 {offsets = [0, 34], sizes = [4, 256], strides = [1, 1]} : vector<4x290xf32> to vector<4x256xf32>
    %146 = vector.broadcast %19 : vector<1x256xf32> to vector<4x256xf32>
    %147 = arith.mulf %145, %146 : vector<4x256xf32>
    %c8_96 = arith.constant 8 : index
    %c0_97 = arith.constant 0 : index
    %c0_98 = arith.constant 0 : index
    %148 = vector.load %arg8[%c8_96, %c0_97, %c0_98] : memref<9x8x4xf32, #tpu.memory_space<vmem>>, vector<1x8x4xf32>
    %149 = vector.shape_cast %148 : vector<1x8x4xf32> to vector<8x4xf32>
    %cst_99 = arith.constant dense<0.000000e+00> : vector<8x256xf32>
    %150 = tpu.matmul %149, %147, %cst_99 {dimension_numbers = #tpu.dot_dimension_numbers<[1], [0], [0], [1], [0, 0, 1, 1], [], []>} : vector<8x4xf32>, vector<4x256xf32>, vector<8x256xf32> -> vector<8x256xf32>
    %151 = arith.addf %144, %150 : vector<8x256xf32>
    %c0_100 = arith.constant 0 : index
    %c0_101 = arith.constant 0 : index
    %152 = vector.load %arg9[%c0_100, %c0_101] : memref<8x1xf32, #tpu.memory_space<vmem>>, vector<8x1xf32>
    %153 = vector.broadcast %152 : vector<8x1xf32> to vector<8x256xf32>
    %154 = arith.addf %151, %153 : vector<8x256xf32>
    %155 = vector.extract_strided_slice %154 {offsets = [0, 0], sizes = [4, 256], strides = [1, 1]} : vector<8x256xf32> to vector<4x256xf32>
    %156 = vector.extract_strided_slice %154 {offsets = [4, 0], sizes = [4, 256], strides = [1, 1]} : vector<8x256xf32> to vector<4x256xf32>
    %cst_102 = arith.constant dense<0.000000e+00> : vector<4xf32>
    %157 = vector.multi_reduction <add>, %1, %cst_102 [1] : vector<4x256xf32> to vector<4xf32>
    %158 = vector.shape_cast %157 : vector<4xf32> to vector<4x1xf32>
    %cst_103 = arith.constant 2.560000e+02 : f32
    %159 = vector.broadcast %cst_103 : f32 to vector<4x1xf32>
    %160 = arith.divf %158, %159 : vector<4x1xf32>
    %161 = vector.broadcast %160 : vector<4x1xf32> to vector<4x256xf32>
    %162 = arith.subf %1, %161 : vector<4x256xf32>
    %163 = arith.mulf %162, %162 : vector<4x256xf32>
    %cst_104 = arith.constant dense<0.000000e+00> : vector<4xf32>
    %164 = vector.multi_reduction <add>, %163, %cst_104 [1] : vector<4x256xf32> to vector<4xf32>
    %165 = vector.shape_cast %164 : vector<4xf32> to vector<4x1xf32>
    %cst_105 = arith.constant 2.560000e+02 : f32
    %166 = vector.broadcast %cst_105 : f32 to vector<4x1xf32>
    %167 = arith.divf %165, %166 : vector<4x1xf32>
    %168 = vector.broadcast %160 : vector<4x1xf32> to vector<4x256xf32>
    %169 = arith.subf %1, %168 : vector<4x256xf32>
    %cst_106 = arith.constant 9.99999974E-6 : f32
    %170 = vector.broadcast %cst_106 : f32 to vector<4x1xf32>
    %171 = arith.addf %167, %170 : vector<4x1xf32>
    %172 = math.rsqrt %171 : vector<4x1xf32>
    %173 = vector.broadcast %172 : vector<4x1xf32> to vector<4x256xf32>
    %174 = arith.mulf %169, %173 : vector<4x256xf32>
    %175 = arith.mulf %174, %155 : vector<4x256xf32>
    %176 = arith.addf %175, %156 : vector<4x256xf32>
    %cst_107 = arith.constant 0.00999999977 : f32
    %177 = vector.broadcast %cst_107 : f32 to vector<4x256xf32>
    %178 = arith.mulf %176, %177 : vector<4x256xf32>
    %179 = arith.maximumf %176, %178 : vector<4x256xf32>
    %cst_108 = arith.constant 0.000000e+00 : f32
    %180 = vector.broadcast %cst_108 : f32 to vector<4x17xf32>
    %181 = tpu.concatenate %180, %179, %180 in 1 : vector<4x17xf32>, vector<4x256xf32>, vector<4x17xf32> -> vector<4x290xf32>
    %182 = vector.extract_strided_slice %181 {offsets = [0, 0], sizes = [4, 256], strides = [1, 1]} : vector<4x290xf32> to vector<4x256xf32>
    %183 = vector.broadcast %5 : vector<1x256xf32> to vector<4x256xf32>
    %184 = arith.mulf %182, %183 : vector<4x256xf32>
    %c0_109 = arith.constant 0 : index
    %c0_110 = arith.constant 0 : index
    %c0_111 = arith.constant 0 : index
    %185 = vector.load %arg14[%c0_109, %c0_110, %c0_111] : memref<9x4x4xf32, #tpu.memory_space<vmem>>, vector<1x4x4xf32>
    %186 = vector.shape_cast %185 : vector<1x4x4xf32> to vector<4x4xf32>
    %cst_112 = arith.constant dense<0.000000e+00> : vector<4x256xf32>
    %187 = tpu.matmul %186, %184, %cst_112 {dimension_numbers = #tpu.dot_dimension_numbers<[1], [0], [0], [1], [0, 0, 1, 1], [], []>} : vector<4x4xf32>, vector<4x256xf32>, vector<4x256xf32> -> vector<4x256xf32>
    %188 = vector.extract_strided_slice %181 {offsets = [0, 1], sizes = [4, 256], strides = [1, 1]} : vector<4x290xf32> to vector<4x256xf32>
    %189 = vector.broadcast %7 : vector<1x256xf32> to vector<4x256xf32>
    %190 = arith.mulf %188, %189 : vector<4x256xf32>
    %c1_113 = arith.constant 1 : index
    %c0_114 = arith.constant 0 : index
    %c0_115 = arith.constant 0 : index
    %191 = vector.load %arg14[%c1_113, %c0_114, %c0_115] : memref<9x4x4xf32, #tpu.memory_space<vmem>>, vector<1x4x4xf32>
    %192 = vector.shape_cast %191 : vector<1x4x4xf32> to vector<4x4xf32>
    %cst_116 = arith.constant dense<0.000000e+00> : vector<4x256xf32>
    %193 = tpu.matmul %192, %190, %cst_116 {dimension_numbers = #tpu.dot_dimension_numbers<[1], [0], [0], [1], [0, 0, 1, 1], [], []>} : vector<4x4xf32>, vector<4x256xf32>, vector<4x256xf32> -> vector<4x256xf32>
    %194 = arith.addf %187, %193 : vector<4x256xf32>
    %195 = vector.extract_strided_slice %181 {offsets = [0, 2], sizes = [4, 256], strides = [1, 1]} : vector<4x290xf32> to vector<4x256xf32>
    %196 = vector.broadcast %9 : vector<1x256xf32> to vector<4x256xf32>
    %197 = arith.mulf %195, %196 : vector<4x256xf32>
    %c2_117 = arith.constant 2 : index
    %c0_118 = arith.constant 0 : index
    %c0_119 = arith.constant 0 : index
    %198 = vector.load %arg14[%c2_117, %c0_118, %c0_119] : memref<9x4x4xf32, #tpu.memory_space<vmem>>, vector<1x4x4xf32>
    %199 = vector.shape_cast %198 : vector<1x4x4xf32> to vector<4x4xf32>
    %cst_120 = arith.constant dense<0.000000e+00> : vector<4x256xf32>
    %200 = tpu.matmul %199, %197, %cst_120 {dimension_numbers = #tpu.dot_dimension_numbers<[1], [0], [0], [1], [0, 0, 1, 1], [], []>} : vector<4x4xf32>, vector<4x256xf32>, vector<4x256xf32> -> vector<4x256xf32>
    %201 = arith.addf %194, %200 : vector<4x256xf32>
    %202 = vector.extract_strided_slice %181 {offsets = [0, 16], sizes = [4, 256], strides = [1, 1]} : vector<4x290xf32> to vector<4x256xf32>
    %203 = vector.broadcast %11 : vector<1x256xf32> to vector<4x256xf32>
    %204 = arith.mulf %202, %203 : vector<4x256xf32>
    %c3_121 = arith.constant 3 : index
    %c0_122 = arith.constant 0 : index
    %c0_123 = arith.constant 0 : index
    %205 = vector.load %arg14[%c3_121, %c0_122, %c0_123] : memref<9x4x4xf32, #tpu.memory_space<vmem>>, vector<1x4x4xf32>
    %206 = vector.shape_cast %205 : vector<1x4x4xf32> to vector<4x4xf32>
    %cst_124 = arith.constant dense<0.000000e+00> : vector<4x256xf32>
    %207 = tpu.matmul %206, %204, %cst_124 {dimension_numbers = #tpu.dot_dimension_numbers<[1], [0], [0], [1], [0, 0, 1, 1], [], []>} : vector<4x4xf32>, vector<4x256xf32>, vector<4x256xf32> -> vector<4x256xf32>
    %208 = arith.addf %201, %207 : vector<4x256xf32>
    %209 = vector.extract_strided_slice %181 {offsets = [0, 17], sizes = [4, 256], strides = [1, 1]} : vector<4x290xf32> to vector<4x256xf32>
    %c4_125 = arith.constant 4 : index
    %c0_126 = arith.constant 0 : index
    %c0_127 = arith.constant 0 : index
    %210 = vector.load %arg14[%c4_125, %c0_126, %c0_127] : memref<9x4x4xf32, #tpu.memory_space<vmem>>, vector<1x4x4xf32>
    %211 = vector.shape_cast %210 : vector<1x4x4xf32> to vector<4x4xf32>
    %cst_128 = arith.constant dense<0.000000e+00> : vector<4x256xf32>
    %212 = tpu.matmul %211, %209, %cst_128 {dimension_numbers = #tpu.dot_dimension_numbers<[1], [0], [0], [1], [0, 0, 1, 1], [], []>} : vector<4x4xf32>, vector<4x256xf32>, vector<4x256xf32> -> vector<4x256xf32>
    %213 = arith.addf %208, %212 : vector<4x256xf32>
    %214 = vector.extract_strided_slice %181 {offsets = [0, 18], sizes = [4, 256], strides = [1, 1]} : vector<4x290xf32> to vector<4x256xf32>
    %215 = vector.broadcast %13 : vector<1x256xf32> to vector<4x256xf32>
    %216 = arith.mulf %214, %215 : vector<4x256xf32>
    %c5_129 = arith.constant 5 : index
    %c0_130 = arith.constant 0 : index
    %c0_131 = arith.constant 0 : index
    %217 = vector.load %arg14[%c5_129, %c0_130, %c0_131] : memref<9x4x4xf32, #tpu.memory_space<vmem>>, vector<1x4x4xf32>
    %218 = vector.shape_cast %217 : vector<1x4x4xf32> to vector<4x4xf32>
    %cst_132 = arith.constant dense<0.000000e+00> : vector<4x256xf32>
    %219 = tpu.matmul %218, %216, %cst_132 {dimension_numbers = #tpu.dot_dimension_numbers<[1], [0], [0], [1], [0, 0, 1, 1], [], []>} : vector<4x4xf32>, vector<4x256xf32>, vector<4x256xf32> -> vector<4x256xf32>
    %220 = arith.addf %213, %219 : vector<4x256xf32>
    %221 = vector.extract_strided_slice %181 {offsets = [0, 32], sizes = [4, 256], strides = [1, 1]} : vector<4x290xf32> to vector<4x256xf32>
    %222 = vector.broadcast %15 : vector<1x256xf32> to vector<4x256xf32>
    %223 = arith.mulf %221, %222 : vector<4x256xf32>
    %c6_133 = arith.constant 6 : index
    %c0_134 = arith.constant 0 : index
    %c0_135 = arith.constant 0 : index
    %224 = vector.load %arg14[%c6_133, %c0_134, %c0_135] : memref<9x4x4xf32, #tpu.memory_space<vmem>>, vector<1x4x4xf32>
    %225 = vector.shape_cast %224 : vector<1x4x4xf32> to vector<4x4xf32>
    %cst_136 = arith.constant dense<0.000000e+00> : vector<4x256xf32>
    %226 = tpu.matmul %225, %223, %cst_136 {dimension_numbers = #tpu.dot_dimension_numbers<[1], [0], [0], [1], [0, 0, 1, 1], [], []>} : vector<4x4xf32>, vector<4x256xf32>, vector<4x256xf32> -> vector<4x256xf32>
    %227 = arith.addf %220, %226 : vector<4x256xf32>
    %228 = vector.extract_strided_slice %181 {offsets = [0, 33], sizes = [4, 256], strides = [1, 1]} : vector<4x290xf32> to vector<4x256xf32>
    %229 = vector.broadcast %17 : vector<1x256xf32> to vector<4x256xf32>
    %230 = arith.mulf %228, %229 : vector<4x256xf32>
    %c7_137 = arith.constant 7 : index
    %c0_138 = arith.constant 0 : index
    %c0_139 = arith.constant 0 : index
    %231 = vector.load %arg14[%c7_137, %c0_138, %c0_139] : memref<9x4x4xf32, #tpu.memory_space<vmem>>, vector<1x4x4xf32>
    %232 = vector.shape_cast %231 : vector<1x4x4xf32> to vector<4x4xf32>
    %cst_140 = arith.constant dense<0.000000e+00> : vector<4x256xf32>
    %233 = tpu.matmul %232, %230, %cst_140 {dimension_numbers = #tpu.dot_dimension_numbers<[1], [0], [0], [1], [0, 0, 1, 1], [], []>} : vector<4x4xf32>, vector<4x256xf32>, vector<4x256xf32> -> vector<4x256xf32>
    %234 = arith.addf %227, %233 : vector<4x256xf32>
    %235 = vector.extract_strided_slice %181 {offsets = [0, 34], sizes = [4, 256], strides = [1, 1]} : vector<4x290xf32> to vector<4x256xf32>
    %236 = vector.broadcast %19 : vector<1x256xf32> to vector<4x256xf32>
    %237 = arith.mulf %235, %236 : vector<4x256xf32>
    %c8_141 = arith.constant 8 : index
    %c0_142 = arith.constant 0 : index
    %c0_143 = arith.constant 0 : index
    %238 = vector.load %arg14[%c8_141, %c0_142, %c0_143] : memref<9x4x4xf32, #tpu.memory_space<vmem>>, vector<1x4x4xf32>
    %239 = vector.shape_cast %238 : vector<1x4x4xf32> to vector<4x4xf32>
    %cst_144 = arith.constant dense<0.000000e+00> : vector<4x256xf32>
    %240 = tpu.matmul %239, %237, %cst_144 {dimension_numbers = #tpu.dot_dimension_numbers<[1], [0], [0], [1], [0, 0, 1, 1], [], []>} : vector<4x4xf32>, vector<4x256xf32>, vector<4x256xf32> -> vector<4x256xf32>
    %241 = arith.addf %234, %240 : vector<4x256xf32>
    %c0_145 = arith.constant 0 : index
    %c0_146 = arith.constant 0 : index
    %242 = vector.load %arg15[%c0_145, %c0_146] : memref<4x1xf32, #tpu.memory_space<vmem>>, vector<4x1xf32>
    %243 = vector.broadcast %242 : vector<4x1xf32> to vector<4x256xf32>
    %244 = arith.addf %241, %243 : vector<4x256xf32>
    %cst_147 = arith.constant 0.000000e+00 : f32
    %245 = vector.broadcast %cst_147 : f32 to vector<4x17xf32>
    %246 = tpu.concatenate %245, %21, %245 in 1 : vector<4x17xf32>, vector<4x256xf32>, vector<4x17xf32> -> vector<4x290xf32>
    %247 = vector.extract_strided_slice %246 {offsets = [0, 0], sizes = [4, 256], strides = [1, 1]} : vector<4x290xf32> to vector<4x256xf32>
    %248 = vector.broadcast %5 : vector<1x256xf32> to vector<4x256xf32>
    %249 = arith.mulf %247, %248 : vector<4x256xf32>
    %c0_148 = arith.constant 0 : index
    %c0_149 = arith.constant 0 : index
    %c0_150 = arith.constant 0 : index
    %250 = vector.load %arg10[%c0_148, %c0_149, %c0_150] : memref<9x4x4xf32, #tpu.memory_space<vmem>>, vector<1x4x4xf32>
    %251 = vector.shape_cast %250 : vector<1x4x4xf32> to vector<4x4xf32>
    %cst_151 = arith.constant dense<0.000000e+00> : vector<4x256xf32>
    %252 = tpu.matmul %251, %249, %cst_151 {dimension_numbers = #tpu.dot_dimension_numbers<[1], [0], [0], [1], [0, 0, 1, 1], [], []>} : vector<4x4xf32>, vector<4x256xf32>, vector<4x256xf32> -> vector<4x256xf32>
    %253 = vector.extract_strided_slice %246 {offsets = [0, 1], sizes = [4, 256], strides = [1, 1]} : vector<4x290xf32> to vector<4x256xf32>
    %254 = vector.broadcast %7 : vector<1x256xf32> to vector<4x256xf32>
    %255 = arith.mulf %253, %254 : vector<4x256xf32>
    %c1_152 = arith.constant 1 : index
    %c0_153 = arith.constant 0 : index
    %c0_154 = arith.constant 0 : index
    %256 = vector.load %arg10[%c1_152, %c0_153, %c0_154] : memref<9x4x4xf32, #tpu.memory_space<vmem>>, vector<1x4x4xf32>
    %257 = vector.shape_cast %256 : vector<1x4x4xf32> to vector<4x4xf32>
    %cst_155 = arith.constant dense<0.000000e+00> : vector<4x256xf32>
    %258 = tpu.matmul %257, %255, %cst_155 {dimension_numbers = #tpu.dot_dimension_numbers<[1], [0], [0], [1], [0, 0, 1, 1], [], []>} : vector<4x4xf32>, vector<4x256xf32>, vector<4x256xf32> -> vector<4x256xf32>
    %259 = arith.addf %252, %258 : vector<4x256xf32>
    %260 = vector.extract_strided_slice %246 {offsets = [0, 2], sizes = [4, 256], strides = [1, 1]} : vector<4x290xf32> to vector<4x256xf32>
    %261 = vector.broadcast %9 : vector<1x256xf32> to vector<4x256xf32>
    %262 = arith.mulf %260, %261 : vector<4x256xf32>
    %c2_156 = arith.constant 2 : index
    %c0_157 = arith.constant 0 : index
    %c0_158 = arith.constant 0 : index
    %263 = vector.load %arg10[%c2_156, %c0_157, %c0_158] : memref<9x4x4xf32, #tpu.memory_space<vmem>>, vector<1x4x4xf32>
    %264 = vector.shape_cast %263 : vector<1x4x4xf32> to vector<4x4xf32>
    %cst_159 = arith.constant dense<0.000000e+00> : vector<4x256xf32>
    %265 = tpu.matmul %264, %262, %cst_159 {dimension_numbers = #tpu.dot_dimension_numbers<[1], [0], [0], [1], [0, 0, 1, 1], [], []>} : vector<4x4xf32>, vector<4x256xf32>, vector<4x256xf32> -> vector<4x256xf32>
    %266 = arith.addf %259, %265 : vector<4x256xf32>
    %267 = vector.extract_strided_slice %246 {offsets = [0, 16], sizes = [4, 256], strides = [1, 1]} : vector<4x290xf32> to vector<4x256xf32>
    %268 = vector.broadcast %11 : vector<1x256xf32> to vector<4x256xf32>
    %269 = arith.mulf %267, %268 : vector<4x256xf32>
    %c3_160 = arith.constant 3 : index
    %c0_161 = arith.constant 0 : index
    %c0_162 = arith.constant 0 : index
    %270 = vector.load %arg10[%c3_160, %c0_161, %c0_162] : memref<9x4x4xf32, #tpu.memory_space<vmem>>, vector<1x4x4xf32>
    %271 = vector.shape_cast %270 : vector<1x4x4xf32> to vector<4x4xf32>
    %cst_163 = arith.constant dense<0.000000e+00> : vector<4x256xf32>
    %272 = tpu.matmul %271, %269, %cst_163 {dimension_numbers = #tpu.dot_dimension_numbers<[1], [0], [0], [1], [0, 0, 1, 1], [], []>} : vector<4x4xf32>, vector<4x256xf32>, vector<4x256xf32> -> vector<4x256xf32>
    %273 = arith.addf %266, %272 : vector<4x256xf32>
    %274 = vector.extract_strided_slice %246 {offsets = [0, 17], sizes = [4, 256], strides = [1, 1]} : vector<4x290xf32> to vector<4x256xf32>
    %c4_164 = arith.constant 4 : index
    %c0_165 = arith.constant 0 : index
    %c0_166 = arith.constant 0 : index
    %275 = vector.load %arg10[%c4_164, %c0_165, %c0_166] : memref<9x4x4xf32, #tpu.memory_space<vmem>>, vector<1x4x4xf32>
    %276 = vector.shape_cast %275 : vector<1x4x4xf32> to vector<4x4xf32>
    %cst_167 = arith.constant dense<0.000000e+00> : vector<4x256xf32>
    %277 = tpu.matmul %276, %274, %cst_167 {dimension_numbers = #tpu.dot_dimension_numbers<[1], [0], [0], [1], [0, 0, 1, 1], [], []>} : vector<4x4xf32>, vector<4x256xf32>, vector<4x256xf32> -> vector<4x256xf32>
    %278 = arith.addf %273, %277 : vector<4x256xf32>
    %279 = vector.extract_strided_slice %246 {offsets = [0, 18], sizes = [4, 256], strides = [1, 1]} : vector<4x290xf32> to vector<4x256xf32>
    %280 = vector.broadcast %13 : vector<1x256xf32> to vector<4x256xf32>
    %281 = arith.mulf %279, %280 : vector<4x256xf32>
    %c5_168 = arith.constant 5 : index
    %c0_169 = arith.constant 0 : index
    %c0_170 = arith.constant 0 : index
    %282 = vector.load %arg10[%c5_168, %c0_169, %c0_170] : memref<9x4x4xf32, #tpu.memory_space<vmem>>, vector<1x4x4xf32>
    %283 = vector.shape_cast %282 : vector<1x4x4xf32> to vector<4x4xf32>
    %cst_171 = arith.constant dense<0.000000e+00> : vector<4x256xf32>
    %284 = tpu.matmul %283, %281, %cst_171 {dimension_numbers = #tpu.dot_dimension_numbers<[1], [0], [0], [1], [0, 0, 1, 1], [], []>} : vector<4x4xf32>, vector<4x256xf32>, vector<4x256xf32> -> vector<4x256xf32>
    %285 = arith.addf %278, %284 : vector<4x256xf32>
    %286 = vector.extract_strided_slice %246 {offsets = [0, 32], sizes = [4, 256], strides = [1, 1]} : vector<4x290xf32> to vector<4x256xf32>
    %287 = vector.broadcast %15 : vector<1x256xf32> to vector<4x256xf32>
    %288 = arith.mulf %286, %287 : vector<4x256xf32>
    %c6_172 = arith.constant 6 : index
    %c0_173 = arith.constant 0 : index
    %c0_174 = arith.constant 0 : index
    %289 = vector.load %arg10[%c6_172, %c0_173, %c0_174] : memref<9x4x4xf32, #tpu.memory_space<vmem>>, vector<1x4x4xf32>
    %290 = vector.shape_cast %289 : vector<1x4x4xf32> to vector<4x4xf32>
    %cst_175 = arith.constant dense<0.000000e+00> : vector<4x256xf32>
    %291 = tpu.matmul %290, %288, %cst_175 {dimension_numbers = #tpu.dot_dimension_numbers<[1], [0], [0], [1], [0, 0, 1, 1], [], []>} : vector<4x4xf32>, vector<4x256xf32>, vector<4x256xf32> -> vector<4x256xf32>
    %292 = arith.addf %285, %291 : vector<4x256xf32>
    %293 = vector.extract_strided_slice %246 {offsets = [0, 33], sizes = [4, 256], strides = [1, 1]} : vector<4x290xf32> to vector<4x256xf32>
    %294 = vector.broadcast %17 : vector<1x256xf32> to vector<4x256xf32>
    %295 = arith.mulf %293, %294 : vector<4x256xf32>
    %c7_176 = arith.constant 7 : index
    %c0_177 = arith.constant 0 : index
    %c0_178 = arith.constant 0 : index
    %296 = vector.load %arg10[%c7_176, %c0_177, %c0_178] : memref<9x4x4xf32, #tpu.memory_space<vmem>>, vector<1x4x4xf32>
    %297 = vector.shape_cast %296 : vector<1x4x4xf32> to vector<4x4xf32>
    %cst_179 = arith.constant dense<0.000000e+00> : vector<4x256xf32>
    %298 = tpu.matmul %297, %295, %cst_179 {dimension_numbers = #tpu.dot_dimension_numbers<[1], [0], [0], [1], [0, 0, 1, 1], [], []>} : vector<4x4xf32>, vector<4x256xf32>, vector<4x256xf32> -> vector<4x256xf32>
    %299 = arith.addf %292, %298 : vector<4x256xf32>
    %300 = vector.extract_strided_slice %246 {offsets = [0, 34], sizes = [4, 256], strides = [1, 1]} : vector<4x290xf32> to vector<4x256xf32>
    %301 = vector.broadcast %19 : vector<1x256xf32> to vector<4x256xf32>
    %302 = arith.mulf %300, %301 : vector<4x256xf32>
    %c8_180 = arith.constant 8 : index
    %c0_181 = arith.constant 0 : index
    %c0_182 = arith.constant 0 : index
    %303 = vector.load %arg10[%c8_180, %c0_181, %c0_182] : memref<9x4x4xf32, #tpu.memory_space<vmem>>, vector<1x4x4xf32>
    %304 = vector.shape_cast %303 : vector<1x4x4xf32> to vector<4x4xf32>
    %cst_183 = arith.constant dense<0.000000e+00> : vector<4x256xf32>
    %305 = tpu.matmul %304, %302, %cst_183 {dimension_numbers = #tpu.dot_dimension_numbers<[1], [0], [0], [1], [0, 0, 1, 1], [], []>} : vector<4x4xf32>, vector<4x256xf32>, vector<4x256xf32> -> vector<4x256xf32>
    %306 = arith.addf %299, %305 : vector<4x256xf32>
    %c0_184 = arith.constant 0 : index
    %c0_185 = arith.constant 0 : index
    %307 = vector.load %arg11[%c0_184, %c0_185] : memref<4x1xf32, #tpu.memory_space<vmem>>, vector<4x1xf32>
    %308 = vector.broadcast %307 : vector<4x1xf32> to vector<4x256xf32>
    %309 = arith.addf %306, %308 : vector<4x256xf32>
    %cst_186 = arith.constant 0.00999999977 : f32
    %310 = vector.broadcast %cst_186 : f32 to vector<4x256xf32>
    %311 = arith.mulf %309, %310 : vector<4x256xf32>
    %312 = arith.maximumf %309, %311 : vector<4x256xf32>
    %cst_187 = arith.constant 0.000000e+00 : f32
    %313 = vector.broadcast %cst_187 : f32 to vector<4x17xf32>
    %314 = tpu.concatenate %313, %312, %313 in 1 : vector<4x17xf32>, vector<4x256xf32>, vector<4x17xf32> -> vector<4x290xf32>
    %315 = vector.extract_strided_slice %314 {offsets = [0, 0], sizes = [4, 256], strides = [1, 1]} : vector<4x290xf32> to vector<4x256xf32>
    %316 = vector.broadcast %5 : vector<1x256xf32> to vector<4x256xf32>
    %317 = arith.mulf %315, %316 : vector<4x256xf32>
    %c0_188 = arith.constant 0 : index
    %c0_189 = arith.constant 0 : index
    %c0_190 = arith.constant 0 : index
    %318 = vector.load %arg12[%c0_188, %c0_189, %c0_190] : memref<9x8x4xf32, #tpu.memory_space<vmem>>, vector<1x8x4xf32>
    %319 = vector.shape_cast %318 : vector<1x8x4xf32> to vector<8x4xf32>
    %cst_191 = arith.constant dense<0.000000e+00> : vector<8x256xf32>
    %320 = tpu.matmul %319, %317, %cst_191 {dimension_numbers = #tpu.dot_dimension_numbers<[1], [0], [0], [1], [0, 0, 1, 1], [], []>} : vector<8x4xf32>, vector<4x256xf32>, vector<8x256xf32> -> vector<8x256xf32>
    %321 = vector.extract_strided_slice %314 {offsets = [0, 1], sizes = [4, 256], strides = [1, 1]} : vector<4x290xf32> to vector<4x256xf32>
    %322 = vector.broadcast %7 : vector<1x256xf32> to vector<4x256xf32>
    %323 = arith.mulf %321, %322 : vector<4x256xf32>
    %c1_192 = arith.constant 1 : index
    %c0_193 = arith.constant 0 : index
    %c0_194 = arith.constant 0 : index
    %324 = vector.load %arg12[%c1_192, %c0_193, %c0_194] : memref<9x8x4xf32, #tpu.memory_space<vmem>>, vector<1x8x4xf32>
    %325 = vector.shape_cast %324 : vector<1x8x4xf32> to vector<8x4xf32>
    %cst_195 = arith.constant dense<0.000000e+00> : vector<8x256xf32>
    %326 = tpu.matmul %325, %323, %cst_195 {dimension_numbers = #tpu.dot_dimension_numbers<[1], [0], [0], [1], [0, 0, 1, 1], [], []>} : vector<8x4xf32>, vector<4x256xf32>, vector<8x256xf32> -> vector<8x256xf32>
    %327 = arith.addf %320, %326 : vector<8x256xf32>
    %328 = vector.extract_strided_slice %314 {offsets = [0, 2], sizes = [4, 256], strides = [1, 1]} : vector<4x290xf32> to vector<4x256xf32>
    %329 = vector.broadcast %9 : vector<1x256xf32> to vector<4x256xf32>
    %330 = arith.mulf %328, %329 : vector<4x256xf32>
    %c2_196 = arith.constant 2 : index
    %c0_197 = arith.constant 0 : index
    %c0_198 = arith.constant 0 : index
    %331 = vector.load %arg12[%c2_196, %c0_197, %c0_198] : memref<9x8x4xf32, #tpu.memory_space<vmem>>, vector<1x8x4xf32>
    %332 = vector.shape_cast %331 : vector<1x8x4xf32> to vector<8x4xf32>
    %cst_199 = arith.constant dense<0.000000e+00> : vector<8x256xf32>
    %333 = tpu.matmul %332, %330, %cst_199 {dimension_numbers = #tpu.dot_dimension_numbers<[1], [0], [0], [1], [0, 0, 1, 1], [], []>} : vector<8x4xf32>, vector<4x256xf32>, vector<8x256xf32> -> vector<8x256xf32>
    %334 = arith.addf %327, %333 : vector<8x256xf32>
    %335 = vector.extract_strided_slice %314 {offsets = [0, 16], sizes = [4, 256], strides = [1, 1]} : vector<4x290xf32> to vector<4x256xf32>
    %336 = vector.broadcast %11 : vector<1x256xf32> to vector<4x256xf32>
    %337 = arith.mulf %335, %336 : vector<4x256xf32>
    %c3_200 = arith.constant 3 : index
    %c0_201 = arith.constant 0 : index
    %c0_202 = arith.constant 0 : index
    %338 = vector.load %arg12[%c3_200, %c0_201, %c0_202] : memref<9x8x4xf32, #tpu.memory_space<vmem>>, vector<1x8x4xf32>
    %339 = vector.shape_cast %338 : vector<1x8x4xf32> to vector<8x4xf32>
    %cst_203 = arith.constant dense<0.000000e+00> : vector<8x256xf32>
    %340 = tpu.matmul %339, %337, %cst_203 {dimension_numbers = #tpu.dot_dimension_numbers<[1], [0], [0], [1], [0, 0, 1, 1], [], []>} : vector<8x4xf32>, vector<4x256xf32>, vector<8x256xf32> -> vector<8x256xf32>
    %341 = arith.addf %334, %340 : vector<8x256xf32>
    %342 = vector.extract_strided_slice %314 {offsets = [0, 17], sizes = [4, 256], strides = [1, 1]} : vector<4x290xf32> to vector<4x256xf32>
    %c4_204 = arith.constant 4 : index
    %c0_205 = arith.constant 0 : index
    %c0_206 = arith.constant 0 : index
    %343 = vector.load %arg12[%c4_204, %c0_205, %c0_206] : memref<9x8x4xf32, #tpu.memory_space<vmem>>, vector<1x8x4xf32>
    %344 = vector.shape_cast %343 : vector<1x8x4xf32> to vector<8x4xf32>
    %cst_207 = arith.constant dense<0.000000e+00> : vector<8x256xf32>
    %345 = tpu.matmul %344, %342, %cst_207 {dimension_numbers = #tpu.dot_dimension_numbers<[1], [0], [0], [1], [0, 0, 1, 1], [], []>} : vector<8x4xf32>, vector<4x256xf32>, vector<8x256xf32> -> vector<8x256xf32>
    %346 = arith.addf %341, %345 : vector<8x256xf32>
    %347 = vector.extract_strided_slice %314 {offsets = [0, 18], sizes = [4, 256], strides = [1, 1]} : vector<4x290xf32> to vector<4x256xf32>
    %348 = vector.broadcast %13 : vector<1x256xf32> to vector<4x256xf32>
    %349 = arith.mulf %347, %348 : vector<4x256xf32>
    %c5_208 = arith.constant 5 : index
    %c0_209 = arith.constant 0 : index
    %c0_210 = arith.constant 0 : index
    %350 = vector.load %arg12[%c5_208, %c0_209, %c0_210] : memref<9x8x4xf32, #tpu.memory_space<vmem>>, vector<1x8x4xf32>
    %351 = vector.shape_cast %350 : vector<1x8x4xf32> to vector<8x4xf32>
    %cst_211 = arith.constant dense<0.000000e+00> : vector<8x256xf32>
    %352 = tpu.matmul %351, %349, %cst_211 {dimension_numbers = #tpu.dot_dimension_numbers<[1], [0], [0], [1], [0, 0, 1, 1], [], []>} : vector<8x4xf32>, vector<4x256xf32>, vector<8x256xf32> -> vector<8x256xf32>
    %353 = arith.addf %346, %352 : vector<8x256xf32>
    %354 = vector.extract_strided_slice %314 {offsets = [0, 32], sizes = [4, 256], strides = [1, 1]} : vector<4x290xf32> to vector<4x256xf32>
    %355 = vector.broadcast %15 : vector<1x256xf32> to vector<4x256xf32>
    %356 = arith.mulf %354, %355 : vector<4x256xf32>
    %c6_212 = arith.constant 6 : index
    %c0_213 = arith.constant 0 : index
    %c0_214 = arith.constant 0 : index
    %357 = vector.load %arg12[%c6_212, %c0_213, %c0_214] : memref<9x8x4xf32, #tpu.memory_space<vmem>>, vector<1x8x4xf32>
    %358 = vector.shape_cast %357 : vector<1x8x4xf32> to vector<8x4xf32>
    %cst_215 = arith.constant dense<0.000000e+00> : vector<8x256xf32>
    %359 = tpu.matmul %358, %356, %cst_215 {dimension_numbers = #tpu.dot_dimension_numbers<[1], [0], [0], [1], [0, 0, 1, 1], [], []>} : vector<8x4xf32>, vector<4x256xf32>, vector<8x256xf32> -> vector<8x256xf32>
    %360 = arith.addf %353, %359 : vector<8x256xf32>
    %361 = vector.extract_strided_slice %314 {offsets = [0, 33], sizes = [4, 256], strides = [1, 1]} : vector<4x290xf32> to vector<4x256xf32>
    %362 = vector.broadcast %17 : vector<1x256xf32> to vector<4x256xf32>
    %363 = arith.mulf %361, %362 : vector<4x256xf32>
    %c7_216 = arith.constant 7 : index
    %c0_217 = arith.constant 0 : index
    %c0_218 = arith.constant 0 : index
    %364 = vector.load %arg12[%c7_216, %c0_217, %c0_218] : memref<9x8x4xf32, #tpu.memory_space<vmem>>, vector<1x8x4xf32>
    %365 = vector.shape_cast %364 : vector<1x8x4xf32> to vector<8x4xf32>
    %cst_219 = arith.constant dense<0.000000e+00> : vector<8x256xf32>
    %366 = tpu.matmul %365, %363, %cst_219 {dimension_numbers = #tpu.dot_dimension_numbers<[1], [0], [0], [1], [0, 0, 1, 1], [], []>} : vector<8x4xf32>, vector<4x256xf32>, vector<8x256xf32> -> vector<8x256xf32>
    %367 = arith.addf %360, %366 : vector<8x256xf32>
    %368 = vector.extract_strided_slice %314 {offsets = [0, 34], sizes = [4, 256], strides = [1, 1]} : vector<4x290xf32> to vector<4x256xf32>
    %369 = vector.broadcast %19 : vector<1x256xf32> to vector<4x256xf32>
    %370 = arith.mulf %368, %369 : vector<4x256xf32>
    %c8_220 = arith.constant 8 : index
    %c0_221 = arith.constant 0 : index
    %c0_222 = arith.constant 0 : index
    %371 = vector.load %arg12[%c8_220, %c0_221, %c0_222] : memref<9x8x4xf32, #tpu.memory_space<vmem>>, vector<1x8x4xf32>
    %372 = vector.shape_cast %371 : vector<1x8x4xf32> to vector<8x4xf32>
    %cst_223 = arith.constant dense<0.000000e+00> : vector<8x256xf32>
    %373 = tpu.matmul %372, %370, %cst_223 {dimension_numbers = #tpu.dot_dimension_numbers<[1], [0], [0], [1], [0, 0, 1, 1], [], []>} : vector<8x4xf32>, vector<4x256xf32>, vector<8x256xf32> -> vector<8x256xf32>
    %374 = arith.addf %367, %373 : vector<8x256xf32>
    %c0_224 = arith.constant 0 : index
    %c0_225 = arith.constant 0 : index
    %375 = vector.load %arg13[%c0_224, %c0_225] : memref<8x1xf32, #tpu.memory_space<vmem>>, vector<8x1xf32>
    %376 = vector.broadcast %375 : vector<8x1xf32> to vector<8x256xf32>
    %377 = arith.addf %374, %376 : vector<8x256xf32>
    %378 = vector.extract_strided_slice %377 {offsets = [0, 0], sizes = [4, 256], strides = [1, 1]} : vector<8x256xf32> to vector<4x256xf32>
    %379 = vector.extract_strided_slice %377 {offsets = [4, 0], sizes = [4, 256], strides = [1, 1]} : vector<8x256xf32> to vector<4x256xf32>
    %cst_226 = arith.constant dense<0.000000e+00> : vector<4xf32>
    %380 = vector.multi_reduction <add>, %244, %cst_226 [1] : vector<4x256xf32> to vector<4xf32>
    %381 = vector.shape_cast %380 : vector<4xf32> to vector<4x1xf32>
    %cst_227 = arith.constant 2.560000e+02 : f32
    %382 = vector.broadcast %cst_227 : f32 to vector<4x1xf32>
    %383 = arith.divf %381, %382 : vector<4x1xf32>
    %384 = vector.broadcast %383 : vector<4x1xf32> to vector<4x256xf32>
    %385 = arith.subf %244, %384 : vector<4x256xf32>
    %386 = arith.mulf %385, %385 : vector<4x256xf32>
    %cst_228 = arith.constant dense<0.000000e+00> : vector<4xf32>
    %387 = vector.multi_reduction <add>, %386, %cst_228 [1] : vector<4x256xf32> to vector<4xf32>
    %388 = vector.shape_cast %387 : vector<4xf32> to vector<4x1xf32>
    %cst_229 = arith.constant 2.560000e+02 : f32
    %389 = vector.broadcast %cst_229 : f32 to vector<4x1xf32>
    %390 = arith.divf %388, %389 : vector<4x1xf32>
    %391 = vector.broadcast %383 : vector<4x1xf32> to vector<4x256xf32>
    %392 = arith.subf %244, %391 : vector<4x256xf32>
    %cst_230 = arith.constant 9.99999974E-6 : f32
    %393 = vector.broadcast %cst_230 : f32 to vector<4x1xf32>
    %394 = arith.addf %390, %393 : vector<4x1xf32>
    %395 = math.rsqrt %394 : vector<4x1xf32>
    %396 = vector.broadcast %395 : vector<4x1xf32> to vector<4x256xf32>
    %397 = arith.mulf %392, %396 : vector<4x256xf32>
    %398 = arith.mulf %397, %378 : vector<4x256xf32>
    %399 = arith.addf %398, %379 : vector<4x256xf32>
    %cst_231 = arith.constant 0.00999999977 : f32
    %400 = vector.broadcast %cst_231 : f32 to vector<4x256xf32>
    %401 = arith.mulf %399, %400 : vector<4x256xf32>
    %402 = arith.maximumf %399, %401 : vector<4x256xf32>
    %cst_232 = arith.constant 0.000000e+00 : f32
    %403 = vector.broadcast %cst_232 : f32 to vector<4x17xf32>
    %404 = tpu.concatenate %403, %402, %403 in 1 : vector<4x17xf32>, vector<4x256xf32>, vector<4x17xf32> -> vector<4x290xf32>
    %405 = vector.extract_strided_slice %404 {offsets = [0, 0], sizes = [4, 256], strides = [1, 1]} : vector<4x290xf32> to vector<4x256xf32>
    %406 = vector.broadcast %5 : vector<1x256xf32> to vector<4x256xf32>
    %407 = arith.mulf %405, %406 : vector<4x256xf32>
    %c0_233 = arith.constant 0 : index
    %c0_234 = arith.constant 0 : index
    %c0_235 = arith.constant 0 : index
    %408 = vector.load %arg16[%c0_233, %c0_234, %c0_235] : memref<9x4x4xf32, #tpu.memory_space<vmem>>, vector<1x4x4xf32>
    %409 = vector.shape_cast %408 : vector<1x4x4xf32> to vector<4x4xf32>
    %cst_236 = arith.constant dense<0.000000e+00> : vector<4x256xf32>
    %410 = tpu.matmul %409, %407, %cst_236 {dimension_numbers = #tpu.dot_dimension_numbers<[1], [0], [0], [1], [0, 0, 1, 1], [], []>} : vector<4x4xf32>, vector<4x256xf32>, vector<4x256xf32> -> vector<4x256xf32>
    %411 = vector.extract_strided_slice %404 {offsets = [0, 1], sizes = [4, 256], strides = [1, 1]} : vector<4x290xf32> to vector<4x256xf32>
    %412 = vector.broadcast %7 : vector<1x256xf32> to vector<4x256xf32>
    %413 = arith.mulf %411, %412 : vector<4x256xf32>
    %c1_237 = arith.constant 1 : index
    %c0_238 = arith.constant 0 : index
    %c0_239 = arith.constant 0 : index
    %414 = vector.load %arg16[%c1_237, %c0_238, %c0_239] : memref<9x4x4xf32, #tpu.memory_space<vmem>>, vector<1x4x4xf32>
    %415 = vector.shape_cast %414 : vector<1x4x4xf32> to vector<4x4xf32>
    %cst_240 = arith.constant dense<0.000000e+00> : vector<4x256xf32>
    %416 = tpu.matmul %415, %413, %cst_240 {dimension_numbers = #tpu.dot_dimension_numbers<[1], [0], [0], [1], [0, 0, 1, 1], [], []>} : vector<4x4xf32>, vector<4x256xf32>, vector<4x256xf32> -> vector<4x256xf32>
    %417 = arith.addf %410, %416 : vector<4x256xf32>
    %418 = vector.extract_strided_slice %404 {offsets = [0, 2], sizes = [4, 256], strides = [1, 1]} : vector<4x290xf32> to vector<4x256xf32>
    %419 = vector.broadcast %9 : vector<1x256xf32> to vector<4x256xf32>
    %420 = arith.mulf %418, %419 : vector<4x256xf32>
    %c2_241 = arith.constant 2 : index
    %c0_242 = arith.constant 0 : index
    %c0_243 = arith.constant 0 : index
    %421 = vector.load %arg16[%c2_241, %c0_242, %c0_243] : memref<9x4x4xf32, #tpu.memory_space<vmem>>, vector<1x4x4xf32>
    %422 = vector.shape_cast %421 : vector<1x4x4xf32> to vector<4x4xf32>
    %cst_244 = arith.constant dense<0.000000e+00> : vector<4x256xf32>
    %423 = tpu.matmul %422, %420, %cst_244 {dimension_numbers = #tpu.dot_dimension_numbers<[1], [0], [0], [1], [0, 0, 1, 1], [], []>} : vector<4x4xf32>, vector<4x256xf32>, vector<4x256xf32> -> vector<4x256xf32>
    %424 = arith.addf %417, %423 : vector<4x256xf32>
    %425 = vector.extract_strided_slice %404 {offsets = [0, 16], sizes = [4, 256], strides = [1, 1]} : vector<4x290xf32> to vector<4x256xf32>
    %426 = vector.broadcast %11 : vector<1x256xf32> to vector<4x256xf32>
    %427 = arith.mulf %425, %426 : vector<4x256xf32>
    %c3_245 = arith.constant 3 : index
    %c0_246 = arith.constant 0 : index
    %c0_247 = arith.constant 0 : index
    %428 = vector.load %arg16[%c3_245, %c0_246, %c0_247] : memref<9x4x4xf32, #tpu.memory_space<vmem>>, vector<1x4x4xf32>
    %429 = vector.shape_cast %428 : vector<1x4x4xf32> to vector<4x4xf32>
    %cst_248 = arith.constant dense<0.000000e+00> : vector<4x256xf32>
    %430 = tpu.matmul %429, %427, %cst_248 {dimension_numbers = #tpu.dot_dimension_numbers<[1], [0], [0], [1], [0, 0, 1, 1], [], []>} : vector<4x4xf32>, vector<4x256xf32>, vector<4x256xf32> -> vector<4x256xf32>
    %431 = arith.addf %424, %430 : vector<4x256xf32>
    %432 = vector.extract_strided_slice %404 {offsets = [0, 17], sizes = [4, 256], strides = [1, 1]} : vector<4x290xf32> to vector<4x256xf32>
    %c4_249 = arith.constant 4 : index
    %c0_250 = arith.constant 0 : index
    %c0_251 = arith.constant 0 : index
    %433 = vector.load %arg16[%c4_249, %c0_250, %c0_251] : memref<9x4x4xf32, #tpu.memory_space<vmem>>, vector<1x4x4xf32>
    %434 = vector.shape_cast %433 : vector<1x4x4xf32> to vector<4x4xf32>
    %cst_252 = arith.constant dense<0.000000e+00> : vector<4x256xf32>
    %435 = tpu.matmul %434, %432, %cst_252 {dimension_numbers = #tpu.dot_dimension_numbers<[1], [0], [0], [1], [0, 0, 1, 1], [], []>} : vector<4x4xf32>, vector<4x256xf32>, vector<4x256xf32> -> vector<4x256xf32>
    %436 = arith.addf %431, %435 : vector<4x256xf32>
    %437 = vector.extract_strided_slice %404 {offsets = [0, 18], sizes = [4, 256], strides = [1, 1]} : vector<4x290xf32> to vector<4x256xf32>
    %438 = vector.broadcast %13 : vector<1x256xf32> to vector<4x256xf32>
    %439 = arith.mulf %437, %438 : vector<4x256xf32>
    %c5_253 = arith.constant 5 : index
    %c0_254 = arith.constant 0 : index
    %c0_255 = arith.constant 0 : index
    %440 = vector.load %arg16[%c5_253, %c0_254, %c0_255] : memref<9x4x4xf32, #tpu.memory_space<vmem>>, vector<1x4x4xf32>
    %441 = vector.shape_cast %440 : vector<1x4x4xf32> to vector<4x4xf32>
    %cst_256 = arith.constant dense<0.000000e+00> : vector<4x256xf32>
    %442 = tpu.matmul %441, %439, %cst_256 {dimension_numbers = #tpu.dot_dimension_numbers<[1], [0], [0], [1], [0, 0, 1, 1], [], []>} : vector<4x4xf32>, vector<4x256xf32>, vector<4x256xf32> -> vector<4x256xf32>
    %443 = arith.addf %436, %442 : vector<4x256xf32>
    %444 = vector.extract_strided_slice %404 {offsets = [0, 32], sizes = [4, 256], strides = [1, 1]} : vector<4x290xf32> to vector<4x256xf32>
    %445 = vector.broadcast %15 : vector<1x256xf32> to vector<4x256xf32>
    %446 = arith.mulf %444, %445 : vector<4x256xf32>
    %c6_257 = arith.constant 6 : index
    %c0_258 = arith.constant 0 : index
    %c0_259 = arith.constant 0 : index
    %447 = vector.load %arg16[%c6_257, %c0_258, %c0_259] : memref<9x4x4xf32, #tpu.memory_space<vmem>>, vector<1x4x4xf32>
    %448 = vector.shape_cast %447 : vector<1x4x4xf32> to vector<4x4xf32>
    %cst_260 = arith.constant dense<0.000000e+00> : vector<4x256xf32>
    %449 = tpu.matmul %448, %446, %cst_260 {dimension_numbers = #tpu.dot_dimension_numbers<[1], [0], [0], [1], [0, 0, 1, 1], [], []>} : vector<4x4xf32>, vector<4x256xf32>, vector<4x256xf32> -> vector<4x256xf32>
    %450 = arith.addf %443, %449 : vector<4x256xf32>
    %451 = vector.extract_strided_slice %404 {offsets = [0, 33], sizes = [4, 256], strides = [1, 1]} : vector<4x290xf32> to vector<4x256xf32>
    %452 = vector.broadcast %17 : vector<1x256xf32> to vector<4x256xf32>
    %453 = arith.mulf %451, %452 : vector<4x256xf32>
    %c7_261 = arith.constant 7 : index
    %c0_262 = arith.constant 0 : index
    %c0_263 = arith.constant 0 : index
    %454 = vector.load %arg16[%c7_261, %c0_262, %c0_263] : memref<9x4x4xf32, #tpu.memory_space<vmem>>, vector<1x4x4xf32>
    %455 = vector.shape_cast %454 : vector<1x4x4xf32> to vector<4x4xf32>
    %cst_264 = arith.constant dense<0.000000e+00> : vector<4x256xf32>
    %456 = tpu.matmul %455, %453, %cst_264 {dimension_numbers = #tpu.dot_dimension_numbers<[1], [0], [0], [1], [0, 0, 1, 1], [], []>} : vector<4x4xf32>, vector<4x256xf32>, vector<4x256xf32> -> vector<4x256xf32>
    %457 = arith.addf %450, %456 : vector<4x256xf32>
    %458 = vector.extract_strided_slice %404 {offsets = [0, 34], sizes = [4, 256], strides = [1, 1]} : vector<4x290xf32> to vector<4x256xf32>
    %459 = vector.broadcast %19 : vector<1x256xf32> to vector<4x256xf32>
    %460 = arith.mulf %458, %459 : vector<4x256xf32>
    %c8_265 = arith.constant 8 : index
    %c0_266 = arith.constant 0 : index
    %c0_267 = arith.constant 0 : index
    %461 = vector.load %arg16[%c8_265, %c0_266, %c0_267] : memref<9x4x4xf32, #tpu.memory_space<vmem>>, vector<1x4x4xf32>
    %462 = vector.shape_cast %461 : vector<1x4x4xf32> to vector<4x4xf32>
    %cst_268 = arith.constant dense<0.000000e+00> : vector<4x256xf32>
    %463 = tpu.matmul %462, %460, %cst_268 {dimension_numbers = #tpu.dot_dimension_numbers<[1], [0], [0], [1], [0, 0, 1, 1], [], []>} : vector<4x4xf32>, vector<4x256xf32>, vector<4x256xf32> -> vector<4x256xf32>
    %464 = arith.addf %457, %463 : vector<4x256xf32>
    %c0_269 = arith.constant 0 : index
    %c0_270 = arith.constant 0 : index
    %465 = vector.load %arg17[%c0_269, %c0_270] : memref<4x1xf32, #tpu.memory_space<vmem>>, vector<4x1xf32>
    %466 = vector.broadcast %465 : vector<4x1xf32> to vector<4x256xf32>
    %467 = arith.addf %464, %466 : vector<4x256xf32>
    %468 = arith.addf %467, %1 : vector<4x256xf32>
    %c0_271 = arith.constant 0 : index
    %c0_272 = arith.constant 0 : index
    %469 = vector.load %arg4[%c0_271, %c0_272] : memref<256x1024xf32, #tpu.memory_space<vmem>>, vector<256x1024xf32>
    %cst_273 = arith.constant dense<0.000000e+00> : vector<4x1024xf32>
    %470 = tpu.matmul %468, %469, %cst_273 {dimension_numbers = #tpu.dot_dimension_numbers<[1], [0], [0], [1], [0, 0, 1, 1], [], []>} : vector<4x256xf32>, vector<256x1024xf32>, vector<4x1024xf32> -> vector<4x1024xf32>
    %c0_274 = arith.constant 0 : index
    %c0_275 = arith.constant 0 : index
    %c0_276 = arith.constant 0 : index
    %471 = vector.load %arg18[%c0_274, %c0_275, %c0_276] : memref<1x4x1024xf32, #tpu.memory_space<vmem>>, vector<1x4x1024xf32>
    %472 = vector.shape_cast %471 : vector<1x4x1024xf32> to vector<4x1024xf32>
    %473 = vector.shape_cast %470 : vector<4x1024xf32> to vector<1x4x1024xf32>
    tpu.vector_store %arg18[%c0_274, %c0_275, %c0_276], %473 {strides = array<i32>} : memref<1x4x1024xf32, #tpu.memory_space<vmem>>, vector<1x4x1024xf32>,
    return
  }
  func.func @transform_0(%arg0: i32) -> (i32, i32, i32) {
    %c0_i32 = arith.constant 0 : i32
    %c0_i32_0 = arith.constant 0 : i32
    %c0_i32_1 = arith.constant 0 : i32
    return %arg0, %c0_i32, %c0_i32_0 : i32, i32, i32
  }
  func.func @transform_1(%arg0: i32) -> (i32, i32, i32) {
    %c0_i32 = arith.constant 0 : i32
    %c0_i32_0 = arith.constant 0 : i32
    %c0_i32_1 = arith.constant 0 : i32
    return %arg0, %c0_i32, %c0_i32_0 : i32, i32, i32
  }
  func.func @transform_2(%arg0: i32) -> (i32, i32) {
    %c0_i32 = arith.constant 0 : i32
    %c0_i32_0 = arith.constant 0 : i32
    %c0_i32_1 = arith.constant 0 : i32
    return %c0_i32, %c0_i32_0 : i32, i32
  }
  func.func @transform_3(%arg0: i32) -> (i32, i32) {
    %c0_i32 = arith.constant 0 : i32
    %c0_i32_0 = arith.constant 0 : i32
    %c0_i32_1 = arith.constant 0 : i32
    return %c0_i32, %c0_i32_0 : i32, i32
  }
  func.func @transform_4(%arg0: i32) -> (i32, i32, i32) {
    %c0_i32 = arith.constant 0 : i32
    %c0_i32_0 = arith.constant 0 : i32
    %c0_i32_1 = arith.constant 0 : i32
    %c0_i32_2 = arith.constant 0 : i32
    return %c0_i32, %c0_i32_0, %c0_i32_1 : i32, i32, i32
  }
  func.func @transform_5(%arg0: i32) -> (i32, i32, i32) {
    %c0_i32 = arith.constant 0 : i32
    %c0_i32_0 = arith.constant 0 : i32
    %c0_i32_1 = arith.constant 0 : i32
    %c0_i32_2 = arith.constant 0 : i32
    return %c0_i32, %c0_i32_0, %c0_i32_1 : i32, i32, i32
  }
  func.func @transform_6(%arg0: i32) -> (i32, i32) {
    %c0_i32 = arith.constant 0 : i32
    %c0_i32_0 = arith.constant 0 : i32
    %c0_i32_1 = arith.constant 0 : i32
    return %c0_i32, %c0_i32_0 : i32, i32
  }
  func.func @transform_7(%arg0: i32) -> (i32, i32, i32) {
    %c0_i32 = arith.constant 0 : i32
    %c0_i32_0 = arith.constant 0 : i32
    %c0_i32_1 = arith.constant 0 : i32
    %c0_i32_2 = arith.constant 0 : i32
    return %c0_i32, %c0_i32_0, %c0_i32_1 : i32, i32, i32
  }
  func.func @transform_8(%arg0: i32) -> (i32, i32) {
    %c0_i32 = arith.constant 0 : i32
    %c0_i32_0 = arith.constant 0 : i32
    %c0_i32_1 = arith.constant 0 : i32
    return %c0_i32, %c0_i32_0 : i32, i32
  }
  func.func @transform_9(%arg0: i32) -> (i32, i32, i32) {
    %c0_i32 = arith.constant 0 : i32
    %c0_i32_0 = arith.constant 0 : i32
    %c0_i32_1 = arith.constant 0 : i32
    %c0_i32_2 = arith.constant 0 : i32
    return %c0_i32, %c0_i32_0, %c0_i32_1 : i32, i32, i32
  }
  func.func @transform_10(%arg0: i32) -> (i32, i32) {
    %c0_i32 = arith.constant 0 : i32
    %c0_i32_0 = arith.constant 0 : i32
    %c0_i32_1 = arith.constant 0 : i32
    return %c0_i32, %c0_i32_0 : i32, i32
  }
  func.func @transform_11(%arg0: i32) -> (i32, i32, i32) {
    %c0_i32 = arith.constant 0 : i32
    %c0_i32_0 = arith.constant 0 : i32
    %c0_i32_1 = arith.constant 0 : i32
    %c0_i32_2 = arith.constant 0 : i32
    return %c0_i32, %c0_i32_0, %c0_i32_1 : i32, i32, i32
  }
  func.func @transform_12(%arg0: i32) -> (i32, i32) {
    %c0_i32 = arith.constant 0 : i32
    %c0_i32_0 = arith.constant 0 : i32
    %c0_i32_1 = arith.constant 0 : i32
    return %c0_i32, %c0_i32_0 : i32, i32
  }
  func.func @transform_13(%arg0: i32) -> (i32, i32, i32) {
    %c0_i32 = arith.constant 0 : i32
    %c0_i32_0 = arith.constant 0 : i32
    %c0_i32_1 = arith.constant 0 : i32
    %c0_i32_2 = arith.constant 0 : i32
    return %c0_i32, %c0_i32_0, %c0_i32_1 : i32, i32, i32
  }
  func.func @transform_14(%arg0: i32) -> (i32, i32) {
    %c0_i32 = arith.constant 0 : i32
    %c0_i32_0 = arith.constant 0 : i32
    %c0_i32_1 = arith.constant 0 : i32
    return %c0_i32, %c0_i32_0 : i32, i32
  }
  func.func @transform_15(%arg0: i32) -> (i32, i32, i32) {
    %c0_i32 = arith.constant 0 : i32
    %c0_i32_0 = arith.constant 0 : i32
    %c0_i32_1 = arith.constant 0 : i32
    %c0_i32_2 = arith.constant 0 : i32
    return %c0_i32, %c0_i32_0, %c0_i32_1 : i32, i32, i32
  }
  func.func @transform_16(%arg0: i32) -> (i32, i32) {
    %c0_i32 = arith.constant 0 : i32
    %c0_i32_0 = arith.constant 0 : i32
    %c0_i32_1 = arith.constant 0 : i32
    return %c0_i32, %c0_i32_0 : i32, i32
  }
  func.func @transform_17(%arg0: i32) -> (i32, i32, i32) {
    %c0_i32 = arith.constant 0 : i32
    %c0_i32_0 = arith.constant 0 : i32
    %c0_i32_1 = arith.constant 0 : i32
    return %arg0, %c0_i32, %c0_i32_0 : i32, i32, i32
  }
}

</mosaic_0001>

<llo_original>
// kernel: spade_resblk_forward.1
$region0: #{spade_resblk_forward.1}
  #allocation0 [shape = 'u32[]', space=smem, size = 0x4, offset = 0x4, fixed_abs, tag = 'smem constant byte address 0x4 - core index']
  #allocation1 [shape = 'u32[144,128]{1,0:T(1,128)}', space=vmem, size = 0x12000, scoped, tag = 'internal scratch']
  %s0 = inlined_call_operand.vmem [shape: f32[2,4,256], index: 0, kind: input, shape index: {}]
  %s1 = inlined_call_operand.vmem [shape: f32[2,4,64], index: 1, kind: input, shape index: {}]
  %s2 = inlined_call_operand.vmem [shape: f32[64,256], index: 2, kind: input, shape index: {}]
  %s3 = inlined_call_operand.hbm [shape: f32[256,1024], index: 3, kind: input, shape index: {}]
  %s4 = inlined_call_operand.vmem [shape: f32[9,1,256], index: 4, kind: input, shape index: {}]
  %s5 = inlined_call_operand.vmem [shape: f32[9,4,4], index: 5, kind: input, shape index: {}]
  %s6 = inlined_call_operand.vmem [shape: f32[4,1], index: 6, kind: input, shape index: {}]
  %s7 = inlined_call_operand.vmem [shape: f32[9,8,4], index: 7, kind: input, shape index: {}]
  %s8 = inlined_call_operand.vmem [shape: f32[8,1], index: 8, kind: input, shape index: {}]
  %s9 = inlined_call_operand.vmem [shape: f32[9,4,4], index: 9, kind: input, shape index: {}]
  %s10 = inlined_call_operand.vmem [shape: f32[4,1], index: 10, kind: input, shape index: {}]
  %s11 = inlined_call_operand.vmem [shape: f32[9,8,4], index: 11, kind: input, shape index: {}]
  %s12 = inlined_call_operand.vmem [shape: f32[8,1], index: 12, kind: input, shape index: {}]
  %s13 = inlined_call_operand.vmem [shape: f32[9,4,4], index: 13, kind: input, shape index: {}]
  %s14 = inlined_call_operand.vmem [shape: f32[4,1], index: 14, kind: input, shape index: {}]
  %s15 = inlined_call_operand.vmem [shape: f32[9,4,4], index: 15, kind: input, shape index: {}]
  %s16 = inlined_call_operand.vmem [shape: f32[4,1], index: 16, kind: input, shape index: {}]
  %s17 = inlined_call_operand.vmem [shape: f32[2,4,1024], index: 17, kind: output, shape index: {}]
  %s18 = sld [smem:[#allocation0]]
  $region105: #{spade_resblk_forward.1} parent=0
    _
  %s20 = ssub.s32 1, %s18
  %s21 = scalar_select 0, %s20, %s18
  $region1: #{spade_resblk_forward.1} parent=0
    #allocation2 [shape = 'u8[1048576]{0}', space=vmem, size = 0x100000, scoped, tag = 'input window, operand 3, single buffered']
    #allocation3 [shape = 's32[2]{0}', space=sflag, size = 0x8, scoped, tag = 'scoped memory for spade_resblk_forward.1']
    %22 = vsyncpa [#allocation3], 0
    loop: start=0, step=1, limit=4
    $region2: #{spade_resblk_forward.1} parent=1 // loop_pre_header
      _
    $region3: #{spade_resblk_forward.1} parent=1 // loop_header
      %s24 = sphi 0, %s28
      %p25 = scmp.ge.s32.totalorder %s24, 4
      %s34 = sphi 0, %s36
      %s37 = sphi 0, %s34
      %s38 = sphi 0, %s37
      %s54 = sphi 0, %s38
      %s60 = sphi 0, %s62
      %s63 = sphi 0, %s60
      %s64 = sphi 0, %s63
      %s80 = sphi 0, %s64
      %s84 = sphi 0, %s84
      %s86 = sphi 0, %s84
      %s87 = sphi 0, %s86
      %s101 = sphi 0, %s87
      %s105 = sphi 0, %s105
      %s107 = sphi 0, %s105
      %s108 = sphi 0, %s107
      %s122 = sphi 0, %s108
      %s126 = sphi 0, %s126
      %s128 = sphi 0, %s126
      %s129 = sphi 0, %s128
      %s143 = sphi 0, %s129
      %s147 = sphi 0, %s147
      %s149 = sphi 0, %s147
      %s150 = sphi 0, %s149
      %s164 = sphi 0, %s150
      %s168 = sphi 0, %s168
      %s170 = sphi 0, %s168
      %s171 = sphi 0, %s170
      %s185 = sphi 0, %s171
      %s189 = sphi 0, %s189
      %s191 = sphi 0, %s189
      %s192 = sphi 0, %s191
      %s206 = sphi 0, %s192
      %s210 = sphi 0, %s210
      %s212 = sphi 0, %s210
      %s213 = sphi 0, %s212
      %s227 = sphi 0, %s213
      %s231 = sphi 0, %s231
      %s233 = sphi 0, %s231
      %s234 = sphi 0, %s233
      %s248 = sphi 0, %s234
      %s252 = sphi 0, %s252
      %s254 = sphi 0, %s252
      %s255 = sphi 0, %s254
      %s269 = sphi 0, %s255
      %s273 = sphi 0, %s273
      %s275 = sphi 0, %s273
      %s276 = sphi 0, %s275
      %s290 = sphi 0, %s276
      %s294 = sphi 0, %s294
      %s296 = sphi 0, %s294
      %s297 = sphi 0, %s296
      %s311 = sphi 0, %s297
      %s315 = sphi 0, %s315
      %s317 = sphi 0, %s315
      %s318 = sphi 0, %s317
      %s332 = sphi 0, %s318
      %s336 = sphi 0, %s336
      %s338 = sphi 0, %s336
      %s339 = sphi 0, %s338
      %s353 = sphi 0, %s339
      %s357 = sphi 0, %s357
      %s359 = sphi 0, %s357
      %s360 = sphi 0, %s359
      %s374 = sphi 0, %s360
      %s378 = sphi 0, %s378
      %s380 = sphi 0, %s378
      %s381 = sphi 0, %s380
      %s395 = sphi 0, %s381
      %s401 = sphi 0, %s403
      %s404 = sphi 0, %s401
      %s405 = sphi 0, %s404
      %s421 = sphi 0, %s405
    $region4: #{spade_resblk_forward.1} parent=1 // loop_header_branch
      %27 = sbr.rel (%p25) target = $region8
    $region5: #{spade_resblk_forward.1} parent=1 // loop_body
      %s29 = ssub.s32 %s24, 1
      %s30 = ssub.s32 %s24, 2
      %s31 = sadd.s32 %s24, 1
      %s32 = ssub.s32 %s24, %s31
      %p33 = scmp.eq.s32.totalorder %s32, 0
      %s35 = sadd.s32 %s34, 1
      %s36 = scalar_select %p33, %s34, %s35
      %p39 = pneg %p33
      %p40 = scmp.eq.s32.totalorder %s24, 1
      %p41 = por %p39, %p40
      %p42 = scmp.ne.s32.totalorder %s34, %s37
      %p43 = scmp.eq.s32.totalorder %s24, 0
      %p44 = por %p42, %p43
      %p45 = scmp.ne.s32.totalorder %s34, %s37
      %p46 = scmp.eq.s32.totalorder %s29, 1
      %p47 = por %p45, %p46
      %p48 = scmp.ne.s32.totalorder %s37, %s38
      %p49 = scmp.eq.s32.totalorder %s29, 0
      %p50 = por %p48, %p49
      %p51 = scmp.ne.s32.totalorder %s37, %s38
      %p52 = scmp.eq.s32.totalorder %s30, 1
      %p53 = por %p51, %p52
      %p55 = scmp.ne.s32.totalorder %s38, %s54
      %p56 = scmp.eq.s32.totalorder %s30, 0
      %p57 = por %p55, %p56
      %s58 = ssub.s32 %s24, %s31
      %p59 = scmp.eq.s32.totalorder %s58, 0
      %s61 = sadd.s32 %s60, 1
      %s62 = scalar_select %p59, %s60, %s61
      %p65 = pneg %p59
      %p66 = scmp.eq.s32.totalorder %s24, 1
      %p67 = por %p65, %p66
      %p68 = scmp.ne.s32.totalorder %s60, %s63
      %p69 = scmp.eq.s32.totalorder %s24, 0
      %p70 = por %p68, %p69
      %p71 = scmp.ne.s32.totalorder %s60, %s63
      %p72 = scmp.eq.s32.totalorder %s29, 1
      %p73 = por %p71, %p72
      %p74 = scmp.ne.s32.totalorder %s63, %s64
      %p75 = scmp.eq.s32.totalorder %s29, 0
      %p76 = por %p74, %p75
      %p77 = scmp.ne.s32.totalorder %s63, %s64
      %p78 = scmp.eq.s32.totalorder %s30, 1
      %p79 = por %p77, %p78
      %p81 = scmp.ne.s32.totalorder %s64, %s80
      %p82 = scmp.eq.s32.totalorder %s30, 0
      %p83 = por %p81, %p82
      %s85 = sadd.s32 %s84, 1
      %p88 = scmp.eq.s32.totalorder %s24, 1
      %p89 = scmp.ne.s32.totalorder %s84, %s86
      %p90 = scmp.eq.s32.totalorder %s24, 0
      %p91 = por %p89, %p90
      %p92 = scmp.ne.s32.totalorder %s84, %s86
      %p93 = scmp.eq.s32.totalorder %s29, 1
      %p94 = por %p92, %p93
      %p95 = scmp.ne.s32.totalorder %s86, %s87
      %p96 = scmp.eq.s32.totalorder %s29, 0
      %p97 = por %p95, %p96
      %p98 = scmp.ne.s32.totalorder %s86, %s87
      %p99 = scmp.eq.s32.totalorder %s30, 1
      %p100 = por %p98, %p99
      %p102 = scmp.ne.s32.totalorder %s87, %s101
      %p103 = scmp.eq.s32.totalorder %s30, 0
      %p104 = por %p102, %p103
      %s106 = sadd.s32 %s105, 1
      %p109 = scmp.eq.s32.totalorder %s24, 1
      %p110 = scmp.ne.s32.totalorder %s105, %s107
      %p111 = scmp.eq.s32.totalorder %s24, 0
      %p112 = por %p110, %p111
      %p113 = scmp.ne.s32.totalorder %s105, %s107
      %p114 = scmp.eq.s32.totalorder %s29, 1
      %p115 = por %p113, %p114
      %p116 = scmp.ne.s32.totalorder %s107, %s108
      %p117 = scmp.eq.s32.totalorder %s29, 0
      %p118 = por %p116, %p117
      %p119 = scmp.ne.s32.totalorder %s107, %s108
      %p120 = scmp.eq.s32.totalorder %s30, 1
      %p121 = por %p119, %p120
      %p123 = scmp.ne.s32.totalorder %s108, %s122
      %p124 = scmp.eq.s32.totalorder %s30, 0
      %p125 = por %p123, %p124
      %s127 = sadd.s32 %s126, 1
      %p130 = scmp.eq.s32.totalorder %s24, 1
      %p131 = scmp.ne.s32.totalorder %s126, %s128
      %p132 = scmp.eq.s32.totalorder %s24, 0
      %p133 = por %p131, %p132
      %p134 = scmp.ne.s32.totalorder %s126, %s128
      %p135 = scmp.eq.s32.totalorder %s29, 1
      %p136 = por %p134, %p135
      %p137 = scmp.ne.s32.totalorder %s128, %s129
      %p138 = scmp.eq.s32.totalorder %s29, 0
      %p139 = por %p137, %p138
      %p140 = scmp.ne.s32.totalorder %s128, %s129
      %p141 = scmp.eq.s32.totalorder %s30, 1
      %p142 = por %p140, %p141
      %p144 = scmp.ne.s32.totalorder %s129, %s143
      %p145 = scmp.eq.s32.totalorder %s30, 0
      %p146 = por %p144, %p145
      %s148 = sadd.s32 %s147, 1
      %p151 = scmp.eq.s32.totalorder %s24, 1
      %p152 = scmp.ne.s32.totalorder %s147, %s149
      %p153 = scmp.eq.s32.totalorder %s24, 0
      %p154 = por %p152, %p153
      %p155 = scmp.ne.s32.totalorder %s147, %s149
      %p156 = scmp.eq.s32.totalorder %s29, 1
      %p157 = por %p155, %p156
      %p158 = scmp.ne.s32.totalorder %s149, %s150
      %p159 = scmp.eq.s32.totalorder %s29, 0
      %p160 = por %p158, %p159
      %p161 = scmp.ne.s32.totalorder %s149, %s150
      %p162 = scmp.eq.s32.totalorder %s30, 1
      %p163 = por %p161, %p162
      %p165 = scmp.ne.s32.totalorder %s150, %s164
      %p166 = scmp.eq.s32.totalorder %s30, 0
      %p167 = por %p165, %p166
      %s169 = sadd.s32 %s168, 1
      %p172 = scmp.eq.s32.totalorder %s24, 1
      %p173 = scmp.ne.s32.totalorder %s168, %s170
      %p174 = scmp.eq.s32.totalorder %s24, 0
      %p175 = por %p173, %p174
      %p176 = scmp.ne.s32.totalorder %s168, %s170
      %p177 = scmp.eq.s32.totalorder %s29, 1
      %p178 = por %p176, %p177
      %p179 = scmp.ne.s32.totalorder %s170, %s171
      %p180 = scmp.eq.s32.totalorder %s29, 0
      %p181 = por %p179, %p180
      %p182 = scmp.ne.s32.totalorder %s170, %s171
      %p183 = scmp.eq.s32.totalorder %s30, 1
      %p184 = por %p182, %p183
      %p186 = scmp.ne.s32.totalorder %s171, %s185
      %p187 = scmp.eq.s32.totalorder %s30, 0
      %p188 = por %p186, %p187
      %s190 = sadd.s32 %s189, 1
      %p193 = scmp.eq.s32.totalorder %s24, 1
      %p194 = scmp.ne.s32.totalorder %s189, %s191
      %p195 = scmp.eq.s32.totalorder %s24, 0
      %p196 = por %p194, %p195
      %p197 = scmp.ne.s32.totalorder %s189, %s191
      %p198 = scmp.eq.s32.totalorder %s29, 1
      %p199 = por %p197, %p198
      %p200 = scmp.ne.s32.totalorder %s191, %s192
      %p201 = scmp.eq.s32.totalorder %s29, 0
      %p202 = por %p200, %p201
      %p203 = scmp.ne.s32.totalorder %s191, %s192
      %p204 = scmp.eq.s32.totalorder %s30, 1
      %p205 = por %p203, %p204
      %p207 = scmp.ne.s32.totalorder %s192, %s206
      %p208 = scmp.eq.s32.totalorder %s30, 0
      %p209 = por %p207, %p208
      %s211 = sadd.s32 %s210, 1
      %p214 = scmp.eq.s32.totalorder %s24, 1
      %p215 = scmp.ne.s32.totalorder %s210, %s212
      %p216 = scmp.eq.s32.totalorder %s24, 0
      %p217 = por %p215, %p216
      %p218 = scmp.ne.s32.totalorder %s210, %s212
      %p219 = scmp.eq.s32.totalorder %s29, 1
      %p220 = por %p218, %p219
      %p221 = scmp.ne.s32.totalorder %s212, %s213
      %p222 = scmp.eq.s32.totalorder %s29, 0
      %p223 = por %p221, %p222
      %p224 = scmp.ne.s32.totalorder %s212, %s213
      %p225 = scmp.eq.s32.totalorder %s30, 1
      %p226 = por %p224, %p225
      %p228 = scmp.ne.s32.totalorder %s213, %s227
      %p229 = scmp.eq.s32.totalorder %s30, 0
      %p230 = por %p228, %p229
      %s232 = sadd.s32 %s231, 1
      %p235 = scmp.eq.s32.totalorder %s24, 1
      %p236 = scmp.ne.s32.totalorder %s231, %s233
      %p237 = scmp.eq.s32.totalorder %s24, 0
      %p238 = por %p236, %p237
      %p239 = scmp.ne.s32.totalorder %s231, %s233
      %p240 = scmp.eq.s32.totalorder %s29, 1
      %p241 = por %p239, %p240
      %p242 = scmp.ne.s32.totalorder %s233, %s234
      %p243 = scmp.eq.s32.totalorder %s29, 0
      %p244 = por %p242, %p243
      %p245 = scmp.ne.s32.totalorder %s233, %s234
      %p246 = scmp.eq.s32.totalorder %s30, 1
      %p247 = por %p245, %p246
      %p249 = scmp.ne.s32.totalorder %s234, %s248
      %p250 = scmp.eq.s32.totalorder %s30, 0
      %p251 = por %p249, %p250
      %s253 = sadd.s32 %s252, 1
      %p256 = scmp.eq.s32.totalorder %s24, 1
      %p257 = scmp.ne.s32.totalorder %s252, %s254
      %p258 = scmp.eq.s32.totalorder %s24, 0
      %p259 = por %p257, %p258
      %p260 = scmp.ne.s32.totalorder %s252, %s254
      %p261 = scmp.eq.s32.totalorder %s29, 1
      %p262 = por %p260, %p261
      %p263 = scmp.ne.s32.totalorder %s254, %s255
      %p264 = scmp.eq.s32.totalorder %s29, 0
      %p265 = por %p263, %p264
      %p266 = scmp.ne.s32.totalorder %s254, %s255
      %p267 = scmp.eq.s32.totalorder %s30, 1
      %p268 = por %p266, %p267
      %p270 = scmp.ne.s32.totalorder %s255, %s269
      %p271 = scmp.eq.s32.totalorder %s30, 0
      %p272 = por %p270, %p271
      %s274 = sadd.s32 %s273, 1
      %p277 = scmp.eq.s32.totalorder %s24, 1
      %p278 = scmp.ne.s32.totalorder %s273, %s275
      %p279 = scmp.eq.s32.totalorder %s24, 0
      %p280 = por %p278, %p279
      %p281 = scmp.ne.s32.totalorder %s273, %s275
      %p282 = scmp.eq.s32.totalorder %s29, 1
      %p283 = por %p281, %p282
      %p284 = scmp.ne.s32.totalorder %s275, %s276
      %p285 = scmp.eq.s32.totalorder %s29, 0
      %p286 = por %p284, %p285
      %p287 = scmp.ne.s32.totalorder %s275, %s276
      %p288 = scmp.eq.s32.totalorder %s30, 1
      %p289 = por %p287, %p288
      %p291 = scmp.ne.s32.totalorder %s276, %s290
      %p292 = scmp.eq.s32.totalorder %s30, 0
      %p293 = por %p291, %p292
      %s295 = sadd.s32 %s294, 1
      %p298 = scmp.eq.s32.totalorder %s24, 1
      %p299 = scmp.ne.s32.totalorder %s294, %s296
      %p300 = scmp.eq.s32.totalorder %s24, 0
      %p301 = por %p299, %p300
      %p302 = scmp.ne.s32.totalorder %s294, %s296
      %p303 = scmp.eq.s32.totalorder %s29, 1
      %p304 = por %p302, %p303
      %p305 = scmp.ne.s32.totalorder %s296, %s297
      %p306 = scmp.eq.s32.totalorder %s29, 0
      %p307 = por %p305, %p306
      %p308 = scmp.ne.s32.totalorder %s296, %s297
      %p309 = scmp.eq.s32.totalorder %s30, 1
      %p310 = por %p308, %p309
      %p312 = scmp.ne.s32.totalorder %s297, %s311
      %p313 = scmp.eq.s32.totalorder %s30, 0
      %p314 = por %p312, %p313
      %s316 = sadd.s32 %s315, 1
      %p319 = scmp.eq.s32.totalorder %s24, 1
      %p320 = scmp.ne.s32.totalorder %s315, %s317
      %p321 = scmp.eq.s32.totalorder %s24, 0
      %p322 = por %p320, %p321
      %p323 = scmp.ne.s32.totalorder %s315, %s317
      %p324 = scmp.eq.s32.totalorder %s29, 1
      %p325 = por %p323, %p324
      %p326 = scmp.ne.s32.totalorder %s317, %s318
      %p327 = scmp.eq.s32.totalorder %s29, 0
      %p328 = por %p326, %p327
      %p329 = scmp.ne.s32.totalorder %s317, %s318
      %p330 = scmp.eq.s32.totalorder %s30, 1
      %p331 = por %p329, %p330
      %p333 = scmp.ne.s32.totalorder %s318, %s332
      %p334 = scmp.eq.s32.totalorder %s30, 0
      %p335 = por %p333, %p334
      %s337 = sadd.s32 %s336, 1
      %p340 = scmp.eq.s32.totalorder %s24, 1
      %p341 = scmp.ne.s32.totalorder %s336, %s338
      %p342 = scmp.eq.s32.totalorder %s24, 0
      %p343 = por %p341, %p342
      %p344 = scmp.ne.s32.totalorder %s336, %s338
      %p345 = scmp.eq.s32.totalorder %s29, 1
      %p346 = por %p344, %p345
      %p347 = scmp.ne.s32.totalorder %s338, %s339
      %p348 = scmp.eq.s32.totalorder %s29, 0
      %p349 = por %p347, %p348
      %p350 = scmp.ne.s32.totalorder %s338, %s339
      %p351 = scmp.eq.s32.totalorder %s30, 1
      %p352 = por %p350, %p351
      %p354 = scmp.ne.s32.totalorder %s339, %s353
      %p355 = scmp.eq.s32.totalorder %s30, 0
      %p356 = por %p354, %p355
      %s358 = sadd.s32 %s357, 1
      %p361 = scmp.eq.s32.totalorder %s24, 1
      %p362 = scmp.ne.s32.totalorder %s357, %s359
      %p363 = scmp.eq.s32.totalorder %s24, 0
      %p364 = por %p362, %p363
      %p365 = scmp.ne.s32.totalorder %s357, %s359
      %p366 = scmp.eq.s32.totalorder %s29, 1
      %p367 = por %p365, %p366
      %p368 = scmp.ne.s32.totalorder %s359, %s360
      %p369 = scmp.eq.s32.totalorder %s29, 0
      %p370 = por %p368, %p369
      %p371 = scmp.ne.s32.totalorder %s359, %s360
      %p372 = scmp.eq.s32.totalorder %s30, 1
      %p373 = por %p371, %p372
      %p375 = scmp.ne.s32.totalorder %s360, %s374
      %p376 = scmp.eq.s32.totalorder %s30, 0
      %p377 = por %p375, %p376
      %s379 = sadd.s32 %s378, 1
      %p382 = scmp.eq.s32.totalorder %s24, 1
      %p383 = scmp.ne.s32.totalorder %s378, %s380
      %p384 = scmp.eq.s32.totalorder %s24, 0
      %p385 = por %p383, %p384
      %p386 = scmp.ne.s32.totalorder %s378, %s380
      %p387 = scmp.eq.s32.totalorder %s29, 1
      %p388 = por %p386, %p387
      %p389 = scmp.ne.s32.totalorder %s380, %s381
      %p390 = scmp.eq.s32.totalorder %s29, 0
      %p391 = por %p389, %p390
      %p392 = scmp.ne.s32.totalorder %s380, %s381
      %p393 = scmp.eq.s32.totalorder %s30, 1
      %p394 = por %p392, %p393
      %p396 = scmp.ne.s32.totalorder %s381, %s395
      %p397 = scmp.eq.s32.totalorder %s30, 0
      %p398 = por %p396, %p397
      %s399 = ssub.s32 %s24, %s31
      %p400 = scmp.eq.s32.totalorder %s399, 0
      %s402 = sadd.s32 %s401, 1
      %s403 = scalar_select %p400, %s401, %s402
      %p406 = pneg %p400
      %p407 = scmp.eq.s32.totalorder %s24, 1
      %p408 = por %p406, %p407
      %p409 = scmp.ne.s32.totalorder %s401, %s404
      %p410 = scmp.eq.s32.totalorder %s24, 0
      %p411 = por %p409, %p410
      %p412 = scmp.ne.s32.totalorder %s401, %s404
      %p413 = scmp.eq.s32.totalorder %s29, 1
      %p414 = por %p412, %p413
      %p415 = scmp.ne.s32.totalorder %s404, %s405
      %p416 = scmp.eq.s32.totalorder %s29, 0
      %p417 = por %p415, %p416
      %p418 = scmp.ne.s32.totalorder %s404, %s405
      %p419 = scmp.eq.s32.totalorder %s30, 1
      %p420 = por %p418, %p419
      %p422 = scmp.ne.s32.totalorder %s405, %s421
      %p423 = scmp.eq.s32.totalorder %s30, 0
      %p424 = por %p422, %p423
      %p425 = scmp.le.s32.totalorder 1, %s24
      %p426 = scmp.lt.s32.totalorder %s24, 3
      %p427 = pnand %p425, %p426
      %p428 = pneg %p427
      // Predicated region
      $region9: #{spade_resblk_forward.1} parent=5 // pred_check
        _
      $region10: #{spade_resblk_forward.1} parent=5 // pred_check_branch
        %430 = sbr.rel (%p427) target = $region12
      $region11: #{spade_resblk_forward.1} parent=5 // pred_region
        %s431 = ssub.s32 %s24, 1
        // Predicated region
        $region13: #{spade_resblk_forward.1} parent=11 // pred_check
          %p432 = pneg %p97
        $region14: #{spade_resblk_forward.1} parent=11 // pred_check_branch
          %434 = sbr.rel (%p432) target = $region16
        $region15: #{spade_resblk_forward.1} parent=11 // pred_region
          _
        $region16: #{spade_resblk_forward.1} parent=11 // pred_fallthru
          _
        // Predicated region
        $region17: #{spade_resblk_forward.1} parent=11 // pred_check
          %p435 = pneg %p118
        $region18: #{spade_resblk_forward.1} parent=11 // pred_check_branch
          %437 = sbr.rel (%p435) target = $region20
        $region19: #{spade_resblk_forward.1} parent=11 // pred_region
          %s439 = ssub.s32 32768, 32768
          %440 = vsyncadd [#allocation3], %s439
          %s441 = sshll.u32 [#allocation2], 4
          %s442 = int_to_ptr.vmem [resolvable:$true] %s441
          %447 = dma.hbm_to_vmem [thread:$0]  %s3, 32768, %s442, [#allocation3], 1024, 1024, 64
        $region20: #{spade_resblk_forward.1} parent=11 // pred_fallthru
          _
        // Predicated region
        $region21: #{spade_resblk_forward.1} parent=11 // pred_check
          %p448 = pneg %p139
        $region22: #{spade_resblk_forward.1} parent=11 // pred_check_branch
          %450 = sbr.rel (%p448) target = $region24
        $region23: #{spade_resblk_forward.1} parent=11 // pred_region
          _
        $region24: #{spade_resblk_forward.1} parent=11 // pred_fallthru
          _
        // Predicated region
        $region25: #{spade_resblk_forward.1} parent=11 // pred_check
          %p451 = pneg %p160
        $region26: #{spade_resblk_forward.1} parent=11 // pred_check_branch
          %453 = sbr.rel (%p451) target = $region28
        $region27: #{spade_resblk_forward.1} parent=11 // pred_region
          _
        $region28: #{spade_resblk_forward.1} parent=11 // pred_fallthru
          _
        // Predicated region
        $region29: #{spade_resblk_forward.1} parent=11 // pred_check
          %p454 = pneg %p181
        $region30: #{spade_resblk_forward.1} parent=11 // pred_check_branch
          %456 = sbr.rel (%p454) target = $region32
        $region31: #{spade_resblk_forward.1} parent=11 // pred_region
          _
        $region32: #{spade_resblk_forward.1} parent=11 // pred_fallthru
          _
        // Predicated region
        $region33: #{spade_resblk_forward.1} parent=11 // pred_check
          %p457 = pneg %p202
        $region34: #{spade_resblk_forward.1} parent=11 // pred_check_branch
          %459 = sbr.rel (%p457) target = $region36
        $region35: #{spade_resblk_forward.1} parent=11 // pred_region
          _
        $region36: #{spade_resblk_forward.1} parent=11 // pred_fallthru
          _
        // Predicated region
        $region37: #{spade_resblk_forward.1} parent=11 // pred_check
          %p460 = pneg %p223
        $region38: #{spade_resblk_forward.1} parent=11 // pred_check_branch
          %462 = sbr.rel (%p460) target = $region40
        $region39: #{spade_resblk_forward.1} parent=11 // pred_region
          _
        $region40: #{spade_resblk_forward.1} parent=11 // pred_fallthru
          _
        // Predicated region
        $region41: #{spade_resblk_forward.1} parent=11 // pred_check
          %p463 = pneg %p244
        $region42: #{spade_resblk_forward.1} parent=11 // pred_check_branch
          %465 = sbr.rel (%p463) target = $region44
        $region43: #{spade_resblk_forward.1} parent=11 // pred_region
          _
        $region44: #{spade_resblk_forward.1} parent=11 // pred_fallthru
          _
        // Predicated region
        $region45: #{spade_resblk_forward.1} parent=11 // pred_check
          %p466 = pneg %p265
        $region46: #{spade_resblk_forward.1} parent=11 // pred_check_branch
          %468 = sbr.rel (%p466) target = $region48
        $region47: #{spade_resblk_forward.1} parent=11 // pred_region
          _
        $region48: #{spade_resblk_forward.1} parent=11 // pred_fallthru
          _
        // Predicated region
        $region49: #{spade_resblk_forward.1} parent=11 // pred_check
          %p469 = pneg %p286
        $region50: #{spade_resblk_forward.1} parent=11 // pred_check_branch
          %471 = sbr.rel (%p469) target = $region52
        $region51: #{spade_resblk_forward.1} parent=11 // pred_region
          _
        $region52: #{spade_resblk_forward.1} parent=11 // pred_fallthru
          _
        // Predicated region
        $region53: #{spade_resblk_forward.1} parent=11 // pred_check
          %p472 = pneg %p307
        $region54: #{spade_resblk_forward.1} parent=11 // pred_check_branch
          %474 = sbr.rel (%p472) target = $region56
        $region55: #{spade_resblk_forward.1} parent=11 // pred_region
          _
        $region56: #{spade_resblk_forward.1} parent=11 // pred_fallthru
          _
        // Predicated region
        $region57: #{spade_resblk_forward.1} parent=11 // pred_check
          %p475 = pneg %p328
        $region58: #{spade_resblk_forward.1} parent=11 // pred_check_branch
          %477 = sbr.rel (%p475) target = $region60
        $region59: #{spade_resblk_forward.1} parent=11 // pred_region
          _
        $region60: #{spade_resblk_forward.1} parent=11 // pred_fallthru
          _
        // Predicated region
        $region61: #{spade_resblk_forward.1} parent=11 // pred_check
          %p478 = pneg %p349
        $region62: #{spade_resblk_forward.1} parent=11 // pred_check_branch
          %480 = sbr.rel (%p478) target = $region64
        $region63: #{spade_resblk_forward.1} parent=11 // pred_region
          _
        $region64: #{spade_resblk_forward.1} parent=11 // pred_fallthru
          _
        // Predicated region
        $region65: #{spade_resblk_forward.1} parent=11 // pred_check
          %p481 = pneg %p370
        $region66: #{spade_resblk_forward.1} parent=11 // pred_check_branch
          %483 = sbr.rel (%p481) target = $region68
        $region67: #{spade_resblk_forward.1} parent=11 // pred_region
          _
        $region68: #{spade_resblk_forward.1} parent=11 // pred_fallthru
          _
        // Predicated region
        $region69: #{spade_resblk_forward.1} parent=11 // pred_check
          %p484 = pneg %p391
        $region70: #{spade_resblk_forward.1} parent=11 // pred_check_branch
          %486 = sbr.rel (%p484) target = $region72
        $region71: #{spade_resblk_forward.1} parent=11 // pred_region
          _
        $region72: #{spade_resblk_forward.1} parent=11 // pred_fallthru
          _
      $region12: #{spade_resblk_forward.1} parent=5 // pred_fallthru
        _
      %p487 = scmp.lt.s32.totalorder %s24, 2
      // Predicated region
      $region73: #{spade_resblk_forward.1} parent=5 // pred_check
        %p488 = pneg %p487
      $region74: #{spade_resblk_forward.1} parent=5 // pred_check_branch
        %490 = sbr.rel (%p488) target = $region76
      $region75: #{spade_resblk_forward.1} parent=5 // pred_region
        // Predicated region
        $region77: #{spade_resblk_forward.1} parent=75 // pred_check
          %p491 = pneg %p44
        $region78: #{spade_resblk_forward.1} parent=75 // pred_check_branch
          %493 = sbr.rel (%p491) target = $region80
        $region79: #{spade_resblk_forward.1} parent=75 // pred_region
          %p494 = scmp.lt.s32.totalorder %s24, 1
          %s495 = scalar_select %p494, %s24, 1
          %s496 = smul.addr %s495, 2
          %s497 = smul.addr %s496, 4
          %s498 = scalar_lea.vmem %s0, %s497
        $region80: #{spade_resblk_forward.1} parent=75 // pred_fallthru
          _
        // Predicated region
        $region81: #{spade_resblk_forward.1} parent=75 // pred_check
          %p499 = pneg %p70
        $region82: #{spade_resblk_forward.1} parent=75 // pred_check_branch
          %501 = sbr.rel (%p499) target = $region84
        $region83: #{spade_resblk_forward.1} parent=75 // pred_region
          %p502 = scmp.lt.s32.totalorder %s24, 1
          %s503 = scalar_select %p502, %s24, 1
          %s504 = smul.addr %s503, 4
          %s505 = scalar_lea.vmem %s1, %s504
        $region84: #{spade_resblk_forward.1} parent=75 // pred_fallthru
          _
      $region76: #{spade_resblk_forward.1} parent=5 // pred_fallthru
        _
      %p506 = scmp.le.s32.totalorder 1, %s24
      %p507 = scmp.lt.s32.totalorder %s24, 3
      %p508 = pnand %p506, %p507
      %p509 = pneg %p508
      // Predicated region
      $region85: #{spade_resblk_forward.1} parent=5 // pred_check
        _
      $region86: #{spade_resblk_forward.1} parent=5 // pred_check_branch
        %511 = sbr.rel (%p508) target = $region88
      $region87: #{spade_resblk_forward.1} parent=5 // pred_region
        %s512 = ssub.s32 %s24, 1
        // Predicated region
        $region89: #{spade_resblk_forward.1} parent=87 // pred_check
          %p513 = pneg %p118
        $region90: #{spade_resblk_forward.1} parent=87 // pred_check_branch
          %515 = sbr.rel (%p513) target = $region92
        $region91: #{spade_resblk_forward.1} parent=87 // pred_region
          %516 = dma.done [#allocation3], 32768
        $region92: #{spade_resblk_forward.1} parent=87 // pred_fallthru
          _
        %p517 = scmp.lt.s32.totalorder %s29, 1
        %s518 = scalar_select %p517, %s29, 1
        %s519 = smul.addr %s518, 2
        %s520 = smul.addr %s519, 4
        %s521 = scalar_lea.vmem %s0, %s520
        %p522 = pneg %p50
        %p523 = pneg %p47
        %p524 = scmp.lt.s32.totalorder %s29, 1
        %s525 = scalar_select %p524, %s29, 1
        %s526 = smul.addr %s525, 4
        %s527 = scalar_lea.vmem %s1, %s526
        %p528 = pneg %p76
        %p529 = pneg %p73
        %p530 = pneg %p97
        %p531 = pneg %p94
        %p532 = pneg %p118
        %p533 = pneg %p115
        %p534 = pneg %p139
        %p535 = pneg %p136
        %p536 = pneg %p160
        %p537 = pneg %p157
        %p538 = pneg %p181
        %p539 = pneg %p178
        %p540 = pneg %p202
        %p541 = pneg %p199
        %p542 = pneg %p223
        %p543 = pneg %p220
        %p544 = pneg %p244
        %p545 = pneg %p241
        %p546 = pneg %p265
        %p547 = pneg %p262
        %p548 = pneg %p286
        %p549 = pneg %p283
        %p550 = pneg %p307
        %p551 = pneg %p304
        %p552 = pneg %p328
        %p553 = pneg %p325
        %p554 = pneg %p349
        %p555 = pneg %p346
        %p556 = pneg %p370
        %p557 = pneg %p367
        %p558 = pneg %p391
        %p559 = pneg %p388
        %p560 = pneg %p417
        %p561 = pneg %p414
        %p562 = scmp.lt.s32.totalorder %s29, 1
        %s563 = scalar_select %p562, %s29, 1
        %s564 = smul.addr %s563, 8
        %s565 = smul.addr %s564, 4
        %s566 = scalar_lea.vmem %s17, %s565
        %p567 = scmp.lt.s32.totalorder %s29, 1
        %s568 = scalar_select %p567, %s29, 1
        %s569 = smul.addr %s568, 2
        %s570 = smul.addr %s569, 4
        %s571 = scalar_lea.vmem %s0, %s570
        %p572 = scmp.lt.s32.totalorder %s29, 1
        %s573 = scalar_select %p572, %s29, 1
        %s574 = smul.addr %s573, 4
        %s575 = scalar_lea.vmem %s1, %s574
        %p576 = scmp.lt.s32.totalorder %s29, 1
        %s577 = scalar_select %p576, %s29, 1
        %s578 = smul.addr %s577, 8
        %s579 = smul.addr %s578, 4
        %s580 = scalar_lea.vmem %s17, %s579
        %v581 = vld [vmem:[%s571] sm:$0xff]
        %v582 = vld [vmem:[%s575] sm:$0xf]
        %v583 = vld [vmem:[%s4] sm:$0x3]
        %s584 = scalar_lea.vmem %s4, 2
        %v585 = vld [vmem:[%s584] sm:$0x3]
        %s586 = scalar_lea.vmem %s4, 4
        %v587 = vld [vmem:[%s586] sm:$0x3]
        %s588 = scalar_lea.vmem %s4, 6
        %v589 = vld [vmem:[%s588] sm:$0x3]
        %s590 = scalar_lea.vmem %s4, 10
        %v591 = vld [vmem:[%s590] sm:$0x3]
        %s592 = scalar_lea.vmem %s4, 12
        %v593 = vld [vmem:[%s592] sm:$0x3]
        %s594 = scalar_lea.vmem %s4, 14
        %v595 = vld [vmem:[%s594] sm:$0x3]
        %s596 = scalar_lea.vmem %s4, 16
        %v597 = vld [vmem:[%s596] sm:$0x3]
        %v598 = vld [vmem:[%s2] sm:$0xff]
        %v599 = vld [vmem:[%s2 + $0x8] sm:$0xff]
        %v600 = vld [vmem:[%s2 + $0x10] sm:$0xff]
        %v601 = vld [vmem:[%s2 + $0x18] sm:$0xff]
        %v602 = vld [vmem:[%s2 + $0x20] sm:$0xff]
        %v603 = vld [vmem:[%s2 + $0x28] sm:$0xff]
        %v604 = vld [vmem:[%s2 + $0x30] sm:$0xff]
        %v605 = vld [vmem:[%s2 + $0x38] sm:$0xff]
        %v606 = vld [vmem:[%s2 + $0x40] sm:$0xff]
        %v607 = vld [vmem:[%s2 + $0x48] sm:$0xff]
        %v608 = vld [vmem:[%s2 + $0x50] sm:$0xff]
        %v609 = vld [vmem:[%s2 + $0x58] sm:$0xff]
        %v610 = vld [vmem:[%s2 + $0x60] sm:$0xff]
        %v611 = vld [vmem:[%s2 + $0x68] sm:$0xff]
        %v612 = vld [vmem:[%s2 + $0x70] sm:$0xff]
        %v613 = vld [vmem:[%s2 + $0x78] sm:$0xff]
        %vm614 = vcmask 523264
        %v616 = vsel %vm614, %v582, 0
        %618 = vmatprep.subr.mxu0 %v599
        %619 = vmatpush1.msra.mxu0 %v598
        %620 = vmatprep.subr.mxu0 %v601
        %621 = vmatpush1.msra.mxu0 %v600
        %622 = vmatprep.subr.mxu0 %v603
        %623 = vmatpush1.msra.mxu0 %v602
        %624 = vmatprep.subr.mxu0 %v605
        %625 = vmatpush1.msra.mxu0 %v604
        %626 = vmatprep.subr.mxu0 %v607
        %627 = vmatpush1.msra.mxu0 %v606
        %628 = vmatprep.subr.mxu0 %v609
        %629 = vmatpush1.msra.mxu0 %v608
        %630 = vmatprep.subr.mxu0 %v611
        %631 = vmatpush1.msra.mxu0 %v610
        %632 = vmatprep.subr.mxu0 %v613
        %633 = vmatpush1.msra.mxu0 %v612
        %634 = vmatprep.subr.mxu0 0.0
        %635 = vmatpush1.msra.mxu0 0.0
        %636 = vmatprep.subr.mxu0 0.0
        %637 = vmatpush1.msra.mxu0 0.0
        %638 = vmatprep.subr.mxu0 0.0
        %639 = vmatpush1.msra.mxu0 0.0
        %640 = vmatprep.subr.mxu0 0.0
        %641 = vmatpush1.msra.mxu0 0.0
        %642 = vmatprep.subr.mxu0 0.0
        %643 = vmatpush1.msra.mxu0 0.0
        %644 = vmatprep.subr.mxu0 0.0
        %645 = vmatpush1.msra.mxu0 0.0
        %646 = vmatprep.subr.mxu0 0.0
        %647 = vmatpush1.msra.mxu0 0.0
        %648 = vmatprep.subr.mxu0 0.0
        %649 = vmatpush1.msra.mxu0 0.0
        %650 = vmatprep.subr.mxu0 0.0
        %651 = vmatpush1.msra.mxu0 0.0
        %652 = vmatprep.subr.mxu0 0.0
        %653 = vmatpush1.msra.mxu0 0.0
        %654 = vmatprep.subr.mxu0 0.0
        %655 = vmatpush1.msra.mxu0 0.0
        %656 = vmatprep.subr.mxu0 0.0
        %657 = vmatpush1.msra.mxu0 0.0
        %658 = vmatprep.subr.mxu0 0.0
        %659 = vmatpush1.msra.mxu0 0.0
        %660 = vmatprep.subr.mxu0 0.0
        %661 = vmatpush1.msra.mxu0 0.0
        %662 = vmatprep.subr.mxu0 0.0
        %663 = vmatpush1.msra.mxu0 0.0
        %664 = vmatprep.subr.mxu0 0.0
        %665 = vmatpush1.msra.mxu0 0.0
        %666 = vmatprep.subr.mxu0 0.0
        %667 = vmatpush1.msra.mxu0 0.0
        %668 = vmatprep.subr.mxu0 0.0
        %669 = vmatpush1.msra.mxu0 0.0
        %670 = vmatprep.subr.mxu0 0.0
        %671 = vmatpush1.msra.mxu0 0.0
        %672 = vmatprep.subr.mxu0 0.0
        %673 = vmatpush1.msra.mxu0 0.0
        %674 = vmatprep.subr.mxu0 0.0
        %675 = vmatpush1.msra.mxu0 0.0
        %676 = vmatprep.subr.mxu0 0.0
        %677 = vmatpush1.msra.mxu0 0.0
        %678 = vmatprep.subr.mxu0 0.0
        %679 = vmatpush1.msra.mxu0 0.0
        %680 = vmatprep.subr.mxu0 0.0
        %681 = vmatpush1.msra.mxu0 0.0
        %682 = vmatprep.mubr.f32.mxu0 0.0
        %683 = vmatmul.mubr.f32.gmra.mrb[0].mxu0 %v616
        %v684 = vpop.f32.mrb[0].mxu0
        %v685 = vadd.f32 0.0, %v684
        %v686 = vpop.f32.mrb[0].mxu0
        %v687 = vadd.f32 0.0, %v686
        %688 = vdwg.mxu0
        %691 = vrot.lane.b32.xlu0 %v685, 17
        %v692 = vpop.permute.xlu0 %691
        %693 = vrot.lane.b32.xlu0 %v687, 17
        %v694 = vpop.permute.xlu0 %693
        %vm695 = vcmask 138240
        %v696 = vsel %vm695, %v692, %v694
        %v700 = vsel %vm695, 0.0, %v692
        %v701 = vsel %vm695, %v694, 0.0
        %v703 = vlaneseq
        %v704 = vshrl.u32 %v703, 7
        %v705 = vsub.s32 0, %v704
        %v706 = vrot.slane %v583, %v705
        %v707 = vlaneseq
        %v708 = vshrl.u32 %v707, 7
        %v709 = vsub.s32 1, %v708
        %v710 = vrot.slane %v583, %v709
        %v713 = vmul.f32 %v700, %v706
        %v714 = vmul.f32 %v696, %v710
        %v715 = vld [vmem:[%s5] sm:$0xf]
        %v717 = vlaneseq
        %v718 = vshrl.u32 %v717, 7
        %v719 = vsub.s32 0, %v718
        %v720 = vrot.slane %v585, %v719
        %v721 = vlaneseq
        %v722 = vshrl.u32 %v721, 7
        %v723 = vsub.s32 1, %v722
        %v724 = vrot.slane %v585, %v723
        %725 = vrot.lane.b32.xlu0 %v720, 1
        %v726 = vpop.permute.xlu0 %725
        %727 = vrot.lane.b32.xlu0 %v724, 1
        %v728 = vpop.permute.xlu0 %727
        %vm729 = vcmask 7168
        %v730 = vsel %vm729, %v726, %v728
        %v734 = vmul.f32 %v700, %v726
        %v735 = vmul.f32 %v696, %v730
        %v736 = vmul.f32 %v701, %v728
        %s737 = scalar_lea.vmem %s5, 4
        %v738 = vld [vmem:[%s737] sm:$0xf]
        %742 = vrot.lane.b32.xlu0 %v734, 127
        %v743 = vpop.permute.xlu0 %742
        %744 = vrot.lane.b32.xlu0 %v735, 127
        %v745 = vpop.permute.xlu0 %744
        %746 = vrot.lane.b32.xlu0 %v736, 127
        %v747 = vpop.permute.xlu0 %746
        %vm748 = vcmask 1039360
        %v749 = vsel %vm748, %v743, %v745
        %v750 = vsel %vm748, %v745, %v747
        %vm751 = vcmask 31744
        %v753 = vsel %vm751, %v738, 0
        %vm755 = vcmask 1043456
        %v756 = vsel %vm755, %v749, 0
        %v758 = vsel %vm755, %v750, 0
        %760 = vmatprep.subr.mxu0 %v758
        %761 = vmatpush1.msra.mxu0 %v756
        %762 = vmatprep.subr.mxu0 0.0
        %763 = vmatpush1.msra.mxu0 0.0
        %764 = vmatprep.subr.mxu0 0.0
        %765 = vmatpush1.msra.mxu0 0.0
        %766 = vmatprep.subr.mxu0 0.0
        %767 = vmatpush1.msra.mxu0 0.0
        %768 = vmatprep.subr.mxu0 0.0
        %769 = vmatpush1.msra.mxu0 0.0
        %770 = vmatprep.subr.mxu0 0.0
        %771 = vmatpush1.msra.mxu0 0.0
        %772 = vmatprep.subr.mxu0 0.0
        %773 = vmatpush1.msra.mxu0 0.0
        %774 = vmatprep.subr.mxu0 0.0
        %775 = vmatpush1.msra.mxu0 0.0
        %776 = vmatprep.subr.mxu0 0.0
        %777 = vmatpush1.msra.mxu0 0.0
        %778 = vmatprep.subr.mxu0 0.0
        %779 = vmatpush1.msra.mxu0 0.0
        %780 = vmatprep.subr.mxu0 0.0
        %781 = vmatpush1.msra.mxu0 0.0
        %782 = vmatprep.subr.mxu0 0.0
        %783 = vmatpush1.msra.mxu0 0.0
        %784 = vmatprep.subr.mxu0 0.0
        %785 = vmatpush1.msra.mxu0 0.0
        %786 = vmatprep.subr.mxu0 0.0
        %787 = vmatpush1.msra.mxu0 0.0
        %788 = vmatprep.subr.mxu0 0.0
        %789 = vmatpush1.msra.mxu0 0.0
        %790 = vmatprep.subr.mxu0 0.0
        %791 = vmatpush1.msra.mxu0 0.0
        %792 = vmatprep.subr.mxu0 0.0
        %793 = vmatpush1.msra.mxu0 0.0
        %794 = vmatprep.subr.mxu0 0.0
        %795 = vmatpush1.msra.mxu0 0.0
        %796 = vmatprep.subr.mxu0 0.0
        %797 = vmatpush1.msra.mxu0 0.0
        %798 = vmatprep.subr.mxu0 0.0
        %799 = vmatpush1.msra.mxu0 0.0
        %800 = vmatprep.subr.mxu0 0.0
        %801 = vmatpush1.msra.mxu0 0.0
        %802 = vmatprep.subr.mxu0 0.0
        %803 = vmatpush1.msra.mxu0 0.0
        %804 = vmatprep.subr.mxu0 0.0
        %805 = vmatpush1.msra.mxu0 0.0
        %806 = vmatprep.subr.mxu0 0.0
        %807 = vmatpush1.msra.mxu0 0.0
        %808 = vmatprep.subr.mxu0 0.0
        %809 = vmatpush1.msra.mxu0 0.0
        %810 = vmatprep.subr.mxu0 0.0
        %811 = vmatpush1.msra.mxu0 0.0
        %812 = vmatprep.subr.mxu0 0.0
        %813 = vmatpush1.msra.mxu0 0.0
        %814 = vmatprep.subr.mxu0 0.0
        %815 = vmatpush1.msra.mxu0 0.0
        %816 = vmatprep.subr.mxu0 0.0
        %817 = vmatpush1.msra.mxu0 0.0
        %818 = vmatprep.subr.mxu0 0.0
        %819 = vmatpush1.msra.mxu0 0.0
        %820 = vmatprep.subr.mxu0 0.0
        %821 = vmatpush1.msra.mxu0 0.0
        %822 = vmatprep.subr.mxu0 0.0
        %823 = vmatpush1.msra.mxu0 0.0
        %824 = vmatprep.mubr.f32.mxu0 0.0
        %825 = vmatmul.mubr.f32.gmra.mrb[0].mxu0 %v753
        %v826 = vpop.f32.mrb[0].mxu0
        %v827 = vadd.f32 0.0, %v826
        %v828 = vpop.f32.mrb[0].mxu0
        %v829 = vadd.f32 0.0, %v828
        %830 = vdwg.mxu0
        %v832 = vsel %vm751, %v715, 0
        %v835 = vsel %vm755, %v713, 0
        %v838 = vsel %vm755, %v714, 0
        %840 = vmatprep.subr.mxu0 %v838
        %841 = vmatpush1.msra.mxu0 %v835
        %842 = vmatprep.subr.mxu0 0.0
        %843 = vmatpush1.msra.mxu0 0.0
        %844 = vmatprep.subr.mxu0 0.0
        %845 = vmatpush1.msra.mxu0 0.0
        %846 = vmatprep.subr.mxu0 0.0
        %847 = vmatpush1.msra.mxu0 0.0
        %848 = vmatprep.subr.mxu0 0.0
        %849 = vmatpush1.msra.mxu0 0.0
        %850 = vmatprep.subr.mxu0 0.0
        %851 = vmatpush1.msra.mxu0 0.0
        %852 = vmatprep.subr.mxu0 0.0
        %853 = vmatpush1.msra.mxu0 0.0
        %854 = vmatprep.subr.mxu0 0.0
        %855 = vmatpush1.msra.mxu0 0.0
        %856 = vmatprep.subr.mxu0 0.0
        %857 = vmatpush1.msra.mxu0 0.0
        %858 = vmatprep.subr.mxu0 0.0
        %859 = vmatpush1.msra.mxu0 0.0
        %860 = vmatprep.subr.mxu0 0.0
        %861 = vmatpush1.msra.mxu0 0.0
        %862 = vmatprep.subr.mxu0 0.0
        %863 = vmatpush1.msra.mxu0 0.0
        %864 = vmatprep.subr.mxu0 0.0
        %865 = vmatpush1.msra.mxu0 0.0
        %866 = vmatprep.subr.mxu0 0.0
        %867 = vmatpush1.msra.mxu0 0.0
        %868 = vmatprep.subr.mxu0 0.0
        %869 = vmatpush1.msra.mxu0 0.0
        %870 = vmatprep.subr.mxu0 0.0
        %871 = vmatpush1.msra.mxu0 0.0
        %872 = vmatprep.subr.mxu0 0.0
        %873 = vmatpush1.msra.mxu0 0.0
        %874 = vmatprep.subr.mxu0 0.0
        %875 = vmatpush1.msra.mxu0 0.0
        %876 = vmatprep.subr.mxu0 0.0
        %877 = vmatpush1.msra.mxu0 0.0
        %878 = vmatprep.subr.mxu0 0.0
        %879 = vmatpush1.msra.mxu0 0.0
        %880 = vmatprep.subr.mxu0 0.0
        %881 = vmatpush1.msra.mxu0 0.0
        %882 = vmatprep.subr.mxu0 0.0
        %883 = vmatpush1.msra.mxu0 0.0
        %884 = vmatprep.subr.mxu0 0.0
        %885 = vmatpush1.msra.mxu0 0.0
        %886 = vmatprep.subr.mxu0 0.0
        %887 = vmatpush1.msra.mxu0 0.0
        %888 = vmatprep.subr.mxu0 0.0
        %889 = vmatpush1.msra.mxu0 0.0
        %890 = vmatprep.subr.mxu0 0.0
        %891 = vmatpush1.msra.mxu0 0.0
        %892 = vmatprep.subr.mxu0 0.0
        %893 = vmatpush1.msra.mxu0 0.0
        %894 = vmatprep.subr.mxu0 0.0
        %895 = vmatpush1.msra.mxu0 0.0
        %896 = vmatprep.subr.mxu0 0.0
        %897 = vmatpush1.msra.mxu0 0.0
        %898 = vmatprep.subr.mxu0 0.0
        %899 = vmatpush1.msra.mxu0 0.0
        %900 = vmatprep.subr.mxu0 0.0
        %901 = vmatpush1.msra.mxu0 0.0
        %902 = vmatprep.subr.mxu0 0.0
        %903 = vmatpush1.msra.mxu0 0.0
        %904 = vmatprep.mubr.f32.mxu0 0.0
        %905 = vmatmul.mubr.f32.gmra.mrb[0].mxu0 %v832
        %v906 = vpop.f32.mrb[0].mxu0
        %v907 = vadd.f32 %v827, %v906
        %v908 = vpop.f32.mrb[0].mxu0
        %v909 = vadd.f32 %v829, %v908
        %910 = vdwg.mxu0
        %v912 = vlaneseq
        %v913 = vshrl.u32 %v912, 7
        %v914 = vsub.s32 0, %v913
        %v915 = vrot.slane %v587, %v914
        %v916 = vlaneseq
        %v917 = vshrl.u32 %v916, 7
        %v918 = vsub.s32 1, %v917
        %v919 = vrot.slane %v587, %v918
        %920 = vrot.lane.b32.xlu0 %v915, 2
        %v921 = vpop.permute.xlu0 %920
        %922 = vrot.lane.b32.xlu0 %v919, 2
        %v923 = vpop.permute.xlu0 %922
        %vm924 = vcmask 15360
        %v925 = vsel %vm924, %v921, %v923
        %v929 = vmul.f32 %v700, %v921
        %v930 = vmul.f32 %v696, %v925
        %v931 = vmul.f32 %v701, %v923
        %s932 = scalar_lea.vmem %s5, 8
        %v933 = vld [vmem:[%s932] sm:$0xf]
        %937 = vrot.lane.b32.xlu0 %v929, 126
        %v938 = vpop.permute.xlu0 %937
        %939 = vrot.lane.b32.xlu0 %v930, 126
        %v940 = vpop.permute.xlu0 %939
        %941 = vrot.lane.b32.xlu0 %v931, 126
        %v942 = vpop.permute.xlu0 %941
        %vm943 = vcmask 1031168
        %v944 = vsel %vm943, %v938, %v940
        %v945 = vsel %vm943, %v940, %v942
        %v947 = vsel %vm751, %v933, 0
        %v949 = vsel %vm755, %v944, 0
        %v951 = vsel %vm755, %v945, 0
        %953 = vmatprep.subr.mxu0 %v951
        %954 = vmatpush1.msra.mxu0 %v949
        %955 = vmatprep.subr.mxu0 0.0
        %956 = vmatpush1.msra.mxu0 0.0
        %957 = vmatprep.subr.mxu0 0.0
        %958 = vmatpush1.msra.mxu0 0.0
        %959 = vmatprep.subr.mxu0 0.0
        %960 = vmatpush1.msra.mxu0 0.0
        %961 = vmatprep.subr.mxu0 0.0
        %962 = vmatpush1.msra.mxu0 0.0
        %963 = vmatprep.subr.mxu0 0.0
        %964 = vmatpush1.msra.mxu0 0.0
        %965 = vmatprep.subr.mxu0 0.0
        %966 = vmatpush1.msra.mxu0 0.0
        %967 = vmatprep.subr.mxu0 0.0
        %968 = vmatpush1.msra.mxu0 0.0
        %969 = vmatprep.subr.mxu0 0.0
        %970 = vmatpush1.msra.mxu0 0.0
        %971 = vmatprep.subr.mxu0 0.0
        %972 = vmatpush1.msra.mxu0 0.0
        %973 = vmatprep.subr.mxu0 0.0
        %974 = vmatpush1.msra.mxu0 0.0
        %975 = vmatprep.subr.mxu0 0.0
        %976 = vmatpush1.msra.mxu0 0.0
        %977 = vmatprep.subr.mxu0 0.0
        %978 = vmatpush1.msra.mxu0 0.0
        %979 = vmatprep.subr.mxu0 0.0
        %980 = vmatpush1.msra.mxu0 0.0
        %981 = vmatprep.subr.mxu0 0.0
        %982 = vmatpush1.msra.mxu0 0.0
        %983 = vmatprep.subr.mxu0 0.0
        %984 = vmatpush1.msra.mxu0 0.0
        %985 = vmatprep.subr.mxu0 0.0
        %986 = vmatpush1.msra.mxu0 0.0
        %987 = vmatprep.subr.mxu0 0.0
        %988 = vmatpush1.msra.mxu0 0.0
        %989 = vmatprep.subr.mxu0 0.0
        %990 = vmatpush1.msra.mxu0 0.0
        %991 = vmatprep.subr.mxu0 0.0
        %992 = vmatpush1.msra.mxu0 0.0
        %993 = vmatprep.subr.mxu0 0.0
        %994 = vmatpush1.msra.mxu0 0.0
        %995 = vmatprep.subr.mxu0 0.0
        %996 = vmatpush1.msra.mxu0 0.0
        %997 = vmatprep.subr.mxu0 0.0
        %998 = vmatpush1.msra.mxu0 0.0
        %999 = vmatprep.subr.mxu0 0.0
        %1000 = vmatpush1.msra.mxu0 0.0
        %1001 = vmatprep.subr.mxu0 0.0
        %1002 = vmatpush1.msra.mxu0 0.0
        %1003 = vmatprep.subr.mxu0 0.0
        %1004 = vmatpush1.msra.mxu0 0.0
        %1005 = vmatprep.subr.mxu0 0.0
        %1006 = vmatpush1.msra.mxu0 0.0
        %1007 = vmatprep.subr.mxu0 0.0
        %1008 = vmatpush1.msra.mxu0 0.0
        %1009 = vmatprep.subr.mxu0 0.0
        %1010 = vmatpush1.msra.mxu0 0.0
        %1011 = vmatprep.subr.mxu0 0.0
        %1012 = vmatpush1.msra.mxu0 0.0
        %1013 = vmatprep.subr.mxu0 0.0
        %1014 = vmatpush1.msra.mxu0 0.0
        %1015 = vmatprep.subr.mxu0 0.0
        %1016 = vmatpush1.msra.mxu0 0.0
        %1017 = vmatprep.mubr.f32.mxu0 0.0
        %1018 = vmatmul.mubr.f32.gmra.mrb[0].mxu0 %v947
        %v1019 = vpop.f32.mrb[0].mxu0
        %v1020 = vadd.f32 0.0, %v1019
        %v1021 = vpop.f32.mrb[0].mxu0
        %v1022 = vadd.f32 0.0, %v1021
        %1023 = vdwg.mxu0
        %v1024 = vadd.f32 %v907, %v1020
        %v1025 = vadd.f32 %v909, %v1022
        %v1027 = vlaneseq
        %v1028 = vshrl.u32 %v1027, 7
        %v1029 = vsub.s32 0, %v1028
        %v1030 = vrot.slane %v589, %v1029
        %v1031 = vlaneseq
        %v1032 = vshrl.u32 %v1031, 7
        %v1033 = vsub.s32 1, %v1032
        %v1034 = vrot.slane %v589, %v1033
        %1035 = vrot.lane.b32.xlu0 %v1030, 16
        %v1036 = vpop.permute.xlu0 %1035
        %1037 = vrot.lane.b32.xlu0 %v1034, 16
        %v1038 = vpop.permute.xlu0 %1037
        %vm1039 = vcmask 130048
        %v1040 = vsel %vm1039, %v1036, %v1038
        %v1044 = vmul.f32 %v700, %v1036
        %v1045 = vmul.f32 %v696, %v1040
        %v1046 = vmul.f32 %v701, %v1038
        %s1047 = scalar_lea.vmem %s5, 12
        %v1048 = vld [vmem:[%s1047] sm:$0xf]
        %1052 = vrot.lane.b32.xlu0 %v1044, 112
        %v1053 = vpop.permute.xlu0 %1052
        %1054 = vrot.lane.b32.xlu0 %v1045, 112
        %v1055 = vpop.permute.xlu0 %1054
        %1056 = vrot.lane.b32.xlu0 %v1046, 112
        %v1057 = vpop.permute.xlu0 %1056
        %vm1058 = vcmask 916480
        %v1059 = vsel %vm1058, %v1053, %v1055
        %v1060 = vsel %vm1058, %v1055, %v1057
        %v1062 = vsel %vm751, %v1048, 0
        %v1064 = vsel %vm755, %v1059, 0
        %v1066 = vsel %vm755, %v1060, 0
        %1068 = vmatprep.subr.mxu0 %v1066
        %1069 = vmatpush1.msra.mxu0 %v1064
        %1070 = vmatprep.subr.mxu0 0.0
        %1071 = vmatpush1.msra.mxu0 0.0
        %1072 = vmatprep.subr.mxu0 0.0
        %1073 = vmatpush1.msra.mxu0 0.0
        %1074 = vmatprep.subr.mxu0 0.0
        %1075 = vmatpush1.msra.mxu0 0.0
        %1076 = vmatprep.subr.mxu0 0.0
        %1077 = vmatpush1.msra.mxu0 0.0
        %1078 = vmatprep.subr.mxu0 0.0
        %1079 = vmatpush1.msra.mxu0 0.0
        %1080 = vmatprep.subr.mxu0 0.0
        %1081 = vmatpush1.msra.mxu0 0.0
        %1082 = vmatprep.subr.mxu0 0.0
        %1083 = vmatpush1.msra.mxu0 0.0
        %1084 = vmatprep.subr.mxu0 0.0
        %1085 = vmatpush1.msra.mxu0 0.0
        %1086 = vmatprep.subr.mxu0 0.0
        %1087 = vmatpush1.msra.mxu0 0.0
        %1088 = vmatprep.subr.mxu0 0.0
        %1089 = vmatpush1.msra.mxu0 0.0
        %1090 = vmatprep.subr.mxu0 0.0
        %1091 = vmatpush1.msra.mxu0 0.0
        %1092 = vmatprep.subr.mxu0 0.0
        %1093 = vmatpush1.msra.mxu0 0.0
        %1094 = vmatprep.subr.mxu0 0.0
        %1095 = vmatpush1.msra.mxu0 0.0
        %1096 = vmatprep.subr.mxu0 0.0
        %1097 = vmatpush1.msra.mxu0 0.0
        %1098 = vmatprep.subr.mxu0 0.0
        %1099 = vmatpush1.msra.mxu0 0.0
        %1100 = vmatprep.subr.mxu0 0.0
        %1101 = vmatpush1.msra.mxu0 0.0
        %1102 = vmatprep.subr.mxu0 0.0
        %1103 = vmatpush1.msra.mxu0 0.0
        %1104 = vmatprep.subr.mxu0 0.0
        %1105 = vmatpush1.msra.mxu0 0.0
        %1106 = vmatprep.subr.mxu0 0.0
        %1107 = vmatpush1.msra.mxu0 0.0
        %1108 = vmatprep.subr.mxu0 0.0
        %1109 = vmatpush1.msra.mxu0 0.0
        %1110 = vmatprep.subr.mxu0 0.0
        %1111 = vmatpush1.msra.mxu0 0.0
        %1112 = vmatprep.subr.mxu0 0.0
        %1113 = vmatpush1.msra.mxu0 0.0
        %1114 = vmatprep.subr.mxu0 0.0
        %1115 = vmatpush1.msra.mxu0 0.0
        %1116 = vmatprep.subr.mxu0 0.0
        %1117 = vmatpush1.msra.mxu0 0.0
        %1118 = vmatprep.subr.mxu0 0.0
        %1119 = vmatpush1.msra.mxu0 0.0
        %1120 = vmatprep.subr.mxu0 0.0
        %1121 = vmatpush1.msra.mxu0 0.0
        %1122 = vmatprep.subr.mxu0 0.0
        %1123 = vmatpush1.msra.mxu0 0.0
        %1124 = vmatprep.subr.mxu0 0.0
        %1125 = vmatpush1.msra.mxu0 0.0
        %1126 = vmatprep.subr.mxu0 0.0
        %1127 = vmatpush1.msra.mxu0 0.0
        %1128 = vmatprep.subr.mxu0 0.0
        %1129 = vmatpush1.msra.mxu0 0.0
        %1130 = vmatprep.subr.mxu0 0.0
        %1131 = vmatpush1.msra.mxu0 0.0
        %1132 = vmatprep.mubr.f32.mxu0 0.0
        %1133 = vmatmul.mubr.f32.gmra.mrb[0].mxu0 %v1062
        %v1134 = vpop.f32.mrb[0].mxu0
        %v1135 = vadd.f32 0.0, %v1134
        %v1136 = vpop.f32.mrb[0].mxu0
        %v1137 = vadd.f32 0.0, %v1136
        %1138 = vdwg.mxu0
        %v1139 = vadd.f32 %v1024, %v1135
        %v1140 = vadd.f32 %v1025, %v1137
        %s1141 = scalar_lea.vmem %s5, 16
        %v1142 = vld [vmem:[%s1141] sm:$0xf]
        %1145 = vrot.lane.b32.xlu0 %v700, 111
        %v1146 = vpop.permute.xlu0 %1145
        %1147 = vrot.lane.b32.xlu0 %v696, 111
        %v1148 = vpop.permute.xlu0 %1147
        %1149 = vrot.lane.b32.xlu0 %v701, 111
        %v1150 = vpop.permute.xlu0 %1149
        %vm1151 = vcmask 908288
        %v1152 = vsel %vm1151, %v1146, %v1148
        %v1153 = vsel %vm1151, %v1148, %v1150
        %v1155 = vsel %vm751, %v1142, 0
        %v1157 = vsel %vm755, %v1152, 0
        %v1159 = vsel %vm755, %v1153, 0
        %1161 = vmatprep.subr.mxu0 %v1159
        %1162 = vmatpush1.msra.mxu0 %v1157
        %1163 = vmatprep.subr.mxu0 0.0
        %1164 = vmatpush1.msra.mxu0 0.0
        %1165 = vmatprep.subr.mxu0 0.0
        %1166 = vmatpush1.msra.mxu0 0.0
        %1167 = vmatprep.subr.mxu0 0.0
        %1168 = vmatpush1.msra.mxu0 0.0
        %1169 = vmatprep.subr.mxu0 0.0
        %1170 = vmatpush1.msra.mxu0 0.0
        %1171 = vmatprep.subr.mxu0 0.0
        %1172 = vmatpush1.msra.mxu0 0.0
        %1173 = vmatprep.subr.mxu0 0.0
        %1174 = vmatpush1.msra.mxu0 0.0
        %1175 = vmatprep.subr.mxu0 0.0
        %1176 = vmatpush1.msra.mxu0 0.0
        %1177 = vmatprep.subr.mxu0 0.0
        %1178 = vmatpush1.msra.mxu0 0.0
        %1179 = vmatprep.subr.mxu0 0.0
        %1180 = vmatpush1.msra.mxu0 0.0
        %1181 = vmatprep.subr.mxu0 0.0
        %1182 = vmatpush1.msra.mxu0 0.0
        %1183 = vmatprep.subr.mxu0 0.0
        %1184 = vmatpush1.msra.mxu0 0.0
        %1185 = vmatprep.subr.mxu0 0.0
        %1186 = vmatpush1.msra.mxu0 0.0
        %1187 = vmatprep.subr.mxu0 0.0
        %1188 = vmatpush1.msra.mxu0 0.0
        %1189 = vmatprep.subr.mxu0 0.0
        %1190 = vmatpush1.msra.mxu0 0.0
        %1191 = vmatprep.subr.mxu0 0.0
        %1192 = vmatpush1.msra.mxu0 0.0
        %1193 = vmatprep.subr.mxu0 0.0
        %1194 = vmatpush1.msra.mxu0 0.0
        %1195 = vmatprep.subr.mxu0 0.0
        %1196 = vmatpush1.msra.mxu0 0.0
        %1197 = vmatprep.subr.mxu0 0.0
        %1198 = vmatpush1.msra.mxu0 0.0
        %1199 = vmatprep.subr.mxu0 0.0
        %1200 = vmatpush1.msra.mxu0 0.0
        %1201 = vmatprep.subr.mxu0 0.0
        %1202 = vmatpush1.msra.mxu0 0.0
        %1203 = vmatprep.subr.mxu0 0.0
        %1204 = vmatpush1.msra.mxu0 0.0
        %1205 = vmatprep.subr.mxu0 0.0
        %1206 = vmatpush1.msra.mxu0 0.0
        %1207 = vmatprep.subr.mxu0 0.0
        %1208 = vmatpush1.msra.mxu0 0.0
        %1209 = vmatprep.subr.mxu0 0.0
        %1210 = vmatpush1.msra.mxu0 0.0
        %1211 = vmatprep.subr.mxu0 0.0
        %1212 = vmatpush1.msra.mxu0 0.0
        %1213 = vmatprep.subr.mxu0 0.0
        %1214 = vmatpush1.msra.mxu0 0.0
        %1215 = vmatprep.subr.mxu0 0.0
        %1216 = vmatpush1.msra.mxu0 0.0
        %1217 = vmatprep.subr.mxu0 0.0
        %1218 = vmatpush1.msra.mxu0 0.0
        %1219 = vmatprep.subr.mxu0 0.0
        %1220 = vmatpush1.msra.mxu0 0.0
        %1221 = vmatprep.subr.mxu0 0.0
        %1222 = vmatpush1.msra.mxu0 0.0
        %1223 = vmatprep.subr.mxu0 0.0
        %1224 = vmatpush1.msra.mxu0 0.0
        %1225 = vmatprep.mubr.f32.mxu0 0.0
        %1226 = vmatmul.mubr.f32.gmra.mrb[0].mxu0 %v1155
        %v1227 = vpop.f32.mrb[0].mxu0
        %v1228 = vadd.f32 0.0, %v1227
        %v1229 = vpop.f32.mrb[0].mxu0
        %v1230 = vadd.f32 0.0, %v1229
        %1231 = vdwg.mxu0
        %v1232 = vadd.f32 %v1139, %v1228
        %v1233 = vadd.f32 %v1140, %v1230
        %v1235 = vlaneseq
        %v1236 = vshrl.u32 %v1235, 7
        %v1237 = vsub.s32 0, %v1236
        %v1238 = vrot.slane %v591, %v1237
        %v1239 = vlaneseq
        %v1240 = vshrl.u32 %v1239, 7
        %v1241 = vsub.s32 1, %v1240
        %v1242 = vrot.slane %v591, %v1241
        %1243 = vrot.lane.b32.xlu0 %v1238, 18
        %v1244 = vpop.permute.xlu0 %1243
        %1245 = vrot.lane.b32.xlu0 %v1242, 18
        %v1246 = vpop.permute.xlu0 %1245
        %vm1247 = vcmask 146432
        %v1248 = vsel %vm1247, %v1244, %v1246
        %v1252 = vmul.f32 %v700, %v1244
        %v1253 = vmul.f32 %v696, %v1248
        %v1254 = vmul.f32 %v701, %v1246
        %s1255 = scalar_lea.vmem %s5, 20
        %v1256 = vld [vmem:[%s1255] sm:$0xf]
        %1260 = vrot.lane.b32.xlu0 %v1252, 110
        %v1261 = vpop.permute.xlu0 %1260
        %1262 = vrot.lane.b32.xlu0 %v1253, 110
        %v1263 = vpop.permute.xlu0 %1262
        %1264 = vrot.lane.b32.xlu0 %v1254, 110
        %v1265 = vpop.permute.xlu0 %1264
        %vm1266 = vcmask 900096
        %v1267 = vsel %vm1266, %v1261, %v1263
        %v1268 = vsel %vm1266, %v1263, %v1265
        %v1270 = vsel %vm751, %v1256, 0
        %v1272 = vsel %vm755, %v1267, 0
        %v1274 = vsel %vm755, %v1268, 0
        %1276 = vmatprep.subr.mxu0 %v1274
        %1277 = vmatpush1.msra.mxu0 %v1272
        %1278 = vmatprep.subr.mxu0 0.0
        %1279 = vmatpush1.msra.mxu0 0.0
        %1280 = vmatprep.subr.mxu0 0.0
        %1281 = vmatpush1.msra.mxu0 0.0
        %1282 = vmatprep.subr.mxu0 0.0
        %1283 = vmatpush1.msra.mxu0 0.0
        %1284 = vmatprep.subr.mxu0 0.0
        %1285 = vmatpush1.msra.mxu0 0.0
        %1286 = vmatprep.subr.mxu0 0.0
        %1287 = vmatpush1.msra.mxu0 0.0
        %1288 = vmatprep.subr.mxu0 0.0
        %1289 = vmatpush1.msra.mxu0 0.0
        %1290 = vmatprep.subr.mxu0 0.0
        %1291 = vmatpush1.msra.mxu0 0.0
        %1292 = vmatprep.subr.mxu0 0.0
        %1293 = vmatpush1.msra.mxu0 0.0
        %1294 = vmatprep.subr.mxu0 0.0
        %1295 = vmatpush1.msra.mxu0 0.0
        %1296 = vmatprep.subr.mxu0 0.0
        %1297 = vmatpush1.msra.mxu0 0.0
        %1298 = vmatprep.subr.mxu0 0.0
        %1299 = vmatpush1.msra.mxu0 0.0
        %1300 = vmatprep.subr.mxu0 0.0
        %1301 = vmatpush1.msra.mxu0 0.0
        %1302 = vmatprep.subr.mxu0 0.0
        %1303 = vmatpush1.msra.mxu0 0.0
        %1304 = vmatprep.subr.mxu0 0.0
        %1305 = vmatpush1.msra.mxu0 0.0
        %1306 = vmatprep.subr.mxu0 0.0
        %1307 = vmatpush1.msra.mxu0 0.0
        %1308 = vmatprep.subr.mxu0 0.0
        %1309 = vmatpush1.msra.mxu0 0.0
        %1310 = vmatprep.subr.mxu0 0.0
        %1311 = vmatpush1.msra.mxu0 0.0
        %1312 = vmatprep.subr.mxu0 0.0
        %1313 = vmatpush1.msra.mxu0 0.0
        %1314 = vmatprep.subr.mxu0 0.0
        %1315 = vmatpush1.msra.mxu0 0.0
        %1316 = vmatprep.subr.mxu0 0.0
        %1317 = vmatpush1.msra.mxu0 0.0
        %1318 = vmatprep.subr.mxu0 0.0
        %1319 = vmatpush1.msra.mxu0 0.0
        %1320 = vmatprep.subr.mxu0 0.0
        %1321 = vmatpush1.msra.mxu0 0.0
        %1322 = vmatprep.subr.mxu0 0.0
        %1323 = vmatpush1.msra.mxu0 0.0
        %1324 = vmatprep.subr.mxu0 0.0
        %1325 = vmatpush1.msra.mxu0 0.0
        %1326 = vmatprep.subr.mxu0 0.0
        %1327 = vmatpush1.msra.mxu0 0.0
        %1328 = vmatprep.subr.mxu0 0.0
        %1329 = vmatpush1.msra.mxu0 0.0
        %1330 = vmatprep.subr.mxu0 0.0
        %1331 = vmatpush1.msra.mxu0 0.0
        %1332 = vmatprep.subr.mxu0 0.0
        %1333 = vmatpush1.msra.mxu0 0.0
        %1334 = vmatprep.subr.mxu0 0.0
        %1335 = vmatpush1.msra.mxu0 0.0
        %1336 = vmatprep.subr.mxu0 0.0
        %1337 = vmatpush1.msra.mxu0 0.0
        %1338 = vmatprep.subr.mxu0 0.0
        %1339 = vmatpush1.msra.mxu0 0.0
        %1340 = vmatprep.mubr.f32.mxu0 0.0
        %1341 = vmatmul.mubr.f32.gmra.mrb[0].mxu0 %v1270
        %v1342 = vpop.f32.mrb[0].mxu0
        %v1343 = vadd.f32 0.0, %v1342
        %v1344 = vpop.f32.mrb[0].mxu0
        %v1345 = vadd.f32 0.0, %v1344
        %1346 = vdwg.mxu0
        %v1347 = vadd.f32 %v1232, %v1343
        %v1348 = vadd.f32 %v1233, %v1345
        %v1350 = vlaneseq
        %v1351 = vshrl.u32 %v1350, 7
        %v1352 = vsub.s32 0, %v1351
        %v1353 = vrot.slane %v593, %v1352
        %v1354 = vlaneseq
        %v1355 = vshrl.u32 %v1354, 7
        %v1356 = vsub.s32 1, %v1355
        %v1357 = vrot.slane %v593, %v1356
        %1358 = vrot.lane.b32.xlu0 %v1353, 32
        %v1359 = vpop.permute.xlu0 %1358
        %1360 = vrot.lane.b32.xlu0 %v1357, 32
        %v1361 = vpop.permute.xlu0 %1360
        %vm1362 = vcmask 261120
        %v1363 = vsel %vm1362, %v1359, %v1361
        %v1367 = vmul.f32 %v700, %v1359
        %v1368 = vmul.f32 %v696, %v1363
        %v1369 = vmul.f32 %v701, %v1361
        %s1370 = scalar_lea.vmem %s5, 24
        %v1371 = vld [vmem:[%s1370] sm:$0xf]
        %1375 = vrot.lane.b32.xlu0 %v1367, 96
        %v1376 = vpop.permute.xlu0 %1375
        %1377 = vrot.lane.b32.xlu0 %v1368, 96
        %v1378 = vpop.permute.xlu0 %1377
        %1379 = vrot.lane.b32.xlu0 %v1369, 96
        %v1380 = vpop.permute.xlu0 %1379
        %vm1381 = vcmask 785408
        %v1382 = vsel %vm1381, %v1376, %v1378
        %v1383 = vsel %vm1381, %v1378, %v1380
        %v1385 = vsel %vm751, %v1371, 0
        %v1387 = vsel %vm755, %v1382, 0
        %v1389 = vsel %vm755, %v1383, 0
        %1391 = vmatprep.subr.mxu0 %v1389
        %1392 = vmatpush1.msra.mxu0 %v1387
        %1393 = vmatprep.subr.mxu0 0.0
        %1394 = vmatpush1.msra.mxu0 0.0
        %1395 = vmatprep.subr.mxu0 0.0
        %1396 = vmatpush1.msra.mxu0 0.0
        %1397 = vmatprep.subr.mxu0 0.0
        %1398 = vmatpush1.msra.mxu0 0.0
        %1399 = vmatprep.subr.mxu0 0.0
        %1400 = vmatpush1.msra.mxu0 0.0
        %1401 = vmatprep.subr.mxu0 0.0
        %1402 = vmatpush1.msra.mxu0 0.0
        %1403 = vmatprep.subr.mxu0 0.0
        %1404 = vmatpush1.msra.mxu0 0.0
        %1405 = vmatprep.subr.mxu0 0.0
        %1406 = vmatpush1.msra.mxu0 0.0
        %1407 = vmatprep.subr.mxu0 0.0
        %1408 = vmatpush1.msra.mxu0 0.0
        %1409 = vmatprep.subr.mxu0 0.0
        %1410 = vmatpush1.msra.mxu0 0.0
        %1411 = vmatprep.subr.mxu0 0.0
        %1412 = vmatpush1.msra.mxu0 0.0
        %1413 = vmatprep.subr.mxu0 0.0
        %1414 = vmatpush1.msra.mxu0 0.0
        %1415 = vmatprep.subr.mxu0 0.0
        %1416 = vmatpush1.msra.mxu0 0.0
        %1417 = vmatprep.subr.mxu0 0.0
        %1418 = vmatpush1.msra.mxu0 0.0
        %1419 = vmatprep.subr.mxu0 0.0
        %1420 = vmatpush1.msra.mxu0 0.0
        %1421 = vmatprep.subr.mxu0 0.0
        %1422 = vmatpush1.msra.mxu0 0.0
        %1423 = vmatprep.subr.mxu0 0.0
        %1424 = vmatpush1.msra.mxu0 0.0
        %1425 = vmatprep.subr.mxu0 0.0
        %1426 = vmatpush1.msra.mxu0 0.0
        %1427 = vmatprep.subr.mxu0 0.0
        %1428 = vmatpush1.msra.mxu0 0.0
        %1429 = vmatprep.subr.mxu0 0.0
        %1430 = vmatpush1.msra.mxu0 0.0
        %1431 = vmatprep.subr.mxu0 0.0
        %1432 = vmatpush1.msra.mxu0 0.0
        %1433 = vmatprep.subr.mxu0 0.0
        %1434 = vmatpush1.msra.mxu0 0.0
        %1435 = vmatprep.subr.mxu0 0.0
        %1436 = vmatpush1.msra.mxu0 0.0
        %1437 = vmatprep.subr.mxu0 0.0
        %1438 = vmatpush1.msra.mxu0 0.0
        %1439 = vmatprep.subr.mxu0 0.0
        %1440 = vmatpush1.msra.mxu0 0.0
        %1441 = vmatprep.subr.mxu0 0.0
        %1442 = vmatpush1.msra.mxu0 0.0
        %1443 = vmatprep.subr.mxu0 0.0
        %1444 = vmatpush1.msra.mxu0 0.0
        %1445 = vmatprep.subr.mxu0 0.0
        %1446 = vmatpush1.msra.mxu0 0.0
        %1447 = vmatprep.subr.mxu0 0.0
        %1448 = vmatpush1.msra.mxu0 0.0
        %1449 = vmatprep.subr.mxu0 0.0
        %1450 = vmatpush1.msra.mxu0 0.0
        %1451 = vmatprep.subr.mxu0 0.0
        %1452 = vmatpush1.msra.mxu0 0.0
        %1453 = vmatprep.subr.mxu0 0.0
        %1454 = vmatpush1.msra.mxu0 0.0
        %1455 = vmatprep.mubr.f32.mxu0 0.0
        %1456 = vmatmul.mubr.f32.gmra.mrb[0].mxu0 %v1385
        %v1457 = vpop.f32.mrb[0].mxu0
        %v1458 = vadd.f32 0.0, %v1457
        %v1459 = vpop.f32.mrb[0].mxu0
        %v1460 = vadd.f32 0.0, %v1459
        %1461 = vdwg.mxu0
        %v1462 = vadd.f32 %v1347, %v1458
        %v1463 = vadd.f32 %v1348, %v1460
        %v1465 = vlaneseq
        %v1466 = vshrl.u32 %v1465, 7
        %v1467 = vsub.s32 0, %v1466
        %v1468 = vrot.slane %v595, %v1467
        %v1469 = vlaneseq
        %v1470 = vshrl.u32 %v1469, 7
        %v1471 = vsub.s32 1, %v1470
        %v1472 = vrot.slane %v595, %v1471
        %1473 = vrot.lane.b32.xlu0 %v1468, 33
        %v1474 = vpop.permute.xlu0 %1473
        %1475 = vrot.lane.b32.xlu0 %v1472, 33
        %v1476 = vpop.permute.xlu0 %1475
        %vm1477 = vcmask 269312
        %v1478 = vsel %vm1477, %v1474, %v1476
        %v1482 = vmul.f32 %v700, %v1474
        %v1483 = vmul.f32 %v696, %v1478
        %v1484 = vmul.f32 %v701, %v1476
        %s1485 = scalar_lea.vmem %s5, 28
        %v1486 = vld [vmem:[%s1485] sm:$0xf]
        %1490 = vrot.lane.b32.xlu0 %v1482, 95
        %v1491 = vpop.permute.xlu0 %1490
        %1492 = vrot.lane.b32.xlu0 %v1483, 95
        %v1493 = vpop.permute.xlu0 %1492
        %1494 = vrot.lane.b32.xlu0 %v1484, 95
        %v1495 = vpop.permute.xlu0 %1494
        %vm1496 = vcmask 777216
        %v1497 = vsel %vm1496, %v1491, %v1493
        %v1498 = vsel %vm1496, %v1493, %v1495
        %v1500 = vsel %vm751, %v1486, 0
        %v1502 = vsel %vm755, %v1497, 0
        %v1504 = vsel %vm755, %v1498, 0
        %1506 = vmatprep.subr.mxu0 %v1504
        %1507 = vmatpush1.msra.mxu0 %v1502
        %1508 = vmatprep.subr.mxu0 0.0
        %1509 = vmatpush1.msra.mxu0 0.0
        %1510 = vmatprep.subr.mxu0 0.0
        %1511 = vmatpush1.msra.mxu0 0.0
        %1512 = vmatprep.subr.mxu0 0.0
        %1513 = vmatpush1.msra.mxu0 0.0
        %1514 = vmatprep.subr.mxu0 0.0
        %1515 = vmatpush1.msra.mxu0 0.0
        %1516 = vmatprep.subr.mxu0 0.0
        %1517 = vmatpush1.msra.mxu0 0.0
        %1518 = vmatprep.subr.mxu0 0.0
        %1519 = vmatpush1.msra.mxu0 0.0
        %1520 = vmatprep.subr.mxu0 0.0
        %1521 = vmatpush1.msra.mxu0 0.0
        %1522 = vmatprep.subr.mxu0 0.0
        %1523 = vmatpush1.msra.mxu0 0.0
        %1524 = vmatprep.subr.mxu0 0.0
        %1525 = vmatpush1.msra.mxu0 0.0
        %1526 = vmatprep.subr.mxu0 0.0
        %1527 = vmatpush1.msra.mxu0 0.0
        %1528 = vmatprep.subr.mxu0 0.0
        %1529 = vmatpush1.msra.mxu0 0.0
        %1530 = vmatprep.subr.mxu0 0.0
        %1531 = vmatpush1.msra.mxu0 0.0
        %1532 = vmatprep.subr.mxu0 0.0
        %1533 = vmatpush1.msra.mxu0 0.0
        %1534 = vmatprep.subr.mxu0 0.0
        %1535 = vmatpush1.msra.mxu0 0.0
        %1536 = vmatprep.subr.mxu0 0.0
        %1537 = vmatpush1.msra.mxu0 0.0
        %1538 = vmatprep.subr.mxu0 0.0
        %1539 = vmatpush1.msra.mxu0 0.0
        %1540 = vmatprep.subr.mxu0 0.0
        %1541 = vmatpush1.msra.mxu0 0.0
        %1542 = vmatprep.subr.mxu0 0.0
        %1543 = vmatpush1.msra.mxu0 0.0
        %1544 = vmatprep.subr.mxu0 0.0
        %1545 = vmatpush1.msra.mxu0 0.0
        %1546 = vmatprep.subr.mxu0 0.0
        %1547 = vmatpush1.msra.mxu0 0.0
        %1548 = vmatprep.subr.mxu0 0.0
        %1549 = vmatpush1.msra.mxu0 0.0
        %1550 = vmatprep.subr.mxu0 0.0
        %1551 = vmatpush1.msra.mxu0 0.0
        %1552 = vmatprep.subr.mxu0 0.0
        %1553 = vmatpush1.msra.mxu0 0.0
        %1554 = vmatprep.subr.mxu0 0.0
        %1555 = vmatpush1.msra.mxu0 0.0
        %1556 = vmatprep.subr.mxu0 0.0
        %1557 = vmatpush1.msra.mxu0 0.0
        %1558 = vmatprep.subr.mxu0 0.0
        %1559 = vmatpush1.msra.mxu0 0.0
        %1560 = vmatprep.subr.mxu0 0.0
        %1561 = vmatpush1.msra.mxu0 0.0
        %1562 = vmatprep.subr.mxu0 0.0
        %1563 = vmatpush1.msra.mxu0 0.0
        %1564 = vmatprep.subr.mxu0 0.0
        %1565 = vmatpush1.msra.mxu0 0.0
        %1566 = vmatprep.subr.mxu0 0.0
        %1567 = vmatpush1.msra.mxu0 0.0
        %1568 = vmatprep.subr.mxu0 0.0
        %1569 = vmatpush1.msra.mxu0 0.0
        %1570 = vmatprep.mubr.f32.mxu0 0.0
        %1571 = vmatmul.mubr.f32.gmra.mrb[0].mxu0 %v1500
        %v1572 = vpop.f32.mrb[0].mxu0
        %v1573 = vadd.f32 0.0, %v1572
        %v1574 = vpop.f32.mrb[0].mxu0
        %v1575 = vadd.f32 0.0, %v1574
        %1576 = vdwg.mxu0
        %v1577 = vadd.f32 %v1462, %v1573
        %v1578 = vadd.f32 %v1463, %v1575
        %v1580 = vlaneseq
        %v1581 = vshrl.u32 %v1580, 7
        %v1582 = vsub.s32 0, %v1581
        %v1583 = vrot.slane %v597, %v1582
        %v1584 = vlaneseq
        %v1585 = vshrl.u32 %v1584, 7
        %v1586 = vsub.s32 1, %v1585
        %v1587 = vrot.slane %v597, %v1586
        %1588 = vrot.lane.b32.xlu0 %v1583, 34
        %v1589 = vpop.permute.xlu0 %1588
        %1590 = vrot.lane.b32.xlu0 %v1587, 34
        %v1591 = vpop.permute.xlu0 %1590
        %vm1592 = vcmask 277504
        %v1593 = vsel %vm1592, %v1589, %v1591
        %v1597 = vmul.f32 %v700, %v1589
        %v1598 = vmul.f32 %v696, %v1593
        %v1599 = vmul.f32 %v701, %v1591
        %s1600 = scalar_lea.vmem %s5, 32
        %v1601 = vld [vmem:[%s1600] sm:$0xf]
        %1605 = vrot.lane.b32.xlu0 %v1597, 94
        %v1606 = vpop.permute.xlu0 %1605
        %1607 = vrot.lane.b32.xlu0 %v1598, 94
        %v1608 = vpop.permute.xlu0 %1607
        %1609 = vrot.lane.b32.xlu0 %v1599, 94
        %v1610 = vpop.permute.xlu0 %1609
        %vm1611 = vcmask 769024
        %v1612 = vsel %vm1611, %v1606, %v1608
        %v1613 = vsel %vm1611, %v1608, %v1610
        %v1615 = vsel %vm751, %v1601, 0
        %v1617 = vsel %vm755, %v1612, 0
        %v1619 = vsel %vm755, %v1613, 0
        %1621 = vmatprep.subr.mxu0 %v1619
        %1622 = vmatpush1.msra.mxu0 %v1617
        %1623 = vmatprep.subr.mxu0 0.0
        %1624 = vmatpush1.msra.mxu0 0.0
        %1625 = vmatprep.subr.mxu0 0.0
        %1626 = vmatpush1.msra.mxu0 0.0
        %1627 = vmatprep.subr.mxu0 0.0
        %1628 = vmatpush1.msra.mxu0 0.0
        %1629 = vmatprep.subr.mxu0 0.0
        %1630 = vmatpush1.msra.mxu0 0.0
        %1631 = vmatprep.subr.mxu0 0.0
        %1632 = vmatpush1.msra.mxu0 0.0
        %1633 = vmatprep.subr.mxu0 0.0
        %1634 = vmatpush1.msra.mxu0 0.0
        %1635 = vmatprep.subr.mxu0 0.0
        %1636 = vmatpush1.msra.mxu0 0.0
        %1637 = vmatprep.subr.mxu0 0.0
        %1638 = vmatpush1.msra.mxu0 0.0
        %1639 = vmatprep.subr.mxu0 0.0
        %1640 = vmatpush1.msra.mxu0 0.0
        %1641 = vmatprep.subr.mxu0 0.0
        %1642 = vmatpush1.msra.mxu0 0.0
        %1643 = vmatprep.subr.mxu0 0.0
        %1644 = vmatpush1.msra.mxu0 0.0
        %1645 = vmatprep.subr.mxu0 0.0
        %1646 = vmatpush1.msra.mxu0 0.0
        %1647 = vmatprep.subr.mxu0 0.0
        %1648 = vmatpush1.msra.mxu0 0.0
        %1649 = vmatprep.subr.mxu0 0.0
        %1650 = vmatpush1.msra.mxu0 0.0
        %1651 = vmatprep.subr.mxu0 0.0
        %1652 = vmatpush1.msra.mxu0 0.0
        %1653 = vmatprep.subr.mxu0 0.0
        %1654 = vmatpush1.msra.mxu0 0.0
        %1655 = vmatprep.subr.mxu0 0.0
        %1656 = vmatpush1.msra.mxu0 0.0
        %1657 = vmatprep.subr.mxu0 0.0
        %1658 = vmatpush1.msra.mxu0 0.0
        %1659 = vmatprep.subr.mxu0 0.0
        %1660 = vmatpush1.msra.mxu0 0.0
        %1661 = vmatprep.subr.mxu0 0.0
        %1662 = vmatpush1.msra.mxu0 0.0
        %1663 = vmatprep.subr.mxu0 0.0
        %1664 = vmatpush1.msra.mxu0 0.0
        %1665 = vmatprep.subr.mxu0 0.0
        %1666 = vmatpush1.msra.mxu0 0.0
        %1667 = vmatprep.subr.mxu0 0.0
        %1668 = vmatpush1.msra.mxu0 0.0
        %1669 = vmatprep.subr.mxu0 0.0
        %1670 = vmatpush1.msra.mxu0 0.0
        %1671 = vmatprep.subr.mxu0 0.0
        %1672 = vmatpush1.msra.mxu0 0.0
        %1673 = vmatprep.subr.mxu0 0.0
        %1674 = vmatpush1.msra.mxu0 0.0
        %1675 = vmatprep.subr.mxu0 0.0
        %1676 = vmatpush1.msra.mxu0 0.0
        %1677 = vmatprep.subr.mxu0 0.0
        %1678 = vmatpush1.msra.mxu0 0.0
        %1679 = vmatprep.subr.mxu0 0.0
        %1680 = vmatpush1.msra.mxu0 0.0
        %1681 = vmatprep.subr.mxu0 0.0
        %1682 = vmatpush1.msra.mxu0 0.0
        %1683 = vmatprep.subr.mxu0 0.0
        %1684 = vmatpush1.msra.mxu0 0.0
        %1685 = vmatprep.mubr.f32.mxu0 0.0
        %1686 = vmatmul.mubr.f32.gmra.mrb[0].mxu0 %v1615
        %v1687 = vpop.f32.mrb[0].mxu0
        %v1688 = vadd.f32 0.0, %v1687
        %v1689 = vpop.f32.mrb[0].mxu0
        %v1690 = vadd.f32 0.0, %v1689
        %1691 = vdwg.mxu0
        %v1692 = vadd.f32 %v1577, %v1688
        %v1693 = vadd.f32 %v1578, %v1690
        %v1694 = vld [vmem:[%s6] sm:$0xf]
        %1696 = vset.pattern.permute.xlu0 0
        %1697 = vperm.xlu0 %1696, %v1694
        %v1698 = vpop.permute.xlu0 %1697
        %v1700 = vadd.f32 %v1692, %v1698
        %v1701 = vadd.f32 %v1693, %v1698
        %v1702 = vmul.f32 %v1700, 0.01
        %v1703 = vmul.f32 %v1701, 0.01
        %v1704 = vmax.f32 %v1700, %v1702
        %v1705 = vmax.f32 %v1701, %v1703
        %1708 = vrot.lane.b32.xlu0 %v1704, 17
        %v1709 = vpop.permute.xlu0 %1708
        %1710 = vrot.lane.b32.xlu0 %v1705, 17
        %v1711 = vpop.permute.xlu0 %1710
        %v1712 = vsel %vm695, %v1709, %v1711
        %v1716 = vsel %vm695, 0.0, %v1709
        %v1717 = vsel %vm695, %v1711, 0.0
        %v1718 = vmul.f32 %v1716, %v706
        %v1719 = vmul.f32 %v1712, %v710
        %v1720 = vld [vmem:[%s7] sm:$0xff]
        %v1721 = vmul.f32 %v1716, %v726
        %v1722 = vmul.f32 %v1712, %v730
        %v1723 = vmul.f32 %v1717, %v728
        %s1724 = scalar_lea.vmem %s7, 8
        %v1725 = vld [vmem:[%s1724] sm:$0xff]
        %1729 = vrot.lane.b32.xlu0 %v1721, 127
        %v1730 = vpop.permute.xlu0 %1729
        %1731 = vrot.lane.b32.xlu0 %v1722, 127
        %v1732 = vpop.permute.xlu0 %1731
        %1733 = vrot.lane.b32.xlu0 %v1723, 127
        %v1734 = vpop.permute.xlu0 %1733
        %v1735 = vsel %vm748, %v1730, %v1732
        %v1736 = vsel %vm748, %v1732, %v1734
        %v1738 = vsel %vm751, %v1725, 0
        %v1740 = vsel %vm755, %v1735, 0
        %v1742 = vsel %vm755, %v1736, 0
        %1744 = vmatprep.subr.mxu0 %v1742
        %1745 = vmatpush1.msra.mxu0 %v1740
        %1746 = vmatprep.subr.mxu0 0.0
        %1747 = vmatpush1.msra.mxu0 0.0
        %1748 = vmatprep.subr.mxu0 0.0
        %1749 = vmatpush1.msra.mxu0 0.0
        %1750 = vmatprep.subr.mxu0 0.0
        %1751 = vmatpush1.msra.mxu0 0.0
        %1752 = vmatprep.subr.mxu0 0.0
        %1753 = vmatpush1.msra.mxu0 0.0
        %1754 = vmatprep.subr.mxu0 0.0
        %1755 = vmatpush1.msra.mxu0 0.0
        %1756 = vmatprep.subr.mxu0 0.0
        %1757 = vmatpush1.msra.mxu0 0.0
        %1758 = vmatprep.subr.mxu0 0.0
        %1759 = vmatpush1.msra.mxu0 0.0
        %1760 = vmatprep.subr.mxu0 0.0
        %1761 = vmatpush1.msra.mxu0 0.0
        %1762 = vmatprep.subr.mxu0 0.0
        %1763 = vmatpush1.msra.mxu0 0.0
        %1764 = vmatprep.subr.mxu0 0.0
        %1765 = vmatpush1.msra.mxu0 0.0
        %1766 = vmatprep.subr.mxu0 0.0
        %1767 = vmatpush1.msra.mxu0 0.0
        %1768 = vmatprep.subr.mxu0 0.0
        %1769 = vmatpush1.msra.mxu0 0.0
        %1770 = vmatprep.subr.mxu0 0.0
        %1771 = vmatpush1.msra.mxu0 0.0
        %1772 = vmatprep.subr.mxu0 0.0
        %1773 = vmatpush1.msra.mxu0 0.0
        %1774 = vmatprep.subr.mxu0 0.0
        %1775 = vmatpush1.msra.mxu0 0.0
        %1776 = vmatprep.subr.mxu0 0.0
        %1777 = vmatpush1.msra.mxu0 0.0
        %1778 = vmatprep.subr.mxu0 0.0
        %1779 = vmatpush1.msra.mxu0 0.0
        %1780 = vmatprep.subr.mxu0 0.0
        %1781 = vmatpush1.msra.mxu0 0.0
        %1782 = vmatprep.subr.mxu0 0.0
        %1783 = vmatpush1.msra.mxu0 0.0
        %1784 = vmatprep.subr.mxu0 0.0
        %1785 = vmatpush1.msra.mxu0 0.0
        %1786 = vmatprep.subr.mxu0 0.0
        %1787 = vmatpush1.msra.mxu0 0.0
        %1788 = vmatprep.subr.mxu0 0.0
        %1789 = vmatpush1.msra.mxu0 0.0
        %1790 = vmatprep.subr.mxu0 0.0
        %1791 = vmatpush1.msra.mxu0 0.0
        %1792 = vmatprep.subr.mxu0 0.0
        %1793 = vmatpush1.msra.mxu0 0.0
        %1794 = vmatprep.subr.mxu0 0.0
        %1795 = vmatpush1.msra.mxu0 0.0
        %1796 = vmatprep.subr.mxu0 0.0
        %1797 = vmatpush1.msra.mxu0 0.0
        %1798 = vmatprep.subr.mxu0 0.0
        %1799 = vmatpush1.msra.mxu0 0.0
        %1800 = vmatprep.subr.mxu0 0.0
        %1801 = vmatpush1.msra.mxu0 0.0
        %1802 = vmatprep.subr.mxu0 0.0
        %1803 = vmatpush1.msra.mxu0 0.0
        %1804 = vmatprep.subr.mxu0 0.0
        %1805 = vmatpush1.msra.mxu0 0.0
        %1806 = vmatprep.subr.mxu0 0.0
        %1807 = vmatpush1.msra.mxu0 0.0
        %1808 = vmatprep.mubr.f32.mxu0 0.0
        %1809 = vmatmul.mubr.f32.gmra.mrb[0].mxu0 %v1738
        %v1810 = vpop.f32.mrb[0].mxu0
        %v1811 = vadd.f32 0.0, %v1810
        %v1812 = vpop.f32.mrb[0].mxu0
        %v1813 = vadd.f32 0.0, %v1812
        %1814 = vdwg.mxu0
        %v1816 = vsel %vm751, %v1720, 0
        %v1819 = vsel %vm755, %v1718, 0
        %v1822 = vsel %vm755, %v1719, 0
        %1824 = vmatprep.subr.mxu0 %v1822
        %1825 = vmatpush1.msra.mxu0 %v1819
        %1826 = vmatprep.subr.mxu0 0.0
        %1827 = vmatpush1.msra.mxu0 0.0
        %1828 = vmatprep.subr.mxu0 0.0
        %1829 = vmatpush1.msra.mxu0 0.0
        %1830 = vmatprep.subr.mxu0 0.0
        %1831 = vmatpush1.msra.mxu0 0.0
        %1832 = vmatprep.subr.mxu0 0.0
        %1833 = vmatpush1.msra.mxu0 0.0
        %1834 = vmatprep.subr.mxu0 0.0
        %1835 = vmatpush1.msra.mxu0 0.0
        %1836 = vmatprep.subr.mxu0 0.0
        %1837 = vmatpush1.msra.mxu0 0.0
        %1838 = vmatprep.subr.mxu0 0.0
        %1839 = vmatpush1.msra.mxu0 0.0
        %1840 = vmatprep.subr.mxu0 0.0
        %1841 = vmatpush1.msra.mxu0 0.0
        %1842 = vmatprep.subr.mxu0 0.0
        %1843 = vmatpush1.msra.mxu0 0.0
        %1844 = vmatprep.subr.mxu0 0.0
        %1845 = vmatpush1.msra.mxu0 0.0
        %1846 = vmatprep.subr.mxu0 0.0
        %1847 = vmatpush1.msra.mxu0 0.0
        %1848 = vmatprep.subr.mxu0 0.0
        %1849 = vmatpush1.msra.mxu0 0.0
        %1850 = vmatprep.subr.mxu0 0.0
        %1851 = vmatpush1.msra.mxu0 0.0
        %1852 = vmatprep.subr.mxu0 0.0
        %1853 = vmatpush1.msra.mxu0 0.0
        %1854 = vmatprep.subr.mxu0 0.0
        %1855 = vmatpush1.msra.mxu0 0.0
        %1856 = vmatprep.subr.mxu0 0.0
        %1857 = vmatpush1.msra.mxu0 0.0
        %1858 = vmatprep.subr.mxu0 0.0
        %1859 = vmatpush1.msra.mxu0 0.0
        %1860 = vmatprep.subr.mxu0 0.0
        %1861 = vmatpush1.msra.mxu0 0.0
        %1862 = vmatprep.subr.mxu0 0.0
        %1863 = vmatpush1.msra.mxu0 0.0
        %1864 = vmatprep.subr.mxu0 0.0
        %1865 = vmatpush1.msra.mxu0 0.0
        %1866 = vmatprep.subr.mxu0 0.0
        %1867 = vmatpush1.msra.mxu0 0.0
        %1868 = vmatprep.subr.mxu0 0.0
        %1869 = vmatpush1.msra.mxu0 0.0
        %1870 = vmatprep.subr.mxu0 0.0
        %1871 = vmatpush1.msra.mxu0 0.0
        %1872 = vmatprep.subr.mxu0 0.0
        %1873 = vmatpush1.msra.mxu0 0.0
        %1874 = vmatprep.subr.mxu0 0.0
        %1875 = vmatpush1.msra.mxu0 0.0
        %1876 = vmatprep.subr.mxu0 0.0
        %1877 = vmatpush1.msra.mxu0 0.0
        %1878 = vmatprep.subr.mxu0 0.0
        %1879 = vmatpush1.msra.mxu0 0.0
        %1880 = vmatprep.subr.mxu0 0.0
        %1881 = vmatpush1.msra.mxu0 0.0
        %1882 = vmatprep.subr.mxu0 0.0
        %1883 = vmatpush1.msra.mxu0 0.0
        %1884 = vmatprep.subr.mxu0 0.0
        %1885 = vmatpush1.msra.mxu0 0.0
        %1886 = vmatprep.subr.mxu0 0.0
        %1887 = vmatpush1.msra.mxu0 0.0
        %1888 = vmatprep.mubr.f32.mxu0 0.0
        %1889 = vmatmul.mubr.f32.gmra.mrb[0].mxu0 %v1816
        %v1890 = vpop.f32.mrb[0].mxu0
        %v1891 = vadd.f32 %v1811, %v1890
        %v1892 = vpop.f32.mrb[0].mxu0
        %v1893 = vadd.f32 %v1813, %v1892
        %1894 = vdwg.mxu0
        %v1895 = vmul.f32 %v1716, %v921
        %v1896 = vmul.f32 %v1712, %v925
        %v1897 = vmul.f32 %v1717, %v923
        %s1898 = scalar_lea.vmem %s7, 16
        %v1899 = vld [vmem:[%s1898] sm:$0xff]
        %1903 = vrot.lane.b32.xlu0 %v1895, 126
        %v1904 = vpop.permute.xlu0 %1903
        %1905 = vrot.lane.b32.xlu0 %v1896, 126
        %v1906 = vpop.permute.xlu0 %1905
        %1907 = vrot.lane.b32.xlu0 %v1897, 126
        %v1908 = vpop.permute.xlu0 %1907
        %v1909 = vsel %vm943, %v1904, %v1906
        %v1910 = vsel %vm943, %v1906, %v1908
        %v1912 = vsel %vm751, %v1899, 0
        %v1914 = vsel %vm755, %v1909, 0
        %v1916 = vsel %vm755, %v1910, 0
        %1918 = vmatprep.subr.mxu0 %v1916
        %1919 = vmatpush1.msra.mxu0 %v1914
        %1920 = vmatprep.subr.mxu0 0.0
        %1921 = vmatpush1.msra.mxu0 0.0
        %1922 = vmatprep.subr.mxu0 0.0
        %1923 = vmatpush1.msra.mxu0 0.0
        %1924 = vmatprep.subr.mxu0 0.0
        %1925 = vmatpush1.msra.mxu0 0.0
        %1926 = vmatprep.subr.mxu0 0.0
        %1927 = vmatpush1.msra.mxu0 0.0
        %1928 = vmatprep.subr.mxu0 0.0
        %1929 = vmatpush1.msra.mxu0 0.0
        %1930 = vmatprep.subr.mxu0 0.0
        %1931 = vmatpush1.msra.mxu0 0.0
        %1932 = vmatprep.subr.mxu0 0.0
        %1933 = vmatpush1.msra.mxu0 0.0
        %1934 = vmatprep.subr.mxu0 0.0
        %1935 = vmatpush1.msra.mxu0 0.0
        %1936 = vmatprep.subr.mxu0 0.0
        %1937 = vmatpush1.msra.mxu0 0.0
        %1938 = vmatprep.subr.mxu0 0.0
        %1939 = vmatpush1.msra.mxu0 0.0
        %1940 = vmatprep.subr.mxu0 0.0
        %1941 = vmatpush1.msra.mxu0 0.0
        %1942 = vmatprep.subr.mxu0 0.0
        %1943 = vmatpush1.msra.mxu0 0.0
        %1944 = vmatprep.subr.mxu0 0.0
        %1945 = vmatpush1.msra.mxu0 0.0
        %1946 = vmatprep.subr.mxu0 0.0
        %1947 = vmatpush1.msra.mxu0 0.0
        %1948 = vmatprep.subr.mxu0 0.0
        %1949 = vmatpush1.msra.mxu0 0.0
        %1950 = vmatprep.subr.mxu0 0.0
        %1951 = vmatpush1.msra.mxu0 0.0
        %1952 = vmatprep.subr.mxu0 0.0
        %1953 = vmatpush1.msra.mxu0 0.0
        %1954 = vmatprep.subr.mxu0 0.0
        %1955 = vmatpush1.msra.mxu0 0.0
        %1956 = vmatprep.subr.mxu0 0.0
        %1957 = vmatpush1.msra.mxu0 0.0
        %1958 = vmatprep.subr.mxu0 0.0
        %1959 = vmatpush1.msra.mxu0 0.0
        %1960 = vmatprep.subr.mxu0 0.0
        %1961 = vmatpush1.msra.mxu0 0.0
        %1962 = vmatprep.subr.mxu0 0.0
        %1963 = vmatpush1.msra.mxu0 0.0
        %1964 = vmatprep.subr.mxu0 0.0
        %1965 = vmatpush1.msra.mxu0 0.0
        %1966 = vmatprep.subr.mxu0 0.0
        %1967 = vmatpush1.msra.mxu0 0.0
        %1968 = vmatprep.subr.mxu0 0.0
        %1969 = vmatpush1.msra.mxu0 0.0
        %1970 = vmatprep.subr.mxu0 0.0
        %1971 = vmatpush1.msra.mxu0 0.0
        %1972 = vmatprep.subr.mxu0 0.0
        %1973 = vmatpush1.msra.mxu0 0.0
        %1974 = vmatprep.subr.mxu0 0.0
        %1975 = vmatpush1.msra.mxu0 0.0
        %1976 = vmatprep.subr.mxu0 0.0
        %1977 = vmatpush1.msra.mxu0 0.0
        %1978 = vmatprep.subr.mxu0 0.0
        %1979 = vmatpush1.msra.mxu0 0.0
        %1980 = vmatprep.subr.mxu0 0.0
        %1981 = vmatpush1.msra.mxu0 0.0
        %1982 = vmatprep.mubr.f32.mxu0 0.0
        %1983 = vmatmul.mubr.f32.gmra.mrb[0].mxu0 %v1912
        %v1984 = vpop.f32.mrb[0].mxu0
        %v1985 = vadd.f32 0.0, %v1984
        %v1986 = vpop.f32.mrb[0].mxu0
        %v1987 = vadd.f32 0.0, %v1986
        %1988 = vdwg.mxu0
        %v1989 = vadd.f32 %v1891, %v1985
        %v1990 = vadd.f32 %v1893, %v1987
        %v1991 = vmul.f32 %v1716, %v1036
        %v1992 = vmul.f32 %v1712, %v1040
        %v1993 = vmul.f32 %v1717, %v1038
        %s1994 = scalar_lea.vmem %s7, 24
        %v1995 = vld [vmem:[%s1994] sm:$0xff]
        %1999 = vrot.lane.b32.xlu0 %v1991, 112
        %v2000 = vpop.permute.xlu0 %1999
        %2001 = vrot.lane.b32.xlu0 %v1992, 112
        %v2002 = vpop.permute.xlu0 %2001
        %2003 = vrot.lane.b32.xlu0 %v1993, 112
        %v2004 = vpop.permute.xlu0 %2003
        %v2005 = vsel %vm1058, %v2000, %v2002
        %v2006 = vsel %vm1058, %v2002, %v2004
        %v2008 = vsel %vm751, %v1995, 0
        %v2010 = vsel %vm755, %v2005, 0
        %v2012 = vsel %vm755, %v2006, 0
        %2014 = vmatprep.subr.mxu0 %v2012
        %2015 = vmatpush1.msra.mxu0 %v2010
        %2016 = vmatprep.subr.mxu0 0.0
        %2017 = vmatpush1.msra.mxu0 0.0
        %2018 = vmatprep.subr.mxu0 0.0
        %2019 = vmatpush1.msra.mxu0 0.0
        %2020 = vmatprep.subr.mxu0 0.0
        %2021 = vmatpush1.msra.mxu0 0.0
        %2022 = vmatprep.subr.mxu0 0.0
        %2023 = vmatpush1.msra.mxu0 0.0
        %2024 = vmatprep.subr.mxu0 0.0
        %2025 = vmatpush1.msra.mxu0 0.0
        %2026 = vmatprep.subr.mxu0 0.0
        %2027 = vmatpush1.msra.mxu0 0.0
        %2028 = vmatprep.subr.mxu0 0.0
        %2029 = vmatpush1.msra.mxu0 0.0
        %2030 = vmatprep.subr.mxu0 0.0
        %2031 = vmatpush1.msra.mxu0 0.0
        %2032 = vmatprep.subr.mxu0 0.0
        %2033 = vmatpush1.msra.mxu0 0.0
        %2034 = vmatprep.subr.mxu0 0.0
        %2035 = vmatpush1.msra.mxu0 0.0
        %2036 = vmatprep.subr.mxu0 0.0
        %2037 = vmatpush1.msra.mxu0 0.0
        %2038 = vmatprep.subr.mxu0 0.0
        %2039 = vmatpush1.msra.mxu0 0.0
        %2040 = vmatprep.subr.mxu0 0.0
        %2041 = vmatpush1.msra.mxu0 0.0
        %2042 = vmatprep.subr.mxu0 0.0
        %2043 = vmatpush1.msra.mxu0 0.0
        %2044 = vmatprep.subr.mxu0 0.0
        %2045 = vmatpush1.msra.mxu0 0.0
        %2046 = vmatprep.subr.mxu0 0.0
        %2047 = vmatpush1.msra.mxu0 0.0
        %2048 = vmatprep.subr.mxu0 0.0
        %2049 = vmatpush1.msra.mxu0 0.0
        %2050 = vmatprep.subr.mxu0 0.0
        %2051 = vmatpush1.msra.mxu0 0.0
        %2052 = vmatprep.subr.mxu0 0.0
        %2053 = vmatpush1.msra.mxu0 0.0
        %2054 = vmatprep.subr.mxu0 0.0
        %2055 = vmatpush1.msra.mxu0 0.0
        %2056 = vmatprep.subr.mxu0 0.0
        %2057 = vmatpush1.msra.mxu0 0.0
        %2058 = vmatprep.subr.mxu0 0.0
        %2059 = vmatpush1.msra.mxu0 0.0
        %2060 = vmatprep.subr.mxu0 0.0
        %2061 = vmatpush1.msra.mxu0 0.0
        %2062 = vmatprep.subr.mxu0 0.0
        %2063 = vmatpush1.msra.mxu0 0.0
        %2064 = vmatprep.subr.mxu0 0.0
        %2065 = vmatpush1.msra.mxu0 0.0
        %2066 = vmatprep.subr.mxu0 0.0
        %2067 = vmatpush1.msra.mxu0 0.0
        %2068 = vmatprep.subr.mxu0 0.0
        %2069 = vmatpush1.msra.mxu0 0.0
        %2070 = vmatprep.subr.mxu0 0.0
        %2071 = vmatpush1.msra.mxu0 0.0
        %2072 = vmatprep.subr.mxu0 0.0
        %2073 = vmatpush1.msra.mxu0 0.0
        %2074 = vmatprep.subr.mxu0 0.0
        %2075 = vmatpush1.msra.mxu0 0.0
        %2076 = vmatprep.subr.mxu0 0.0
        %2077 = vmatpush1.msra.mxu0 0.0
        %2078 = vmatprep.mubr.f32.mxu0 0.0
        %2079 = vmatmul.mubr.f32.gmra.mrb[0].mxu0 %v2008
        %v2080 = vpop.f32.mrb[0].mxu0
        %v2081 = vadd.f32 0.0, %v2080
        %v2082 = vpop.f32.mrb[0].mxu0
        %v2083 = vadd.f32 0.0, %v2082
        %2084 = vdwg.mxu0
        %v2085 = vadd.f32 %v1989, %v2081
        %v2086 = vadd.f32 %v1990, %v2083
        %s2087 = scalar_lea.vmem %s7, 32
        %v2088 = vld [vmem:[%s2087] sm:$0xff]
        %2091 = vrot.lane.b32.xlu0 %v1716, 111
        %v2092 = vpop.permute.xlu0 %2091
        %2093 = vrot.lane.b32.xlu0 %v1712, 111
        %v2094 = vpop.permute.xlu0 %2093
        %2095 = vrot.lane.b32.xlu0 %v1717, 111
        %v2096 = vpop.permute.xlu0 %2095
        %v2097 = vsel %vm1151, %v2092, %v2094
        %v2098 = vsel %vm1151, %v2094, %v2096
        %v2100 = vsel %vm751, %v2088, 0
        %v2102 = vsel %vm755, %v2097, 0
        %v2104 = vsel %vm755, %v2098, 0
        %2106 = vmatprep.subr.mxu0 %v2104
        %2107 = vmatpush1.msra.mxu0 %v2102
        %2108 = vmatprep.subr.mxu0 0.0
        %2109 = vmatpush1.msra.mxu0 0.0
        %2110 = vmatprep.subr.mxu0 0.0
        %2111 = vmatpush1.msra.mxu0 0.0
        %2112 = vmatprep.subr.mxu0 0.0
        %2113 = vmatpush1.msra.mxu0 0.0
        %2114 = vmatprep.subr.mxu0 0.0
        %2115 = vmatpush1.msra.mxu0 0.0
        %2116 = vmatprep.subr.mxu0 0.0
        %2117 = vmatpush1.msra.mxu0 0.0
        %2118 = vmatprep.subr.mxu0 0.0
        %2119 = vmatpush1.msra.mxu0 0.0
        %2120 = vmatprep.subr.mxu0 0.0
        %2121 = vmatpush1.msra.mxu0 0.0
        %2122 = vmatprep.subr.mxu0 0.0
        %2123 = vmatpush1.msra.mxu0 0.0
        %2124 = vmatprep.subr.mxu0 0.0
        %2125 = vmatpush1.msra.mxu0 0.0
        %2126 = vmatprep.subr.mxu0 0.0
        %2127 = vmatpush1.msra.mxu0 0.0
        %2128 = vmatprep.subr.mxu0 0.0
        %2129 = vmatpush1.msra.mxu0 0.0
        %2130 = vmatprep.subr.mxu0 0.0
        %2131 = vmatpush1.msra.mxu0 0.0
        %2132 = vmatprep.subr.mxu0 0.0
        %2133 = vmatpush1.msra.mxu0 0.0
        %2134 = vmatprep.subr.mxu0 0.0
        %2135 = vmatpush1.msra.mxu0 0.0
        %2136 = vmatprep.subr.mxu0 0.0
        %2137 = vmatpush1.msra.mxu0 0.0
        %2138 = vmatprep.subr.mxu0 0.0
        %2139 = vmatpush1.msra.mxu0 0.0
        %2140 = vmatprep.subr.mxu0 0.0
        %2141 = vmatpush1.msra.mxu0 0.0
        %2142 = vmatprep.subr.mxu0 0.0
        %2143 = vmatpush1.msra.mxu0 0.0
        %2144 = vmatprep.subr.mxu0 0.0
        %2145 = vmatpush1.msra.mxu0 0.0
        %2146 = vmatprep.subr.mxu0 0.0
        %2147 = vmatpush1.msra.mxu0 0.0
        %2148 = vmatprep.subr.mxu0 0.0
        %2149 = vmatpush1.msra.mxu0 0.0
        %2150 = vmatprep.subr.mxu0 0.0
        %2151 = vmatpush1.msra.mxu0 0.0
        %2152 = vmatprep.subr.mxu0 0.0
        %2153 = vmatpush1.msra.mxu0 0.0
        %2154 = vmatprep.subr.mxu0 0.0
        %2155 = vmatpush1.msra.mxu0 0.0
        %2156 = vmatprep.subr.mxu0 0.0
        %2157 = vmatpush1.msra.mxu0 0.0
        %2158 = vmatprep.subr.mxu0 0.0
        %2159 = vmatpush1.msra.mxu0 0.0
        %2160 = vmatprep.subr.mxu0 0.0
        %2161 = vmatpush1.msra.mxu0 0.0
        %2162 = vmatprep.subr.mxu0 0.0
        %2163 = vmatpush1.msra.mxu0 0.0
        %2164 = vmatprep.subr.mxu0 0.0
        %2165 = vmatpush1.msra.mxu0 0.0
        %2166 = vmatprep.subr.mxu0 0.0
        %2167 = vmatpush1.msra.mxu0 0.0
        %2168 = vmatprep.subr.mxu0 0.0
        %2169 = vmatpush1.msra.mxu0 0.0
        %2170 = vmatprep.mubr.f32.mxu0 0.0
        %2171 = vmatmul.mubr.f32.gmra.mrb[0].mxu0 %v2100
        %v2172 = vpop.f32.mrb[0].mxu0
        %v2173 = vadd.f32 0.0, %v2172
        %v2174 = vpop.f32.mrb[0].mxu0
        %v2175 = vadd.f32 0.0, %v2174
        %2176 = vdwg.mxu0
        %v2177 = vadd.f32 %v2085, %v2173
        %v2178 = vadd.f32 %v2086, %v2175
        %v2179 = vmul.f32 %v1716, %v1244
        %v2180 = vmul.f32 %v1712, %v1248
        %v2181 = vmul.f32 %v1717, %v1246
        %s2182 = scalar_lea.vmem %s7, 40
        %v2183 = vld [vmem:[%s2182] sm:$0xff]
        %2187 = vrot.lane.b32.xlu0 %v2179, 110
        %v2188 = vpop.permute.xlu0 %2187
        %2189 = vrot.lane.b32.xlu0 %v2180, 110
        %v2190 = vpop.permute.xlu0 %2189
        %2191 = vrot.lane.b32.xlu0 %v2181, 110
        %v2192 = vpop.permute.xlu0 %2191
        %v2193 = vsel %vm1266, %v2188, %v2190
        %v2194 = vsel %vm1266, %v2190, %v2192
        %v2196 = vsel %vm751, %v2183, 0
        %v2198 = vsel %vm755, %v2193, 0
        %v2200 = vsel %vm755, %v2194, 0
        %2202 = vmatprep.subr.mxu0 %v2200
        %2203 = vmatpush1.msra.mxu0 %v2198
        %2204 = vmatprep.subr.mxu0 0.0
        %2205 = vmatpush1.msra.mxu0 0.0
        %2206 = vmatprep.subr.mxu0 0.0
        %2207 = vmatpush1.msra.mxu0 0.0
        %2208 = vmatprep.subr.mxu0 0.0
        %2209 = vmatpush1.msra.mxu0 0.0
        %2210 = vmatprep.subr.mxu0 0.0
        %2211 = vmatpush1.msra.mxu0 0.0
        %2212 = vmatprep.subr.mxu0 0.0
        %2213 = vmatpush1.msra.mxu0 0.0
        %2214 = vmatprep.subr.mxu0 0.0
        %2215 = vmatpush1.msra.mxu0 0.0
        %2216 = vmatprep.subr.mxu0 0.0
        %2217 = vmatpush1.msra.mxu0 0.0
        %2218 = vmatprep.subr.mxu0 0.0
        %2219 = vmatpush1.msra.mxu0 0.0
        %2220 = vmatprep.subr.mxu0 0.0
        %2221 = vmatpush1.msra.mxu0 0.0
        %2222 = vmatprep.subr.mxu0 0.0
        %2223 = vmatpush1.msra.mxu0 0.0
        %2224 = vmatprep.subr.mxu0 0.0
        %2225 = vmatpush1.msra.mxu0 0.0
        %2226 = vmatprep.subr.mxu0 0.0
        %2227 = vmatpush1.msra.mxu0 0.0
        %2228 = vmatprep.subr.mxu0 0.0
        %2229 = vmatpush1.msra.mxu0 0.0
        %2230 = vmatprep.subr.mxu0 0.0
        %2231 = vmatpush1.msra.mxu0 0.0
        %2232 = vmatprep.subr.mxu0 0.0
        %2233 = vmatpush1.msra.mxu0 0.0
        %2234 = vmatprep.subr.mxu0 0.0
        %2235 = vmatpush1.msra.mxu0 0.0
        %2236 = vmatprep.subr.mxu0 0.0
        %2237 = vmatpush1.msra.mxu0 0.0
        %2238 = vmatprep.subr.mxu0 0.0
        %2239 = vmatpush1.msra.mxu0 0.0
        %2240 = vmatprep.subr.mxu0 0.0
        %2241 = vmatpush1.msra.mxu0 0.0
        %2242 = vmatprep.subr.mxu0 0.0
        %2243 = vmatpush1.msra.mxu0 0.0
        %2244 = vmatprep.subr.mxu0 0.0
        %2245 = vmatpush1.msra.mxu0 0.0
        %2246 = vmatprep.subr.mxu0 0.0
        %2247 = vmatpush1.msra.mxu0 0.0
        %2248 = vmatprep.subr.mxu0 0.0
        %2249 = vmatpush1.msra.mxu0 0.0
        %2250 = vmatprep.subr.mxu0 0.0
        %2251 = vmatpush1.msra.mxu0 0.0
        %2252 = vmatprep.subr.mxu0 0.0
        %2253 = vmatpush1.msra.mxu0 0.0
        %2254 = vmatprep.subr.mxu0 0.0
        %2255 = vmatpush1.msra.mxu0 0.0
        %2256 = vmatprep.subr.mxu0 0.0
        %2257 = vmatpush1.msra.mxu0 0.0
        %2258 = vmatprep.subr.mxu0 0.0
        %2259 = vmatpush1.msra.mxu0 0.0
        %2260 = vmatprep.subr.mxu0 0.0
        %2261 = vmatpush1.msra.mxu0 0.0
        %2262 = vmatprep.subr.mxu0 0.0
        %2263 = vmatpush1.msra.mxu0 0.0
        %2264 = vmatprep.subr.mxu0 0.0
        %2265 = vmatpush1.msra.mxu0 0.0
        %2266 = vmatprep.mubr.f32.mxu0 0.0
        %2267 = vmatmul.mubr.f32.gmra.mrb[0].mxu0 %v2196
        %v2268 = vpop.f32.mrb[0].mxu0
        %v2269 = vadd.f32 0.0, %v2268
        %v2270 = vpop.f32.mrb[0].mxu0
        %v2271 = vadd.f32 0.0, %v2270
        %2272 = vdwg.mxu0
        %v2273 = vadd.f32 %v2177, %v2269
        %v2274 = vadd.f32 %v2178, %v2271
        %v2275 = vmul.f32 %v1716, %v1359
        %v2276 = vmul.f32 %v1712, %v1363
        %v2277 = vmul.f32 %v1717, %v1361
        %s2278 = scalar_lea.vmem %s7, 48
        %v2279 = vld [vmem:[%s2278] sm:$0xff]
        %2283 = vrot.lane.b32.xlu0 %v2275, 96
        %v2284 = vpop.permute.xlu0 %2283
        %2285 = vrot.lane.b32.xlu0 %v2276, 96
        %v2286 = vpop.permute.xlu0 %2285
        %2287 = vrot.lane.b32.xlu0 %v2277, 96
        %v2288 = vpop.permute.xlu0 %2287
        %v2289 = vsel %vm1381, %v2284, %v2286
        %v2290 = vsel %vm1381, %v2286, %v2288
        %v2292 = vsel %vm751, %v2279, 0
        %v2294 = vsel %vm755, %v2289, 0
        %v2296 = vsel %vm755, %v2290, 0
        %2298 = vmatprep.subr.mxu0 %v2296
        %2299 = vmatpush1.msra.mxu0 %v2294
        %2300 = vmatprep.subr.mxu0 0.0
        %2301 = vmatpush1.msra.mxu0 0.0
        %2302 = vmatprep.subr.mxu0 0.0
        %2303 = vmatpush1.msra.mxu0 0.0
        %2304 = vmatprep.subr.mxu0 0.0
        %2305 = vmatpush1.msra.mxu0 0.0
        %2306 = vmatprep.subr.mxu0 0.0
        %2307 = vmatpush1.msra.mxu0 0.0
        %2308 = vmatprep.subr.mxu0 0.0
        %2309 = vmatpush1.msra.mxu0 0.0
        %2310 = vmatprep.subr.mxu0 0.0
        %2311 = vmatpush1.msra.mxu0 0.0
        %2312 = vmatprep.subr.mxu0 0.0
        %2313 = vmatpush1.msra.mxu0 0.0
        %2314 = vmatprep.subr.mxu0 0.0
        %2315 = vmatpush1.msra.mxu0 0.0
        %2316 = vmatprep.subr.mxu0 0.0
        %2317 = vmatpush1.msra.mxu0 0.0
        %2318 = vmatprep.subr.mxu0 0.0
        %2319 = vmatpush1.msra.mxu0 0.0
        %2320 = vmatprep.subr.mxu0 0.0
        %2321 = vmatpush1.msra.mxu0 0.0
        %2322 = vmatprep.subr.mxu0 0.0
        %2323 = vmatpush1.msra.mxu0 0.0
        %2324 = vmatprep.subr.mxu0 0.0
        %2325 = vmatpush1.msra.mxu0 0.0
        %2326 = vmatprep.subr.mxu0 0.0
        %2327 = vmatpush1.msra.mxu0 0.0
        %2328 = vmatprep.subr.mxu0 0.0
        %2329 = vmatpush1.msra.mxu0 0.0
        %2330 = vmatprep.subr.mxu0 0.0
        %2331 = vmatpush1.msra.mxu0 0.0
        %2332 = vmatprep.subr.mxu0 0.0
        %2333 = vmatpush1.msra.mxu0 0.0
        %2334 = vmatprep.subr.mxu0 0.0
        %2335 = vmatpush1.msra.mxu0 0.0
        %2336 = vmatprep.subr.mxu0 0.0
        %2337 = vmatpush1.msra.mxu0 0.0
        %2338 = vmatprep.subr.mxu0 0.0
        %2339 = vmatpush1.msra.mxu0 0.0
        %2340 = vmatprep.subr.mxu0 0.0
        %2341 = vmatpush1.msra.mxu0 0.0
        %2342 = vmatprep.subr.mxu0 0.0
        %2343 = vmatpush1.msra.mxu0 0.0
        %2344 = vmatprep.subr.mxu0 0.0
        %2345 = vmatpush1.msra.mxu0 0.0
        %2346 = vmatprep.subr.mxu0 0.0
        %2347 = vmatpush1.msra.mxu0 0.0
        %2348 = vmatprep.subr.mxu0 0.0
        %2349 = vmatpush1.msra.mxu0 0.0
        %2350 = vmatprep.subr.mxu0 0.0
        %2351 = vmatpush1.msra.mxu0 0.0
        %2352 = vmatprep.subr.mxu0 0.0
        %2353 = vmatpush1.msra.mxu0 0.0
        %2354 = vmatprep.subr.mxu0 0.0
        %2355 = vmatpush1.msra.mxu0 0.0
        %2356 = vmatprep.subr.mxu0 0.0
        %2357 = vmatpush1.msra.mxu0 0.0
        %2358 = vmatprep.subr.mxu0 0.0
        %2359 = vmatpush1.msra.mxu0 0.0
        %2360 = vmatprep.subr.mxu0 0.0
        %2361 = vmatpush1.msra.mxu0 0.0
        %2362 = vmatprep.mubr.f32.mxu0 0.0
        %2363 = vmatmul.mubr.f32.gmra.mrb[0].mxu0 %v2292
        %v2364 = vpop.f32.mrb[0].mxu0
        %v2365 = vadd.f32 0.0, %v2364
        %v2366 = vpop.f32.mrb[0].mxu0
        %v2367 = vadd.f32 0.0, %v2366
        %2368 = vdwg.mxu0
        %v2369 = vadd.f32 %v2273, %v2365
        %v2370 = vadd.f32 %v2274, %v2367
        %v2371 = vmul.f32 %v1716, %v1474
        %v2372 = vmul.f32 %v1712, %v1478
        %v2373 = vmul.f32 %v1717, %v1476
        %s2374 = scalar_lea.vmem %s7, 56
        %v2375 = vld [vmem:[%s2374] sm:$0xff]
        %2379 = vrot.lane.b32.xlu0 %v2371, 95
        %v2380 = vpop.permute.xlu0 %2379
        %2381 = vrot.lane.b32.xlu0 %v2372, 95
        %v2382 = vpop.permute.xlu0 %2381
        %2383 = vrot.lane.b32.xlu0 %v2373, 95
        %v2384 = vpop.permute.xlu0 %2383
        %v2385 = vsel %vm1496, %v2380, %v2382
        %v2386 = vsel %vm1496, %v2382, %v2384
        %v2388 = vsel %vm751, %v2375, 0
        %v2390 = vsel %vm755, %v2385, 0
        %v2392 = vsel %vm755, %v2386, 0
        %2394 = vmatprep.subr.mxu0 %v2392
        %2395 = vmatpush1.msra.mxu0 %v2390
        %2396 = vmatprep.subr.mxu0 0.0
        %2397 = vmatpush1.msra.mxu0 0.0
        %2398 = vmatprep.subr.mxu0 0.0
        %2399 = vmatpush1.msra.mxu0 0.0
        %2400 = vmatprep.subr.mxu0 0.0
        %2401 = vmatpush1.msra.mxu0 0.0
        %2402 = vmatprep.subr.mxu0 0.0
        %2403 = vmatpush1.msra.mxu0 0.0
        %2404 = vmatprep.subr.mxu0 0.0
        %2405 = vmatpush1.msra.mxu0 0.0
        %2406 = vmatprep.subr.mxu0 0.0
        %2407 = vmatpush1.msra.mxu0 0.0
        %2408 = vmatprep.subr.mxu0 0.0
        %2409 = vmatpush1.msra.mxu0 0.0
        %2410 = vmatprep.subr.mxu0 0.0
        %2411 = vmatpush1.msra.mxu0 0.0
        %2412 = vmatprep.subr.mxu0 0.0
        %2413 = vmatpush1.msra.mxu0 0.0
        %2414 = vmatprep.subr.mxu0 0.0
        %2415 = vmatpush1.msra.mxu0 0.0
        %2416 = vmatprep.subr.mxu0 0.0
        %2417 = vmatpush1.msra.mxu0 0.0
        %2418 = vmatprep.subr.mxu0 0.0
        %2419 = vmatpush1.msra.mxu0 0.0
        %2420 = vmatprep.subr.mxu0 0.0
        %2421 = vmatpush1.msra.mxu0 0.0
        %2422 = vmatprep.subr.mxu0 0.0
        %2423 = vmatpush1.msra.mxu0 0.0
        %2424 = vmatprep.subr.mxu0 0.0
        %2425 = vmatpush1.msra.mxu0 0.0
        %2426 = vmatprep.subr.mxu0 0.0
        %2427 = vmatpush1.msra.mxu0 0.0
        %2428 = vmatprep.subr.mxu0 0.0
        %2429 = vmatpush1.msra.mxu0 0.0
        %2430 = vmatprep.subr.mxu0 0.0
        %2431 = vmatpush1.msra.mxu0 0.0
        %2432 = vmatprep.subr.mxu0 0.0
        %2433 = vmatpush1.msra.mxu0 0.0
        %2434 = vmatprep.subr.mxu0 0.0
        %2435 = vmatpush1.msra.mxu0 0.0
        %2436 = vmatprep.subr.mxu0 0.0
        %2437 = vmatpush1.msra.mxu0 0.0
        %2438 = vmatprep.subr.mxu0 0.0
        %2439 = vmatpush1.msra.mxu0 0.0
        %2440 = vmatprep.subr.mxu0 0.0
        %2441 = vmatpush1.msra.mxu0 0.0
        %2442 = vmatprep.subr.mxu0 0.0
        %2443 = vmatpush1.msra.mxu0 0.0
        %2444 = vmatprep.subr.mxu0 0.0
        %2445 = vmatpush1.msra.mxu0 0.0
        %2446 = vmatprep.subr.mxu0 0.0
        %2447 = vmatpush1.msra.mxu0 0.0
        %2448 = vmatprep.subr.mxu0 0.0
        %2449 = vmatpush1.msra.mxu0 0.0
        %2450 = vmatprep.subr.mxu0 0.0
        %2451 = vmatpush1.msra.mxu0 0.0
        %2452 = vmatprep.subr.mxu0 0.0
        %2453 = vmatpush1.msra.mxu0 0.0
        %2454 = vmatprep.subr.mxu0 0.0
        %2455 = vmatpush1.msra.mxu0 0.0
        %2456 = vmatprep.subr.mxu0 0.0
        %2457 = vmatpush1.msra.mxu0 0.0
        %2458 = vmatprep.mubr.f32.mxu0 0.0
        %2459 = vmatmul.mubr.f32.gmra.mrb[0].mxu0 %v2388
        %v2460 = vpop.f32.mrb[0].mxu0
        %v2461 = vadd.f32 0.0, %v2460
        %v2462 = vpop.f32.mrb[0].mxu0
        %v2463 = vadd.f32 0.0, %v2462
        %2464 = vdwg.mxu0
        %v2465 = vadd.f32 %v2369, %v2461
        %v2466 = vadd.f32 %v2370, %v2463
        %v2467 = vmul.f32 %v1716, %v1589
        %v2468 = vmul.f32 %v1712, %v1593
        %v2469 = vmul.f32 %v1717, %v1591
        %s2470 = scalar_lea.vmem %s7, 64
        %v2471 = vld [vmem:[%s2470] sm:$0xff]
        %2475 = vrot.lane.b32.xlu0 %v2467, 94
        %v2476 = vpop.permute.xlu0 %2475
        %2477 = vrot.lane.b32.xlu0 %v2468, 94
        %v2478 = vpop.permute.xlu0 %2477
        %2479 = vrot.lane.b32.xlu0 %v2469, 94
        %v2480 = vpop.permute.xlu0 %2479
        %v2481 = vsel %vm1611, %v2476, %v2478
        %v2482 = vsel %vm1611, %v2478, %v2480
        %v2484 = vsel %vm751, %v2471, 0
        %v2486 = vsel %vm755, %v2481, 0
        %v2488 = vsel %vm755, %v2482, 0
        %2490 = vmatprep.subr.mxu0 %v2488
        %2491 = vmatpush1.msra.mxu0 %v2486
        %2492 = vmatprep.subr.mxu0 0.0
        %2493 = vmatpush1.msra.mxu0 0.0
        %2494 = vmatprep.subr.mxu0 0.0
        %2495 = vmatpush1.msra.mxu0 0.0
        %2496 = vmatprep.subr.mxu0 0.0
        %2497 = vmatpush1.msra.mxu0 0.0
        %2498 = vmatprep.subr.mxu0 0.0
        %2499 = vmatpush1.msra.mxu0 0.0
        %2500 = vmatprep.subr.mxu0 0.0
        %2501 = vmatpush1.msra.mxu0 0.0
        %2502 = vmatprep.subr.mxu0 0.0
        %2503 = vmatpush1.msra.mxu0 0.0
        %2504 = vmatprep.subr.mxu0 0.0
        %2505 = vmatpush1.msra.mxu0 0.0
        %2506 = vmatprep.subr.mxu0 0.0
        %2507 = vmatpush1.msra.mxu0 0.0
        %2508 = vmatprep.subr.mxu0 0.0
        %2509 = vmatpush1.msra.mxu0 0.0
        %2510 = vmatprep.subr.mxu0 0.0
        %2511 = vmatpush1.msra.mxu0 0.0
        %2512 = vmatprep.subr.mxu0 0.0
        %2513 = vmatpush1.msra.mxu0 0.0
        %2514 = vmatprep.subr.mxu0 0.0
        %2515 = vmatpush1.msra.mxu0 0.0
        %2516 = vmatprep.subr.mxu0 0.0
        %2517 = vmatpush1.msra.mxu0 0.0
        %2518 = vmatprep.subr.mxu0 0.0
        %2519 = vmatpush1.msra.mxu0 0.0
        %2520 = vmatprep.subr.mxu0 0.0
        %2521 = vmatpush1.msra.mxu0 0.0
        %2522 = vmatprep.subr.mxu0 0.0
        %2523 = vmatpush1.msra.mxu0 0.0
        %2524 = vmatprep.subr.mxu0 0.0
        %2525 = vmatpush1.msra.mxu0 0.0
        %2526 = vmatprep.subr.mxu0 0.0
        %2527 = vmatpush1.msra.mxu0 0.0
        %2528 = vmatprep.subr.mxu0 0.0
        %2529 = vmatpush1.msra.mxu0 0.0
        %2530 = vmatprep.subr.mxu0 0.0
        %2531 = vmatpush1.msra.mxu0 0.0
        %2532 = vmatprep.subr.mxu0 0.0
        %2533 = vmatpush1.msra.mxu0 0.0
        %2534 = vmatprep.subr.mxu0 0.0
        %2535 = vmatpush1.msra.mxu0 0.0
        %2536 = vmatprep.subr.mxu0 0.0
        %2537 = vmatpush1.msra.mxu0 0.0
        %2538 = vmatprep.subr.mxu0 0.0
        %2539 = vmatpush1.msra.mxu0 0.0
        %2540 = vmatprep.subr.mxu0 0.0
        %2541 = vmatpush1.msra.mxu0 0.0
        %2542 = vmatprep.subr.mxu0 0.0
        %2543 = vmatpush1.msra.mxu0 0.0
        %2544 = vmatprep.subr.mxu0 0.0
        %2545 = vmatpush1.msra.mxu0 0.0
        %2546 = vmatprep.subr.mxu0 0.0
        %2547 = vmatpush1.msra.mxu0 0.0
        %2548 = vmatprep.subr.mxu0 0.0
        %2549 = vmatpush1.msra.mxu0 0.0
        %2550 = vmatprep.subr.mxu0 0.0
        %2551 = vmatpush1.msra.mxu0 0.0
        %2552 = vmatprep.subr.mxu0 0.0
        %2553 = vmatpush1.msra.mxu0 0.0
        %2554 = vmatprep.mubr.f32.mxu0 0.0
        %2555 = vmatmul.mubr.f32.gmra.mrb[0].mxu0 %v2484
        %v2556 = vpop.f32.mrb[0].mxu0
        %v2557 = vadd.f32 0.0, %v2556
        %v2558 = vpop.f32.mrb[0].mxu0
        %v2559 = vadd.f32 0.0, %v2558
        %2560 = vdwg.mxu0
        %v2561 = vadd.f32 %v2465, %v2557
        %v2562 = vadd.f32 %v2466, %v2559
        %v2563 = vld [vmem:[%s8] sm:$0xff]
        %2565 = vset.pattern.permute.xlu0 0
        %2566 = vperm.xlu0 %2565, %v2563
        %v2567 = vpop.permute.xlu0 %2566
        %v2569 = vadd.f32 %v2561, %v2567
        %v2570 = vadd.f32 %v2562, %v2567
        %v2572 = vcombine.high %v581, %v581
        %v2574 = vsel %vm755, %v581, 0.0
        %v2575 = vsel %vm755, %v2572, 0.0
        %v2576 = vadd.f32 %v2574, %v2575
        %2577 = vadd.xlane.f32.xlu0 %v2576
        %v2578 = vpop.xlane.xlu0 %2577
        %v2579 = vrcp.pop 256.0
        %v2580 = vmul.f32 %v2578, %v2579
        %v2583 = vunpack.c.l.s4 839922192
        %v2584 = vunpack.c.0.s8 %v2583
        %v2585 = vlaneseq
        %v2586 = vshrl.u32 %v2585, 7
        %v2587 = vsub.s32 %v2584, %v2586
        %v2588 = vrot.slane %v2580, %v2587
        %v2590 = vsub.f32 %v581, %v2588
        %v2591 = vmul.f32 %v2590, %v2590
        %v2593 = vcombine.high %v2591, %v2591
        %v2595 = vsel %vm755, %v2591, 0.0
        %v2596 = vsel %vm755, %v2593, 0.0
        %v2597 = vadd.f32 %v2595, %v2596
        %2598 = vadd.xlane.f32.xlu0 %v2597
        %v2599 = vpop.xlane.xlu0 %2598
        %v2600 = vmul.f32 %v2599, %v2579
        %v2601 = vadd.f32 %v2600, 1e-05
        %v2602 = vrsqrt.pop %v2601
        %v2605 = vunpack.c.l.s4 839922192
        %v2606 = vunpack.c.0.s8 %v2605
        %v2607 = vlaneseq
        %v2608 = vshrl.u32 %v2607, 7
        %v2609 = vsub.s32 %v2606, %v2608
        %v2610 = vrot.slane %v2602, %v2609
        %v2612 = vmul.f32 %v2590, %v2610
        %v2615 = vcombine.low %v2569, %v2570
        %v2617 = vmul.f32 %v2612, %v2615
        %v2618 = vcombine.high %v2569, %v2570
        %v2620 = vadd.f32 %v2617, %v2618
        %v2621 = vmul.f32 %v2620, 0.01
        %v2622 = vmax.f32 %v2620, %v2621
        %v2624 = vcombine.high %v2622, %v2622
        %2625 = vrot.lane.b32.xlu0 %v2622, 17
        %v2626 = vpop.permute.xlu0 %2625
        %2627 = vrot.lane.b32.xlu0 %v2624, 17
        %v2628 = vpop.permute.xlu0 %2627
        %v2629 = vsel %vm695, %v2626, %v2628
        %v2633 = vsel %vm695, 0.0, %v2626
        %v2634 = vsel %vm695, %v2628, 0.0
        %v2635 = vmul.f32 %v2633, %v706
        %v2636 = vmul.f32 %v2629, %v710
        %v2637 = vld [vmem:[%s13] sm:$0xf]
        %v2638 = vmul.f32 %v2633, %v726
        %v2639 = vmul.f32 %v2629, %v730
        %v2640 = vmul.f32 %v2634, %v728
        %s2641 = scalar_lea.vmem %s13, 4
        %v2642 = vld [vmem:[%s2641] sm:$0xf]
        %2646 = vrot.lane.b32.xlu0 %v2638, 127
        %v2647 = vpop.permute.xlu0 %2646
        %2648 = vrot.lane.b32.xlu0 %v2639, 127
        %v2649 = vpop.permute.xlu0 %2648
        %2650 = vrot.lane.b32.xlu0 %v2640, 127
        %v2651 = vpop.permute.xlu0 %2650
        %v2652 = vsel %vm748, %v2647, %v2649
        %v2653 = vsel %vm748, %v2649, %v2651
        %v2655 = vsel %vm751, %v2642, 0
        %v2657 = vsel %vm755, %v2652, 0
        %v2659 = vsel %vm755, %v2653, 0
        %2661 = vmatprep.subr.mxu0 %v2659
        %2662 = vmatpush1.msra.mxu0 %v2657
        %2663 = vmatprep.subr.mxu0 0.0
        %2664 = vmatpush1.msra.mxu0 0.0
        %2665 = vmatprep.subr.mxu0 0.0
        %2666 = vmatpush1.msra.mxu0 0.0
        %2667 = vmatprep.subr.mxu0 0.0
        %2668 = vmatpush1.msra.mxu0 0.0
        %2669 = vmatprep.subr.mxu0 0.0
        %2670 = vmatpush1.msra.mxu0 0.0
        %2671 = vmatprep.subr.mxu0 0.0
        %2672 = vmatpush1.msra.mxu0 0.0
        %2673 = vmatprep.subr.mxu0 0.0
        %2674 = vmatpush1.msra.mxu0 0.0
        %2675 = vmatprep.subr.mxu0 0.0
        %2676 = vmatpush1.msra.mxu0 0.0
        %2677 = vmatprep.subr.mxu0 0.0
        %2678 = vmatpush1.msra.mxu0 0.0
        %2679 = vmatprep.subr.mxu0 0.0
        %2680 = vmatpush1.msra.mxu0 0.0
        %2681 = vmatprep.subr.mxu0 0.0
        %2682 = vmatpush1.msra.mxu0 0.0
        %2683 = vmatprep.subr.mxu0 0.0
        %2684 = vmatpush1.msra.mxu0 0.0
        %2685 = vmatprep.subr.mxu0 0.0
        %2686 = vmatpush1.msra.mxu0 0.0
        %2687 = vmatprep.subr.mxu0 0.0
        %2688 = vmatpush1.msra.mxu0 0.0
        %2689 = vmatprep.subr.mxu0 0.0
        %2690 = vmatpush1.msra.mxu0 0.0
        %2691 = vmatprep.subr.mxu0 0.0
        %2692 = vmatpush1.msra.mxu0 0.0
        %2693 = vmatprep.subr.mxu0 0.0
        %2694 = vmatpush1.msra.mxu0 0.0
        %2695 = vmatprep.subr.mxu0 0.0
        %2696 = vmatpush1.msra.mxu0 0.0
        %2697 = vmatprep.subr.mxu0 0.0
        %2698 = vmatpush1.msra.mxu0 0.0
        %2699 = vmatprep.subr.mxu0 0.0
        %2700 = vmatpush1.msra.mxu0 0.0
        %2701 = vmatprep.subr.mxu0 0.0
        %2702 = vmatpush1.msra.mxu0 0.0
        %2703 = vmatprep.subr.mxu0 0.0
        %2704 = vmatpush1.msra.mxu0 0.0
        %2705 = vmatprep.subr.mxu0 0.0
        %2706 = vmatpush1.msra.mxu0 0.0
        %2707 = vmatprep.subr.mxu0 0.0
        %2708 = vmatpush1.msra.mxu0 0.0
        %2709 = vmatprep.subr.mxu0 0.0
        %2710 = vmatpush1.msra.mxu0 0.0
        %2711 = vmatprep.subr.mxu0 0.0
        %2712 = vmatpush1.msra.mxu0 0.0
        %2713 = vmatprep.subr.mxu0 0.0
        %2714 = vmatpush1.msra.mxu0 0.0
        %2715 = vmatprep.subr.mxu0 0.0
        %2716 = vmatpush1.msra.mxu0 0.0
        %2717 = vmatprep.subr.mxu0 0.0
        %2718 = vmatpush1.msra.mxu0 0.0
        %2719 = vmatprep.subr.mxu0 0.0
        %2720 = vmatpush1.msra.mxu0 0.0
        %2721 = vmatprep.subr.mxu0 0.0
        %2722 = vmatpush1.msra.mxu0 0.0
        %2723 = vmatprep.subr.mxu0 0.0
        %2724 = vmatpush1.msra.mxu0 0.0
        %2725 = vmatprep.mubr.f32.mxu0 0.0
        %2726 = vmatmul.mubr.f32.gmra.mrb[0].mxu0 %v2655
        %v2727 = vpop.f32.mrb[0].mxu0
        %v2728 = vadd.f32 0.0, %v2727
        %v2729 = vpop.f32.mrb[0].mxu0
        %v2730 = vadd.f32 0.0, %v2729
        %2731 = vdwg.mxu0
        %v2733 = vsel %vm751, %v2637, 0
        %v2736 = vsel %vm755, %v2635, 0
        %v2739 = vsel %vm755, %v2636, 0
        %2741 = vmatprep.subr.mxu0 %v2739
        %2742 = vmatpush1.msra.mxu0 %v2736
        %2743 = vmatprep.subr.mxu0 0.0
        %2744 = vmatpush1.msra.mxu0 0.0
        %2745 = vmatprep.subr.mxu0 0.0
        %2746 = vmatpush1.msra.mxu0 0.0
        %2747 = vmatprep.subr.mxu0 0.0
        %2748 = vmatpush1.msra.mxu0 0.0
        %2749 = vmatprep.subr.mxu0 0.0
        %2750 = vmatpush1.msra.mxu0 0.0
        %2751 = vmatprep.subr.mxu0 0.0
        %2752 = vmatpush1.msra.mxu0 0.0
        %2753 = vmatprep.subr.mxu0 0.0
        %2754 = vmatpush1.msra.mxu0 0.0
        %2755 = vmatprep.subr.mxu0 0.0
        %2756 = vmatpush1.msra.mxu0 0.0
        %2757 = vmatprep.subr.mxu0 0.0
        %2758 = vmatpush1.msra.mxu0 0.0
        %2759 = vmatprep.subr.mxu0 0.0
        %2760 = vmatpush1.msra.mxu0 0.0
        %2761 = vmatprep.subr.mxu0 0.0
        %2762 = vmatpush1.msra.mxu0 0.0
        %2763 = vmatprep.subr.mxu0 0.0
        %2764 = vmatpush1.msra.mxu0 0.0
        %2765 = vmatprep.subr.mxu0 0.0
        %2766 = vmatpush1.msra.mxu0 0.0
        %2767 = vmatprep.subr.mxu0 0.0
        %2768 = vmatpush1.msra.mxu0 0.0
        %2769 = vmatprep.subr.mxu0 0.0
        %2770 = vmatpush1.msra.mxu0 0.0
        %2771 = vmatprep.subr.mxu0 0.0
        %2772 = vmatpush1.msra.mxu0 0.0
        %2773 = vmatprep.subr.mxu0 0.0
        %2774 = vmatpush1.msra.mxu0 0.0
        %2775 = vmatprep.subr.mxu0 0.0
        %2776 = vmatpush1.msra.mxu0 0.0
        %2777 = vmatprep.subr.mxu0 0.0
        %2778 = vmatpush1.msra.mxu0 0.0
        %2779 = vmatprep.subr.mxu0 0.0
        %2780 = vmatpush1.msra.mxu0 0.0
        %2781 = vmatprep.subr.mxu0 0.0
        %2782 = vmatpush1.msra.mxu0 0.0
        %2783 = vmatprep.subr.mxu0 0.0
        %2784 = vmatpush1.msra.mxu0 0.0
        %2785 = vmatprep.subr.mxu0 0.0
        %2786 = vmatpush1.msra.mxu0 0.0
        %2787 = vmatprep.subr.mxu0 0.0
        %2788 = vmatpush1.msra.mxu0 0.0
        %2789 = vmatprep.subr.mxu0 0.0
        %2790 = vmatpush1.msra.mxu0 0.0
        %2791 = vmatprep.subr.mxu0 0.0
        %2792 = vmatpush1.msra.mxu0 0.0
        %2793 = vmatprep.subr.mxu0 0.0
        %2794 = vmatpush1.msra.mxu0 0.0
        %2795 = vmatprep.subr.mxu0 0.0
        %2796 = vmatpush1.msra.mxu0 0.0
        %2797 = vmatprep.subr.mxu0 0.0
        %2798 = vmatpush1.msra.mxu0 0.0
        %2799 = vmatprep.subr.mxu0 0.0
        %2800 = vmatpush1.msra.mxu0 0.0
        %2801 = vmatprep.subr.mxu0 0.0
        %2802 = vmatpush1.msra.mxu0 0.0
        %2803 = vmatprep.subr.mxu0 0.0
        %2804 = vmatpush1.msra.mxu0 0.0
        %2805 = vmatprep.mubr.f32.mxu0 0.0
        %2806 = vmatmul.mubr.f32.gmra.mrb[0].mxu0 %v2733
        %v2807 = vpop.f32.mrb[0].mxu0
        %v2808 = vadd.f32 %v2728, %v2807
        %v2809 = vpop.f32.mrb[0].mxu0
        %v2810 = vadd.f32 %v2730, %v2809
        %2811 = vdwg.mxu0
        %v2812 = vmul.f32 %v2633, %v921
        %v2813 = vmul.f32 %v2629, %v925
        %v2814 = vmul.f32 %v2634, %v923
        %s2815 = scalar_lea.vmem %s13, 8
        %v2816 = vld [vmem:[%s2815] sm:$0xf]
        %2820 = vrot.lane.b32.xlu0 %v2812, 126
        %v2821 = vpop.permute.xlu0 %2820
        %2822 = vrot.lane.b32.xlu0 %v2813, 126
        %v2823 = vpop.permute.xlu0 %2822
        %2824 = vrot.lane.b32.xlu0 %v2814, 126
        %v2825 = vpop.permute.xlu0 %2824
        %v2826 = vsel %vm943, %v2821, %v2823
        %v2827 = vsel %vm943, %v2823, %v2825
        %v2829 = vsel %vm751, %v2816, 0
        %v2831 = vsel %vm755, %v2826, 0
        %v2833 = vsel %vm755, %v2827, 0
        %2835 = vmatprep.subr.mxu0 %v2833
        %2836 = vmatpush1.msra.mxu0 %v2831
        %2837 = vmatprep.subr.mxu0 0.0
        %2838 = vmatpush1.msra.mxu0 0.0
        %2839 = vmatprep.subr.mxu0 0.0
        %2840 = vmatpush1.msra.mxu0 0.0
        %2841 = vmatprep.subr.mxu0 0.0
        %2842 = vmatpush1.msra.mxu0 0.0
        %2843 = vmatprep.subr.mxu0 0.0
        %2844 = vmatpush1.msra.mxu0 0.0
        %2845 = vmatprep.subr.mxu0 0.0
        %2846 = vmatpush1.msra.mxu0 0.0
        %2847 = vmatprep.subr.mxu0 0.0
        %2848 = vmatpush1.msra.mxu0 0.0
        %2849 = vmatprep.subr.mxu0 0.0
        %2850 = vmatpush1.msra.mxu0 0.0
        %2851 = vmatprep.subr.mxu0 0.0
        %2852 = vmatpush1.msra.mxu0 0.0
        %2853 = vmatprep.subr.mxu0 0.0
        %2854 = vmatpush1.msra.mxu0 0.0
        %2855 = vmatprep.subr.mxu0 0.0
        %2856 = vmatpush1.msra.mxu0 0.0
        %2857 = vmatprep.subr.mxu0 0.0
        %2858 = vmatpush1.msra.mxu0 0.0
        %2859 = vmatprep.subr.mxu0 0.0
        %2860 = vmatpush1.msra.mxu0 0.0
        %2861 = vmatprep.subr.mxu0 0.0
        %2862 = vmatpush1.msra.mxu0 0.0
        %2863 = vmatprep.subr.mxu0 0.0
        %2864 = vmatpush1.msra.mxu0 0.0
        %2865 = vmatprep.subr.mxu0 0.0
        %2866 = vmatpush1.msra.mxu0 0.0
        %2867 = vmatprep.subr.mxu0 0.0
        %2868 = vmatpush1.msra.mxu0 0.0
        %2869 = vmatprep.subr.mxu0 0.0
        %2870 = vmatpush1.msra.mxu0 0.0
        %2871 = vmatprep.subr.mxu0 0.0
        %2872 = vmatpush1.msra.mxu0 0.0
        %2873 = vmatprep.subr.mxu0 0.0
        %2874 = vmatpush1.msra.mxu0 0.0
        %2875 = vmatprep.subr.mxu0 0.0
        %2876 = vmatpush1.msra.mxu0 0.0
        %2877 = vmatprep.subr.mxu0 0.0
        %2878 = vmatpush1.msra.mxu0 0.0
        %2879 = vmatprep.subr.mxu0 0.0
        %2880 = vmatpush1.msra.mxu0 0.0
        %2881 = vmatprep.subr.mxu0 0.0
        %2882 = vmatpush1.msra.mxu0 0.0
        %2883 = vmatprep.subr.mxu0 0.0
        %2884 = vmatpush1.msra.mxu0 0.0
        %2885 = vmatprep.subr.mxu0 0.0
        %2886 = vmatpush1.msra.mxu0 0.0
        %2887 = vmatprep.subr.mxu0 0.0
        %2888 = vmatpush1.msra.mxu0 0.0
        %2889 = vmatprep.subr.mxu0 0.0
        %2890 = vmatpush1.msra.mxu0 0.0
        %2891 = vmatprep.subr.mxu0 0.0
        %2892 = vmatpush1.msra.mxu0 0.0
        %2893 = vmatprep.subr.mxu0 0.0
        %2894 = vmatpush1.msra.mxu0 0.0
        %2895 = vmatprep.subr.mxu0 0.0
        %2896 = vmatpush1.msra.mxu0 0.0
        %2897 = vmatprep.subr.mxu0 0.0
        %2898 = vmatpush1.msra.mxu0 0.0
        %2899 = vmatprep.mubr.f32.mxu0 0.0
        %2900 = vmatmul.mubr.f32.gmra.mrb[0].mxu0 %v2829
        %v2901 = vpop.f32.mrb[0].mxu0
        %v2902 = vadd.f32 0.0, %v2901
        %v2903 = vpop.f32.mrb[0].mxu0
        %v2904 = vadd.f32 0.0, %v2903
        %2905 = vdwg.mxu0
        %v2906 = vadd.f32 %v2808, %v2902
        %v2907 = vadd.f32 %v2810, %v2904
        %v2908 = vmul.f32 %v2633, %v1036
        %v2909 = vmul.f32 %v2629, %v1040
        %v2910 = vmul.f32 %v2634, %v1038
        %s2911 = scalar_lea.vmem %s13, 12
        %v2912 = vld [vmem:[%s2911] sm:$0xf]
        %2916 = vrot.lane.b32.xlu0 %v2908, 112
        %v2917 = vpop.permute.xlu0 %2916
        %2918 = vrot.lane.b32.xlu0 %v2909, 112
        %v2919 = vpop.permute.xlu0 %2918
        %2920 = vrot.lane.b32.xlu0 %v2910, 112
        %v2921 = vpop.permute.xlu0 %2920
        %v2922 = vsel %vm1058, %v2917, %v2919
        %v2923 = vsel %vm1058, %v2919, %v2921
        %v2925 = vsel %vm751, %v2912, 0
        %v2927 = vsel %vm755, %v2922, 0
        %v2929 = vsel %vm755, %v2923, 0
        %2931 = vmatprep.subr.mxu0 %v2929
        %2932 = vmatpush1.msra.mxu0 %v2927
        %2933 = vmatprep.subr.mxu0 0.0
        %2934 = vmatpush1.msra.mxu0 0.0
        %2935 = vmatprep.subr.mxu0 0.0
        %2936 = vmatpush1.msra.mxu0 0.0
        %2937 = vmatprep.subr.mxu0 0.0
        %2938 = vmatpush1.msra.mxu0 0.0
        %2939 = vmatprep.subr.mxu0 0.0
        %2940 = vmatpush1.msra.mxu0 0.0
        %2941 = vmatprep.subr.mxu0 0.0
        %2942 = vmatpush1.msra.mxu0 0.0
        %2943 = vmatprep.subr.mxu0 0.0
        %2944 = vmatpush1.msra.mxu0 0.0
        %2945 = vmatprep.subr.mxu0 0.0
        %2946 = vmatpush1.msra.mxu0 0.0
        %2947 = vmatprep.subr.mxu0 0.0
        %2948 = vmatpush1.msra.mxu0 0.0
        %2949 = vmatprep.subr.mxu0 0.0
        %2950 = vmatpush1.msra.mxu0 0.0
        %2951 = vmatprep.subr.mxu0 0.0
        %2952 = vmatpush1.msra.mxu0 0.0
        %2953 = vmatprep.subr.mxu0 0.0
        %2954 = vmatpush1.msra.mxu0 0.0
        %2955 = vmatprep.subr.mxu0 0.0
        %2956 = vmatpush1.msra.mxu0 0.0
        %2957 = vmatprep.subr.mxu0 0.0
        %2958 = vmatpush1.msra.mxu0 0.0
        %2959 = vmatprep.subr.mxu0 0.0
        %2960 = vmatpush1.msra.mxu0 0.0
        %2961 = vmatprep.subr.mxu0 0.0
        %2962 = vmatpush1.msra.mxu0 0.0
        %2963 = vmatprep.subr.mxu0 0.0
        %2964 = vmatpush1.msra.mxu0 0.0
        %2965 = vmatprep.subr.mxu0 0.0
        %2966 = vmatpush1.msra.mxu0 0.0
        %2967 = vmatprep.subr.mxu0 0.0
        %2968 = vmatpush1.msra.mxu0 0.0
        %2969 = vmatprep.subr.mxu0 0.0
        %2970 = vmatpush1.msra.mxu0 0.0
        %2971 = vmatprep.subr.mxu0 0.0
        %2972 = vmatpush1.msra.mxu0 0.0
        %2973 = vmatprep.subr.mxu0 0.0
        %2974 = vmatpush1.msra.mxu0 0.0
        %2975 = vmatprep.subr.mxu0 0.0
        %2976 = vmatpush1.msra.mxu0 0.0
        %2977 = vmatprep.subr.mxu0 0.0
        %2978 = vmatpush1.msra.mxu0 0.0
        %2979 = vmatprep.subr.mxu0 0.0
        %2980 = vmatpush1.msra.mxu0 0.0
        %2981 = vmatprep.subr.mxu0 0.0
        %2982 = vmatpush1.msra.mxu0 0.0
        %2983 = vmatprep.subr.mxu0 0.0
        %2984 = vmatpush1.msra.mxu0 0.0
        %2985 = vmatprep.subr.mxu0 0.0
        %2986 = vmatpush1.msra.mxu0 0.0
        %2987 = vmatprep.subr.mxu0 0.0
        %2988 = vmatpush1.msra.mxu0 0.0
        %2989 = vmatprep.subr.mxu0 0.0
        %2990 = vmatpush1.msra.mxu0 0.0
        %2991 = vmatprep.subr.mxu0 0.0
        %2992 = vmatpush1.msra.mxu0 0.0
        %2993 = vmatprep.subr.mxu0 0.0
        %2994 = vmatpush1.msra.mxu0 0.0
        %2995 = vmatprep.mubr.f32.mxu0 0.0
        %2996 = vmatmul.mubr.f32.gmra.mrb[0].mxu0 %v2925
        %v2997 = vpop.f32.mrb[0].mxu0
        %v2998 = vadd.f32 0.0, %v2997
        %v2999 = vpop.f32.mrb[0].mxu0
        %v3000 = vadd.f32 0.0, %v2999
        %3001 = vdwg.mxu0
        %v3002 = vadd.f32 %v2906, %v2998
        %v3003 = vadd.f32 %v2907, %v3000
        %s3004 = scalar_lea.vmem %s13, 16
        %v3005 = vld [vmem:[%s3004] sm:$0xf]
        %3008 = vrot.lane.b32.xlu0 %v2633, 111
        %v3009 = vpop.permute.xlu0 %3008
        %3010 = vrot.lane.b32.xlu0 %v2629, 111
        %v3011 = vpop.permute.xlu0 %3010
        %3012 = vrot.lane.b32.xlu0 %v2634, 111
        %v3013 = vpop.permute.xlu0 %3012
        %v3014 = vsel %vm1151, %v3009, %v3011
        %v3015 = vsel %vm1151, %v3011, %v3013
        %v3017 = vsel %vm751, %v3005, 0
        %v3019 = vsel %vm755, %v3014, 0
        %v3021 = vsel %vm755, %v3015, 0
        %3023 = vmatprep.subr.mxu0 %v3021
        %3024 = vmatpush1.msra.mxu0 %v3019
        %3025 = vmatprep.subr.mxu0 0.0
        %3026 = vmatpush1.msra.mxu0 0.0
        %3027 = vmatprep.subr.mxu0 0.0
        %3028 = vmatpush1.msra.mxu0 0.0
        %3029 = vmatprep.subr.mxu0 0.0
        %3030 = vmatpush1.msra.mxu0 0.0
        %3031 = vmatprep.subr.mxu0 0.0
        %3032 = vmatpush1.msra.mxu0 0.0
        %3033 = vmatprep.subr.mxu0 0.0
        %3034 = vmatpush1.msra.mxu0 0.0
        %3035 = vmatprep.subr.mxu0 0.0
        %3036 = vmatpush1.msra.mxu0 0.0
        %3037 = vmatprep.subr.mxu0 0.0
        %3038 = vmatpush1.msra.mxu0 0.0
        %3039 = vmatprep.subr.mxu0 0.0
        %3040 = vmatpush1.msra.mxu0 0.0
        %3041 = vmatprep.subr.mxu0 0.0
        %3042 = vmatpush1.msra.mxu0 0.0
        %3043 = vmatprep.subr.mxu0 0.0
        %3044 = vmatpush1.msra.mxu0 0.0
        %3045 = vmatprep.subr.mxu0 0.0
        %3046 = vmatpush1.msra.mxu0 0.0
        %3047 = vmatprep.subr.mxu0 0.0
        %3048 = vmatpush1.msra.mxu0 0.0
        %3049 = vmatprep.subr.mxu0 0.0
        %3050 = vmatpush1.msra.mxu0 0.0
        %3051 = vmatprep.subr.mxu0 0.0
        %3052 = vmatpush1.msra.mxu0 0.0
        %3053 = vmatprep.subr.mxu0 0.0
        %3054 = vmatpush1.msra.mxu0 0.0
        %3055 = vmatprep.subr.mxu0 0.0
        %3056 = vmatpush1.msra.mxu0 0.0
        %3057 = vmatprep.subr.mxu0 0.0
        %3058 = vmatpush1.msra.mxu0 0.0
        %3059 = vmatprep.subr.mxu0 0.0
        %3060 = vmatpush1.msra.mxu0 0.0
        %3061 = vmatprep.subr.mxu0 0.0
        %3062 = vmatpush1.msra.mxu0 0.0
        %3063 = vmatprep.subr.mxu0 0.0
        %3064 = vmatpush1.msra.mxu0 0.0
        %3065 = vmatprep.subr.mxu0 0.0
        %3066 = vmatpush1.msra.mxu0 0.0
        %3067 = vmatprep.subr.mxu0 0.0
        %3068 = vmatpush1.msra.mxu0 0.0
        %3069 = vmatprep.subr.mxu0 0.0
        %3070 = vmatpush1.msra.mxu0 0.0
        %3071 = vmatprep.subr.mxu0 0.0
        %3072 = vmatpush1.msra.mxu0 0.0
        %3073 = vmatprep.subr.mxu0 0.0
        %3074 = vmatpush1.msra.mxu0 0.0
        %3075 = vmatprep.subr.mxu0 0.0
        %3076 = vmatpush1.msra.mxu0 0.0
        %3077 = vmatprep.subr.mxu0 0.0
        %3078 = vmatpush1.msra.mxu0 0.0
        %3079 = vmatprep.subr.mxu0 0.0
        %3080 = vmatpush1.msra.mxu0 0.0
        %3081 = vmatprep.subr.mxu0 0.0
        %3082 = vmatpush1.msra.mxu0 0.0
        %3083 = vmatprep.subr.mxu0 0.0
        %3084 = vmatpush1.msra.mxu0 0.0
        %3085 = vmatprep.subr.mxu0 0.0
        %3086 = vmatpush1.msra.mxu0 0.0
        %3087 = vmatprep.mubr.f32.mxu0 0.0
        %3088 = vmatmul.mubr.f32.gmra.mrb[0].mxu0 %v3017
        %v3089 = vpop.f32.mrb[0].mxu0
        %v3090 = vadd.f32 0.0, %v3089
        %v3091 = vpop.f32.mrb[0].mxu0
        %v3092 = vadd.f32 0.0, %v3091
        %3093 = vdwg.mxu0
        %v3094 = vadd.f32 %v3002, %v3090
        %v3095 = vadd.f32 %v3003, %v3092
        %v3096 = vmul.f32 %v2633, %v1244
        %v3097 = vmul.f32 %v2629, %v1248
        %v3098 = vmul.f32 %v2634, %v1246
        %s3099 = scalar_lea.vmem %s13, 20
        %v3100 = vld [vmem:[%s3099] sm:$0xf]
        %3104 = vrot.lane.b32.xlu0 %v3096, 110
        %v3105 = vpop.permute.xlu0 %3104
        %3106 = vrot.lane.b32.xlu0 %v3097, 110
        %v3107 = vpop.permute.xlu0 %3106
        %3108 = vrot.lane.b32.xlu0 %v3098, 110
        %v3109 = vpop.permute.xlu0 %3108
        %v3110 = vsel %vm1266, %v3105, %v3107
        %v3111 = vsel %vm1266, %v3107, %v3109
        %v3113 = vsel %vm751, %v3100, 0
        %v3115 = vsel %vm755, %v3110, 0
        %v3117 = vsel %vm755, %v3111, 0
        %3119 = vmatprep.subr.mxu0 %v3117
        %3120 = vmatpush1.msra.mxu0 %v3115
        %3121 = vmatprep.subr.mxu0 0.0
        %3122 = vmatpush1.msra.mxu0 0.0
        %3123 = vmatprep.subr.mxu0 0.0
        %3124 = vmatpush1.msra.mxu0 0.0
        %3125 = vmatprep.subr.mxu0 0.0
        %3126 = vmatpush1.msra.mxu0 0.0
        %3127 = vmatprep.subr.mxu0 0.0
        %3128 = vmatpush1.msra.mxu0 0.0
        %3129 = vmatprep.subr.mxu0 0.0
        %3130 = vmatpush1.msra.mxu0 0.0
        %3131 = vmatprep.subr.mxu0 0.0
        %3132 = vmatpush1.msra.mxu0 0.0
        %3133 = vmatprep.subr.mxu0 0.0
        %3134 = vmatpush1.msra.mxu0 0.0
        %3135 = vmatprep.subr.mxu0 0.0
        %3136 = vmatpush1.msra.mxu0 0.0
        %3137 = vmatprep.subr.mxu0 0.0
        %3138 = vmatpush1.msra.mxu0 0.0
        %3139 = vmatprep.subr.mxu0 0.0
        %3140 = vmatpush1.msra.mxu0 0.0
        %3141 = vmatprep.subr.mxu0 0.0
        %3142 = vmatpush1.msra.mxu0 0.0
        %3143 = vmatprep.subr.mxu0 0.0
        %3144 = vmatpush1.msra.mxu0 0.0
        %3145 = vmatprep.subr.mxu0 0.0
        %3146 = vmatpush1.msra.mxu0 0.0
        %3147 = vmatprep.subr.mxu0 0.0
        %3148 = vmatpush1.msra.mxu0 0.0
        %3149 = vmatprep.subr.mxu0 0.0
        %3150 = vmatpush1.msra.mxu0 0.0
        %3151 = vmatprep.subr.mxu0 0.0
        %3152 = vmatpush1.msra.mxu0 0.0
        %3153 = vmatprep.subr.mxu0 0.0
        %3154 = vmatpush1.msra.mxu0 0.0
        %3155 = vmatprep.subr.mxu0 0.0
        %3156 = vmatpush1.msra.mxu0 0.0
        %3157 = vmatprep.subr.mxu0 0.0
        %3158 = vmatpush1.msra.mxu0 0.0
        %3159 = vmatprep.subr.mxu0 0.0
        %3160 = vmatpush1.msra.mxu0 0.0
        %3161 = vmatprep.subr.mxu0 0.0
        %3162 = vmatpush1.msra.mxu0 0.0
        %3163 = vmatprep.subr.mxu0 0.0
        %3164 = vmatpush1.msra.mxu0 0.0
        %3165 = vmatprep.subr.mxu0 0.0
        %3166 = vmatpush1.msra.mxu0 0.0
        %3167 = vmatprep.subr.mxu0 0.0
        %3168 = vmatpush1.msra.mxu0 0.0
        %3169 = vmatprep.subr.mxu0 0.0
        %3170 = vmatpush1.msra.mxu0 0.0
        %3171 = vmatprep.subr.mxu0 0.0
        %3172 = vmatpush1.msra.mxu0 0.0
        %3173 = vmatprep.subr.mxu0 0.0
        %3174 = vmatpush1.msra.mxu0 0.0
        %3175 = vmatprep.subr.mxu0 0.0
        %3176 = vmatpush1.msra.mxu0 0.0
        %3177 = vmatprep.subr.mxu0 0.0
        %3178 = vmatpush1.msra.mxu0 0.0
        %3179 = vmatprep.subr.mxu0 0.0
        %3180 = vmatpush1.msra.mxu0 0.0
        %3181 = vmatprep.subr.mxu0 0.0
        %3182 = vmatpush1.msra.mxu0 0.0
        %3183 = vmatprep.mubr.f32.mxu0 0.0
        %3184 = vmatmul.mubr.f32.gmra.mrb[0].mxu0 %v3113
        %v3185 = vpop.f32.mrb[0].mxu0
        %v3186 = vadd.f32 0.0, %v3185
        %v3187 = vpop.f32.mrb[0].mxu0
        %v3188 = vadd.f32 0.0, %v3187
        %3189 = vdwg.mxu0
        %v3190 = vadd.f32 %v3094, %v3186
        %v3191 = vadd.f32 %v3095, %v3188
        %v3192 = vmul.f32 %v2633, %v1359
        %v3193 = vmul.f32 %v2629, %v1363
        %v3194 = vmul.f32 %v2634, %v1361
        %s3195 = scalar_lea.vmem %s13, 24
        %v3196 = vld [vmem:[%s3195] sm:$0xf]
        %3200 = vrot.lane.b32.xlu0 %v3192, 96
        %v3201 = vpop.permute.xlu0 %3200
        %3202 = vrot.lane.b32.xlu0 %v3193, 96
        %v3203 = vpop.permute.xlu0 %3202
        %3204 = vrot.lane.b32.xlu0 %v3194, 96
        %v3205 = vpop.permute.xlu0 %3204
        %v3206 = vsel %vm1381, %v3201, %v3203
        %v3207 = vsel %vm1381, %v3203, %v3205
        %v3209 = vsel %vm751, %v3196, 0
        %v3211 = vsel %vm755, %v3206, 0
        %v3213 = vsel %vm755, %v3207, 0
        %3215 = vmatprep.subr.mxu0 %v3213
        %3216 = vmatpush1.msra.mxu0 %v3211
        %3217 = vmatprep.subr.mxu0 0.0
        %3218 = vmatpush1.msra.mxu0 0.0
        %3219 = vmatprep.subr.mxu0 0.0
        %3220 = vmatpush1.msra.mxu0 0.0
        %3221 = vmatprep.subr.mxu0 0.0
        %3222 = vmatpush1.msra.mxu0 0.0
        %3223 = vmatprep.subr.mxu0 0.0
        %3224 = vmatpush1.msra.mxu0 0.0
        %3225 = vmatprep.subr.mxu0 0.0
        %3226 = vmatpush1.msra.mxu0 0.0
        %3227 = vmatprep.subr.mxu0 0.0
        %3228 = vmatpush1.msra.mxu0 0.0
        %3229 = vmatprep.subr.mxu0 0.0
        %3230 = vmatpush1.msra.mxu0 0.0
        %3231 = vmatprep.subr.mxu0 0.0
        %3232 = vmatpush1.msra.mxu0 0.0
        %3233 = vmatprep.subr.mxu0 0.0
        %3234 = vmatpush1.msra.mxu0 0.0
        %3235 = vmatprep.subr.mxu0 0.0
        %3236 = vmatpush1.msra.mxu0 0.0
        %3237 = vmatprep.subr.mxu0 0.0
        %3238 = vmatpush1.msra.mxu0 0.0
        %3239 = vmatprep.subr.mxu0 0.0
        %3240 = vmatpush1.msra.mxu0 0.0
        %3241 = vmatprep.subr.mxu0 0.0
        %3242 = vmatpush1.msra.mxu0 0.0
        %3243 = vmatprep.subr.mxu0 0.0
        %3244 = vmatpush1.msra.mxu0 0.0
        %3245 = vmatprep.subr.mxu0 0.0
        %3246 = vmatpush1.msra.mxu0 0.0
        %3247 = vmatprep.subr.mxu0 0.0
        %3248 = vmatpush1.msra.mxu0 0.0
        %3249 = vmatprep.subr.mxu0 0.0
        %3250 = vmatpush1.msra.mxu0 0.0
        %3251 = vmatprep.subr.mxu0 0.0
        %3252 = vmatpush1.msra.mxu0 0.0
        %3253 = vmatprep.subr.mxu0 0.0
        %3254 = vmatpush1.msra.mxu0 0.0
        %3255 = vmatprep.subr.mxu0 0.0
        %3256 = vmatpush1.msra.mxu0 0.0
        %3257 = vmatprep.subr.mxu0 0.0
        %3258 = vmatpush1.msra.mxu0 0.0
        %3259 = vmatprep.subr.mxu0 0.0
        %3260 = vmatpush1.msra.mxu0 0.0
        %3261 = vmatprep.subr.mxu0 0.0
        %3262 = vmatpush1.msra.mxu0 0.0
        %3263 = vmatprep.subr.mxu0 0.0
        %3264 = vmatpush1.msra.mxu0 0.0
        %3265 = vmatprep.subr.mxu0 0.0
        %3266 = vmatpush1.msra.mxu0 0.0
        %3267 = vmatprep.subr.mxu0 0.0
        %3268 = vmatpush1.msra.mxu0 0.0
        %3269 = vmatprep.subr.mxu0 0.0
        %3270 = vmatpush1.msra.mxu0 0.0
        %3271 = vmatprep.subr.mxu0 0.0
        %3272 = vmatpush1.msra.mxu0 0.0
        %3273 = vmatprep.subr.mxu0 0.0
        %3274 = vmatpush1.msra.mxu0 0.0
        %3275 = vmatprep.subr.mxu0 0.0
        %3276 = vmatpush1.msra.mxu0 0.0
        %3277 = vmatprep.subr.mxu0 0.0
        %3278 = vmatpush1.msra.mxu0 0.0
        %3279 = vmatprep.mubr.f32.mxu0 0.0
        %3280 = vmatmul.mubr.f32.gmra.mrb[0].mxu0 %v3209
        %v3281 = vpop.f32.mrb[0].mxu0
        %v3282 = vadd.f32 0.0, %v3281
        %v3283 = vpop.f32.mrb[0].mxu0
        %v3284 = vadd.f32 0.0, %v3283
        %3285 = vdwg.mxu0
        %v3286 = vadd.f32 %v3190, %v3282
        %v3287 = vadd.f32 %v3191, %v3284
        %v3288 = vmul.f32 %v2633, %v1474
        %v3289 = vmul.f32 %v2629, %v1478
        %v3290 = vmul.f32 %v2634, %v1476
        %s3291 = scalar_lea.vmem %s13, 28
        %v3292 = vld [vmem:[%s3291] sm:$0xf]
        %3296 = vrot.lane.b32.xlu0 %v3288, 95
        %v3297 = vpop.permute.xlu0 %3296
        %3298 = vrot.lane.b32.xlu0 %v3289, 95
        %v3299 = vpop.permute.xlu0 %3298
        %3300 = vrot.lane.b32.xlu0 %v3290, 95
        %v3301 = vpop.permute.xlu0 %3300
        %v3302 = vsel %vm1496, %v3297, %v3299
        %v3303 = vsel %vm1496, %v3299, %v3301
        %v3305 = vsel %vm751, %v3292, 0
        %v3307 = vsel %vm755, %v3302, 0
        %v3309 = vsel %vm755, %v3303, 0
        %3311 = vmatprep.subr.mxu0 %v3309
        %3312 = vmatpush1.msra.mxu0 %v3307
        %3313 = vmatprep.subr.mxu0 0.0
        %3314 = vmatpush1.msra.mxu0 0.0
        %3315 = vmatprep.subr.mxu0 0.0
        %3316 = vmatpush1.msra.mxu0 0.0
        %3317 = vmatprep.subr.mxu0 0.0
        %3318 = vmatpush1.msra.mxu0 0.0
        %3319 = vmatprep.subr.mxu0 0.0
        %3320 = vmatpush1.msra.mxu0 0.0
        %3321 = vmatprep.subr.mxu0 0.0
        %3322 = vmatpush1.msra.mxu0 0.0
        %3323 = vmatprep.subr.mxu0 0.0
        %3324 = vmatpush1.msra.mxu0 0.0
        %3325 = vmatprep.subr.mxu0 0.0
        %3326 = vmatpush1.msra.mxu0 0.0
        %3327 = vmatprep.subr.mxu0 0.0
        %3328 = vmatpush1.msra.mxu0 0.0
        %3329 = vmatprep.subr.mxu0 0.0
        %3330 = vmatpush1.msra.mxu0 0.0
        %3331 = vmatprep.subr.mxu0 0.0
        %3332 = vmatpush1.msra.mxu0 0.0
        %3333 = vmatprep.subr.mxu0 0.0
        %3334 = vmatpush1.msra.mxu0 0.0
        %3335 = vmatprep.subr.mxu0 0.0
        %3336 = vmatpush1.msra.mxu0 0.0
        %3337 = vmatprep.subr.mxu0 0.0
        %3338 = vmatpush1.msra.mxu0 0.0
        %3339 = vmatprep.subr.mxu0 0.0
        %3340 = vmatpush1.msra.mxu0 0.0
        %3341 = vmatprep.subr.mxu0 0.0
        %3342 = vmatpush1.msra.mxu0 0.0
        %3343 = vmatprep.subr.mxu0 0.0
        %3344 = vmatpush1.msra.mxu0 0.0
        %3345 = vmatprep.subr.mxu0 0.0
        %3346 = vmatpush1.msra.mxu0 0.0
        %3347 = vmatprep.subr.mxu0 0.0
        %3348 = vmatpush1.msra.mxu0 0.0
        %3349 = vmatprep.subr.mxu0 0.0
        %3350 = vmatpush1.msra.mxu0 0.0
        %3351 = vmatprep.subr.mxu0 0.0
        %3352 = vmatpush1.msra.mxu0 0.0
        %3353 = vmatprep.subr.mxu0 0.0
        %3354 = vmatpush1.msra.mxu0 0.0
        %3355 = vmatprep.subr.mxu0 0.0
        %3356 = vmatpush1.msra.mxu0 0.0
        %3357 = vmatprep.subr.mxu0 0.0
        %3358 = vmatpush1.msra.mxu0 0.0
        %3359 = vmatprep.subr.mxu0 0.0
        %3360 = vmatpush1.msra.mxu0 0.0
        %3361 = vmatprep.subr.mxu0 0.0
        %3362 = vmatpush1.msra.mxu0 0.0
        %3363 = vmatprep.subr.mxu0 0.0
        %3364 = vmatpush1.msra.mxu0 0.0
        %3365 = vmatprep.subr.mxu0 0.0
        %3366 = vmatpush1.msra.mxu0 0.0
        %3367 = vmatprep.subr.mxu0 0.0
        %3368 = vmatpush1.msra.mxu0 0.0
        %3369 = vmatprep.subr.mxu0 0.0
        %3370 = vmatpush1.msra.mxu0 0.0
        %3371 = vmatprep.subr.mxu0 0.0
        %3372 = vmatpush1.msra.mxu0 0.0
        %3373 = vmatprep.subr.mxu0 0.0
        %3374 = vmatpush1.msra.mxu0 0.0
        %3375 = vmatprep.mubr.f32.mxu0 0.0
        %3376 = vmatmul.mubr.f32.gmra.mrb[0].mxu0 %v3305
        %v3377 = vpop.f32.mrb[0].mxu0
        %v3378 = vadd.f32 0.0, %v3377
        %v3379 = vpop.f32.mrb[0].mxu0
        %v3380 = vadd.f32 0.0, %v3379
        %3381 = vdwg.mxu0
        %v3382 = vadd.f32 %v3286, %v3378
        %v3383 = vadd.f32 %v3287, %v3380
        %v3384 = vmul.f32 %v2633, %v1589
        %v3385 = vmul.f32 %v2629, %v1593
        %v3386 = vmul.f32 %v2634, %v1591
        %s3387 = scalar_lea.vmem %s13, 32
        %v3388 = vld [vmem:[%s3387] sm:$0xf]
        %3392 = vrot.lane.b32.xlu0 %v3384, 94
        %v3393 = vpop.permute.xlu0 %3392
        %3394 = vrot.lane.b32.xlu0 %v3385, 94
        %v3395 = vpop.permute.xlu0 %3394
        %3396 = vrot.lane.b32.xlu0 %v3386, 94
        %v3397 = vpop.permute.xlu0 %3396
        %v3398 = vsel %vm1611, %v3393, %v3395
        %v3399 = vsel %vm1611, %v3395, %v3397
        %v3401 = vsel %vm751, %v3388, 0
        %v3403 = vsel %vm755, %v3398, 0
        %v3405 = vsel %vm755, %v3399, 0
        %3407 = vmatprep.subr.mxu0 %v3405
        %3408 = vmatpush1.msra.mxu0 %v3403
        %3409 = vmatprep.subr.mxu0 0.0
        %3410 = vmatpush1.msra.mxu0 0.0
        %3411 = vmatprep.subr.mxu0 0.0
        %3412 = vmatpush1.msra.mxu0 0.0
        %3413 = vmatprep.subr.mxu0 0.0
        %3414 = vmatpush1.msra.mxu0 0.0
        %3415 = vmatprep.subr.mxu0 0.0
        %3416 = vmatpush1.msra.mxu0 0.0
        %3417 = vmatprep.subr.mxu0 0.0
        %3418 = vmatpush1.msra.mxu0 0.0
        %3419 = vmatprep.subr.mxu0 0.0
        %3420 = vmatpush1.msra.mxu0 0.0
        %3421 = vmatprep.subr.mxu0 0.0
        %3422 = vmatpush1.msra.mxu0 0.0
        %3423 = vmatprep.subr.mxu0 0.0
        %3424 = vmatpush1.msra.mxu0 0.0
        %3425 = vmatprep.subr.mxu0 0.0
        %3426 = vmatpush1.msra.mxu0 0.0
        %3427 = vmatprep.subr.mxu0 0.0
        %3428 = vmatpush1.msra.mxu0 0.0
        %3429 = vmatprep.subr.mxu0 0.0
        %3430 = vmatpush1.msra.mxu0 0.0
        %3431 = vmatprep.subr.mxu0 0.0
        %3432 = vmatpush1.msra.mxu0 0.0
        %3433 = vmatprep.subr.mxu0 0.0
        %3434 = vmatpush1.msra.mxu0 0.0
        %3435 = vmatprep.subr.mxu0 0.0
        %3436 = vmatpush1.msra.mxu0 0.0
        %3437 = vmatprep.subr.mxu0 0.0
        %3438 = vmatpush1.msra.mxu0 0.0
        %3439 = vmatprep.subr.mxu0 0.0
        %3440 = vmatpush1.msra.mxu0 0.0
        %3441 = vmatprep.subr.mxu0 0.0
        %3442 = vmatpush1.msra.mxu0 0.0
        %3443 = vmatprep.subr.mxu0 0.0
        %3444 = vmatpush1.msra.mxu0 0.0
        %3445 = vmatprep.subr.mxu0 0.0
        %3446 = vmatpush1.msra.mxu0 0.0
        %3447 = vmatprep.subr.mxu0 0.0
        %3448 = vmatpush1.msra.mxu0 0.0
        %3449 = vmatprep.subr.mxu0 0.0
        %3450 = vmatpush1.msra.mxu0 0.0
        %3451 = vmatprep.subr.mxu0 0.0
        %3452 = vmatpush1.msra.mxu0 0.0
        %3453 = vmatprep.subr.mxu0 0.0
        %3454 = vmatpush1.msra.mxu0 0.0
        %3455 = vmatprep.subr.mxu0 0.0
        %3456 = vmatpush1.msra.mxu0 0.0
        %3457 = vmatprep.subr.mxu0 0.0
        %3458 = vmatpush1.msra.mxu0 0.0
        %3459 = vmatprep.subr.mxu0 0.0
        %3460 = vmatpush1.msra.mxu0 0.0
        %3461 = vmatprep.subr.mxu0 0.0
        %3462 = vmatpush1.msra.mxu0 0.0
        %3463 = vmatprep.subr.mxu0 0.0
        %3464 = vmatpush1.msra.mxu0 0.0
        %3465 = vmatprep.subr.mxu0 0.0
        %3466 = vmatpush1.msra.mxu0 0.0
        %3467 = vmatprep.subr.mxu0 0.0
        %3468 = vmatpush1.msra.mxu0 0.0
        %3469 = vmatprep.subr.mxu0 0.0
        %3470 = vmatpush1.msra.mxu0 0.0
        %3471 = vmatprep.mubr.f32.mxu0 0.0
        %3472 = vmatmul.mubr.f32.gmra.mrb[0].mxu0 %v3401
        %v3473 = vpop.f32.mrb[0].mxu0
        %v3474 = vadd.f32 0.0, %v3473
        %v3475 = vpop.f32.mrb[0].mxu0
        %v3476 = vadd.f32 0.0, %v3475
        %3477 = vdwg.mxu0
        %v3478 = vadd.f32 %v3382, %v3474
        %v3479 = vadd.f32 %v3383, %v3476
        %v3480 = vld [vmem:[%s14] sm:$0xf]
        %3482 = vset.pattern.permute.xlu0 0
        %3483 = vperm.xlu0 %3482, %v3480
        %v3484 = vpop.permute.xlu0 %3483
        %v3486 = vadd.f32 %v3478, %v3484
        %v3487 = vadd.f32 %v3479, %v3484
        %v3488 = vld [vmem:[%s9] sm:$0xf]
        %s3489 = scalar_lea.vmem %s9, 4
        %v3490 = vld [vmem:[%s3489] sm:$0xf]
        %v3492 = vsel %vm751, %v3490, 0
        %3494 = vmatprep.subr.mxu0 %v758
        %3495 = vmatpush1.msra.mxu0 %v756
        %3496 = vmatprep.subr.mxu0 0.0
        %3497 = vmatpush1.msra.mxu0 0.0
        %3498 = vmatprep.subr.mxu0 0.0
        %3499 = vmatpush1.msra.mxu0 0.0
        %3500 = vmatprep.subr.mxu0 0.0
        %3501 = vmatpush1.msra.mxu0 0.0
        %3502 = vmatprep.subr.mxu0 0.0
        %3503 = vmatpush1.msra.mxu0 0.0
        %3504 = vmatprep.subr.mxu0 0.0
        %3505 = vmatpush1.msra.mxu0 0.0
        %3506 = vmatprep.subr.mxu0 0.0
        %3507 = vmatpush1.msra.mxu0 0.0
        %3508 = vmatprep.subr.mxu0 0.0
        %3509 = vmatpush1.msra.mxu0 0.0
        %3510 = vmatprep.subr.mxu0 0.0
        %3511 = vmatpush1.msra.mxu0 0.0
        %3512 = vmatprep.subr.mxu0 0.0
        %3513 = vmatpush1.msra.mxu0 0.0
        %3514 = vmatprep.subr.mxu0 0.0
        %3515 = vmatpush1.msra.mxu0 0.0
        %3516 = vmatprep.subr.mxu0 0.0
        %3517 = vmatpush1.msra.mxu0 0.0
        %3518 = vmatprep.subr.mxu0 0.0
        %3519 = vmatpush1.msra.mxu0 0.0
        %3520 = vmatprep.subr.mxu0 0.0
        %3521 = vmatpush1.msra.mxu0 0.0
        %3522 = vmatprep.subr.mxu0 0.0
        %3523 = vmatpush1.msra.mxu0 0.0
        %3524 = vmatprep.subr.mxu0 0.0
        %3525 = vmatpush1.msra.mxu0 0.0
        %3526 = vmatprep.subr.mxu0 0.0
        %3527 = vmatpush1.msra.mxu0 0.0
        %3528 = vmatprep.subr.mxu0 0.0
        %3529 = vmatpush1.msra.mxu0 0.0
        %3530 = vmatprep.subr.mxu0 0.0
        %3531 = vmatpush1.msra.mxu0 0.0
        %3532 = vmatprep.subr.mxu0 0.0
        %3533 = vmatpush1.msra.mxu0 0.0
        %3534 = vmatprep.subr.mxu0 0.0
        %3535 = vmatpush1.msra.mxu0 0.0
        %3536 = vmatprep.subr.mxu0 0.0
        %3537 = vmatpush1.msra.mxu0 0.0
        %3538 = vmatprep.subr.mxu0 0.0
        %3539 = vmatpush1.msra.mxu0 0.0
        %3540 = vmatprep.subr.mxu0 0.0
        %3541 = vmatpush1.msra.mxu0 0.0
        %3542 = vmatprep.subr.mxu0 0.0
        %3543 = vmatpush1.msra.mxu0 0.0
        %3544 = vmatprep.subr.mxu0 0.0
        %3545 = vmatpush1.msra.mxu0 0.0
        %3546 = vmatprep.subr.mxu0 0.0
        %3547 = vmatpush1.msra.mxu0 0.0
        %3548 = vmatprep.subr.mxu0 0.0
        %3549 = vmatpush1.msra.mxu0 0.0
        %3550 = vmatprep.subr.mxu0 0.0
        %3551 = vmatpush1.msra.mxu0 0.0
        %3552 = vmatprep.subr.mxu0 0.0
        %3553 = vmatpush1.msra.mxu0 0.0
        %3554 = vmatprep.subr.mxu0 0.0
        %3555 = vmatpush1.msra.mxu0 0.0
        %3556 = vmatprep.subr.mxu0 0.0
        %3557 = vmatpush1.msra.mxu0 0.0
        %3558 = vmatprep.mubr.f32.mxu0 0.0
        %3559 = vmatmul.mubr.f32.gmra.mrb[0].mxu0 %v3492
        %v3560 = vpop.f32.mrb[0].mxu0
        %v3561 = vadd.f32 0.0, %v3560
        %v3562 = vpop.f32.mrb[0].mxu0
        %v3563 = vadd.f32 0.0, %v3562
        %3564 = vdwg.mxu0
        %v3566 = vsel %vm751, %v3488, 0
        %3568 = vmatprep.subr.mxu0 %v838
        %3569 = vmatpush1.msra.mxu0 %v835
        %3570 = vmatprep.subr.mxu0 0.0
        %3571 = vmatpush1.msra.mxu0 0.0
        %3572 = vmatprep.subr.mxu0 0.0
        %3573 = vmatpush1.msra.mxu0 0.0
        %3574 = vmatprep.subr.mxu0 0.0
        %3575 = vmatpush1.msra.mxu0 0.0
        %3576 = vmatprep.subr.mxu0 0.0
        %3577 = vmatpush1.msra.mxu0 0.0
        %3578 = vmatprep.subr.mxu0 0.0
        %3579 = vmatpush1.msra.mxu0 0.0
        %3580 = vmatprep.subr.mxu0 0.0
        %3581 = vmatpush1.msra.mxu0 0.0
        %3582 = vmatprep.subr.mxu0 0.0
        %3583 = vmatpush1.msra.mxu0 0.0
        %3584 = vmatprep.subr.mxu0 0.0
        %3585 = vmatpush1.msra.mxu0 0.0
        %3586 = vmatprep.subr.mxu0 0.0
        %3587 = vmatpush1.msra.mxu0 0.0
        %3588 = vmatprep.subr.mxu0 0.0
        %3589 = vmatpush1.msra.mxu0 0.0
        %3590 = vmatprep.subr.mxu0 0.0
        %3591 = vmatpush1.msra.mxu0 0.0
        %3592 = vmatprep.subr.mxu0 0.0
        %3593 = vmatpush1.msra.mxu0 0.0
        %3594 = vmatprep.subr.mxu0 0.0
        %3595 = vmatpush1.msra.mxu0 0.0
        %3596 = vmatprep.subr.mxu0 0.0
        %3597 = vmatpush1.msra.mxu0 0.0
        %3598 = vmatprep.subr.mxu0 0.0
        %3599 = vmatpush1.msra.mxu0 0.0
        %3600 = vmatprep.subr.mxu0 0.0
        %3601 = vmatpush1.msra.mxu0 0.0
        %3602 = vmatprep.subr.mxu0 0.0
        %3603 = vmatpush1.msra.mxu0 0.0
        %3604 = vmatprep.subr.mxu0 0.0
        %3605 = vmatpush1.msra.mxu0 0.0
        %3606 = vmatprep.subr.mxu0 0.0
        %3607 = vmatpush1.msra.mxu0 0.0
        %3608 = vmatprep.subr.mxu0 0.0
        %3609 = vmatpush1.msra.mxu0 0.0
        %3610 = vmatprep.subr.mxu0 0.0
        %3611 = vmatpush1.msra.mxu0 0.0
        %3612 = vmatprep.subr.mxu0 0.0
        %3613 = vmatpush1.msra.mxu0 0.0
        %3614 = vmatprep.subr.mxu0 0.0
        %3615 = vmatpush1.msra.mxu0 0.0
        %3616 = vmatprep.subr.mxu0 0.0
        %3617 = vmatpush1.msra.mxu0 0.0
        %3618 = vmatprep.subr.mxu0 0.0
        %3619 = vmatpush1.msra.mxu0 0.0
        %3620 = vmatprep.subr.mxu0 0.0
        %3621 = vmatpush1.msra.mxu0 0.0
        %3622 = vmatprep.subr.mxu0 0.0
        %3623 = vmatpush1.msra.mxu0 0.0
        %3624 = vmatprep.subr.mxu0 0.0
        %3625 = vmatpush1.msra.mxu0 0.0
        %3626 = vmatprep.subr.mxu0 0.0
        %3627 = vmatpush1.msra.mxu0 0.0
        %3628 = vmatprep.subr.mxu0 0.0
        %3629 = vmatpush1.msra.mxu0 0.0
        %3630 = vmatprep.subr.mxu0 0.0
        %3631 = vmatpush1.msra.mxu0 0.0
        %3632 = vmatprep.mubr.f32.mxu0 0.0
        %3633 = vmatmul.mubr.f32.gmra.mrb[0].mxu0 %v3566
        %v3634 = vpop.f32.mrb[0].mxu0
        %v3635 = vadd.f32 %v3561, %v3634
        %v3636 = vpop.f32.mrb[0].mxu0
        %v3637 = vadd.f32 %v3563, %v3636
        %3638 = vdwg.mxu0
        %s3639 = scalar_lea.vmem %s9, 8
        %v3640 = vld [vmem:[%s3639] sm:$0xf]
        %v3642 = vsel %vm751, %v3640, 0
        %3644 = vmatprep.subr.mxu0 %v951
        %3645 = vmatpush1.msra.mxu0 %v949
        %3646 = vmatprep.subr.mxu0 0.0
        %3647 = vmatpush1.msra.mxu0 0.0
        %3648 = vmatprep.subr.mxu0 0.0
        %3649 = vmatpush1.msra.mxu0 0.0
        %3650 = vmatprep.subr.mxu0 0.0
        %3651 = vmatpush1.msra.mxu0 0.0
        %3652 = vmatprep.subr.mxu0 0.0
        %3653 = vmatpush1.msra.mxu0 0.0
        %3654 = vmatprep.subr.mxu0 0.0
        %3655 = vmatpush1.msra.mxu0 0.0
        %3656 = vmatprep.subr.mxu0 0.0
        %3657 = vmatpush1.msra.mxu0 0.0
        %3658 = vmatprep.subr.mxu0 0.0
        %3659 = vmatpush1.msra.mxu0 0.0
        %3660 = vmatprep.subr.mxu0 0.0
        %3661 = vmatpush1.msra.mxu0 0.0
        %3662 = vmatprep.subr.mxu0 0.0
        %3663 = vmatpush1.msra.mxu0 0.0
        %3664 = vmatprep.subr.mxu0 0.0
        %3665 = vmatpush1.msra.mxu0 0.0
        %3666 = vmatprep.subr.mxu0 0.0
        %3667 = vmatpush1.msra.mxu0 0.0
        %3668 = vmatprep.subr.mxu0 0.0
        %3669 = vmatpush1.msra.mxu0 0.0
        %3670 = vmatprep.subr.mxu0 0.0
        %3671 = vmatpush1.msra.mxu0 0.0
        %3672 = vmatprep.subr.mxu0 0.0
        %3673 = vmatpush1.msra.mxu0 0.0
        %3674 = vmatprep.subr.mxu0 0.0
        %3675 = vmatpush1.msra.mxu0 0.0
        %3676 = vmatprep.subr.mxu0 0.0
        %3677 = vmatpush1.msra.mxu0 0.0
        %3678 = vmatprep.subr.mxu0 0.0
        %3679 = vmatpush1.msra.mxu0 0.0
        %3680 = vmatprep.subr.mxu0 0.0
        %3681 = vmatpush1.msra.mxu0 0.0
        %3682 = vmatprep.subr.mxu0 0.0
        %3683 = vmatpush1.msra.mxu0 0.0
        %3684 = vmatprep.subr.mxu0 0.0
        %3685 = vmatpush1.msra.mxu0 0.0
        %3686 = vmatprep.subr.mxu0 0.0
        %3687 = vmatpush1.msra.mxu0 0.0
        %3688 = vmatprep.subr.mxu0 0.0
        %3689 = vmatpush1.msra.mxu0 0.0
        %3690 = vmatprep.subr.mxu0 0.0
        %3691 = vmatpush1.msra.mxu0 0.0
        %3692 = vmatprep.subr.mxu0 0.0
        %3693 = vmatpush1.msra.mxu0 0.0
        %3694 = vmatprep.subr.mxu0 0.0
        %3695 = vmatpush1.msra.mxu0 0.0
        %3696 = vmatprep.subr.mxu0 0.0
        %3697 = vmatpush1.msra.mxu0 0.0
        %3698 = vmatprep.subr.mxu0 0.0
        %3699 = vmatpush1.msra.mxu0 0.0
        %3700 = vmatprep.subr.mxu0 0.0
        %3701 = vmatpush1.msra.mxu0 0.0
        %3702 = vmatprep.subr.mxu0 0.0
        %3703 = vmatpush1.msra.mxu0 0.0
        %3704 = vmatprep.subr.mxu0 0.0
        %3705 = vmatpush1.msra.mxu0 0.0
        %3706 = vmatprep.subr.mxu0 0.0
        %3707 = vmatpush1.msra.mxu0 0.0
        %3708 = vmatprep.mubr.f32.mxu0 0.0
        %3709 = vmatmul.mubr.f32.gmra.mrb[0].mxu0 %v3642
        %v3710 = vpop.f32.mrb[0].mxu0
        %v3711 = vadd.f32 0.0, %v3710
        %v3712 = vpop.f32.mrb[0].mxu0
        %v3713 = vadd.f32 0.0, %v3712
        %3714 = vdwg.mxu0
        %v3715 = vadd.f32 %v3635, %v3711
        %v3716 = vadd.f32 %v3637, %v3713
        %s3717 = scalar_lea.vmem %s9, 12
        %v3718 = vld [vmem:[%s3717] sm:$0xf]
        %v3720 = vsel %vm751, %v3718, 0
        %3722 = vmatprep.subr.mxu0 %v1066
        %3723 = vmatpush1.msra.mxu0 %v1064
        %3724 = vmatprep.subr.mxu0 0.0
        %3725 = vmatpush1.msra.mxu0 0.0
        %3726 = vmatprep.subr.mxu0 0.0
        %3727 = vmatpush1.msra.mxu0 0.0
        %3728 = vmatprep.subr.mxu0 0.0
        %3729 = vmatpush1.msra.mxu0 0.0
        %3730 = vmatprep.subr.mxu0 0.0
        %3731 = vmatpush1.msra.mxu0 0.0
        %3732 = vmatprep.subr.mxu0 0.0
        %3733 = vmatpush1.msra.mxu0 0.0
        %3734 = vmatprep.subr.mxu0 0.0
        %3735 = vmatpush1.msra.mxu0 0.0
        %3736 = vmatprep.subr.mxu0 0.0
        %3737 = vmatpush1.msra.mxu0 0.0
        %3738 = vmatprep.subr.mxu0 0.0
        %3739 = vmatpush1.msra.mxu0 0.0
        %3740 = vmatprep.subr.mxu0 0.0
        %3741 = vmatpush1.msra.mxu0 0.0
        %3742 = vmatprep.subr.mxu0 0.0
        %3743 = vmatpush1.msra.mxu0 0.0
        %3744 = vmatprep.subr.mxu0 0.0
        %3745 = vmatpush1.msra.mxu0 0.0
        %3746 = vmatprep.subr.mxu0 0.0
        %3747 = vmatpush1.msra.mxu0 0.0
        %3748 = vmatprep.subr.mxu0 0.0
        %3749 = vmatpush1.msra.mxu0 0.0
        %3750 = vmatprep.subr.mxu0 0.0
        %3751 = vmatpush1.msra.mxu0 0.0
        %3752 = vmatprep.subr.mxu0 0.0
        %3753 = vmatpush1.msra.mxu0 0.0
        %3754 = vmatprep.subr.mxu0 0.0
        %3755 = vmatpush1.msra.mxu0 0.0
        %3756 = vmatprep.subr.mxu0 0.0
        %3757 = vmatpush1.msra.mxu0 0.0
        %3758 = vmatprep.subr.mxu0 0.0
        %3759 = vmatpush1.msra.mxu0 0.0
        %3760 = vmatprep.subr.mxu0 0.0
        %3761 = vmatpush1.msra.mxu0 0.0
        %3762 = vmatprep.subr.mxu0 0.0
        %3763 = vmatpush1.msra.mxu0 0.0
        %3764 = vmatprep.subr.mxu0 0.0
        %3765 = vmatpush1.msra.mxu0 0.0
        %3766 = vmatprep.subr.mxu0 0.0
        %3767 = vmatpush1.msra.mxu0 0.0
        %3768 = vmatprep.subr.mxu0 0.0
        %3769 = vmatpush1.msra.mxu0 0.0
        %3770 = vmatprep.subr.mxu0 0.0
        %3771 = vmatpush1.msra.mxu0 0.0
        %3772 = vmatprep.subr.mxu0 0.0
        %3773 = vmatpush1.msra.mxu0 0.0
        %3774 = vmatprep.subr.mxu0 0.0
        %3775 = vmatpush1.msra.mxu0 0.0
        %3776 = vmatprep.subr.mxu0 0.0
        %3777 = vmatpush1.msra.mxu0 0.0
        %3778 = vmatprep.subr.mxu0 0.0
        %3779 = vmatpush1.msra.mxu0 0.0
        %3780 = vmatprep.subr.mxu0 0.0
        %3781 = vmatpush1.msra.mxu0 0.0
        %3782 = vmatprep.subr.mxu0 0.0
        %3783 = vmatpush1.msra.mxu0 0.0
        %3784 = vmatprep.subr.mxu0 0.0
        %3785 = vmatpush1.msra.mxu0 0.0
        %3786 = vmatprep.mubr.f32.mxu0 0.0
        %3787 = vmatmul.mubr.f32.gmra.mrb[0].mxu0 %v3720
        %v3788 = vpop.f32.mrb[0].mxu0
        %v3789 = vadd.f32 0.0, %v3788
        %v3790 = vpop.f32.mrb[0].mxu0
        %v3791 = vadd.f32 0.0, %v3790
        %3792 = vdwg.mxu0
        %v3793 = vadd.f32 %v3715, %v3789
        %v3794 = vadd.f32 %v3716, %v3791
        %s3795 = scalar_lea.vmem %s9, 16
        %v3796 = vld [vmem:[%s3795] sm:$0xf]
        %v3798 = vsel %vm751, %v3796, 0
        %3800 = vmatprep.subr.mxu0 %v1159
        %3801 = vmatpush1.msra.mxu0 %v1157
        %3802 = vmatprep.subr.mxu0 0.0
        %3803 = vmatpush1.msra.mxu0 0.0
        %3804 = vmatprep.subr.mxu0 0.0
        %3805 = vmatpush1.msra.mxu0 0.0
        %3806 = vmatprep.subr.mxu0 0.0
        %3807 = vmatpush1.msra.mxu0 0.0
        %3808 = vmatprep.subr.mxu0 0.0
        %3809 = vmatpush1.msra.mxu0 0.0
        %3810 = vmatprep.subr.mxu0 0.0
        %3811 = vmatpush1.msra.mxu0 0.0
        %3812 = vmatprep.subr.mxu0 0.0
        %3813 = vmatpush1.msra.mxu0 0.0
        %3814 = vmatprep.subr.mxu0 0.0
        %3815 = vmatpush1.msra.mxu0 0.0
        %3816 = vmatprep.subr.mxu0 0.0
        %3817 = vmatpush1.msra.mxu0 0.0
        %3818 = vmatprep.subr.mxu0 0.0
        %3819 = vmatpush1.msra.mxu0 0.0
        %3820 = vmatprep.subr.mxu0 0.0
        %3821 = vmatpush1.msra.mxu0 0.0
        %3822 = vmatprep.subr.mxu0 0.0
        %3823 = vmatpush1.msra.mxu0 0.0
        %3824 = vmatprep.subr.mxu0 0.0
        %3825 = vmatpush1.msra.mxu0 0.0
        %3826 = vmatprep.subr.mxu0 0.0
        %3827 = vmatpush1.msra.mxu0 0.0
        %3828 = vmatprep.subr.mxu0 0.0
        %3829 = vmatpush1.msra.mxu0 0.0
        %3830 = vmatprep.subr.mxu0 0.0
        %3831 = vmatpush1.msra.mxu0 0.0
        %3832 = vmatprep.subr.mxu0 0.0
        %3833 = vmatpush1.msra.mxu0 0.0
        %3834 = vmatprep.subr.mxu0 0.0
        %3835 = vmatpush1.msra.mxu0 0.0
        %3836 = vmatprep.subr.mxu0 0.0
        %3837 = vmatpush1.msra.mxu0 0.0
        %3838 = vmatprep.subr.mxu0 0.0
        %3839 = vmatpush1.msra.mxu0 0.0
        %3840 = vmatprep.subr.mxu0 0.0
        %3841 = vmatpush1.msra.mxu0 0.0
        %3842 = vmatprep.subr.mxu0 0.0
        %3843 = vmatpush1.msra.mxu0 0.0
        %3844 = vmatprep.subr.mxu0 0.0
        %3845 = vmatpush1.msra.mxu0 0.0
        %3846 = vmatprep.subr.mxu0 0.0
        %3847 = vmatpush1.msra.mxu0 0.0
        %3848 = vmatprep.subr.mxu0 0.0
        %3849 = vmatpush1.msra.mxu0 0.0
        %3850 = vmatprep.subr.mxu0 0.0
        %3851 = vmatpush1.msra.mxu0 0.0
        %3852 = vmatprep.subr.mxu0 0.0
        %3853 = vmatpush1.msra.mxu0 0.0
        %3854 = vmatprep.subr.mxu0 0.0
        %3855 = vmatpush1.msra.mxu0 0.0
        %3856 = vmatprep.subr.mxu0 0.0
        %3857 = vmatpush1.msra.mxu0 0.0
        %3858 = vmatprep.subr.mxu0 0.0
        %3859 = vmatpush1.msra.mxu0 0.0
        %3860 = vmatprep.subr.mxu0 0.0
        %3861 = vmatpush1.msra.mxu0 0.0
        %3862 = vmatprep.subr.mxu0 0.0
        %3863 = vmatpush1.msra.mxu0 0.0
        %3864 = vmatprep.mubr.f32.mxu0 0.0
        %3865 = vmatmul.mubr.f32.gmra.mrb[0].mxu0 %v3798
        %v3866 = vpop.f32.mrb[0].mxu0
        %v3867 = vadd.f32 0.0, %v3866
        %v3868 = vpop.f32.mrb[0].mxu0
        %v3869 = vadd.f32 0.0, %v3868
        %3870 = vdwg.mxu0
        %v3871 = vadd.f32 %v3793, %v3867
        %v3872 = vadd.f32 %v3794, %v3869
        %s3873 = scalar_lea.vmem %s9, 20
        %v3874 = vld [vmem:[%s3873] sm:$0xf]
        %v3876 = vsel %vm751, %v3874, 0
        %3878 = vmatprep.subr.mxu0 %v1274
        %3879 = vmatpush1.msra.mxu0 %v1272
        %3880 = vmatprep.subr.mxu0 0.0
        %3881 = vmatpush1.msra.mxu0 0.0
        %3882 = vmatprep.subr.mxu0 0.0
        %3883 = vmatpush1.msra.mxu0 0.0
        %3884 = vmatprep.subr.mxu0 0.0
        %3885 = vmatpush1.msra.mxu0 0.0
        %3886 = vmatprep.subr.mxu0 0.0
        %3887 = vmatpush1.msra.mxu0 0.0
        %3888 = vmatprep.subr.mxu0 0.0
        %3889 = vmatpush1.msra.mxu0 0.0
        %3890 = vmatprep.subr.mxu0 0.0
        %3891 = vmatpush1.msra.mxu0 0.0
        %3892 = vmatprep.subr.mxu0 0.0
        %3893 = vmatpush1.msra.mxu0 0.0
        %3894 = vmatprep.subr.mxu0 0.0
        %3895 = vmatpush1.msra.mxu0 0.0
        %3896 = vmatprep.subr.mxu0 0.0
        %3897 = vmatpush1.msra.mxu0 0.0
        %3898 = vmatprep.subr.mxu0 0.0
        %3899 = vmatpush1.msra.mxu0 0.0
        %3900 = vmatprep.subr.mxu0 0.0
        %3901 = vmatpush1.msra.mxu0 0.0
        %3902 = vmatprep.subr.mxu0 0.0
        %3903 = vmatpush1.msra.mxu0 0.0
        %3904 = vmatprep.subr.mxu0 0.0
        %3905 = vmatpush1.msra.mxu0 0.0
        %3906 = vmatprep.subr.mxu0 0.0
        %3907 = vmatpush1.msra.mxu0 0.0
        %3908 = vmatprep.subr.mxu0 0.0
        %3909 = vmatpush1.msra.mxu0 0.0
        %3910 = vmatprep.subr.mxu0 0.0
        %3911 = vmatpush1.msra.mxu0 0.0
        %3912 = vmatprep.subr.mxu0 0.0
        %3913 = vmatpush1.msra.mxu0 0.0
        %3914 = vmatprep.subr.mxu0 0.0
        %3915 = vmatpush1.msra.mxu0 0.0
        %3916 = vmatprep.subr.mxu0 0.0
        %3917 = vmatpush1.msra.mxu0 0.0
        %3918 = vmatprep.subr.mxu0 0.0
        %3919 = vmatpush1.msra.mxu0 0.0
        %3920 = vmatprep.subr.mxu0 0.0
        %3921 = vmatpush1.msra.mxu0 0.0
        %3922 = vmatprep.subr.mxu0 0.0
        %3923 = vmatpush1.msra.mxu0 0.0
        %3924 = vmatprep.subr.mxu0 0.0
        %3925 = vmatpush1.msra.mxu0 0.0
        %3926 = vmatprep.subr.mxu0 0.0
        %3927 = vmatpush1.msra.mxu0 0.0
        %3928 = vmatprep.subr.mxu0 0.0
        %3929 = vmatpush1.msra.mxu0 0.0
        %3930 = vmatprep.subr.mxu0 0.0
        %3931 = vmatpush1.msra.mxu0 0.0
        %3932 = vmatprep.subr.mxu0 0.0
        %3933 = vmatpush1.msra.mxu0 0.0
        %3934 = vmatprep.subr.mxu0 0.0
        %3935 = vmatpush1.msra.mxu0 0.0
        %3936 = vmatprep.subr.mxu0 0.0
        %3937 = vmatpush1.msra.mxu0 0.0
        %3938 = vmatprep.subr.mxu0 0.0
        %3939 = vmatpush1.msra.mxu0 0.0
        %3940 = vmatprep.subr.mxu0 0.0
        %3941 = vmatpush1.msra.mxu0 0.0
        %3942 = vmatprep.mubr.f32.mxu0 0.0
        %3943 = vmatmul.mubr.f32.gmra.mrb[0].mxu0 %v3876
        %v3944 = vpop.f32.mrb[0].mxu0
        %v3945 = vadd.f32 0.0, %v3944
        %v3946 = vpop.f32.mrb[0].mxu0
        %v3947 = vadd.f32 0.0, %v3946
        %3948 = vdwg.mxu0
        %v3949 = vadd.f32 %v3871, %v3945
        %v3950 = vadd.f32 %v3872, %v3947
        %s3951 = scalar_lea.vmem %s9, 24
        %v3952 = vld [vmem:[%s3951] sm:$0xf]
        %v3954 = vsel %vm751, %v3952, 0
        %3956 = vmatprep.subr.mxu0 %v1389
        %3957 = vmatpush1.msra.mxu0 %v1387
        %3958 = vmatprep.subr.mxu0 0.0
        %3959 = vmatpush1.msra.mxu0 0.0
        %3960 = vmatprep.subr.mxu0 0.0
        %3961 = vmatpush1.msra.mxu0 0.0
        %3962 = vmatprep.subr.mxu0 0.0
        %3963 = vmatpush1.msra.mxu0 0.0
        %3964 = vmatprep.subr.mxu0 0.0
        %3965 = vmatpush1.msra.mxu0 0.0
        %3966 = vmatprep.subr.mxu0 0.0
        %3967 = vmatpush1.msra.mxu0 0.0
        %3968 = vmatprep.subr.mxu0 0.0
        %3969 = vmatpush1.msra.mxu0 0.0
        %3970 = vmatprep.subr.mxu0 0.0
        %3971 = vmatpush1.msra.mxu0 0.0
        %3972 = vmatprep.subr.mxu0 0.0
        %3973 = vmatpush1.msra.mxu0 0.0
        %3974 = vmatprep.subr.mxu0 0.0
        %3975 = vmatpush1.msra.mxu0 0.0
        %3976 = vmatprep.subr.mxu0 0.0
        %3977 = vmatpush1.msra.mxu0 0.0
        %3978 = vmatprep.subr.mxu0 0.0
        %3979 = vmatpush1.msra.mxu0 0.0
        %3980 = vmatprep.subr.mxu0 0.0
        %3981 = vmatpush1.msra.mxu0 0.0
        %3982 = vmatprep.subr.mxu0 0.0
        %3983 = vmatpush1.msra.mxu0 0.0
        %3984 = vmatprep.subr.mxu0 0.0
        %3985 = vmatpush1.msra.mxu0 0.0
        %3986 = vmatprep.subr.mxu0 0.0
        %3987 = vmatpush1.msra.mxu0 0.0
        %3988 = vmatprep.subr.mxu0 0.0
        %3989 = vmatpush1.msra.mxu0 0.0
        %3990 = vmatprep.subr.mxu0 0.0
        %3991 = vmatpush1.msra.mxu0 0.0
        %3992 = vmatprep.subr.mxu0 0.0
        %3993 = vmatpush1.msra.mxu0 0.0
        %3994 = vmatprep.subr.mxu0 0.0
        %3995 = vmatpush1.msra.mxu0 0.0
        %3996 = vmatprep.subr.mxu0 0.0
        %3997 = vmatpush1.msra.mxu0 0.0
        %3998 = vmatprep.subr.mxu0 0.0
        %3999 = vmatpush1.msra.mxu0 0.0
        %4000 = vmatprep.subr.mxu0 0.0
        %4001 = vmatpush1.msra.mxu0 0.0
        %4002 = vmatprep.subr.mxu0 0.0
        %4003 = vmatpush1.msra.mxu0 0.0
        %4004 = vmatprep.subr.mxu0 0.0
        %4005 = vmatpush1.msra.mxu0 0.0
        %4006 = vmatprep.subr.mxu0 0.0
        %4007 = vmatpush1.msra.mxu0 0.0
        %4008 = vmatprep.subr.mxu0 0.0
        %4009 = vmatpush1.msra.mxu0 0.0
        %4010 = vmatprep.subr.mxu0 0.0
        %4011 = vmatpush1.msra.mxu0 0.0
        %4012 = vmatprep.subr.mxu0 0.0
        %4013 = vmatpush1.msra.mxu0 0.0
        %4014 = vmatprep.subr.mxu0 0.0
        %4015 = vmatpush1.msra.mxu0 0.0
        %4016 = vmatprep.subr.mxu0 0.0
        %4017 = vmatpush1.msra.mxu0 0.0
        %4018 = vmatprep.subr.mxu0 0.0
        %4019 = vmatpush1.msra.mxu0 0.0
        %4020 = vmatprep.mubr.f32.mxu0 0.0
        %4021 = vmatmul.mubr.f32.gmra.mrb[0].mxu0 %v3954
        %v4022 = vpop.f32.mrb[0].mxu0
        %v4023 = vadd.f32 0.0, %v4022
        %v4024 = vpop.f32.mrb[0].mxu0
        %v4025 = vadd.f32 0.0, %v4024
        %4026 = vdwg.mxu0
        %v4027 = vadd.f32 %v3949, %v4023
        %v4028 = vadd.f32 %v3950, %v4025
        %s4029 = scalar_lea.vmem %s9, 28
        %v4030 = vld [vmem:[%s4029] sm:$0xf]
        %v4032 = vsel %vm751, %v4030, 0
        %4034 = vmatprep.subr.mxu0 %v1504
        %4035 = vmatpush1.msra.mxu0 %v1502
        %4036 = vmatprep.subr.mxu0 0.0
        %4037 = vmatpush1.msra.mxu0 0.0
        %4038 = vmatprep.subr.mxu0 0.0
        %4039 = vmatpush1.msra.mxu0 0.0
        %4040 = vmatprep.subr.mxu0 0.0
        %4041 = vmatpush1.msra.mxu0 0.0
        %4042 = vmatprep.subr.mxu0 0.0
        %4043 = vmatpush1.msra.mxu0 0.0
        %4044 = vmatprep.subr.mxu0 0.0
        %4045 = vmatpush1.msra.mxu0 0.0
        %4046 = vmatprep.subr.mxu0 0.0
        %4047 = vmatpush1.msra.mxu0 0.0
        %4048 = vmatprep.subr.mxu0 0.0
        %4049 = vmatpush1.msra.mxu0 0.0
        %4050 = vmatprep.subr.mxu0 0.0
        %4051 = vmatpush1.msra.mxu0 0.0
        %4052 = vmatprep.subr.mxu0 0.0
        %4053 = vmatpush1.msra.mxu0 0.0
        %4054 = vmatprep.subr.mxu0 0.0
        %4055 = vmatpush1.msra.mxu0 0.0
        %4056 = vmatprep.subr.mxu0 0.0
        %4057 = vmatpush1.msra.mxu0 0.0
        %4058 = vmatprep.subr.mxu0 0.0
        %4059 = vmatpush1.msra.mxu0 0.0
        %4060 = vmatprep.subr.mxu0 0.0
        %4061 = vmatpush1.msra.mxu0 0.0
        %4062 = vmatprep.subr.mxu0 0.0
        %4063 = vmatpush1.msra.mxu0 0.0
        %4064 = vmatprep.subr.mxu0 0.0
        %4065 = vmatpush1.msra.mxu0 0.0
        %4066 = vmatprep.subr.mxu0 0.0
        %4067 = vmatpush1.msra.mxu0 0.0
        %4068 = vmatprep.subr.mxu0 0.0
        %4069 = vmatpush1.msra.mxu0 0.0
        %4070 = vmatprep.subr.mxu0 0.0
        %4071 = vmatpush1.msra.mxu0 0.0
        %4072 = vmatprep.subr.mxu0 0.0
        %4073 = vmatpush1.msra.mxu0 0.0
        %4074 = vmatprep.subr.mxu0 0.0
        %4075 = vmatpush1.msra.mxu0 0.0
        %4076 = vmatprep.subr.mxu0 0.0
        %4077 = vmatpush1.msra.mxu0 0.0
        %4078 = vmatprep.subr.mxu0 0.0
        %4079 = vmatpush1.msra.mxu0 0.0
        %4080 = vmatprep.subr.mxu0 0.0
        %4081 = vmatpush1.msra.mxu0 0.0
        %4082 = vmatprep.subr.mxu0 0.0
        %4083 = vmatpush1.msra.mxu0 0.0
        %4084 = vmatprep.subr.mxu0 0.0
        %4085 = vmatpush1.msra.mxu0 0.0
        %4086 = vmatprep.subr.mxu0 0.0
        %4087 = vmatpush1.msra.mxu0 0.0
        %4088 = vmatprep.subr.mxu0 0.0
        %4089 = vmatpush1.msra.mxu0 0.0
        %4090 = vmatprep.subr.mxu0 0.0
        %4091 = vmatpush1.msra.mxu0 0.0
        %4092 = vmatprep.subr.mxu0 0.0
        %4093 = vmatpush1.msra.mxu0 0.0
        %4094 = vmatprep.subr.mxu0 0.0
        %4095 = vmatpush1.msra.mxu0 0.0
        %4096 = vmatprep.subr.mxu0 0.0
        %4097 = vmatpush1.msra.mxu0 0.0
        %4098 = vmatprep.mubr.f32.mxu0 0.0
        %4099 = vmatmul.mubr.f32.gmra.mrb[0].mxu0 %v4032
        %v4100 = vpop.f32.mrb[0].mxu0
        %v4101 = vadd.f32 0.0, %v4100
        %v4102 = vpop.f32.mrb[0].mxu0
        %v4103 = vadd.f32 0.0, %v4102
        %4104 = vdwg.mxu0
        %v4105 = vadd.f32 %v4027, %v4101
        %v4106 = vadd.f32 %v4028, %v4103
        %s4107 = scalar_lea.vmem %s9, 32
        %v4108 = vld [vmem:[%s4107] sm:$0xf]
        %v4110 = vsel %vm751, %v4108, 0
        %4112 = vmatprep.subr.mxu0 %v1619
        %4113 = vmatpush1.msra.mxu0 %v1617
        %4114 = vmatprep.subr.mxu0 0.0
        %4115 = vmatpush1.msra.mxu0 0.0
        %4116 = vmatprep.subr.mxu0 0.0
        %4117 = vmatpush1.msra.mxu0 0.0
        %4118 = vmatprep.subr.mxu0 0.0
        %4119 = vmatpush1.msra.mxu0 0.0
        %4120 = vmatprep.subr.mxu0 0.0
        %4121 = vmatpush1.msra.mxu0 0.0
        %4122 = vmatprep.subr.mxu0 0.0
        %4123 = vmatpush1.msra.mxu0 0.0
        %4124 = vmatprep.subr.mxu0 0.0
        %4125 = vmatpush1.msra.mxu0 0.0
        %4126 = vmatprep.subr.mxu0 0.0
        %4127 = vmatpush1.msra.mxu0 0.0
        %4128 = vmatprep.subr.mxu0 0.0
        %4129 = vmatpush1.msra.mxu0 0.0
        %4130 = vmatprep.subr.mxu0 0.0
        %4131 = vmatpush1.msra.mxu0 0.0
        %4132 = vmatprep.subr.mxu0 0.0
        %4133 = vmatpush1.msra.mxu0 0.0
        %4134 = vmatprep.subr.mxu0 0.0
        %4135 = vmatpush1.msra.mxu0 0.0
        %4136 = vmatprep.subr.mxu0 0.0
        %4137 = vmatpush1.msra.mxu0 0.0
        %4138 = vmatprep.subr.mxu0 0.0
        %4139 = vmatpush1.msra.mxu0 0.0
        %4140 = vmatprep.subr.mxu0 0.0
        %4141 = vmatpush1.msra.mxu0 0.0
        %4142 = vmatprep.subr.mxu0 0.0
        %4143 = vmatpush1.msra.mxu0 0.0
        %4144 = vmatprep.subr.mxu0 0.0
        %4145 = vmatpush1.msra.mxu0 0.0
        %4146 = vmatprep.subr.mxu0 0.0
        %4147 = vmatpush1.msra.mxu0 0.0
        %4148 = vmatprep.subr.mxu0 0.0
        %4149 = vmatpush1.msra.mxu0 0.0
        %4150 = vmatprep.subr.mxu0 0.0
        %4151 = vmatpush1.msra.mxu0 0.0
        %4152 = vmatprep.subr.mxu0 0.0
        %4153 = vmatpush1.msra.mxu0 0.0
        %4154 = vmatprep.subr.mxu0 0.0
        %4155 = vmatpush1.msra.mxu0 0.0
        %4156 = vmatprep.subr.mxu0 0.0
        %4157 = vmatpush1.msra.mxu0 0.0
        %4158 = vmatprep.subr.mxu0 0.0
        %4159 = vmatpush1.msra.mxu0 0.0
        %4160 = vmatprep.subr.mxu0 0.0
        %4161 = vmatpush1.msra.mxu0 0.0
        %4162 = vmatprep.subr.mxu0 0.0
        %4163 = vmatpush1.msra.mxu0 0.0
        %4164 = vmatprep.subr.mxu0 0.0
        %4165 = vmatpush1.msra.mxu0 0.0
        %4166 = vmatprep.subr.mxu0 0.0
        %4167 = vmatpush1.msra.mxu0 0.0
        %4168 = vmatprep.subr.mxu0 0.0
        %4169 = vmatpush1.msra.mxu0 0.0
        %4170 = vmatprep.subr.mxu0 0.0
        %4171 = vmatpush1.msra.mxu0 0.0
        %4172 = vmatprep.subr.mxu0 0.0
        %4173 = vmatpush1.msra.mxu0 0.0
        %4174 = vmatprep.subr.mxu0 0.0
        %4175 = vmatpush1.msra.mxu0 0.0
        %4176 = vmatprep.mubr.f32.mxu0 0.0
        %4177 = vmatmul.mubr.f32.gmra.mrb[0].mxu0 %v4110
        %v4178 = vpop.f32.mrb[0].mxu0
        %v4179 = vadd.f32 0.0, %v4178
        %v4180 = vpop.f32.mrb[0].mxu0
        %v4181 = vadd.f32 0.0, %v4180
        %4182 = vdwg.mxu0
        %v4183 = vadd.f32 %v4105, %v4179
        %v4184 = vadd.f32 %v4106, %v4181
        %v4185 = vld [vmem:[%s10] sm:$0xf]
        %4187 = vset.pattern.permute.xlu0 0
        %4188 = vperm.xlu0 %4187, %v4185
        %v4189 = vpop.permute.xlu0 %4188
        %v4191 = vadd.f32 %v4183, %v4189
        %v4192 = vadd.f32 %v4184, %v4189
        %v4193 = vmul.f32 %v4191, 0.01
        %v4194 = vmul.f32 %v4192, 0.01
        %v4195 = vmax.f32 %v4191, %v4193
        %v4196 = vmax.f32 %v4192, %v4194
        %4199 = vrot.lane.b32.xlu0 %v4195, 17
        %v4200 = vpop.permute.xlu0 %4199
        %4201 = vrot.lane.b32.xlu0 %v4196, 17
        %v4202 = vpop.permute.xlu0 %4201
        %v4203 = vsel %vm695, %v4200, %v4202
        %v4207 = vsel %vm695, 0.0, %v4200
        %v4208 = vsel %vm695, %v4202, 0.0
        %v4209 = vmul.f32 %v4207, %v706
        %v4210 = vmul.f32 %v4203, %v710
        %v4211 = vld [vmem:[%s11] sm:$0xff]
        %v4212 = vmul.f32 %v4207, %v726
        %v4213 = vmul.f32 %v4203, %v730
        %v4214 = vmul.f32 %v4208, %v728
        %s4215 = scalar_lea.vmem %s11, 8
        %v4216 = vld [vmem:[%s4215] sm:$0xff]
        %4220 = vrot.lane.b32.xlu0 %v4212, 127
        %v4221 = vpop.permute.xlu0 %4220
        %4222 = vrot.lane.b32.xlu0 %v4213, 127
        %v4223 = vpop.permute.xlu0 %4222
        %4224 = vrot.lane.b32.xlu0 %v4214, 127
        %v4225 = vpop.permute.xlu0 %4224
        %v4226 = vsel %vm748, %v4221, %v4223
        %v4227 = vsel %vm748, %v4223, %v4225
        %v4229 = vsel %vm751, %v4216, 0
        %v4231 = vsel %vm755, %v4226, 0
        %v4233 = vsel %vm755, %v4227, 0
        %4235 = vmatprep.subr.mxu0 %v4233
        %4236 = vmatpush1.msra.mxu0 %v4231
        %4237 = vmatprep.subr.mxu0 0.0
        %4238 = vmatpush1.msra.mxu0 0.0
        %4239 = vmatprep.subr.mxu0 0.0
        %4240 = vmatpush1.msra.mxu0 0.0
        %4241 = vmatprep.subr.mxu0 0.0
        %4242 = vmatpush1.msra.mxu0 0.0
        %4243 = vmatprep.subr.mxu0 0.0
        %4244 = vmatpush1.msra.mxu0 0.0
        %4245 = vmatprep.subr.mxu0 0.0
        %4246 = vmatpush1.msra.mxu0 0.0
        %4247 = vmatprep.subr.mxu0 0.0
        %4248 = vmatpush1.msra.mxu0 0.0
        %4249 = vmatprep.subr.mxu0 0.0
        %4250 = vmatpush1.msra.mxu0 0.0
        %4251 = vmatprep.subr.mxu0 0.0
        %4252 = vmatpush1.msra.mxu0 0.0
        %4253 = vmatprep.subr.mxu0 0.0
        %4254 = vmatpush1.msra.mxu0 0.0
        %4255 = vmatprep.subr.mxu0 0.0
        %4256 = vmatpush1.msra.mxu0 0.0
        %4257 = vmatprep.subr.mxu0 0.0
        %4258 = vmatpush1.msra.mxu0 0.0
        %4259 = vmatprep.subr.mxu0 0.0
        %4260 = vmatpush1.msra.mxu0 0.0
        %4261 = vmatprep.subr.mxu0 0.0
        %4262 = vmatpush1.msra.mxu0 0.0
        %4263 = vmatprep.subr.mxu0 0.0
        %4264 = vmatpush1.msra.mxu0 0.0
        %4265 = vmatprep.subr.mxu0 0.0
        %4266 = vmatpush1.msra.mxu0 0.0
        %4267 = vmatprep.subr.mxu0 0.0
        %4268 = vmatpush1.msra.mxu0 0.0
        %4269 = vmatprep.subr.mxu0 0.0
        %4270 = vmatpush1.msra.mxu0 0.0
        %4271 = vmatprep.subr.mxu0 0.0
        %4272 = vmatpush1.msra.mxu0 0.0
        %4273 = vmatprep.subr.mxu0 0.0
        %4274 = vmatpush1.msra.mxu0 0.0
        %4275 = vmatprep.subr.mxu0 0.0
        %4276 = vmatpush1.msra.mxu0 0.0
        %4277 = vmatprep.subr.mxu0 0.0
        %4278 = vmatpush1.msra.mxu0 0.0
        %4279 = vmatprep.subr.mxu0 0.0
        %4280 = vmatpush1.msra.mxu0 0.0
        %4281 = vmatprep.subr.mxu0 0.0
        %4282 = vmatpush1.msra.mxu0 0.0
        %4283 = vmatprep.subr.mxu0 0.0
        %4284 = vmatpush1.msra.mxu0 0.0
        %4285 = vmatprep.subr.mxu0 0.0
        %4286 = vmatpush1.msra.mxu0 0.0
        %4287 = vmatprep.subr.mxu0 0.0
        %4288 = vmatpush1.msra.mxu0 0.0
        %4289 = vmatprep.subr.mxu0 0.0
        %4290 = vmatpush1.msra.mxu0 0.0
        %4291 = vmatprep.subr.mxu0 0.0
        %4292 = vmatpush1.msra.mxu0 0.0
        %4293 = vmatprep.subr.mxu0 0.0
        %4294 = vmatpush1.msra.mxu0 0.0
        %4295 = vmatprep.subr.mxu0 0.0
        %4296 = vmatpush1.msra.mxu0 0.0
        %4297 = vmatprep.subr.mxu0 0.0
        %4298 = vmatpush1.msra.mxu0 0.0
        %4299 = vmatprep.mubr.f32.mxu0 0.0
        %4300 = vmatmul.mubr.f32.gmra.mrb[0].mxu0 %v4229
        %v4301 = vpop.f32.mrb[0].mxu0
        %v4302 = vadd.f32 0.0, %v4301
        %v4303 = vpop.f32.mrb[0].mxu0
        %v4304 = vadd.f32 0.0, %v4303
        %4305 = vdwg.mxu0
        %v4307 = vsel %vm751, %v4211, 0
        %v4310 = vsel %vm755, %v4209, 0
        %v4313 = vsel %vm755, %v4210, 0
        %4315 = vmatprep.subr.mxu0 %v4313
        %4316 = vmatpush1.msra.mxu0 %v4310
        %4317 = vmatprep.subr.mxu0 0.0
        %4318 = vmatpush1.msra.mxu0 0.0
        %4319 = vmatprep.subr.mxu0 0.0
        %4320 = vmatpush1.msra.mxu0 0.0
        %4321 = vmatprep.subr.mxu0 0.0
        %4322 = vmatpush1.msra.mxu0 0.0
        %4323 = vmatprep.subr.mxu0 0.0
        %4324 = vmatpush1.msra.mxu0 0.0
        %4325 = vmatprep.subr.mxu0 0.0
        %4326 = vmatpush1.msra.mxu0 0.0
        %4327 = vmatprep.subr.mxu0 0.0
        %4328 = vmatpush1.msra.mxu0 0.0
        %4329 = vmatprep.subr.mxu0 0.0
        %4330 = vmatpush1.msra.mxu0 0.0
        %4331 = vmatprep.subr.mxu0 0.0
        %4332 = vmatpush1.msra.mxu0 0.0
        %4333 = vmatprep.subr.mxu0 0.0
        %4334 = vmatpush1.msra.mxu0 0.0
        %4335 = vmatprep.subr.mxu0 0.0
        %4336 = vmatpush1.msra.mxu0 0.0
        %4337 = vmatprep.subr.mxu0 0.0
        %4338 = vmatpush1.msra.mxu0 0.0
        %4339 = vmatprep.subr.mxu0 0.0
        %4340 = vmatpush1.msra.mxu0 0.0
        %4341 = vmatprep.subr.mxu0 0.0
        %4342 = vmatpush1.msra.mxu0 0.0
        %4343 = vmatprep.subr.mxu0 0.0
        %4344 = vmatpush1.msra.mxu0 0.0
        %4345 = vmatprep.subr.mxu0 0.0
        %4346 = vmatpush1.msra.mxu0 0.0
        %4347 = vmatprep.subr.mxu0 0.0
        %4348 = vmatpush1.msra.mxu0 0.0
        %4349 = vmatprep.subr.mxu0 0.0
        %4350 = vmatpush1.msra.mxu0 0.0
        %4351 = vmatprep.subr.mxu0 0.0
        %4352 = vmatpush1.msra.mxu0 0.0
        %4353 = vmatprep.subr.mxu0 0.0
        %4354 = vmatpush1.msra.mxu0 0.0
        %4355 = vmatprep.subr.mxu0 0.0
        %4356 = vmatpush1.msra.mxu0 0.0
        %4357 = vmatprep.subr.mxu0 0.0
        %4358 = vmatpush1.msra.mxu0 0.0
        %4359 = vmatprep.subr.mxu0 0.0
        %4360 = vmatpush1.msra.mxu0 0.0
        %4361 = vmatprep.subr.mxu0 0.0
        %4362 = vmatpush1.msra.mxu0 0.0
        %4363 = vmatprep.subr.mxu0 0.0
        %4364 = vmatpush1.msra.mxu0 0.0
        %4365 = vmatprep.subr.mxu0 0.0
        %4366 = vmatpush1.msra.mxu0 0.0
        %4367 = vmatprep.subr.mxu0 0.0
        %4368 = vmatpush1.msra.mxu0 0.0
        %4369 = vmatprep.subr.mxu0 0.0
        %4370 = vmatpush1.msra.mxu0 0.0
        %4371 = vmatprep.subr.mxu0 0.0
        %4372 = vmatpush1.msra.mxu0 0.0
        %4373 = vmatprep.subr.mxu0 0.0
        %4374 = vmatpush1.msra.mxu0 0.0
        %4375 = vmatprep.subr.mxu0 0.0
        %4376 = vmatpush1.msra.mxu0 0.0
        %4377 = vmatprep.subr.mxu0 0.0
        %4378 = vmatpush1.msra.mxu0 0.0
        %4379 = vmatprep.mubr.f32.mxu0 0.0
        %4380 = vmatmul.mubr.f32.gmra.mrb[0].mxu0 %v4307
        %v4381 = vpop.f32.mrb[0].mxu0
        %v4382 = vadd.f32 %v4302, %v4381
        %v4383 = vpop.f32.mrb[0].mxu0
        %v4384 = vadd.f32 %v4304, %v4383
        %4385 = vdwg.mxu0
        %v4386 = vmul.f32 %v4207, %v921
        %v4387 = vmul.f32 %v4203, %v925
        %v4388 = vmul.f32 %v4208, %v923
        %s4389 = scalar_lea.vmem %s11, 16
        %v4390 = vld [vmem:[%s4389] sm:$0xff]
        %4394 = vrot.lane.b32.xlu0 %v4386, 126
        %v4395 = vpop.permute.xlu0 %4394
        %4396 = vrot.lane.b32.xlu0 %v4387, 126
        %v4397 = vpop.permute.xlu0 %4396
        %4398 = vrot.lane.b32.xlu0 %v4388, 126
        %v4399 = vpop.permute.xlu0 %4398
        %v4400 = vsel %vm943, %v4395, %v4397
        %v4401 = vsel %vm943, %v4397, %v4399
        %v4403 = vsel %vm751, %v4390, 0
        %v4405 = vsel %vm755, %v4400, 0
        %v4407 = vsel %vm755, %v4401, 0
        %4409 = vmatprep.subr.mxu0 %v4407
        %4410 = vmatpush1.msra.mxu0 %v4405
        %4411 = vmatprep.subr.mxu0 0.0
        %4412 = vmatpush1.msra.mxu0 0.0
        %4413 = vmatprep.subr.mxu0 0.0
        %4414 = vmatpush1.msra.mxu0 0.0
        %4415 = vmatprep.subr.mxu0 0.0
        %4416 = vmatpush1.msra.mxu0 0.0
        %4417 = vmatprep.subr.mxu0 0.0
        %4418 = vmatpush1.msra.mxu0 0.0
        %4419 = vmatprep.subr.mxu0 0.0
        %4420 = vmatpush1.msra.mxu0 0.0
        %4421 = vmatprep.subr.mxu0 0.0
        %4422 = vmatpush1.msra.mxu0 0.0
        %4423 = vmatprep.subr.mxu0 0.0
        %4424 = vmatpush1.msra.mxu0 0.0
        %4425 = vmatprep.subr.mxu0 0.0
        %4426 = vmatpush1.msra.mxu0 0.0
        %4427 = vmatprep.subr.mxu0 0.0
        %4428 = vmatpush1.msra.mxu0 0.0
        %4429 = vmatprep.subr.mxu0 0.0
        %4430 = vmatpush1.msra.mxu0 0.0
        %4431 = vmatprep.subr.mxu0 0.0
        %4432 = vmatpush1.msra.mxu0 0.0
        %4433 = vmatprep.subr.mxu0 0.0
        %4434 = vmatpush1.msra.mxu0 0.0
        %4435 = vmatprep.subr.mxu0 0.0
        %4436 = vmatpush1.msra.mxu0 0.0
        %4437 = vmatprep.subr.mxu0 0.0
        %4438 = vmatpush1.msra.mxu0 0.0
        %4439 = vmatprep.subr.mxu0 0.0
        %4440 = vmatpush1.msra.mxu0 0.0
        %4441 = vmatprep.subr.mxu0 0.0
        %4442 = vmatpush1.msra.mxu0 0.0
        %4443 = vmatprep.subr.mxu0 0.0
        %4444 = vmatpush1.msra.mxu0 0.0
        %4445 = vmatprep.subr.mxu0 0.0
        %4446 = vmatpush1.msra.mxu0 0.0
        %4447 = vmatprep.subr.mxu0 0.0
        %4448 = vmatpush1.msra.mxu0 0.0
        %4449 = vmatprep.subr.mxu0 0.0
        %4450 = vmatpush1.msra.mxu0 0.0
        %4451 = vmatprep.subr.mxu0 0.0
        %4452 = vmatpush1.msra.mxu0 0.0
        %4453 = vmatprep.subr.mxu0 0.0
        %4454 = vmatpush1.msra.mxu0 0.0
        %4455 = vmatprep.subr.mxu0 0.0
        %4456 = vmatpush1.msra.mxu0 0.0
        %4457 = vmatprep.subr.mxu0 0.0
        %4458 = vmatpush1.msra.mxu0 0.0
        %4459 = vmatprep.subr.mxu0 0.0
        %4460 = vmatpush1.msra.mxu0 0.0
        %4461 = vmatprep.subr.mxu0 0.0
        %4462 = vmatpush1.msra.mxu0 0.0
        %4463 = vmatprep.subr.mxu0 0.0
        %4464 = vmatpush1.msra.mxu0 0.0
        %4465 = vmatprep.subr.mxu0 0.0
        %4466 = vmatpush1.msra.mxu0 0.0
        %4467 = vmatprep.subr.mxu0 0.0
        %4468 = vmatpush1.msra.mxu0 0.0
        %4469 = vmatprep.subr.mxu0 0.0
        %4470 = vmatpush1.msra.mxu0 0.0
        %4471 = vmatprep.subr.mxu0 0.0
        %4472 = vmatpush1.msra.mxu0 0.0
        %4473 = vmatprep.mubr.f32.mxu0 0.0
        %4474 = vmatmul.mubr.f32.gmra.mrb[0].mxu0 %v4403
        %v4475 = vpop.f32.mrb[0].mxu0
        %v4476 = vadd.f32 0.0, %v4475
        %v4477 = vpop.f32.mrb[0].mxu0
        %v4478 = vadd.f32 0.0, %v4477
        %4479 = vdwg.mxu0
        %v4480 = vadd.f32 %v4382, %v4476
        %v4481 = vadd.f32 %v4384, %v4478
        %v4482 = vmul.f32 %v4207, %v1036
        %v4483 = vmul.f32 %v4203, %v1040
        %v4484 = vmul.f32 %v4208, %v1038
        %s4485 = scalar_lea.vmem %s11, 24
        %v4486 = vld [vmem:[%s4485] sm:$0xff]
        %4490 = vrot.lane.b32.xlu0 %v4482, 112
        %v4491 = vpop.permute.xlu0 %4490
        %4492 = vrot.lane.b32.xlu0 %v4483, 112
        %v4493 = vpop.permute.xlu0 %4492
        %4494 = vrot.lane.b32.xlu0 %v4484, 112
        %v4495 = vpop.permute.xlu0 %4494
        %v4496 = vsel %vm1058, %v4491, %v4493
        %v4497 = vsel %vm1058, %v4493, %v4495
        %v4499 = vsel %vm751, %v4486, 0
        %v4501 = vsel %vm755, %v4496, 0
        %v4503 = vsel %vm755, %v4497, 0
        %4505 = vmatprep.subr.mxu0 %v4503
        %4506 = vmatpush1.msra.mxu0 %v4501
        %4507 = vmatprep.subr.mxu0 0.0
        %4508 = vmatpush1.msra.mxu0 0.0
        %4509 = vmatprep.subr.mxu0 0.0
        %4510 = vmatpush1.msra.mxu0 0.0
        %4511 = vmatprep.subr.mxu0 0.0
        %4512 = vmatpush1.msra.mxu0 0.0
        %4513 = vmatprep.subr.mxu0 0.0
        %4514 = vmatpush1.msra.mxu0 0.0
        %4515 = vmatprep.subr.mxu0 0.0
        %4516 = vmatpush1.msra.mxu0 0.0
        %4517 = vmatprep.subr.mxu0 0.0
        %4518 = vmatpush1.msra.mxu0 0.0
        %4519 = vmatprep.subr.mxu0 0.0
        %4520 = vmatpush1.msra.mxu0 0.0
        %4521 = vmatprep.subr.mxu0 0.0
        %4522 = vmatpush1.msra.mxu0 0.0
        %4523 = vmatprep.subr.mxu0 0.0
        %4524 = vmatpush1.msra.mxu0 0.0
        %4525 = vmatprep.subr.mxu0 0.0
        %4526 = vmatpush1.msra.mxu0 0.0
        %4527 = vmatprep.subr.mxu0 0.0
        %4528 = vmatpush1.msra.mxu0 0.0
        %4529 = vmatprep.subr.mxu0 0.0
        %4530 = vmatpush1.msra.mxu0 0.0
        %4531 = vmatprep.subr.mxu0 0.0
        %4532 = vmatpush1.msra.mxu0 0.0
        %4533 = vmatprep.subr.mxu0 0.0
        %4534 = vmatpush1.msra.mxu0 0.0
        %4535 = vmatprep.subr.mxu0 0.0
        %4536 = vmatpush1.msra.mxu0 0.0
        %4537 = vmatprep.subr.mxu0 0.0
        %4538 = vmatpush1.msra.mxu0 0.0
        %4539 = vmatprep.subr.mxu0 0.0
        %4540 = vmatpush1.msra.mxu0 0.0
        %4541 = vmatprep.subr.mxu0 0.0
        %4542 = vmatpush1.msra.mxu0 0.0
        %4543 = vmatprep.subr.mxu0 0.0
        %4544 = vmatpush1.msra.mxu0 0.0
        %4545 = vmatprep.subr.mxu0 0.0
        %4546 = vmatpush1.msra.mxu0 0.0
        %4547 = vmatprep.subr.mxu0 0.0
        %4548 = vmatpush1.msra.mxu0 0.0
        %4549 = vmatprep.subr.mxu0 0.0
        %4550 = vmatpush1.msra.mxu0 0.0
        %4551 = vmatprep.subr.mxu0 0.0
        %4552 = vmatpush1.msra.mxu0 0.0
        %4553 = vmatprep.subr.mxu0 0.0
        %4554 = vmatpush1.msra.mxu0 0.0
        %4555 = vmatprep.subr.mxu0 0.0
        %4556 = vmatpush1.msra.mxu0 0.0
        %4557 = vmatprep.subr.mxu0 0.0
        %4558 = vmatpush1.msra.mxu0 0.0
        %4559 = vmatprep.subr.mxu0 0.0
        %4560 = vmatpush1.msra.mxu0 0.0
        %4561 = vmatprep.subr.mxu0 0.0
        %4562 = vmatpush1.msra.mxu0 0.0
        %4563 = vmatprep.subr.mxu0 0.0
        %4564 = vmatpush1.msra.mxu0 0.0
        %4565 = vmatprep.subr.mxu0 0.0
        %4566 = vmatpush1.msra.mxu0 0.0
        %4567 = vmatprep.subr.mxu0 0.0
        %4568 = vmatpush1.msra.mxu0 0.0
        %4569 = vmatprep.mubr.f32.mxu0 0.0
        %4570 = vmatmul.mubr.f32.gmra.mrb[0].mxu0 %v4499
        %v4571 = vpop.f32.mrb[0].mxu0
        %v4572 = vadd.f32 0.0, %v4571
        %v4573 = vpop.f32.mrb[0].mxu0
        %v4574 = vadd.f32 0.0, %v4573
        %4575 = vdwg.mxu0
        %v4576 = vadd.f32 %v4480, %v4572
        %v4577 = vadd.f32 %v4481, %v4574
        %s4578 = scalar_lea.vmem %s11, 32
        %v4579 = vld [vmem:[%s4578] sm:$0xff]
        %4582 = vrot.lane.b32.xlu0 %v4207, 111
        %v4583 = vpop.permute.xlu0 %4582
        %4584 = vrot.lane.b32.xlu0 %v4203, 111
        %v4585 = vpop.permute.xlu0 %4584
        %4586 = vrot.lane.b32.xlu0 %v4208, 111
        %v4587 = vpop.permute.xlu0 %4586
        %v4588 = vsel %vm1151, %v4583, %v4585
        %v4589 = vsel %vm1151, %v4585, %v4587
        %v4591 = vsel %vm751, %v4579, 0
        %v4593 = vsel %vm755, %v4588, 0
        %v4595 = vsel %vm755, %v4589, 0
        %4597 = vmatprep.subr.mxu0 %v4595
        %4598 = vmatpush1.msra.mxu0 %v4593
        %4599 = vmatprep.subr.mxu0 0.0
        %4600 = vmatpush1.msra.mxu0 0.0
        %4601 = vmatprep.subr.mxu0 0.0
        %4602 = vmatpush1.msra.mxu0 0.0
        %4603 = vmatprep.subr.mxu0 0.0
        %4604 = vmatpush1.msra.mxu0 0.0
        %4605 = vmatprep.subr.mxu0 0.0
        %4606 = vmatpush1.msra.mxu0 0.0
        %4607 = vmatprep.subr.mxu0 0.0
        %4608 = vmatpush1.msra.mxu0 0.0
        %4609 = vmatprep.subr.mxu0 0.0
        %4610 = vmatpush1.msra.mxu0 0.0
        %4611 = vmatprep.subr.mxu0 0.0
        %4612 = vmatpush1.msra.mxu0 0.0
        %4613 = vmatprep.subr.mxu0 0.0
        %4614 = vmatpush1.msra.mxu0 0.0
        %4615 = vmatprep.subr.mxu0 0.0
        %4616 = vmatpush1.msra.mxu0 0.0
        %4617 = vmatprep.subr.mxu0 0.0
        %4618 = vmatpush1.msra.mxu0 0.0
        %4619 = vmatprep.subr.mxu0 0.0
        %4620 = vmatpush1.msra.mxu0 0.0
        %4621 = vmatprep.subr.mxu0 0.0
        %4622 = vmatpush1.msra.mxu0 0.0
        %4623 = vmatprep.subr.mxu0 0.0
        %4624 = vmatpush1.msra.mxu0 0.0
        %4625 = vmatprep.subr.mxu0 0.0
        %4626 = vmatpush1.msra.mxu0 0.0
        %4627 = vmatprep.subr.mxu0 0.0
        %4628 = vmatpush1.msra.mxu0 0.0
        %4629 = vmatprep.subr.mxu0 0.0
        %4630 = vmatpush1.msra.mxu0 0.0
        %4631 = vmatprep.subr.mxu0 0.0
        %4632 = vmatpush1.msra.mxu0 0.0
        %4633 = vmatprep.subr.mxu0 0.0
        %4634 = vmatpush1.msra.mxu0 0.0
        %4635 = vmatprep.subr.mxu0 0.0
        %4636 = vmatpush1.msra.mxu0 0.0
        %4637 = vmatprep.subr.mxu0 0.0
        %4638 = vmatpush1.msra.mxu0 0.0
        %4639 = vmatprep.subr.mxu0 0.0
        %4640 = vmatpush1.msra.mxu0 0.0
        %4641 = vmatprep.subr.mxu0 0.0
        %4642 = vmatpush1.msra.mxu0 0.0
        %4643 = vmatprep.subr.mxu0 0.0
        %4644 = vmatpush1.msra.mxu0 0.0
        %4645 = vmatprep.subr.mxu0 0.0
        %4646 = vmatpush1.msra.mxu0 0.0
        %4647 = vmatprep.subr.mxu0 0.0
        %4648 = vmatpush1.msra.mxu0 0.0
        %4649 = vmatprep.subr.mxu0 0.0
        %4650 = vmatpush1.msra.mxu0 0.0
        %4651 = vmatprep.subr.mxu0 0.0
        %4652 = vmatpush1.msra.mxu0 0.0
        %4653 = vmatprep.subr.mxu0 0.0
        %4654 = vmatpush1.msra.mxu0 0.0
        %4655 = vmatprep.subr.mxu0 0.0
        %4656 = vmatpush1.msra.mxu0 0.0
        %4657 = vmatprep.subr.mxu0 0.0
        %4658 = vmatpush1.msra.mxu0 0.0
        %4659 = vmatprep.subr.mxu0 0.0
        %4660 = vmatpush1.msra.mxu0 0.0
        %4661 = vmatprep.mubr.f32.mxu0 0.0
        %4662 = vmatmul.mubr.f32.gmra.mrb[0].mxu0 %v4591
        %v4663 = vpop.f32.mrb[0].mxu0
        %v4664 = vadd.f32 0.0, %v4663
        %v4665 = vpop.f32.mrb[0].mxu0
        %v4666 = vadd.f32 0.0, %v4665
        %4667 = vdwg.mxu0
        %v4668 = vadd.f32 %v4576, %v4664
        %v4669 = vadd.f32 %v4577, %v4666
        %v4670 = vmul.f32 %v4207, %v1244
        %v4671 = vmul.f32 %v4203, %v1248
        %v4672 = vmul.f32 %v4208, %v1246
        %s4673 = scalar_lea.vmem %s11, 40
        %v4674 = vld [vmem:[%s4673] sm:$0xff]
        %4678 = vrot.lane.b32.xlu0 %v4670, 110
        %v4679 = vpop.permute.xlu0 %4678
        %4680 = vrot.lane.b32.xlu0 %v4671, 110
        %v4681 = vpop.permute.xlu0 %4680
        %4682 = vrot.lane.b32.xlu0 %v4672, 110
        %v4683 = vpop.permute.xlu0 %4682
        %v4684 = vsel %vm1266, %v4679, %v4681
        %v4685 = vsel %vm1266, %v4681, %v4683
        %v4687 = vsel %vm751, %v4674, 0
        %v4689 = vsel %vm755, %v4684, 0
        %v4691 = vsel %vm755, %v4685, 0
        %4693 = vmatprep.subr.mxu0 %v4691
        %4694 = vmatpush1.msra.mxu0 %v4689
        %4695 = vmatprep.subr.mxu0 0.0
        %4696 = vmatpush1.msra.mxu0 0.0
        %4697 = vmatprep.subr.mxu0 0.0
        %4698 = vmatpush1.msra.mxu0 0.0
        %4699 = vmatprep.subr.mxu0 0.0
        %4700 = vmatpush1.msra.mxu0 0.0
        %4701 = vmatprep.subr.mxu0 0.0
        %4702 = vmatpush1.msra.mxu0 0.0
        %4703 = vmatprep.subr.mxu0 0.0
        %4704 = vmatpush1.msra.mxu0 0.0
        %4705 = vmatprep.subr.mxu0 0.0
        %4706 = vmatpush1.msra.mxu0 0.0
        %4707 = vmatprep.subr.mxu0 0.0
        %4708 = vmatpush1.msra.mxu0 0.0
        %4709 = vmatprep.subr.mxu0 0.0
        %4710 = vmatpush1.msra.mxu0 0.0
        %4711 = vmatprep.subr.mxu0 0.0
        %4712 = vmatpush1.msra.mxu0 0.0
        %4713 = vmatprep.subr.mxu0 0.0
        %4714 = vmatpush1.msra.mxu0 0.0
        %4715 = vmatprep.subr.mxu0 0.0
        %4716 = vmatpush1.msra.mxu0 0.0
        %4717 = vmatprep.subr.mxu0 0.0
        %4718 = vmatpush1.msra.mxu0 0.0
        %4719 = vmatprep.subr.mxu0 0.0
        %4720 = vmatpush1.msra.mxu0 0.0
        %4721 = vmatprep.subr.mxu0 0.0
        %4722 = vmatpush1.msra.mxu0 0.0
        %4723 = vmatprep.subr.mxu0 0.0
        %4724 = vmatpush1.msra.mxu0 0.0
        %4725 = vmatprep.subr.mxu0 0.0
        %4726 = vmatpush1.msra.mxu0 0.0
        %4727 = vmatprep.subr.mxu0 0.0
        %4728 = vmatpush1.msra.mxu0 0.0
        %4729 = vmatprep.subr.mxu0 0.0
        %4730 = vmatpush1.msra.mxu0 0.0
        %4731 = vmatprep.subr.mxu0 0.0
        %4732 = vmatpush1.msra.mxu0 0.0
        %4733 = vmatprep.subr.mxu0 0.0
        %4734 = vmatpush1.msra.mxu0 0.0
        %4735 = vmatprep.subr.mxu0 0.0
        %4736 = vmatpush1.msra.mxu0 0.0
        %4737 = vmatprep.subr.mxu0 0.0
        %4738 = vmatpush1.msra.mxu0 0.0
        %4739 = vmatprep.subr.mxu0 0.0
        %4740 = vmatpush1.msra.mxu0 0.0
        %4741 = vmatprep.subr.mxu0 0.0
        %4742 = vmatpush1.msra.mxu0 0.0
        %4743 = vmatprep.subr.mxu0 0.0
        %4744 = vmatpush1.msra.mxu0 0.0
        %4745 = vmatprep.subr.mxu0 0.0
        %4746 = vmatpush1.msra.mxu0 0.0
        %4747 = vmatprep.subr.mxu0 0.0
        %4748 = vmatpush1.msra.mxu0 0.0
        %4749 = vmatprep.subr.mxu0 0.0
        %4750 = vmatpush1.msra.mxu0 0.0
        %4751 = vmatprep.subr.mxu0 0.0
        %4752 = vmatpush1.msra.mxu0 0.0
        %4753 = vmatprep.subr.mxu0 0.0
        %4754 = vmatpush1.msra.mxu0 0.0
        %4755 = vmatprep.subr.mxu0 0.0
        %4756 = vmatpush1.msra.mxu0 0.0
        %4757 = vmatprep.mubr.f32.mxu0 0.0
        %4758 = vmatmul.mubr.f32.gmra.mrb[0].mxu0 %v4687
        %v4759 = vpop.f32.mrb[0].mxu0
        %v4760 = vadd.f32 0.0, %v4759
        %v4761 = vpop.f32.mrb[0].mxu0
        %v4762 = vadd.f32 0.0, %v4761
        %4763 = vdwg.mxu0
        %v4764 = vadd.f32 %v4668, %v4760
        %v4765 = vadd.f32 %v4669, %v4762
        %v4766 = vmul.f32 %v4207, %v1359
        %v4767 = vmul.f32 %v4203, %v1363
        %v4768 = vmul.f32 %v4208, %v1361
        %s4769 = scalar_lea.vmem %s11, 48
        %v4770 = vld [vmem:[%s4769] sm:$0xff]
        %4774 = vrot.lane.b32.xlu0 %v4766, 96
        %v4775 = vpop.permute.xlu0 %4774
        %4776 = vrot.lane.b32.xlu0 %v4767, 96
        %v4777 = vpop.permute.xlu0 %4776
        %4778 = vrot.lane.b32.xlu0 %v4768, 96
        %v4779 = vpop.permute.xlu0 %4778
        %v4780 = vsel %vm1381, %v4775, %v4777
        %v4781 = vsel %vm1381, %v4777, %v4779
        %v4783 = vsel %vm751, %v4770, 0
        %v4785 = vsel %vm755, %v4780, 0
        %v4787 = vsel %vm755, %v4781, 0
        %4789 = vmatprep.subr.mxu0 %v4787
        %4790 = vmatpush1.msra.mxu0 %v4785
        %4791 = vmatprep.subr.mxu0 0.0
        %4792 = vmatpush1.msra.mxu0 0.0
        %4793 = vmatprep.subr.mxu0 0.0
        %4794 = vmatpush1.msra.mxu0 0.0
        %4795 = vmatprep.subr.mxu0 0.0
        %4796 = vmatpush1.msra.mxu0 0.0
        %4797 = vmatprep.subr.mxu0 0.0
        %4798 = vmatpush1.msra.mxu0 0.0
        %4799 = vmatprep.subr.mxu0 0.0
        %4800 = vmatpush1.msra.mxu0 0.0
        %4801 = vmatprep.subr.mxu0 0.0
        %4802 = vmatpush1.msra.mxu0 0.0
        %4803 = vmatprep.subr.mxu0 0.0
        %4804 = vmatpush1.msra.mxu0 0.0
        %4805 = vmatprep.subr.mxu0 0.0
        %4806 = vmatpush1.msra.mxu0 0.0
        %4807 = vmatprep.subr.mxu0 0.0
        %4808 = vmatpush1.msra.mxu0 0.0
        %4809 = vmatprep.subr.mxu0 0.0
        %4810 = vmatpush1.msra.mxu0 0.0
        %4811 = vmatprep.subr.mxu0 0.0
        %4812 = vmatpush1.msra.mxu0 0.0
        %4813 = vmatprep.subr.mxu0 0.0
        %4814 = vmatpush1.msra.mxu0 0.0
        %4815 = vmatprep.subr.mxu0 0.0
        %4816 = vmatpush1.msra.mxu0 0.0
        %4817 = vmatprep.subr.mxu0 0.0
        %4818 = vmatpush1.msra.mxu0 0.0
        %4819 = vmatprep.subr.mxu0 0.0
        %4820 = vmatpush1.msra.mxu0 0.0
        %4821 = vmatprep.subr.mxu0 0.0
        %4822 = vmatpush1.msra.mxu0 0.0
        %4823 = vmatprep.subr.mxu0 0.0
        %4824 = vmatpush1.msra.mxu0 0.0
        %4825 = vmatprep.subr.mxu0 0.0
        %4826 = vmatpush1.msra.mxu0 0.0
        %4827 = vmatprep.subr.mxu0 0.0
        %4828 = vmatpush1.msra.mxu0 0.0
        %4829 = vmatprep.subr.mxu0 0.0
        %4830 = vmatpush1.msra.mxu0 0.0
        %4831 = vmatprep.subr.mxu0 0.0
        %4832 = vmatpush1.msra.mxu0 0.0
        %4833 = vmatprep.subr.mxu0 0.0
        %4834 = vmatpush1.msra.mxu0 0.0
        %4835 = vmatprep.subr.mxu0 0.0
        %4836 = vmatpush1.msra.mxu0 0.0
        %4837 = vmatprep.subr.mxu0 0.0
        %4838 = vmatpush1.msra.mxu0 0.0
        %4839 = vmatprep.subr.mxu0 0.0
        %4840 = vmatpush1.msra.mxu0 0.0
        %4841 = vmatprep.subr.mxu0 0.0
        %4842 = vmatpush1.msra.mxu0 0.0
        %4843 = vmatprep.subr.mxu0 0.0
        %4844 = vmatpush1.msra.mxu0 0.0
        %4845 = vmatprep.subr.mxu0 0.0
        %4846 = vmatpush1.msra.mxu0 0.0
        %4847 = vmatprep.subr.mxu0 0.0
        %4848 = vmatpush1.msra.mxu0 0.0
        %4849 = vmatprep.subr.mxu0 0.0
        %4850 = vmatpush1.msra.mxu0 0.0
        %4851 = vmatprep.subr.mxu0 0.0
        %4852 = vmatpush1.msra.mxu0 0.0
        %4853 = vmatprep.mubr.f32.mxu0 0.0
        %4854 = vmatmul.mubr.f32.gmra.mrb[0].mxu0 %v4783
        %v4855 = vpop.f32.mrb[0].mxu0
        %v4856 = vadd.f32 0.0, %v4855
        %v4857 = vpop.f32.mrb[0].mxu0
        %v4858 = vadd.f32 0.0, %v4857
        %4859 = vdwg.mxu0
        %v4860 = vadd.f32 %v4764, %v4856
        %v4861 = vadd.f32 %v4765, %v4858
        %v4862 = vmul.f32 %v4207, %v1474
        %v4863 = vmul.f32 %v4203, %v1478
        %v4864 = vmul.f32 %v4208, %v1476
        %s4865 = scalar_lea.vmem %s11, 56
        %v4866 = vld [vmem:[%s4865] sm:$0xff]
        %4870 = vrot.lane.b32.xlu0 %v4862, 95
        %v4871 = vpop.permute.xlu0 %4870
        %4872 = vrot.lane.b32.xlu0 %v4863, 95
        %v4873 = vpop.permute.xlu0 %4872
        %4874 = vrot.lane.b32.xlu0 %v4864, 95
        %v4875 = vpop.permute.xlu0 %4874
        %v4876 = vsel %vm1496, %v4871, %v4873
        %v4877 = vsel %vm1496, %v4873, %v4875
        %v4879 = vsel %vm751, %v4866, 0
        %v4881 = vsel %vm755, %v4876, 0
        %v4883 = vsel %vm755, %v4877, 0
        %4885 = vmatprep.subr.mxu0 %v4883
        %4886 = vmatpush1.msra.mxu0 %v4881
        %4887 = vmatprep.subr.mxu0 0.0
        %4888 = vmatpush1.msra.mxu0 0.0
        %4889 = vmatprep.subr.mxu0 0.0
        %4890 = vmatpush1.msra.mxu0 0.0
        %4891 = vmatprep.subr.mxu0 0.0
        %4892 = vmatpush1.msra.mxu0 0.0
        %4893 = vmatprep.subr.mxu0 0.0
        %4894 = vmatpush1.msra.mxu0 0.0
        %4895 = vmatprep.subr.mxu0 0.0
        %4896 = vmatpush1.msra.mxu0 0.0
        %4897 = vmatprep.subr.mxu0 0.0
        %4898 = vmatpush1.msra.mxu0 0.0
        %4899 = vmatprep.subr.mxu0 0.0
        %4900 = vmatpush1.msra.mxu0 0.0
        %4901 = vmatprep.subr.mxu0 0.0
        %4902 = vmatpush1.msra.mxu0 0.0
        %4903 = vmatprep.subr.mxu0 0.0
        %4904 = vmatpush1.msra.mxu0 0.0
        %4905 = vmatprep.subr.mxu0 0.0
        %4906 = vmatpush1.msra.mxu0 0.0
        %4907 = vmatprep.subr.mxu0 0.0
        %4908 = vmatpush1.msra.mxu0 0.0
        %4909 = vmatprep.subr.mxu0 0.0
        %4910 = vmatpush1.msra.mxu0 0.0
        %4911 = vmatprep.subr.mxu0 0.0
        %4912 = vmatpush1.msra.mxu0 0.0
        %4913 = vmatprep.subr.mxu0 0.0
        %4914 = vmatpush1.msra.mxu0 0.0
        %4915 = vmatprep.subr.mxu0 0.0
        %4916 = vmatpush1.msra.mxu0 0.0
        %4917 = vmatprep.subr.mxu0 0.0
        %4918 = vmatpush1.msra.mxu0 0.0
        %4919 = vmatprep.subr.mxu0 0.0
        %4920 = vmatpush1.msra.mxu0 0.0
        %4921 = vmatprep.subr.mxu0 0.0
        %4922 = vmatpush1.msra.mxu0 0.0
        %4923 = vmatprep.subr.mxu0 0.0
        %4924 = vmatpush1.msra.mxu0 0.0
        %4925 = vmatprep.subr.mxu0 0.0
        %4926 = vmatpush1.msra.mxu0 0.0
        %4927 = vmatprep.subr.mxu0 0.0
        %4928 = vmatpush1.msra.mxu0 0.0
        %4929 = vmatprep.subr.mxu0 0.0
        %4930 = vmatpush1.msra.mxu0 0.0
        %4931 = vmatprep.subr.mxu0 0.0
        %4932 = vmatpush1.msra.mxu0 0.0
        %4933 = vmatprep.subr.mxu0 0.0
        %4934 = vmatpush1.msra.mxu0 0.0
        %4935 = vmatprep.subr.mxu0 0.0
        %4936 = vmatpush1.msra.mxu0 0.0
        %4937 = vmatprep.subr.mxu0 0.0
        %4938 = vmatpush1.msra.mxu0 0.0
        %4939 = vmatprep.subr.mxu0 0.0
        %4940 = vmatpush1.msra.mxu0 0.0
        %4941 = vmatprep.subr.mxu0 0.0
        %4942 = vmatpush1.msra.mxu0 0.0
        %4943 = vmatprep.subr.mxu0 0.0
        %4944 = vmatpush1.msra.mxu0 0.0
        %4945 = vmatprep.subr.mxu0 0.0
        %4946 = vmatpush1.msra.mxu0 0.0
        %4947 = vmatprep.subr.mxu0 0.0
        %4948 = vmatpush1.msra.mxu0 0.0
        %4949 = vmatprep.mubr.f32.mxu0 0.0
        %4950 = vmatmul.mubr.f32.gmra.mrb[0].mxu0 %v4879
        %v4951 = vpop.f32.mrb[0].mxu0
        %v4952 = vadd.f32 0.0, %v4951
        %v4953 = vpop.f32.mrb[0].mxu0
        %v4954 = vadd.f32 0.0, %v4953
        %4955 = vdwg.mxu0
        %v4956 = vadd.f32 %v4860, %v4952
        %v4957 = vadd.f32 %v4861, %v4954
        %v4958 = vmul.f32 %v4207, %v1589
        %v4959 = vmul.f32 %v4203, %v1593
        %v4960 = vmul.f32 %v4208, %v1591
        %s4961 = scalar_lea.vmem %s11, 64
        %v4962 = vld [vmem:[%s4961] sm:$0xff]
        %4966 = vrot.lane.b32.xlu0 %v4958, 94
        %v4967 = vpop.permute.xlu0 %4966
        %4968 = vrot.lane.b32.xlu0 %v4959, 94
        %v4969 = vpop.permute.xlu0 %4968
        %4970 = vrot.lane.b32.xlu0 %v4960, 94
        %v4971 = vpop.permute.xlu0 %4970
        %v4972 = vsel %vm1611, %v4967, %v4969
        %v4973 = vsel %vm1611, %v4969, %v4971
        %v4975 = vsel %vm751, %v4962, 0
        %v4977 = vsel %vm755, %v4972, 0
        %v4979 = vsel %vm755, %v4973, 0
        %4981 = vmatprep.subr.mxu0 %v4979
        %4982 = vmatpush1.msra.mxu0 %v4977
        %4983 = vmatprep.subr.mxu0 0.0
        %4984 = vmatpush1.msra.mxu0 0.0
        %4985 = vmatprep.subr.mxu0 0.0
        %4986 = vmatpush1.msra.mxu0 0.0
        %4987 = vmatprep.subr.mxu0 0.0
        %4988 = vmatpush1.msra.mxu0 0.0
        %4989 = vmatprep.subr.mxu0 0.0
        %4990 = vmatpush1.msra.mxu0 0.0
        %4991 = vmatprep.subr.mxu0 0.0
        %4992 = vmatpush1.msra.mxu0 0.0
        %4993 = vmatprep.subr.mxu0 0.0
        %4994 = vmatpush1.msra.mxu0 0.0
        %4995 = vmatprep.subr.mxu0 0.0
        %4996 = vmatpush1.msra.mxu0 0.0
        %4997 = vmatprep.subr.mxu0 0.0
        %4998 = vmatpush1.msra.mxu0 0.0
        %4999 = vmatprep.subr.mxu0 0.0
        %5000 = vmatpush1.msra.mxu0 0.0
        %5001 = vmatprep.subr.mxu0 0.0
        %5002 = vmatpush1.msra.mxu0 0.0
        %5003 = vmatprep.subr.mxu0 0.0
        %5004 = vmatpush1.msra.mxu0 0.0
        %5005 = vmatprep.subr.mxu0 0.0
        %5006 = vmatpush1.msra.mxu0 0.0
        %5007 = vmatprep.subr.mxu0 0.0
        %5008 = vmatpush1.msra.mxu0 0.0
        %5009 = vmatprep.subr.mxu0 0.0
        %5010 = vmatpush1.msra.mxu0 0.0
        %5011 = vmatprep.subr.mxu0 0.0
        %5012 = vmatpush1.msra.mxu0 0.0
        %5013 = vmatprep.subr.mxu0 0.0
        %5014 = vmatpush1.msra.mxu0 0.0
        %5015 = vmatprep.subr.mxu0 0.0
        %5016 = vmatpush1.msra.mxu0 0.0
        %5017 = vmatprep.subr.mxu0 0.0
        %5018 = vmatpush1.msra.mxu0 0.0
        %5019 = vmatprep.subr.mxu0 0.0
        %5020 = vmatpush1.msra.mxu0 0.0
        %5021 = vmatprep.subr.mxu0 0.0
        %5022 = vmatpush1.msra.mxu0 0.0
        %5023 = vmatprep.subr.mxu0 0.0
        %5024 = vmatpush1.msra.mxu0 0.0
        %5025 = vmatprep.subr.mxu0 0.0
        %5026 = vmatpush1.msra.mxu0 0.0
        %5027 = vmatprep.subr.mxu0 0.0
        %5028 = vmatpush1.msra.mxu0 0.0
        %5029 = vmatprep.subr.mxu0 0.0
        %5030 = vmatpush1.msra.mxu0 0.0
        %5031 = vmatprep.subr.mxu0 0.0
        %5032 = vmatpush1.msra.mxu0 0.0
        %5033 = vmatprep.subr.mxu0 0.0
        %5034 = vmatpush1.msra.mxu0 0.0
        %5035 = vmatprep.subr.mxu0 0.0
        %5036 = vmatpush1.msra.mxu0 0.0
        %5037 = vmatprep.subr.mxu0 0.0
        %5038 = vmatpush1.msra.mxu0 0.0
        %5039 = vmatprep.subr.mxu0 0.0
        %5040 = vmatpush1.msra.mxu0 0.0
        %5041 = vmatprep.subr.mxu0 0.0
        %5042 = vmatpush1.msra.mxu0 0.0
        %5043 = vmatprep.subr.mxu0 0.0
        %5044 = vmatpush1.msra.mxu0 0.0
        %5045 = vmatprep.mubr.f32.mxu0 0.0
        %5046 = vmatmul.mubr.f32.gmra.mrb[0].mxu0 %v4975
        %v5047 = vpop.f32.mrb[0].mxu0
        %v5048 = vadd.f32 0.0, %v5047
        %v5049 = vpop.f32.mrb[0].mxu0
        %v5050 = vadd.f32 0.0, %v5049
        %5051 = vdwg.mxu0
        %v5052 = vadd.f32 %v4956, %v5048
        %v5053 = vadd.f32 %v4957, %v5050
        %v5054 = vld [vmem:[%s12] sm:$0xff]
        %5056 = vset.pattern.permute.xlu0 0
        %5057 = vperm.xlu0 %5056, %v5054
        %v5058 = vpop.permute.xlu0 %5057
        %v5060 = vadd.f32 %v5052, %v5058
        %v5061 = vadd.f32 %v5053, %v5058
        %v5062 = vsel %vm755, %v3486, 0.0
        %v5063 = vsel %vm755, %v3487, 0.0
        %v5064 = vadd.f32 %v5062, %v5063
        %5065 = vadd.xlane.f32.xlu0 %v5064
        %v5066 = vpop.xlane.xlu0 %5065
        %v5067 = vmul.f32 %v5066, %v2579
        %v5068 = vsub.f32 %v3486, %v5067
        %v5069 = vsub.f32 %v3487, %v5067
        %v5070 = vmul.f32 %v5068, %v5068
        %v5071 = vmul.f32 %v5069, %v5069
        %v5072 = vsel %vm755, %v5070, 0.0
        %v5073 = vsel %vm755, %v5071, 0.0
        %v5074 = vadd.f32 %v5072, %v5073
        %5075 = vadd.xlane.f32.xlu0 %v5074
        %v5076 = vpop.xlane.xlu0 %5075
        %v5077 = vmul.f32 %v5076, %v2579
        %v5078 = vadd.f32 %v5077, 1e-05
        %v5079 = vrsqrt.pop %v5078
        %v5080 = vmul.f32 %v5068, %v5079
        %v5081 = vmul.f32 %v5069, %v5079
        %v5082 = vmul.f32 %v5080, %v5060
        %v5083 = vmul.f32 %v5081, %v5061
        %v5086 = vrot.slane %v5060, 4
        %v5087 = vrot.slane %v5061, 4
        %v5090 = vadd.f32 %v5082, %v5086
        %v5091 = vadd.f32 %v5083, %v5087
        %v5092 = vmul.f32 %v5090, 0.01
        %v5093 = vmul.f32 %v5091, 0.01
        %v5094 = vmax.f32 %v5090, %v5092
        %v5095 = vmax.f32 %v5091, %v5093
        %5098 = vrot.lane.b32.xlu0 %v5094, 17
        %v5099 = vpop.permute.xlu0 %5098
        %5100 = vrot.lane.b32.xlu0 %v5095, 17
        %v5101 = vpop.permute.xlu0 %5100
        %v5102 = vsel %vm695, %v5099, %v5101
        %v5106 = vsel %vm695, 0.0, %v5099
        %v5107 = vsel %vm695, %v5101, 0.0
        %v5108 = vmul.f32 %v5106, %v706
        %v5109 = vmul.f32 %v5102, %v710
        %v5110 = vld [vmem:[%s15] sm:$0xf]
        %v5111 = vmul.f32 %v5106, %v726
        %v5112 = vmul.f32 %v5102, %v730
        %v5113 = vmul.f32 %v5107, %v728
        %s5114 = scalar_lea.vmem %s15, 4
        %v5115 = vld [vmem:[%s5114] sm:$0xf]
        %5119 = vrot.lane.b32.xlu0 %v5111, 127
        %v5120 = vpop.permute.xlu0 %5119
        %5121 = vrot.lane.b32.xlu0 %v5112, 127
        %v5122 = vpop.permute.xlu0 %5121
        %5123 = vrot.lane.b32.xlu0 %v5113, 127
        %v5124 = vpop.permute.xlu0 %5123
        %v5125 = vsel %vm748, %v5120, %v5122
        %v5126 = vsel %vm748, %v5122, %v5124
        %v5128 = vsel %vm751, %v5115, 0
        %v5130 = vsel %vm755, %v5125, 0
        %v5132 = vsel %vm755, %v5126, 0
        %5134 = vmatprep.subr.mxu0 %v5132
        %5135 = vmatpush1.msra.mxu0 %v5130
        %5136 = vmatprep.subr.mxu0 0.0
        %5137 = vmatpush1.msra.mxu0 0.0
        %5138 = vmatprep.subr.mxu0 0.0
        %5139 = vmatpush1.msra.mxu0 0.0
        %5140 = vmatprep.subr.mxu0 0.0
        %5141 = vmatpush1.msra.mxu0 0.0
        %5142 = vmatprep.subr.mxu0 0.0
        %5143 = vmatpush1.msra.mxu0 0.0
        %5144 = vmatprep.subr.mxu0 0.0
        %5145 = vmatpush1.msra.mxu0 0.0
        %5146 = vmatprep.subr.mxu0 0.0
        %5147 = vmatpush1.msra.mxu0 0.0
        %5148 = vmatprep.subr.mxu0 0.0
        %5149 = vmatpush1.msra.mxu0 0.0
        %5150 = vmatprep.subr.mxu0 0.0
        %5151 = vmatpush1.msra.mxu0 0.0
        %5152 = vmatprep.subr.mxu0 0.0
        %5153 = vmatpush1.msra.mxu0 0.0
        %5154 = vmatprep.subr.mxu0 0.0
        %5155 = vmatpush1.msra.mxu0 0.0
        %5156 = vmatprep.subr.mxu0 0.0
        %5157 = vmatpush1.msra.mxu0 0.0
        %5158 = vmatprep.subr.mxu0 0.0
        %5159 = vmatpush1.msra.mxu0 0.0
        %5160 = vmatprep.subr.mxu0 0.0
        %5161 = vmatpush1.msra.mxu0 0.0
        %5162 = vmatprep.subr.mxu0 0.0
        %5163 = vmatpush1.msra.mxu0 0.0
        %5164 = vmatprep.subr.mxu0 0.0
        %5165 = vmatpush1.msra.mxu0 0.0
        %5166 = vmatprep.subr.mxu0 0.0
        %5167 = vmatpush1.msra.mxu0 0.0
        %5168 = vmatprep.subr.mxu0 0.0
        %5169 = vmatpush1.msra.mxu0 0.0
        %5170 = vmatprep.subr.mxu0 0.0
        %5171 = vmatpush1.msra.mxu0 0.0
        %5172 = vmatprep.subr.mxu0 0.0
        %5173 = vmatpush1.msra.mxu0 0.0
        %5174 = vmatprep.subr.mxu0 0.0
        %5175 = vmatpush1.msra.mxu0 0.0
        %5176 = vmatprep.subr.mxu0 0.0
        %5177 = vmatpush1.msra.mxu0 0.0
        %5178 = vmatprep.subr.mxu0 0.0
        %5179 = vmatpush1.msra.mxu0 0.0
        %5180 = vmatprep.subr.mxu0 0.0
        %5181 = vmatpush1.msra.mxu0 0.0
        %5182 = vmatprep.subr.mxu0 0.0
        %5183 = vmatpush1.msra.mxu0 0.0
        %5184 = vmatprep.subr.mxu0 0.0
        %5185 = vmatpush1.msra.mxu0 0.0
        %5186 = vmatprep.subr.mxu0 0.0
        %5187 = vmatpush1.msra.mxu0 0.0
        %5188 = vmatprep.subr.mxu0 0.0
        %5189 = vmatpush1.msra.mxu0 0.0
        %5190 = vmatprep.subr.mxu0 0.0
        %5191 = vmatpush1.msra.mxu0 0.0
        %5192 = vmatprep.subr.mxu0 0.0
        %5193 = vmatpush1.msra.mxu0 0.0
        %5194 = vmatprep.subr.mxu0 0.0
        %5195 = vmatpush1.msra.mxu0 0.0
        %5196 = vmatprep.subr.mxu0 0.0
        %5197 = vmatpush1.msra.mxu0 0.0
        %5198 = vmatprep.mubr.f32.mxu0 0.0
        %5199 = vmatmul.mubr.f32.gmra.mrb[0].mxu0 %v5128
        %v5200 = vpop.f32.mrb[0].mxu0
        %v5201 = vadd.f32 0.0, %v5200
        %v5202 = vpop.f32.mrb[0].mxu0
        %v5203 = vadd.f32 0.0, %v5202
        %5204 = vdwg.mxu0
        %v5206 = vsel %vm751, %v5110, 0
        %v5209 = vsel %vm755, %v5108, 0
        %v5212 = vsel %vm755, %v5109, 0
        %5214 = vmatprep.subr.mxu0 %v5212
        %5215 = vmatpush1.msra.mxu0 %v5209
        %5216 = vmatprep.subr.mxu0 0.0
        %5217 = vmatpush1.msra.mxu0 0.0
        %5218 = vmatprep.subr.mxu0 0.0
        %5219 = vmatpush1.msra.mxu0 0.0
        %5220 = vmatprep.subr.mxu0 0.0
        %5221 = vmatpush1.msra.mxu0 0.0
        %5222 = vmatprep.subr.mxu0 0.0
        %5223 = vmatpush1.msra.mxu0 0.0
        %5224 = vmatprep.subr.mxu0 0.0
        %5225 = vmatpush1.msra.mxu0 0.0
        %5226 = vmatprep.subr.mxu0 0.0
        %5227 = vmatpush1.msra.mxu0 0.0
        %5228 = vmatprep.subr.mxu0 0.0
        %5229 = vmatpush1.msra.mxu0 0.0
        %5230 = vmatprep.subr.mxu0 0.0
        %5231 = vmatpush1.msra.mxu0 0.0
        %5232 = vmatprep.subr.mxu0 0.0
        %5233 = vmatpush1.msra.mxu0 0.0
        %5234 = vmatprep.subr.mxu0 0.0
        %5235 = vmatpush1.msra.mxu0 0.0
        %5236 = vmatprep.subr.mxu0 0.0
        %5237 = vmatpush1.msra.mxu0 0.0
        %5238 = vmatprep.subr.mxu0 0.0
        %5239 = vmatpush1.msra.mxu0 0.0
        %5240 = vmatprep.subr.mxu0 0.0
        %5241 = vmatpush1.msra.mxu0 0.0
        %5242 = vmatprep.subr.mxu0 0.0
        %5243 = vmatpush1.msra.mxu0 0.0
        %5244 = vmatprep.subr.mxu0 0.0
        %5245 = vmatpush1.msra.mxu0 0.0
        %5246 = vmatprep.subr.mxu0 0.0
        %5247 = vmatpush1.msra.mxu0 0.0
        %5248 = vmatprep.subr.mxu0 0.0
        %5249 = vmatpush1.msra.mxu0 0.0
        %5250 = vmatprep.subr.mxu0 0.0
        %5251 = vmatpush1.msra.mxu0 0.0
        %5252 = vmatprep.subr.mxu0 0.0
        %5253 = vmatpush1.msra.mxu0 0.0
        %5254 = vmatprep.subr.mxu0 0.0
        %5255 = vmatpush1.msra.mxu0 0.0
        %5256 = vmatprep.subr.mxu0 0.0
        %5257 = vmatpush1.msra.mxu0 0.0
        %5258 = vmatprep.subr.mxu0 0.0
        %5259 = vmatpush1.msra.mxu0 0.0
        %5260 = vmatprep.subr.mxu0 0.0
        %5261 = vmatpush1.msra.mxu0 0.0
        %5262 = vmatprep.subr.mxu0 0.0
        %5263 = vmatpush1.msra.mxu0 0.0
        %5264 = vmatprep.subr.mxu0 0.0
        %5265 = vmatpush1.msra.mxu0 0.0
        %5266 = vmatprep.subr.mxu0 0.0
        %5267 = vmatpush1.msra.mxu0 0.0
        %5268 = vmatprep.subr.mxu0 0.0
        %5269 = vmatpush1.msra.mxu0 0.0
        %5270 = vmatprep.subr.mxu0 0.0
        %5271 = vmatpush1.msra.mxu0 0.0
        %5272 = vmatprep.subr.mxu0 0.0
        %5273 = vmatpush1.msra.mxu0 0.0
        %5274 = vmatprep.subr.mxu0 0.0
        %5275 = vmatpush1.msra.mxu0 0.0
        %5276 = vmatprep.subr.mxu0 0.0
        %5277 = vmatpush1.msra.mxu0 0.0
        %5278 = vmatprep.mubr.f32.mxu0 0.0
        %5279 = vmatmul.mubr.f32.gmra.mrb[0].mxu0 %v5206
        %v5280 = vpop.f32.mrb[0].mxu0
        %v5281 = vadd.f32 %v5201, %v5280
        %v5282 = vpop.f32.mrb[0].mxu0
        %v5283 = vadd.f32 %v5203, %v5282
        %5284 = vdwg.mxu0
        %v5285 = vmul.f32 %v5106, %v921
        %v5286 = vmul.f32 %v5102, %v925
        %v5287 = vmul.f32 %v5107, %v923
        %s5288 = scalar_lea.vmem %s15, 8
        %v5289 = vld [vmem:[%s5288] sm:$0xf]
        %5293 = vrot.lane.b32.xlu0 %v5285, 126
        %v5294 = vpop.permute.xlu0 %5293
        %5295 = vrot.lane.b32.xlu0 %v5286, 126
        %v5296 = vpop.permute.xlu0 %5295
        %5297 = vrot.lane.b32.xlu0 %v5287, 126
        %v5298 = vpop.permute.xlu0 %5297
        %v5299 = vsel %vm943, %v5294, %v5296
        %v5300 = vsel %vm943, %v5296, %v5298
        %v5302 = vsel %vm751, %v5289, 0
        %v5304 = vsel %vm755, %v5299, 0
        %v5306 = vsel %vm755, %v5300, 0
        %5308 = vmatprep.subr.mxu0 %v5306
        %5309 = vmatpush1.msra.mxu0 %v5304
        %5310 = vmatprep.subr.mxu0 0.0
        %5311 = vmatpush1.msra.mxu0 0.0
        %5312 = vmatprep.subr.mxu0 0.0
        %5313 = vmatpush1.msra.mxu0 0.0
        %5314 = vmatprep.subr.mxu0 0.0
        %5315 = vmatpush1.msra.mxu0 0.0
        %5316 = vmatprep.subr.mxu0 0.0
        %5317 = vmatpush1.msra.mxu0 0.0
        %5318 = vmatprep.subr.mxu0 0.0
        %5319 = vmatpush1.msra.mxu0 0.0
        %5320 = vmatprep.subr.mxu0 0.0
        %5321 = vmatpush1.msra.mxu0 0.0
        %5322 = vmatprep.subr.mxu0 0.0
        %5323 = vmatpush1.msra.mxu0 0.0
        %5324 = vmatprep.subr.mxu0 0.0
        %5325 = vmatpush1.msra.mxu0 0.0
        %5326 = vmatprep.subr.mxu0 0.0
        %5327 = vmatpush1.msra.mxu0 0.0
        %5328 = vmatprep.subr.mxu0 0.0
        %5329 = vmatpush1.msra.mxu0 0.0
        %5330 = vmatprep.subr.mxu0 0.0
        %5331 = vmatpush1.msra.mxu0 0.0
        %5332 = vmatprep.subr.mxu0 0.0
        %5333 = vmatpush1.msra.mxu0 0.0
        %5334 = vmatprep.subr.mxu0 0.0
        %5335 = vmatpush1.msra.mxu0 0.0
        %5336 = vmatprep.subr.mxu0 0.0
        %5337 = vmatpush1.msra.mxu0 0.0
        %5338 = vmatprep.subr.mxu0 0.0
        %5339 = vmatpush1.msra.mxu0 0.0
        %5340 = vmatprep.subr.mxu0 0.0
        %5341 = vmatpush1.msra.mxu0 0.0
        %5342 = vmatprep.subr.mxu0 0.0
        %5343 = vmatpush1.msra.mxu0 0.0
        %5344 = vmatprep.subr.mxu0 0.0
        %5345 = vmatpush1.msra.mxu0 0.0
        %5346 = vmatprep.subr.mxu0 0.0
        %5347 = vmatpush1.msra.mxu0 0.0
        %5348 = vmatprep.subr.mxu0 0.0
        %5349 = vmatpush1.msra.mxu0 0.0
        %5350 = vmatprep.subr.mxu0 0.0
        %5351 = vmatpush1.msra.mxu0 0.0
        %5352 = vmatprep.subr.mxu0 0.0
        %5353 = vmatpush1.msra.mxu0 0.0
        %5354 = vmatprep.subr.mxu0 0.0
        %5355 = vmatpush1.msra.mxu0 0.0
        %5356 = vmatprep.subr.mxu0 0.0
        %5357 = vmatpush1.msra.mxu0 0.0
        %5358 = vmatprep.subr.mxu0 0.0
        %5359 = vmatpush1.msra.mxu0 0.0
        %5360 = vmatprep.subr.mxu0 0.0
        %5361 = vmatpush1.msra.mxu0 0.0
        %5362 = vmatprep.subr.mxu0 0.0
        %5363 = vmatpush1.msra.mxu0 0.0
        %5364 = vmatprep.subr.mxu0 0.0
        %5365 = vmatpush1.msra.mxu0 0.0
        %5366 = vmatprep.subr.mxu0 0.0
        %5367 = vmatpush1.msra.mxu0 0.0
        %5368 = vmatprep.subr.mxu0 0.0
        %5369 = vmatpush1.msra.mxu0 0.0
        %5370 = vmatprep.subr.mxu0 0.0
        %5371 = vmatpush1.msra.mxu0 0.0
        %5372 = vmatprep.mubr.f32.mxu0 0.0
        %5373 = vmatmul.mubr.f32.gmra.mrb[0].mxu0 %v5302
        %v5374 = vpop.f32.mrb[0].mxu0
        %v5375 = vadd.f32 0.0, %v5374
        %v5376 = vpop.f32.mrb[0].mxu0
        %v5377 = vadd.f32 0.0, %v5376
        %5378 = vdwg.mxu0
        %v5379 = vadd.f32 %v5281, %v5375
        %v5380 = vadd.f32 %v5283, %v5377
        %v5381 = vmul.f32 %v5106, %v1036
        %v5382 = vmul.f32 %v5102, %v1040
        %v5383 = vmul.f32 %v5107, %v1038
        %s5384 = scalar_lea.vmem %s15, 12
        %v5385 = vld [vmem:[%s5384] sm:$0xf]
        %5389 = vrot.lane.b32.xlu0 %v5381, 112
        %v5390 = vpop.permute.xlu0 %5389
        %5391 = vrot.lane.b32.xlu0 %v5382, 112
        %v5392 = vpop.permute.xlu0 %5391
        %5393 = vrot.lane.b32.xlu0 %v5383, 112
        %v5394 = vpop.permute.xlu0 %5393
        %v5395 = vsel %vm1058, %v5390, %v5392
        %v5396 = vsel %vm1058, %v5392, %v5394
        %v5398 = vsel %vm751, %v5385, 0
        %v5400 = vsel %vm755, %v5395, 0
        %v5402 = vsel %vm755, %v5396, 0
        %5404 = vmatprep.subr.mxu0 %v5402
        %5405 = vmatpush1.msra.mxu0 %v5400
        %5406 = vmatprep.subr.mxu0 0.0
        %5407 = vmatpush1.msra.mxu0 0.0
        %5408 = vmatprep.subr.mxu0 0.0
        %5409 = vmatpush1.msra.mxu0 0.0
        %5410 = vmatprep.subr.mxu0 0.0
        %5411 = vmatpush1.msra.mxu0 0.0
        %5412 = vmatprep.subr.mxu0 0.0
        %5413 = vmatpush1.msra.mxu0 0.0
        %5414 = vmatprep.subr.mxu0 0.0
        %5415 = vmatpush1.msra.mxu0 0.0
        %5416 = vmatprep.subr.mxu0 0.0
        %5417 = vmatpush1.msra.mxu0 0.0
        %5418 = vmatprep.subr.mxu0 0.0
        %5419 = vmatpush1.msra.mxu0 0.0
        %5420 = vmatprep.subr.mxu0 0.0
        %5421 = vmatpush1.msra.mxu0 0.0
        %5422 = vmatprep.subr.mxu0 0.0
        %5423 = vmatpush1.msra.mxu0 0.0
        %5424 = vmatprep.subr.mxu0 0.0
        %5425 = vmatpush1.msra.mxu0 0.0
        %5426 = vmatprep.subr.mxu0 0.0
        %5427 = vmatpush1.msra.mxu0 0.0
        %5428 = vmatprep.subr.mxu0 0.0
        %5429 = vmatpush1.msra.mxu0 0.0
        %5430 = vmatprep.subr.mxu0 0.0
        %5431 = vmatpush1.msra.mxu0 0.0
        %5432 = vmatprep.subr.mxu0 0.0
        %5433 = vmatpush1.msra.mxu0 0.0
        %5434 = vmatprep.subr.mxu0 0.0
        %5435 = vmatpush1.msra.mxu0 0.0
        %5436 = vmatprep.subr.mxu0 0.0
        %5437 = vmatpush1.msra.mxu0 0.0
        %5438 = vmatprep.subr.mxu0 0.0
        %5439 = vmatpush1.msra.mxu0 0.0
        %5440 = vmatprep.subr.mxu0 0.0
        %5441 = vmatpush1.msra.mxu0 0.0
        %5442 = vmatprep.subr.mxu0 0.0
        %5443 = vmatpush1.msra.mxu0 0.0
        %5444 = vmatprep.subr.mxu0 0.0
        %5445 = vmatpush1.msra.mxu0 0.0
        %5446 = vmatprep.subr.mxu0 0.0
        %5447 = vmatpush1.msra.mxu0 0.0
        %5448 = vmatprep.subr.mxu0 0.0
        %5449 = vmatpush1.msra.mxu0 0.0
        %5450 = vmatprep.subr.mxu0 0.0
        %5451 = vmatpush1.msra.mxu0 0.0
        %5452 = vmatprep.subr.mxu0 0.0
        %5453 = vmatpush1.msra.mxu0 0.0
        %5454 = vmatprep.subr.mxu0 0.0
        %5455 = vmatpush1.msra.mxu0 0.0
        %5456 = vmatprep.subr.mxu0 0.0
        %5457 = vmatpush1.msra.mxu0 0.0
        %5458 = vmatprep.subr.mxu0 0.0
        %5459 = vmatpush1.msra.mxu0 0.0
        %5460 = vmatprep.subr.mxu0 0.0
        %5461 = vmatpush1.msra.mxu0 0.0
        %5462 = vmatprep.subr.mxu0 0.0
        %5463 = vmatpush1.msra.mxu0 0.0
        %5464 = vmatprep.subr.mxu0 0.0
        %5465 = vmatpush1.msra.mxu0 0.0
        %5466 = vmatprep.subr.mxu0 0.0
        %5467 = vmatpush1.msra.mxu0 0.0
        %5468 = vmatprep.mubr.f32.mxu0 0.0
        %5469 = vmatmul.mubr.f32.gmra.mrb[0].mxu0 %v5398
        %v5470 = vpop.f32.mrb[0].mxu0
        %v5471 = vadd.f32 0.0, %v5470
        %v5472 = vpop.f32.mrb[0].mxu0
        %v5473 = vadd.f32 0.0, %v5472
        %5474 = vdwg.mxu0
        %v5475 = vadd.f32 %v5379, %v5471
        %v5476 = vadd.f32 %v5380, %v5473
        %s5477 = scalar_lea.vmem %s15, 16
        %v5478 = vld [vmem:[%s5477] sm:$0xf]
        %5481 = vrot.lane.b32.xlu0 %v5106, 111
        %v5482 = vpop.permute.xlu0 %5481
        %5483 = vrot.lane.b32.xlu0 %v5102, 111
        %v5484 = vpop.permute.xlu0 %5483
        %5485 = vrot.lane.b32.xlu0 %v5107, 111
        %v5486 = vpop.permute.xlu0 %5485
        %v5487 = vsel %vm1151, %v5482, %v5484
        %v5488 = vsel %vm1151, %v5484, %v5486
        %v5490 = vsel %vm751, %v5478, 0
        %v5492 = vsel %vm755, %v5487, 0
        %v5494 = vsel %vm755, %v5488, 0
        %5496 = vmatprep.subr.mxu0 %v5494
        %5497 = vmatpush1.msra.mxu0 %v5492
        %5498 = vmatprep.subr.mxu0 0.0
        %5499 = vmatpush1.msra.mxu0 0.0
        %5500 = vmatprep.subr.mxu0 0.0
        %5501 = vmatpush1.msra.mxu0 0.0
        %5502 = vmatprep.subr.mxu0 0.0
        %5503 = vmatpush1.msra.mxu0 0.0
        %5504 = vmatprep.subr.mxu0 0.0
        %5505 = vmatpush1.msra.mxu0 0.0
        %5506 = vmatprep.subr.mxu0 0.0
        %5507 = vmatpush1.msra.mxu0 0.0
        %5508 = vmatprep.subr.mxu0 0.0
        %5509 = vmatpush1.msra.mxu0 0.0
        %5510 = vmatprep.subr.mxu0 0.0
        %5511 = vmatpush1.msra.mxu0 0.0
        %5512 = vmatprep.subr.mxu0 0.0
        %5513 = vmatpush1.msra.mxu0 0.0
        %5514 = vmatprep.subr.mxu0 0.0
        %5515 = vmatpush1.msra.mxu0 0.0
        %5516 = vmatprep.subr.mxu0 0.0
        %5517 = vmatpush1.msra.mxu0 0.0
        %5518 = vmatprep.subr.mxu0 0.0
        %5519 = vmatpush1.msra.mxu0 0.0
        %5520 = vmatprep.subr.mxu0 0.0
        %5521 = vmatpush1.msra.mxu0 0.0
        %5522 = vmatprep.subr.mxu0 0.0
        %5523 = vmatpush1.msra.mxu0 0.0
        %5524 = vmatprep.subr.mxu0 0.0
        %5525 = vmatpush1.msra.mxu0 0.0
        %5526 = vmatprep.subr.mxu0 0.0
        %5527 = vmatpush1.msra.mxu0 0.0
        %5528 = vmatprep.subr.mxu0 0.0
        %5529 = vmatpush1.msra.mxu0 0.0
        %5530 = vmatprep.subr.mxu0 0.0
        %5531 = vmatpush1.msra.mxu0 0.0
        %5532 = vmatprep.subr.mxu0 0.0
        %5533 = vmatpush1.msra.mxu0 0.0
        %5534 = vmatprep.subr.mxu0 0.0
        %5535 = vmatpush1.msra.mxu0 0.0
        %5536 = vmatprep.subr.mxu0 0.0
        %5537 = vmatpush1.msra.mxu0 0.0
        %5538 = vmatprep.subr.mxu0 0.0
        %5539 = vmatpush1.msra.mxu0 0.0
        %5540 = vmatprep.subr.mxu0 0.0
        %5541 = vmatpush1.msra.mxu0 0.0
        %5542 = vmatprep.subr.mxu0 0.0
        %5543 = vmatpush1.msra.mxu0 0.0
        %5544 = vmatprep.subr.mxu0 0.0
        %5545 = vmatpush1.msra.mxu0 0.0
        %5546 = vmatprep.subr.mxu0 0.0
        %5547 = vmatpush1.msra.mxu0 0.0
        %5548 = vmatprep.subr.mxu0 0.0
        %5549 = vmatpush1.msra.mxu0 0.0
        %5550 = vmatprep.subr.mxu0 0.0
        %5551 = vmatpush1.msra.mxu0 0.0
        %5552 = vmatprep.subr.mxu0 0.0
        %5553 = vmatpush1.msra.mxu0 0.0
        %5554 = vmatprep.subr.mxu0 0.0
        %5555 = vmatpush1.msra.mxu0 0.0
        %5556 = vmatprep.subr.mxu0 0.0
        %5557 = vmatpush1.msra.mxu0 0.0
        %5558 = vmatprep.subr.mxu0 0.0
        %5559 = vmatpush1.msra.mxu0 0.0
        %5560 = vmatprep.mubr.f32.mxu0 0.0
        %5561 = vmatmul.mubr.f32.gmra.mrb[0].mxu0 %v5490
        %v5562 = vpop.f32.mrb[0].mxu0
        %v5563 = vadd.f32 0.0, %v5562
        %v5564 = vpop.f32.mrb[0].mxu0
        %v5565 = vadd.f32 0.0, %v5564
        %5566 = vdwg.mxu0
        %v5567 = vadd.f32 %v5475, %v5563
        %v5568 = vadd.f32 %v5476, %v5565
        %v5569 = vmul.f32 %v5106, %v1244
        %v5570 = vmul.f32 %v5102, %v1248
        %v5571 = vmul.f32 %v5107, %v1246
        %s5572 = scalar_lea.vmem %s15, 20
        %v5573 = vld [vmem:[%s5572] sm:$0xf]
        %5577 = vrot.lane.b32.xlu0 %v5569, 110
        %v5578 = vpop.permute.xlu0 %5577
        %5579 = vrot.lane.b32.xlu0 %v5570, 110
        %v5580 = vpop.permute.xlu0 %5579
        %5581 = vrot.lane.b32.xlu0 %v5571, 110
        %v5582 = vpop.permute.xlu0 %5581
        %v5583 = vsel %vm1266, %v5578, %v5580
        %v5584 = vsel %vm1266, %v5580, %v5582
        %v5586 = vsel %vm751, %v5573, 0
        %v5588 = vsel %vm755, %v5583, 0
        %v5590 = vsel %vm755, %v5584, 0
        %5592 = vmatprep.subr.mxu0 %v5590
        %5593 = vmatpush1.msra.mxu0 %v5588
        %5594 = vmatprep.subr.mxu0 0.0
        %5595 = vmatpush1.msra.mxu0 0.0
        %5596 = vmatprep.subr.mxu0 0.0
        %5597 = vmatpush1.msra.mxu0 0.0
        %5598 = vmatprep.subr.mxu0 0.0
        %5599 = vmatpush1.msra.mxu0 0.0
        %5600 = vmatprep.subr.mxu0 0.0
        %5601 = vmatpush1.msra.mxu0 0.0
        %5602 = vmatprep.subr.mxu0 0.0
        %5603 = vmatpush1.msra.mxu0 0.0
        %5604 = vmatprep.subr.mxu0 0.0
        %5605 = vmatpush1.msra.mxu0 0.0
        %5606 = vmatprep.subr.mxu0 0.0
        %5607 = vmatpush1.msra.mxu0 0.0
        %5608 = vmatprep.subr.mxu0 0.0
        %5609 = vmatpush1.msra.mxu0 0.0
        %5610 = vmatprep.subr.mxu0 0.0
        %5611 = vmatpush1.msra.mxu0 0.0
        %5612 = vmatprep.subr.mxu0 0.0
        %5613 = vmatpush1.msra.mxu0 0.0
        %5614 = vmatprep.subr.mxu0 0.0
        %5615 = vmatpush1.msra.mxu0 0.0
        %5616 = vmatprep.subr.mxu0 0.0
        %5617 = vmatpush1.msra.mxu0 0.0
        %5618 = vmatprep.subr.mxu0 0.0
        %5619 = vmatpush1.msra.mxu0 0.0
        %5620 = vmatprep.subr.mxu0 0.0
        %5621 = vmatpush1.msra.mxu0 0.0
        %5622 = vmatprep.subr.mxu0 0.0
        %5623 = vmatpush1.msra.mxu0 0.0
        %5624 = vmatprep.subr.mxu0 0.0
        %5625 = vmatpush1.msra.mxu0 0.0
        %5626 = vmatprep.subr.mxu0 0.0
        %5627 = vmatpush1.msra.mxu0 0.0
        %5628 = vmatprep.subr.mxu0 0.0
        %5629 = vmatpush1.msra.mxu0 0.0
        %5630 = vmatprep.subr.mxu0 0.0
        %5631 = vmatpush1.msra.mxu0 0.0
        %5632 = vmatprep.subr.mxu0 0.0
        %5633 = vmatpush1.msra.mxu0 0.0
        %5634 = vmatprep.subr.mxu0 0.0
        %5635 = vmatpush1.msra.mxu0 0.0
        %5636 = vmatprep.subr.mxu0 0.0
        %5637 = vmatpush1.msra.mxu0 0.0
        %5638 = vmatprep.subr.mxu0 0.0
        %5639 = vmatpush1.msra.mxu0 0.0
        %5640 = vmatprep.subr.mxu0 0.0
        %5641 = vmatpush1.msra.mxu0 0.0
        %5642 = vmatprep.subr.mxu0 0.0
        %5643 = vmatpush1.msra.mxu0 0.0
        %5644 = vmatprep.subr.mxu0 0.0
        %5645 = vmatpush1.msra.mxu0 0.0
        %5646 = vmatprep.subr.mxu0 0.0
        %5647 = vmatpush1.msra.mxu0 0.0
        %5648 = vmatprep.subr.mxu0 0.0
        %5649 = vmatpush1.msra.mxu0 0.0
        %5650 = vmatprep.subr.mxu0 0.0
        %5651 = vmatpush1.msra.mxu0 0.0
        %5652 = vmatprep.subr.mxu0 0.0
        %5653 = vmatpush1.msra.mxu0 0.0
        %5654 = vmatprep.subr.mxu0 0.0
        %5655 = vmatpush1.msra.mxu0 0.0
        %5656 = vmatprep.mubr.f32.mxu0 0.0
        %5657 = vmatmul.mubr.f32.gmra.mrb[0].mxu0 %v5586
        %v5658 = vpop.f32.mrb[0].mxu0
        %v5659 = vadd.f32 0.0, %v5658
        %v5660 = vpop.f32.mrb[0].mxu0
        %v5661 = vadd.f32 0.0, %v5660
        %5662 = vdwg.mxu0
        %v5663 = vadd.f32 %v5567, %v5659
        %v5664 = vadd.f32 %v5568, %v5661
        %v5665 = vmul.f32 %v5106, %v1359
        %v5666 = vmul.f32 %v5102, %v1363
        %v5667 = vmul.f32 %v5107, %v1361
        %s5668 = scalar_lea.vmem %s15, 24
        %v5669 = vld [vmem:[%s5668] sm:$0xf]
        %5673 = vrot.lane.b32.xlu0 %v5665, 96
        %v5674 = vpop.permute.xlu0 %5673
        %5675 = vrot.lane.b32.xlu0 %v5666, 96
        %v5676 = vpop.permute.xlu0 %5675
        %5677 = vrot.lane.b32.xlu0 %v5667, 96
        %v5678 = vpop.permute.xlu0 %5677
        %v5679 = vsel %vm1381, %v5674, %v5676
        %v5680 = vsel %vm1381, %v5676, %v5678
        %v5682 = vsel %vm751, %v5669, 0
        %v5684 = vsel %vm755, %v5679, 0
        %v5686 = vsel %vm755, %v5680, 0
        %5688 = vmatprep.subr.mxu0 %v5686
        %5689 = vmatpush1.msra.mxu0 %v5684
        %5690 = vmatprep.subr.mxu0 0.0
        %5691 = vmatpush1.msra.mxu0 0.0
        %5692 = vmatprep.subr.mxu0 0.0
        %5693 = vmatpush1.msra.mxu0 0.0
        %5694 = vmatprep.subr.mxu0 0.0
        %5695 = vmatpush1.msra.mxu0 0.0
        %5696 = vmatprep.subr.mxu0 0.0
        %5697 = vmatpush1.msra.mxu0 0.0
        %5698 = vmatprep.subr.mxu0 0.0
        %5699 = vmatpush1.msra.mxu0 0.0
        %5700 = vmatprep.subr.mxu0 0.0
        %5701 = vmatpush1.msra.mxu0 0.0
        %5702 = vmatprep.subr.mxu0 0.0
        %5703 = vmatpush1.msra.mxu0 0.0
        %5704 = vmatprep.subr.mxu0 0.0
        %5705 = vmatpush1.msra.mxu0 0.0
        %5706 = vmatprep.subr.mxu0 0.0
        %5707 = vmatpush1.msra.mxu0 0.0
        %5708 = vmatprep.subr.mxu0 0.0
        %5709 = vmatpush1.msra.mxu0 0.0
        %5710 = vmatprep.subr.mxu0 0.0
        %5711 = vmatpush1.msra.mxu0 0.0
        %5712 = vmatprep.subr.mxu0 0.0
        %5713 = vmatpush1.msra.mxu0 0.0
        %5714 = vmatprep.subr.mxu0 0.0
        %5715 = vmatpush1.msra.mxu0 0.0
        %5716 = vmatprep.subr.mxu0 0.0
        %5717 = vmatpush1.msra.mxu0 0.0
        %5718 = vmatprep.subr.mxu0 0.0
        %5719 = vmatpush1.msra.mxu0 0.0
        %5720 = vmatprep.subr.mxu0 0.0
        %5721 = vmatpush1.msra.mxu0 0.0
        %5722 = vmatprep.subr.mxu0 0.0
        %5723 = vmatpush1.msra.mxu0 0.0
        %5724 = vmatprep.subr.mxu0 0.0
        %5725 = vmatpush1.msra.mxu0 0.0
        %5726 = vmatprep.subr.mxu0 0.0
        %5727 = vmatpush1.msra.mxu0 0.0
        %5728 = vmatprep.subr.mxu0 0.0
        %5729 = vmatpush1.msra.mxu0 0.0
        %5730 = vmatprep.subr.mxu0 0.0
        %5731 = vmatpush1.msra.mxu0 0.0
        %5732 = vmatprep.subr.mxu0 0.0
        %5733 = vmatpush1.msra.mxu0 0.0
        %5734 = vmatprep.subr.mxu0 0.0
        %5735 = vmatpush1.msra.mxu0 0.0
        %5736 = vmatprep.subr.mxu0 0.0
        %5737 = vmatpush1.msra.mxu0 0.0
        %5738 = vmatprep.subr.mxu0 0.0
        %5739 = vmatpush1.msra.mxu0 0.0
        %5740 = vmatprep.subr.mxu0 0.0
        %5741 = vmatpush1.msra.mxu0 0.0
        %5742 = vmatprep.subr.mxu0 0.0
        %5743 = vmatpush1.msra.mxu0 0.0
        %5744 = vmatprep.subr.mxu0 0.0
        %5745 = vmatpush1.msra.mxu0 0.0
        %5746 = vmatprep.subr.mxu0 0.0
        %5747 = vmatpush1.msra.mxu0 0.0
        %5748 = vmatprep.subr.mxu0 0.0
        %5749 = vmatpush1.msra.mxu0 0.0
        %5750 = vmatprep.subr.mxu0 0.0
        %5751 = vmatpush1.msra.mxu0 0.0
        %5752 = vmatprep.mubr.f32.mxu0 0.0
        %5753 = vmatmul.mubr.f32.gmra.mrb[0].mxu0 %v5682
        %v5754 = vpop.f32.mrb[0].mxu0
        %v5755 = vadd.f32 0.0, %v5754
        %v5756 = vpop.f32.mrb[0].mxu0
        %v5757 = vadd.f32 0.0, %v5756
        %5758 = vdwg.mxu0
        %v5759 = vadd.f32 %v5663, %v5755
        %v5760 = vadd.f32 %v5664, %v5757
        %v5761 = vmul.f32 %v5106, %v1474
        %v5762 = vmul.f32 %v5102, %v1478
        %v5763 = vmul.f32 %v5107, %v1476
        %s5764 = scalar_lea.vmem %s15, 28
        %v5765 = vld [vmem:[%s5764] sm:$0xf]
        %5769 = vrot.lane.b32.xlu0 %v5761, 95
        %v5770 = vpop.permute.xlu0 %5769
        %5771 = vrot.lane.b32.xlu0 %v5762, 95
        %v5772 = vpop.permute.xlu0 %5771
        %5773 = vrot.lane.b32.xlu0 %v5763, 95
        %v5774 = vpop.permute.xlu0 %5773
        %v5775 = vsel %vm1496, %v5770, %v5772
        %v5776 = vsel %vm1496, %v5772, %v5774
        %v5778 = vsel %vm751, %v5765, 0
        %v5780 = vsel %vm755, %v5775, 0
        %v5782 = vsel %vm755, %v5776, 0
        %5784 = vmatprep.subr.mxu0 %v5782
        %5785 = vmatpush1.msra.mxu0 %v5780
        %5786 = vmatprep.subr.mxu0 0.0
        %5787 = vmatpush1.msra.mxu0 0.0
        %5788 = vmatprep.subr.mxu0 0.0
        %5789 = vmatpush1.msra.mxu0 0.0
        %5790 = vmatprep.subr.mxu0 0.0
        %5791 = vmatpush1.msra.mxu0 0.0
        %5792 = vmatprep.subr.mxu0 0.0
        %5793 = vmatpush1.msra.mxu0 0.0
        %5794 = vmatprep.subr.mxu0 0.0
        %5795 = vmatpush1.msra.mxu0 0.0
        %5796 = vmatprep.subr.mxu0 0.0
        %5797 = vmatpush1.msra.mxu0 0.0
        %5798 = vmatprep.subr.mxu0 0.0
        %5799 = vmatpush1.msra.mxu0 0.0
        %5800 = vmatprep.subr.mxu0 0.0
        %5801 = vmatpush1.msra.mxu0 0.0
        %5802 = vmatprep.subr.mxu0 0.0
        %5803 = vmatpush1.msra.mxu0 0.0
        %5804 = vmatprep.subr.mxu0 0.0
        %5805 = vmatpush1.msra.mxu0 0.0
        %5806 = vmatprep.subr.mxu0 0.0
        %5807 = vmatpush1.msra.mxu0 0.0
        %5808 = vmatprep.subr.mxu0 0.0
        %5809 = vmatpush1.msra.mxu0 0.0
        %5810 = vmatprep.subr.mxu0 0.0
        %5811 = vmatpush1.msra.mxu0 0.0
        %5812 = vmatprep.subr.mxu0 0.0
        %5813 = vmatpush1.msra.mxu0 0.0
        %5814 = vmatprep.subr.mxu0 0.0
        %5815 = vmatpush1.msra.mxu0 0.0
        %5816 = vmatprep.subr.mxu0 0.0
        %5817 = vmatpush1.msra.mxu0 0.0
        %5818 = vmatprep.subr.mxu0 0.0
        %5819 = vmatpush1.msra.mxu0 0.0
        %5820 = vmatprep.subr.mxu0 0.0
        %5821 = vmatpush1.msra.mxu0 0.0
        %5822 = vmatprep.subr.mxu0 0.0
        %5823 = vmatpush1.msra.mxu0 0.0
        %5824 = vmatprep.subr.mxu0 0.0
        %5825 = vmatpush1.msra.mxu0 0.0
        %5826 = vmatprep.subr.mxu0 0.0
        %5827 = vmatpush1.msra.mxu0 0.0
        %5828 = vmatprep.subr.mxu0 0.0
        %5829 = vmatpush1.msra.mxu0 0.0
        %5830 = vmatprep.subr.mxu0 0.0
        %5831 = vmatpush1.msra.mxu0 0.0
        %5832 = vmatprep.subr.mxu0 0.0
        %5833 = vmatpush1.msra.mxu0 0.0
        %5834 = vmatprep.subr.mxu0 0.0
        %5835 = vmatpush1.msra.mxu0 0.0
        %5836 = vmatprep.subr.mxu0 0.0
        %5837 = vmatpush1.msra.mxu0 0.0
        %5838 = vmatprep.subr.mxu0 0.0
        %5839 = vmatpush1.msra.mxu0 0.0
        %5840 = vmatprep.subr.mxu0 0.0
        %5841 = vmatpush1.msra.mxu0 0.0
        %5842 = vmatprep.subr.mxu0 0.0
        %5843 = vmatpush1.msra.mxu0 0.0
        %5844 = vmatprep.subr.mxu0 0.0
        %5845 = vmatpush1.msra.mxu0 0.0
        %5846 = vmatprep.subr.mxu0 0.0
        %5847 = vmatpush1.msra.mxu0 0.0
        %5848 = vmatprep.mubr.f32.mxu0 0.0
        %5849 = vmatmul.mubr.f32.gmra.mrb[0].mxu0 %v5778
        %v5850 = vpop.f32.mrb[0].mxu0
        %v5851 = vadd.f32 0.0, %v5850
        %v5852 = vpop.f32.mrb[0].mxu0
        %v5853 = vadd.f32 0.0, %v5852
        %5854 = vdwg.mxu0
        %v5855 = vadd.f32 %v5759, %v5851
        %v5856 = vadd.f32 %v5760, %v5853
        %v5857 = vmul.f32 %v5106, %v1589
        %v5858 = vmul.f32 %v5102, %v1593
        %v5859 = vmul.f32 %v5107, %v1591
        %s5860 = scalar_lea.vmem %s15, 32
        %v5861 = vld [vmem:[%s5860] sm:$0xf]
        %5865 = vrot.lane.b32.xlu0 %v5857, 94
        %v5866 = vpop.permute.xlu0 %5865
        %5867 = vrot.lane.b32.xlu0 %v5858, 94
        %v5868 = vpop.permute.xlu0 %5867
        %5869 = vrot.lane.b32.xlu0 %v5859, 94
        %v5870 = vpop.permute.xlu0 %5869
        %v5871 = vsel %vm1611, %v5866, %v5868
        %v5872 = vsel %vm1611, %v5868, %v5870
        %v5874 = vsel %vm751, %v5861, 0
        %v5876 = vsel %vm755, %v5871, 0
        %v5878 = vsel %vm755, %v5872, 0
        %5880 = vmatprep.subr.mxu0 %v5878
        %5881 = vmatpush1.msra.mxu0 %v5876
        %5882 = vmatprep.subr.mxu0 0.0
        %5883 = vmatpush1.msra.mxu0 0.0
        %5884 = vmatprep.subr.mxu0 0.0
        %5885 = vmatpush1.msra.mxu0 0.0
        %5886 = vmatprep.subr.mxu0 0.0
        %5887 = vmatpush1.msra.mxu0 0.0
        %5888 = vmatprep.subr.mxu0 0.0
        %5889 = vmatpush1.msra.mxu0 0.0
        %5890 = vmatprep.subr.mxu0 0.0
        %5891 = vmatpush1.msra.mxu0 0.0
        %5892 = vmatprep.subr.mxu0 0.0
        %5893 = vmatpush1.msra.mxu0 0.0
        %5894 = vmatprep.subr.mxu0 0.0
        %5895 = vmatpush1.msra.mxu0 0.0
        %5896 = vmatprep.subr.mxu0 0.0
        %5897 = vmatpush1.msra.mxu0 0.0
        %5898 = vmatprep.subr.mxu0 0.0
        %5899 = vmatpush1.msra.mxu0 0.0
        %5900 = vmatprep.subr.mxu0 0.0
        %5901 = vmatpush1.msra.mxu0 0.0
        %5902 = vmatprep.subr.mxu0 0.0
        %5903 = vmatpush1.msra.mxu0 0.0
        %5904 = vmatprep.subr.mxu0 0.0
        %5905 = vmatpush1.msra.mxu0 0.0
        %5906 = vmatprep.subr.mxu0 0.0
        %5907 = vmatpush1.msra.mxu0 0.0
        %5908 = vmatprep.subr.mxu0 0.0
        %5909 = vmatpush1.msra.mxu0 0.0
        %5910 = vmatprep.subr.mxu0 0.0
        %5911 = vmatpush1.msra.mxu0 0.0
        %5912 = vmatprep.subr.mxu0 0.0
        %5913 = vmatpush1.msra.mxu0 0.0
        %5914 = vmatprep.subr.mxu0 0.0
        %5915 = vmatpush1.msra.mxu0 0.0
        %5916 = vmatprep.subr.mxu0 0.0
        %5917 = vmatpush1.msra.mxu0 0.0
        %5918 = vmatprep.subr.mxu0 0.0
        %5919 = vmatpush1.msra.mxu0 0.0
        %5920 = vmatprep.subr.mxu0 0.0
        %5921 = vmatpush1.msra.mxu0 0.0
        %5922 = vmatprep.subr.mxu0 0.0
        %5923 = vmatpush1.msra.mxu0 0.0
        %5924 = vmatprep.subr.mxu0 0.0
        %5925 = vmatpush1.msra.mxu0 0.0
        %5926 = vmatprep.subr.mxu0 0.0
        %5927 = vmatpush1.msra.mxu0 0.0
        %5928 = vmatprep.subr.mxu0 0.0
        %5929 = vmatpush1.msra.mxu0 0.0
        %5930 = vmatprep.subr.mxu0 0.0
        %5931 = vmatpush1.msra.mxu0 0.0
        %5932 = vmatprep.subr.mxu0 0.0
        %5933 = vmatpush1.msra.mxu0 0.0
        %5934 = vmatprep.subr.mxu0 0.0
        %5935 = vmatpush1.msra.mxu0 0.0
        %5936 = vmatprep.subr.mxu0 0.0
        %5937 = vmatpush1.msra.mxu0 0.0
        %5938 = vmatprep.subr.mxu0 0.0
        %5939 = vmatpush1.msra.mxu0 0.0
        %5940 = vmatprep.subr.mxu0 0.0
        %5941 = vmatpush1.msra.mxu0 0.0
        %5942 = vmatprep.subr.mxu0 0.0
        %5943 = vmatpush1.msra.mxu0 0.0
        %5944 = vmatprep.mubr.f32.mxu0 0.0
        %5945 = vmatmul.mubr.f32.gmra.mrb[0].mxu0 %v5874
        %v5946 = vpop.f32.mrb[0].mxu0
        %v5947 = vadd.f32 0.0, %v5946
        %v5948 = vpop.f32.mrb[0].mxu0
        %v5949 = vadd.f32 0.0, %v5948
        %5950 = vdwg.mxu0
        %v5951 = vadd.f32 %v5855, %v5947
        %v5952 = vadd.f32 %v5856, %v5949
        %v5953 = vld [vmem:[%s16] sm:$0xf]
        %5955 = vset.pattern.permute.xlu0 0
        %5956 = vperm.xlu0 %5955, %v5953
        %v5957 = vpop.permute.xlu0 %5956
        %v5959 = vadd.f32 %v5951, %v5957
        %v5960 = vadd.f32 %v5952, %v5957
        %v5961 = vadd.f32 %v5959, %v581
        %v5962 = vadd.f32 %v5960, %v2572
        %v5963 = vld [vmem:[#allocation2] sm:$0xff]
        %v5964 = vld [vmem:[#allocation2 + $0x8] sm:$0xff]
        %v5965 = vld [vmem:[#allocation2 + $0x10] sm:$0xff]
        %v5966 = vld [vmem:[#allocation2 + $0x18] sm:$0xff]
        %v5967 = vld [vmem:[#allocation2 + $0x20] sm:$0xff]
        %v5968 = vld [vmem:[#allocation2 + $0x28] sm:$0xff]
        %v5969 = vld [vmem:[#allocation2 + $0x30] sm:$0xff]
        %v5970 = vld [vmem:[#allocation2 + $0x38] sm:$0xff]
        %v5971 = vld [vmem:[#allocation2 + $0x40] sm:$0xff]
        %v5972 = vld [vmem:[#allocation2 + $0x48] sm:$0xff]
        %v5973 = vld [vmem:[#allocation2 + $0x50] sm:$0xff]
        %v5974 = vld [vmem:[#allocation2 + $0x58] sm:$0xff]
        %v5975 = vld [vmem:[#allocation2 + $0x60] sm:$0xff]
        %v5976 = vld [vmem:[#allocation2 + $0x68] sm:$0xff]
        %v5977 = vld [vmem:[#allocation2 + $0x70] sm:$0xff]
        %v5978 = vld [vmem:[#allocation2 + $0x78] sm:$0xff]
        %v5979 = vld [vmem:[#allocation2 + $0x80] sm:$0xff]
        %v5980 = vld [vmem:[#allocation2 + $0x88] sm:$0xff]
        %v5981 = vld [vmem:[#allocation2 + $0x90] sm:$0xff]
        %v5982 = vld [vmem:[#allocation2 + $0x98] sm:$0xff]
        %v5983 = vld [vmem:[#allocation2 + $0xa0] sm:$0xff]
        %v5984 = vld [vmem:[#allocation2 + $0xa8] sm:$0xff]
        %v5985 = vld [vmem:[#allocation2 + $0xb0] sm:$0xff]
        %v5986 = vld [vmem:[#allocation2 + $0xb8] sm:$0xff]
        %v5987 = vld [vmem:[#allocation2 + $0xc0] sm:$0xff]
        %v5988 = vld [vmem:[#allocation2 + $0xc8] sm:$0xff]
        %v5989 = vld [vmem:[#allocation2 + $0xd0] sm:$0xff]
        %v5990 = vld [vmem:[#allocation2 + $0xd8] sm:$0xff]
        %v5991 = vld [vmem:[#allocation2 + $0xe0] sm:$0xff]
        %v5992 = vld [vmem:[#allocation2 + $0xe8] sm:$0xff]
        %v5993 = vld [vmem:[#allocation2 + $0xf0] sm:$0xff]
        %v5994 = vld [vmem:[#allocation2 + $0xf8] sm:$0xff]
        %v5995 = vld [vmem:[#allocation2 + $0x100] sm:$0xff]
        %v5996 = vld [vmem:[#allocation2 + $0x108] sm:$0xff]
        %v5997 = vld [vmem:[#allocation2 + $0x110] sm:$0xff]
        %v5998 = vld [vmem:[#allocation2 + $0x118] sm:$0xff]
        %v5999 = vld [vmem:[#allocation2 + $0x120] sm:$0xff]
        %v6000 = vld [vmem:[#allocation2 + $0x128] sm:$0xff]
        %v6001 = vld [vmem:[#allocation2 + $0x130] sm:$0xff]
        %v6002 = vld [vmem:[#allocation2 + $0x138] sm:$0xff]
        %v6003 = vld [vmem:[#allocation2 + $0x140] sm:$0xff]
        %v6004 = vld [vmem:[#allocation2 + $0x148] sm:$0xff]
        %v6005 = vld [vmem:[#allocation2 + $0x150] sm:$0xff]
        %v6006 = vld [vmem:[#allocation2 + $0x158] sm:$0xff]
        %v6007 = vld [vmem:[#allocation2 + $0x160] sm:$0xff]
        %v6008 = vld [vmem:[#allocation2 + $0x168] sm:$0xff]
        %v6009 = vld [vmem:[#allocation2 + $0x170] sm:$0xff]
        %v6010 = vld [vmem:[#allocation2 + $0x178] sm:$0xff]
        %v6011 = vld [vmem:[#allocation2 + $0x180] sm:$0xff]
        %v6012 = vld [vmem:[#allocation2 + $0x188] sm:$0xff]
        %v6013 = vld [vmem:[#allocation2 + $0x190] sm:$0xff]
        %v6014 = vld [vmem:[#allocation2 + $0x198] sm:$0xff]
        %v6015 = vld [vmem:[#allocation2 + $0x1a0] sm:$0xff]
        %v6016 = vld [vmem:[#allocation2 + $0x1a8] sm:$0xff]
        %v6017 = vld [vmem:[#allocation2 + $0x1b0] sm:$0xff]
        %v6018 = vld [vmem:[#allocation2 + $0x1b8] sm:$0xff]
        %v6019 = vld [vmem:[#allocation2 + $0x1c0] sm:$0xff]
        %v6020 = vld [vmem:[#allocation2 + $0x1c8] sm:$0xff]
        %v6021 = vld [vmem:[#allocation2 + $0x1d0] sm:$0xff]
        %v6022 = vld [vmem:[#allocation2 + $0x1d8] sm:$0xff]
        %v6023 = vld [vmem:[#allocation2 + $0x1e0] sm:$0xff]
        %v6024 = vld [vmem:[#allocation2 + $0x1e8] sm:$0xff]
        %v6025 = vld [vmem:[#allocation2 + $0x1f0] sm:$0xff]
        %v6026 = vld [vmem:[#allocation2 + $0x1f8] sm:$0xff]
        %v6027 = vld [vmem:[#allocation2 + $0x200] sm:$0xff]
        %v6028 = vld [vmem:[#allocation2 + $0x208] sm:$0xff]
        %v6029 = vld [vmem:[#allocation2 + $0x210] sm:$0xff]
        %v6030 = vld [vmem:[#allocation2 + $0x218] sm:$0xff]
        %v6031 = vld [vmem:[#allocation2 + $0x220] sm:$0xff]
        %v6032 = vld [vmem:[#allocation2 + $0x228] sm:$0xff]
        %v6033 = vld [vmem:[#allocation2 + $0x230] sm:$0xff]
        %v6034 = vld [vmem:[#allocation2 + $0x238] sm:$0xff]
        %v6035 = vld [vmem:[#allocation2 + $0x240] sm:$0xff]
        %v6036 = vld [vmem:[#allocation2 + $0x248] sm:$0xff]
        %v6037 = vld [vmem:[#allocation2 + $0x250] sm:$0xff]
        %v6038 = vld [vmem:[#allocation2 + $0x258] sm:$0xff]
        %v6039 = vld [vmem:[#allocation2 + $0x260] sm:$0xff]
        %v6040 = vld [vmem:[#allocation2 + $0x268] sm:$0xff]
        %v6041 = vld [vmem:[#allocation2 + $0x270] sm:$0xff]
        %v6042 = vld [vmem:[#allocation2 + $0x278] sm:$0xff]
        %v6043 = vld [vmem:[#allocation2 + $0x280] sm:$0xff]
        %v6044 = vld [vmem:[#allocation2 + $0x288] sm:$0xff]
        %v6045 = vld [vmem:[#allocation2 + $0x290] sm:$0xff]
        %v6046 = vld [vmem:[#allocation2 + $0x298] sm:$0xff]
        %v6047 = vld [vmem:[#allocation2 + $0x2a0] sm:$0xff]
        %v6048 = vld [vmem:[#allocation2 + $0x2a8] sm:$0xff]
        %v6049 = vld [vmem:[#allocation2 + $0x2b0] sm:$0xff]
        %v6050 = vld [vmem:[#allocation2 + $0x2b8] sm:$0xff]
        %v6051 = vld [vmem:[#allocation2 + $0x2c0] sm:$0xff]
        %v6052 = vld [vmem:[#allocation2 + $0x2c8] sm:$0xff]
        %v6053 = vld [vmem:[#allocation2 + $0x2d0] sm:$0xff]
        %v6054 = vld [vmem:[#allocation2 + $0x2d8] sm:$0xff]
        %v6055 = vld [vmem:[#allocation2 + $0x2e0] sm:$0xff]
        %v6056 = vld [vmem:[#allocation2 + $0x2e8] sm:$0xff]
        %v6057 = vld [vmem:[#allocation2 + $0x2f0] sm:$0xff]
        %v6058 = vld [vmem:[#allocation2 + $0x2f8] sm:$0xff]
        %v6059 = vld [vmem:[#allocation2 + $0x300] sm:$0xff]
        %v6060 = vld [vmem:[#allocation2 + $0x308] sm:$0xff]
        %v6061 = vld [vmem:[#allocation2 + $0x310] sm:$0xff]
        %v6062 = vld [vmem:[#allocation2 + $0x318] sm:$0xff]
        %v6063 = vld [vmem:[#allocation2 + $0x320] sm:$0xff]
        %v6064 = vld [vmem:[#allocation2 + $0x328] sm:$0xff]
        %v6065 = vld [vmem:[#allocation2 + $0x330] sm:$0xff]
        %v6066 = vld [vmem:[#allocation2 + $0x338] sm:$0xff]
        %v6067 = vld [vmem:[#allocation2 + $0x340] sm:$0xff]
        %v6068 = vld [vmem:[#allocation2 + $0x348] sm:$0xff]
        %v6069 = vld [vmem:[#allocation2 + $0x350] sm:$0xff]
        %v6070 = vld [vmem:[#allocation2 + $0x358] sm:$0xff]
        %v6071 = vld [vmem:[#allocation2 + $0x360] sm:$0xff]
        %v6072 = vld [vmem:[#allocation2 + $0x368] sm:$0xff]
        %v6073 = vld [vmem:[#allocation2 + $0x370] sm:$0xff]
        %v6074 = vld [vmem:[#allocation2 + $0x378] sm:$0xff]
        %v6075 = vld [vmem:[#allocation2 + $0x380] sm:$0xff]
        %v6076 = vld [vmem:[#allocation2 + $0x388] sm:$0xff]
        %v6077 = vld [vmem:[#allocation2 + $0x390] sm:$0xff]
        %v6078 = vld [vmem:[#allocation2 + $0x398] sm:$0xff]
        %v6079 = vld [vmem:[#allocation2 + $0x3a0] sm:$0xff]
        %v6080 = vld [vmem:[#allocation2 + $0x3a8] sm:$0xff]
        %v6081 = vld [vmem:[#allocation2 + $0x3b0] sm:$0xff]
        %v6082 = vld [vmem:[#allocation2 + $0x3b8] sm:$0xff]
        %v6083 = vld [vmem:[#allocation2 + $0x3c0] sm:$0xff]
        %v6084 = vld [vmem:[#allocation2 + $0x3c8] sm:$0xff]
        %v6085 = vld [vmem:[#allocation2 + $0x3d0] sm:$0xff]
        %v6086 = vld [vmem:[#allocation2 + $0x3d8] sm:$0xff]
        %v6087 = vld [vmem:[#allocation2 + $0x3e0] sm:$0xff]
        %v6088 = vld [vmem:[#allocation2 + $0x3e8] sm:$0xff]
        %v6089 = vld [vmem:[#allocation2 + $0x3f0] sm:$0xff]
        %v6090 = vld [vmem:[#allocation2 + $0x3f8] sm:$0xff]
        %v6091 = vld [vmem:[#allocation2 + $0x400] sm:$0xff]
        %v6092 = vld [vmem:[#allocation2 + $0x408] sm:$0xff]
        %v6093 = vld [vmem:[#allocation2 + $0x410] sm:$0xff]
        %v6094 = vld [vmem:[#allocation2 + $0x418] sm:$0xff]
        %v6095 = vld [vmem:[#allocation2 + $0x420] sm:$0xff]
        %v6096 = vld [vmem:[#allocation2 + $0x428] sm:$0xff]
        %v6097 = vld [vmem:[#allocation2 + $0x430] sm:$0xff]
        %v6098 = vld [vmem:[#allocation2 + $0x438] sm:$0xff]
        %v6099 = vld [vmem:[#allocation2 + $0x440] sm:$0xff]
        %v6100 = vld [vmem:[#allocation2 + $0x448] sm:$0xff]
        %v6101 = vld [vmem:[#allocation2 + $0x450] sm:$0xff]
        %v6102 = vld [vmem:[#allocation2 + $0x458] sm:$0xff]
        %v6103 = vld [vmem:[#allocation2 + $0x460] sm:$0xff]
        %v6104 = vld [vmem:[#allocation2 + $0x468] sm:$0xff]
        %v6105 = vld [vmem:[#allocation2 + $0x470] sm:$0xff]
        %v6106 = vld [vmem:[#allocation2 + $0x478] sm:$0xff]
        %v6107 = vld [vmem:[#allocation2 + $0x480] sm:$0xff]
        %v6108 = vld [vmem:[#allocation2 + $0x488] sm:$0xff]
        %v6109 = vld [vmem:[#allocation2 + $0x490] sm:$0xff]
        %v6110 = vld [vmem:[#allocation2 + $0x498] sm:$0xff]
        %v6111 = vld [vmem:[#allocation2 + $0x4a0] sm:$0xff]
        %v6112 = vld [vmem:[#allocation2 + $0x4a8] sm:$0xff]
        %v6113 = vld [vmem:[#allocation2 + $0x4b0] sm:$0xff]
        %v6114 = vld [vmem:[#allocation2 + $0x4b8] sm:$0xff]
        %v6115 = vld [vmem:[#allocation2 + $0x4c0] sm:$0xff]
        %v6116 = vld [vmem:[#allocation2 + $0x4c8] sm:$0xff]
        %v6117 = vld [vmem:[#allocation2 + $0x4d0] sm:$0xff]
        %v6118 = vld [vmem:[#allocation2 + $0x4d8] sm:$0xff]
        %v6119 = vld [vmem:[#allocation2 + $0x4e0] sm:$0xff]
        %v6120 = vld [vmem:[#allocation2 + $0x4e8] sm:$0xff]
        %v6121 = vld [vmem:[#allocation2 + $0x4f0] sm:$0xff]
        %v6122 = vld [vmem:[#allocation2 + $0x4f8] sm:$0xff]
        %v6123 = vld [vmem:[#allocation2 + $0x500] sm:$0xff]
        %v6124 = vld [vmem:[#allocation2 + $0x508] sm:$0xff]
        %v6125 = vld [vmem:[#allocation2 + $0x510] sm:$0xff]
        %v6126 = vld [vmem:[#allocation2 + $0x518] sm:$0xff]
        %v6127 = vld [vmem:[#allocation2 + $0x520] sm:$0xff]
        %v6128 = vld [vmem:[#allocation2 + $0x528] sm:$0xff]
        %v6129 = vld [vmem:[#allocation2 + $0x530] sm:$0xff]
        %v6130 = vld [vmem:[#allocation2 + $0x538] sm:$0xff]
        %v6131 = vld [vmem:[#allocation2 + $0x540] sm:$0xff]
        %v6132 = vld [vmem:[#allocation2 + $0x548] sm:$0xff]
        %v6133 = vld [vmem:[#allocation2 + $0x550] sm:$0xff]
        %v6134 = vld [vmem:[#allocation2 + $0x558] sm:$0xff]
        %v6135 = vld [vmem:[#allocation2 + $0x560] sm:$0xff]
        %v6136 = vld [vmem:[#allocation2 + $0x568] sm:$0xff]
        %v6137 = vld [vmem:[#allocation2 + $0x570] sm:$0xff]
        %v6138 = vld [vmem:[#allocation2 + $0x578] sm:$0xff]
        %v6139 = vld [vmem:[#allocation2 + $0x580] sm:$0xff]
        %v6140 = vld [vmem:[#allocation2 + $0x588] sm:$0xff]
        %v6141 = vld [vmem:[#allocation2 + $0x590] sm:$0xff]
        %v6142 = vld [vmem:[#allocation2 + $0x598] sm:$0xff]
        %v6143 = vld [vmem:[#allocation2 + $0x5a0] sm:$0xff]
        %v6144 = vld [vmem:[#allocation2 + $0x5a8] sm:$0xff]
        %v6145 = vld [vmem:[#allocation2 + $0x5b0] sm:$0xff]
        %v6146 = vld [vmem:[#allocation2 + $0x5b8] sm:$0xff]
        %v6147 = vld [vmem:[#allocation2 + $0x5c0] sm:$0xff]
        %v6148 = vld [vmem:[#allocation2 + $0x5c8] sm:$0xff]
        %v6149 = vld [vmem:[#allocation2 + $0x5d0] sm:$0xff]
        %v6150 = vld [vmem:[#allocation2 + $0x5d8] sm:$0xff]
        %v6151 = vld [vmem:[#allocation2 + $0x5e0] sm:$0xff]
        %v6152 = vld [vmem:[#allocation2 + $0x5e8] sm:$0xff]
        %v6153 = vld [vmem:[#allocation2 + $0x5f0] sm:$0xff]
        %v6154 = vld [vmem:[#allocation2 + $0x5f8] sm:$0xff]
        %v6155 = vld [vmem:[#allocation2 + $0x600] sm:$0xff]
        %v6156 = vld [vmem:[#allocation2 + $0x608] sm:$0xff]
        %v6157 = vld [vmem:[#allocation2 + $0x610] sm:$0xff]
        %v6158 = vld [vmem:[#allocation2 + $0x618] sm:$0xff]
        %v6159 = vld [vmem:[#allocation2 + $0x620] sm:$0xff]
        %v6160 = vld [vmem:[#allocation2 + $0x628] sm:$0xff]
        %v6161 = vld [vmem:[#allocation2 + $0x630] sm:$0xff]
        %v6162 = vld [vmem:[#allocation2 + $0x638] sm:$0xff]
        %v6163 = vld [vmem:[#allocation2 + $0x640] sm:$0xff]
        %v6164 = vld [vmem:[#allocation2 + $0x648] sm:$0xff]
        %v6165 = vld [vmem:[#allocation2 + $0x650] sm:$0xff]
        %v6166 = vld [vmem:[#allocation2 + $0x658] sm:$0xff]
        %v6167 = vld [vmem:[#allocation2 + $0x660] sm:$0xff]
        %v6168 = vld [vmem:[#allocation2 + $0x668] sm:$0xff]
        %v6169 = vld [vmem:[#allocation2 + $0x670] sm:$0xff]
        %v6170 = vld [vmem:[#allocation2 + $0x678] sm:$0xff]
        %v6171 = vld [vmem:[#allocation2 + $0x680] sm:$0xff]
        %v6172 = vld [vmem:[#allocation2 + $0x688] sm:$0xff]
        %v6173 = vld [vmem:[#allocation2 + $0x690] sm:$0xff]
        %v6174 = vld [vmem:[#allocation2 + $0x698] sm:$0xff]
        %v6175 = vld [vmem:[#allocation2 + $0x6a0] sm:$0xff]
        %v6176 = vld [vmem:[#allocation2 + $0x6a8] sm:$0xff]
        %v6177 = vld [vmem:[#allocation2 + $0x6b0] sm:$0xff]
        %v6178 = vld [vmem:[#allocation2 + $0x6b8] sm:$0xff]
        %v6179 = vld [vmem:[#allocation2 + $0x6c0] sm:$0xff]
        %v6180 = vld [vmem:[#allocation2 + $0x6c8] sm:$0xff]
        %v6181 = vld [vmem:[#allocation2 + $0x6d0] sm:$0xff]
        %v6182 = vld [vmem:[#allocation2 + $0x6d8] sm:$0xff]
        %v6183 = vld [vmem:[#allocation2 + $0x6e0] sm:$0xff]
        %v6184 = vld [vmem:[#allocation2 + $0x6e8] sm:$0xff]
        %v6185 = vld [vmem:[#allocation2 + $0x6f0] sm:$0xff]
        %v6186 = vld [vmem:[#allocation2 + $0x6f8] sm:$0xff]
        %v6187 = vld [vmem:[#allocation2 + $0x700] sm:$0xff]
        %v6188 = vld [vmem:[#allocation2 + $0x708] sm:$0xff]
        %v6189 = vld [vmem:[#allocation2 + $0x710] sm:$0xff]
        %v6190 = vld [vmem:[#allocation2 + $0x718] sm:$0xff]
        %v6191 = vld [vmem:[#allocation2 + $0x720] sm:$0xff]
        %v6192 = vld [vmem:[#allocation2 + $0x728] sm:$0xff]
        %v6193 = vld [vmem:[#allocation2 + $0x730] sm:$0xff]
        %v6194 = vld [vmem:[#allocation2 + $0x738] sm:$0xff]
        %v6195 = vld [vmem:[#allocation2 + $0x740] sm:$0xff]
        %v6196 = vld [vmem:[#allocation2 + $0x748] sm:$0xff]
        %v6197 = vld [vmem:[#allocation2 + $0x750] sm:$0xff]
        %v6198 = vld [vmem:[#allocation2 + $0x758] sm:$0xff]
        %v6199 = vld [vmem:[#allocation2 + $0x760] sm:$0xff]
        %v6200 = vld [vmem:[#allocation2 + $0x768] sm:$0xff]
        %v6201 = vld [vmem:[#allocation2 + $0x770] sm:$0xff]
        %v6202 = vld [vmem:[#allocation2 + $0x778] sm:$0xff]
        %v6203 = vld [vmem:[#allocation2 + $0x780] sm:$0xff]
        %v6204 = vld [vmem:[#allocation2 + $0x788] sm:$0xff]
        %v6205 = vld [vmem:[#allocation2 + $0x790] sm:$0xff]
        %v6206 = vld [vmem:[#allocation2 + $0x798] sm:$0xff]
        %v6207 = vld [vmem:[#allocation2 + $0x7a0] sm:$0xff]
        %v6208 = vld [vmem:[#allocation2 + $0x7a8] sm:$0xff]
        %v6209 = vld [vmem:[#allocation2 + $0x7b0] sm:$0xff]
        %v6210 = vld [vmem:[#allocation2 + $0x7b8] sm:$0xff]
        %v6211 = vld [vmem:[#allocation2 + $0x7c0] sm:$0xff]
        %v6212 = vld [vmem:[#allocation2 + $0x7c8] sm:$0xff]
        %v6213 = vld [vmem:[#allocation2 + $0x7d0] sm:$0xff]
        %v6214 = vld [vmem:[#allocation2 + $0x7d8] sm:$0xff]
        %v6215 = vld [vmem:[#allocation2 + $0x7e0] sm:$0xff]
        %v6216 = vld [vmem:[#allocation2 + $0x7e8] sm:$0xff]
        %v6217 = vld [vmem:[#allocation2 + $0x7f0] sm:$0xff]
        %v6218 = vld [vmem:[#allocation2 + $0x7f8] sm:$0xff]
        %6219 = vmatprep.subr.mxu0 %v5964
        %6220 = vmatpush1.msra.mxu0 %v5963
        %6221 = vmatprep.subr.mxu0 %v5972
        %6222 = vmatpush1.msra.mxu0 %v5971
        %6223 = vmatprep.subr.mxu0 %v5980
        %6224 = vmatpush1.msra.mxu0 %v5979
        %6225 = vmatprep.subr.mxu0 %v5988
        %6226 = vmatpush1.msra.mxu0 %v5987
        %6227 = vmatprep.subr.mxu0 %v5996
        %6228 = vmatpush1.msra.mxu0 %v5995
        %6229 = vmatprep.subr.mxu0 %v6004
        %6230 = vmatpush1.msra.mxu0 %v6003
        %6231 = vmatprep.subr.mxu0 %v6012
        %6232 = vmatpush1.msra.mxu0 %v6011
        %6233 = vmatprep.subr.mxu0 %v6020
        %6234 = vmatpush1.msra.mxu0 %v6019
        %6235 = vmatprep.subr.mxu0 %v6028
        %6236 = vmatpush1.msra.mxu0 %v6027
        %6237 = vmatprep.subr.mxu0 %v6036
        %6238 = vmatpush1.msra.mxu0 %v6035
        %6239 = vmatprep.subr.mxu0 %v6044
        %6240 = vmatpush1.msra.mxu0 %v6043
        %6241 = vmatprep.subr.mxu0 %v6052
        %6242 = vmatpush1.msra.mxu0 %v6051
        %6243 = vmatprep.subr.mxu0 %v6060
        %6244 = vmatpush1.msra.mxu0 %v6059
        %6245 = vmatprep.subr.mxu0 %v6068
        %6246 = vmatpush1.msra.mxu0 %v6067
        %6247 = vmatprep.subr.mxu0 %v6076
        %6248 = vmatpush1.msra.mxu0 %v6075
        %6249 = vmatprep.subr.mxu0 %v6084
        %6250 = vmatpush1.msra.mxu0 %v6083
        %6251 = vmatprep.subr.mxu0 %v6092
        %6252 = vmatpush1.msra.mxu0 %v6091
        %6253 = vmatprep.subr.mxu0 %v6100
        %6254 = vmatpush1.msra.mxu0 %v6099
        %6255 = vmatprep.subr.mxu0 %v6108
        %6256 = vmatpush1.msra.mxu0 %v6107
        %6257 = vmatprep.subr.mxu0 %v6116
        %6258 = vmatpush1.msra.mxu0 %v6115
        %6259 = vmatprep.subr.mxu0 %v6124
        %6260 = vmatpush1.msra.mxu0 %v6123
        %6261 = vmatprep.subr.mxu0 %v6132
        %6262 = vmatpush1.msra.mxu0 %v6131
        %6263 = vmatprep.subr.mxu0 %v6140
        %6264 = vmatpush1.msra.mxu0 %v6139
        %6265 = vmatprep.subr.mxu0 %v6148
        %6266 = vmatpush1.msra.mxu0 %v6147
        %6267 = vmatprep.subr.mxu0 %v6156
        %6268 = vmatpush1.msra.mxu0 %v6155
        %6269 = vmatprep.subr.mxu0 %v6164
        %6270 = vmatpush1.msra.mxu0 %v6163
        %6271 = vmatprep.subr.mxu0 %v6172
        %6272 = vmatpush1.msra.mxu0 %v6171
        %6273 = vmatprep.subr.mxu0 %v6180
        %6274 = vmatpush1.msra.mxu0 %v6179
        %6275 = vmatprep.subr.mxu0 %v6188
        %6276 = vmatpush1.msra.mxu0 %v6187
        %6277 = vmatprep.subr.mxu0 %v6196
        %6278 = vmatpush1.msra.mxu0 %v6195
        %6279 = vmatprep.subr.mxu0 %v6204
        %6280 = vmatpush1.msra.mxu0 %v6203
        %6281 = vmatprep.subr.mxu0 %v6212
        %6282 = vmatpush1.msra.mxu0 %v6211
        %6283 = vmatprep.mubr.f32.mxu0 %v5962
        %6284 = vmatmul.mubr.f32.gmra.mrb[0].mxu0 %v5961
        %v6285 = vpop.f32.mrb[0].mxu0
        %v6286 = vadd.f32 0.0, %v6285
        %v6287 = vpop.f32.mrb[0].mxu0
        %v6288 = vadd.f32 0.0, %v6287
        %6289 = vdwg.mxu0
        %6290 = vmatprep.subr.mxu0 %v5966
        %6291 = vmatpush1.msra.mxu0 %v5965
        %6292 = vmatprep.subr.mxu0 %v5974
        %6293 = vmatpush1.msra.mxu0 %v5973
        %6294 = vmatprep.subr.mxu0 %v5982
        %6295 = vmatpush1.msra.mxu0 %v5981
        %6296 = vmatprep.subr.mxu0 %v5990
        %6297 = vmatpush1.msra.mxu0 %v5989
        %6298 = vmatprep.subr.mxu0 %v5998
        %6299 = vmatpush1.msra.mxu0 %v5997
        %6300 = vmatprep.subr.mxu0 %v6006
        %6301 = vmatpush1.msra.mxu0 %v6005
        %6302 = vmatprep.subr.mxu0 %v6014
        %6303 = vmatpush1.msra.mxu0 %v6013
        %6304 = vmatprep.subr.mxu0 %v6022
        %6305 = vmatpush1.msra.mxu0 %v6021
        %6306 = vmatprep.subr.mxu0 %v6030
        %6307 = vmatpush1.msra.mxu0 %v6029
        %6308 = vmatprep.subr.mxu0 %v6038
        %6309 = vmatpush1.msra.mxu0 %v6037
        %6310 = vmatprep.subr.mxu0 %v6046
        %6311 = vmatpush1.msra.mxu0 %v6045
        %6312 = vmatprep.subr.mxu0 %v6054
        %6313 = vmatpush1.msra.mxu0 %v6053
        %6314 = vmatprep.subr.mxu0 %v6062
        %6315 = vmatpush1.msra.mxu0 %v6061
        %6316 = vmatprep.subr.mxu0 %v6070
        %6317 = vmatpush1.msra.mxu0 %v6069
        %6318 = vmatprep.subr.mxu0 %v6078
        %6319 = vmatpush1.msra.mxu0 %v6077
        %6320 = vmatprep.subr.mxu0 %v6086
        %6321 = vmatpush1.msra.mxu0 %v6085
        %6322 = vmatprep.subr.mxu0 %v6094
        %6323 = vmatpush1.msra.mxu0 %v6093
        %6324 = vmatprep.subr.mxu0 %v6102
        %6325 = vmatpush1.msra.mxu0 %v6101
        %6326 = vmatprep.subr.mxu0 %v6110
        %6327 = vmatpush1.msra.mxu0 %v6109
        %6328 = vmatprep.subr.mxu0 %v6118
        %6329 = vmatpush1.msra.mxu0 %v6117
        %6330 = vmatprep.subr.mxu0 %v6126
        %6331 = vmatpush1.msra.mxu0 %v6125
        %6332 = vmatprep.subr.mxu0 %v6134
        %6333 = vmatpush1.msra.mxu0 %v6133
        %6334 = vmatprep.subr.mxu0 %v6142
        %6335 = vmatpush1.msra.mxu0 %v6141
        %6336 = vmatprep.subr.mxu0 %v6150
        %6337 = vmatpush1.msra.mxu0 %v6149
        %6338 = vmatprep.subr.mxu0 %v6158
        %6339 = vmatpush1.msra.mxu0 %v6157
        %6340 = vmatprep.subr.mxu0 %v6166
        %6341 = vmatpush1.msra.mxu0 %v6165
        %6342 = vmatprep.subr.mxu0 %v6174
        %6343 = vmatpush1.msra.mxu0 %v6173
        %6344 = vmatprep.subr.mxu0 %v6182
        %6345 = vmatpush1.msra.mxu0 %v6181
        %6346 = vmatprep.subr.mxu0 %v6190
        %6347 = vmatpush1.msra.mxu0 %v6189
        %6348 = vmatprep.subr.mxu0 %v6198
        %6349 = vmatpush1.msra.mxu0 %v6197
        %6350 = vmatprep.subr.mxu0 %v6206
        %6351 = vmatpush1.msra.mxu0 %v6205
        %6352 = vmatprep.subr.mxu0 %v6214
        %6353 = vmatpush1.msra.mxu0 %v6213
        %6354 = vmatprep.mubr.f32.mxu0 %v5962
        %6355 = vmatmul.mubr.f32.gmra.mrb[0].mxu0 %v5961
        %v6356 = vpop.f32.mrb[0].mxu0
        %v6357 = vadd.f32 0.0, %v6356
        %v6358 = vpop.f32.mrb[0].mxu0
        %v6359 = vadd.f32 0.0, %v6358
        %6360 = vdwg.mxu0
        %6361 = vmatprep.subr.mxu0 %v5968
        %6362 = vmatpush1.msra.mxu0 %v5967
        %6363 = vmatprep.subr.mxu0 %v5976
        %6364 = vmatpush1.msra.mxu0 %v5975
        %6365 = vmatprep.subr.mxu0 %v5984
        %6366 = vmatpush1.msra.mxu0 %v5983
        %6367 = vmatprep.subr.mxu0 %v5992
        %6368 = vmatpush1.msra.mxu0 %v5991
        %6369 = vmatprep.subr.mxu0 %v6000
        %6370 = vmatpush1.msra.mxu0 %v5999
        %6371 = vmatprep.subr.mxu0 %v6008
        %6372 = vmatpush1.msra.mxu0 %v6007
        %6373 = vmatprep.subr.mxu0 %v6016
        %6374 = vmatpush1.msra.mxu0 %v6015
        %6375 = vmatprep.subr.mxu0 %v6024
        %6376 = vmatpush1.msra.mxu0 %v6023
        %6377 = vmatprep.subr.mxu0 %v6032
        %6378 = vmatpush1.msra.mxu0 %v6031
        %6379 = vmatprep.subr.mxu0 %v6040
        %6380 = vmatpush1.msra.mxu0 %v6039
        %6381 = vmatprep.subr.mxu0 %v6048
        %6382 = vmatpush1.msra.mxu0 %v6047
        %6383 = vmatprep.subr.mxu0 %v6056
        %6384 = vmatpush1.msra.mxu0 %v6055
        %6385 = vmatprep.subr.mxu0 %v6064
        %6386 = vmatpush1.msra.mxu0 %v6063
        %6387 = vmatprep.subr.mxu0 %v6072
        %6388 = vmatpush1.msra.mxu0 %v6071
        %6389 = vmatprep.subr.mxu0 %v6080
        %6390 = vmatpush1.msra.mxu0 %v6079
        %6391 = vmatprep.subr.mxu0 %v6088
        %6392 = vmatpush1.msra.mxu0 %v6087
        %6393 = vmatprep.subr.mxu0 %v6096
        %6394 = vmatpush1.msra.mxu0 %v6095
        %6395 = vmatprep.subr.mxu0 %v6104
        %6396 = vmatpush1.msra.mxu0 %v6103
        %6397 = vmatprep.subr.mxu0 %v6112
        %6398 = vmatpush1.msra.mxu0 %v6111
        %6399 = vmatprep.subr.mxu0 %v6120
        %6400 = vmatpush1.msra.mxu0 %v6119
        %6401 = vmatprep.subr.mxu0 %v6128
        %6402 = vmatpush1.msra.mxu0 %v6127
        %6403 = vmatprep.subr.mxu0 %v6136
        %6404 = vmatpush1.msra.mxu0 %v6135
        %6405 = vmatprep.subr.mxu0 %v6144
        %6406 = vmatpush1.msra.mxu0 %v6143
        %6407 = vmatprep.subr.mxu0 %v6152
        %6408 = vmatpush1.msra.mxu0 %v6151
        %6409 = vmatprep.subr.mxu0 %v6160
        %6410 = vmatpush1.msra.mxu0 %v6159
        %6411 = vmatprep.subr.mxu0 %v6168
        %6412 = vmatpush1.msra.mxu0 %v6167
        %6413 = vmatprep.subr.mxu0 %v6176
        %6414 = vmatpush1.msra.mxu0 %v6175
        %6415 = vmatprep.subr.mxu0 %v6184
        %6416 = vmatpush1.msra.mxu0 %v6183
        %6417 = vmatprep.subr.mxu0 %v6192
        %6418 = vmatpush1.msra.mxu0 %v6191
        %6419 = vmatprep.subr.mxu0 %v6200
        %6420 = vmatpush1.msra.mxu0 %v6199
        %6421 = vmatprep.subr.mxu0 %v6208
        %6422 = vmatpush1.msra.mxu0 %v6207
        %6423 = vmatprep.subr.mxu0 %v6216
        %6424 = vmatpush1.msra.mxu0 %v6215
        %6425 = vmatprep.mubr.f32.mxu0 %v5962
        %6426 = vmatmul.mubr.f32.gmra.mrb[0].mxu0 %v5961
        %v6427 = vpop.f32.mrb[0].mxu0
        %v6428 = vadd.f32 0.0, %v6427
        %v6429 = vpop.f32.mrb[0].mxu0
        %v6430 = vadd.f32 0.0, %v6429
        %6431 = vdwg.mxu0
        %6432 = vmatprep.subr.mxu0 %v5970
        %6433 = vmatpush1.msra.mxu0 %v5969
        %6434 = vmatprep.subr.mxu0 %v5978
        %6435 = vmatpush1.msra.mxu0 %v5977
        %6436 = vmatprep.subr.mxu0 %v5986
        %6437 = vmatpush1.msra.mxu0 %v5985
        %6438 = vmatprep.subr.mxu0 %v5994
        %6439 = vmatpush1.msra.mxu0 %v5993
        %6440 = vmatprep.subr.mxu0 %v6002
        %6441 = vmatpush1.msra.mxu0 %v6001
        %6442 = vmatprep.subr.mxu0 %v6010
        %6443 = vmatpush1.msra.mxu0 %v6009
        %6444 = vmatprep.subr.mxu0 %v6018
        %6445 = vmatpush1.msra.mxu0 %v6017
        %6446 = vmatprep.subr.mxu0 %v6026
        %6447 = vmatpush1.msra.mxu0 %v6025
        %6448 = vmatprep.subr.mxu0 %v6034
        %6449 = vmatpush1.msra.mxu0 %v6033
        %6450 = vmatprep.subr.mxu0 %v6042
        %6451 = vmatpush1.msra.mxu0 %v6041
        %6452 = vmatprep.subr.mxu0 %v6050
        %6453 = vmatpush1.msra.mxu0 %v6049
        %6454 = vmatprep.subr.mxu0 %v6058
        %6455 = vmatpush1.msra.mxu0 %v6057
        %6456 = vmatprep.subr.mxu0 %v6066
        %6457 = vmatpush1.msra.mxu0 %v6065
        %6458 = vmatprep.subr.mxu0 %v6074
        %6459 = vmatpush1.msra.mxu0 %v6073
        %6460 = vmatprep.subr.mxu0 %v6082
        %6461 = vmatpush1.msra.mxu0 %v6081
        %6462 = vmatprep.subr.mxu0 %v6090
        %6463 = vmatpush1.msra.mxu0 %v6089
        %6464 = vmatprep.subr.mxu0 %v6098
        %6465 = vmatpush1.msra.mxu0 %v6097
        %6466 = vmatprep.subr.mxu0 %v6106
        %6467 = vmatpush1.msra.mxu0 %v6105
        %6468 = vmatprep.subr.mxu0 %v6114
        %6469 = vmatpush1.msra.mxu0 %v6113
        %6470 = vmatprep.subr.mxu0 %v6122
        %6471 = vmatpush1.msra.mxu0 %v6121
        %6472 = vmatprep.subr.mxu0 %v6130
        %6473 = vmatpush1.msra.mxu0 %v6129
        %6474 = vmatprep.subr.mxu0 %v6138
        %6475 = vmatpush1.msra.mxu0 %v6137
        %6476 = vmatprep.subr.mxu0 %v6146
        %6477 = vmatpush1.msra.mxu0 %v6145
        %6478 = vmatprep.subr.mxu0 %v6154
        %6479 = vmatpush1.msra.mxu0 %v6153
        %6480 = vmatprep.subr.mxu0 %v6162
        %6481 = vmatpush1.msra.mxu0 %v6161
        %6482 = vmatprep.subr.mxu0 %v6170
        %6483 = vmatpush1.msra.mxu0 %v6169
        %6484 = vmatprep.subr.mxu0 %v6178
        %6485 = vmatpush1.msra.mxu0 %v6177
        %6486 = vmatprep.subr.mxu0 %v6186
        %6487 = vmatpush1.msra.mxu0 %v6185
        %6488 = vmatprep.subr.mxu0 %v6194
        %6489 = vmatpush1.msra.mxu0 %v6193
        %6490 = vmatprep.subr.mxu0 %v6202
        %6491 = vmatpush1.msra.mxu0 %v6201
        %6492 = vmatprep.subr.mxu0 %v6210
        %6493 = vmatpush1.msra.mxu0 %v6209
        %6494 = vmatprep.subr.mxu0 %v6218
        %6495 = vmatpush1.msra.mxu0 %v6217
        %6496 = vmatprep.mubr.f32.mxu0 %v5962
        %6497 = vmatmul.mubr.f32.gmra.mrb[0].mxu0 %v5961
        %v6498 = vpop.f32.mrb[0].mxu0
        %v6499 = vadd.f32 0.0, %v6498
        %v6500 = vpop.f32.mrb[0].mxu0
        %v6501 = vadd.f32 0.0, %v6500
        %6502 = vdwg.mxu0
        %v6511 = vcombine.low %v6286, %v6288
        %v6512 = vcombine.low %v6357, %v6359
        %v6513 = vcombine.low %v6428, %v6430
        %v6514 = vcombine.low %v6499, %v6501
        %6519 = vst [vmem:[%s580] sm:$0xff] %v6511
        %6520 = vst [vmem:[%s580 + $0x8] sm:$0xff] %v6512
        %6521 = vst [vmem:[%s580 + $0x10] sm:$0xff] %v6513
        %6522 = vst [vmem:[%s580 + $0x18] sm:$0xff] %v6514
        %p6523 = scmp.lt.s32.totalorder %s29, 1
        %s6524 = scalar_select %p6523, %s29, 1
        %s6525 = smul.addr %s6524, 8
        %s6526 = smul.addr %s6525, 4
        %s6527 = scalar_lea.vmem %s17, %s6526
        // Predicated region
        $region93: #{spade_resblk_forward.1} parent=87 // pred_check
          %p6528 = pneg %p414
        $region94: #{spade_resblk_forward.1} parent=87 // pred_check_branch
          %6530 = sbr.rel (%p6528) target = $region96
        $region95: #{spade_resblk_forward.1} parent=87 // pred_region
          _
        $region96: #{spade_resblk_forward.1} parent=87 // pred_fallthru
          _
      $region88: #{spade_resblk_forward.1} parent=5 // pred_fallthru
        _
      %p6531 = scmp.le.s32.totalorder 2, %s24
      // Predicated region
      $region97: #{spade_resblk_forward.1} parent=5 // pred_check
        %p6532 = pneg %p6531
      $region98: #{spade_resblk_forward.1} parent=5 // pred_check_branch
        %6534 = sbr.rel (%p6532) target = $region100
      $region99: #{spade_resblk_forward.1} parent=5 // pred_region
        %s6535 = ssub.s32 %s24, 2
        // Predicated region
        $region101: #{spade_resblk_forward.1} parent=99 // pred_check
          %p6536 = pneg %p420
        $region102: #{spade_resblk_forward.1} parent=99 // pred_check_branch
          %6538 = sbr.rel (%p6536) target = $region104
        $region103: #{spade_resblk_forward.1} parent=99 // pred_region
          %p6539 = scmp.lt.s32.totalorder %s30, 1
          %s6540 = scalar_select %p6539, %s30, 1
          %s6541 = smul.addr %s6540, 8
          %s6542 = smul.addr %s6541, 4
          %s6543 = scalar_lea.vmem %s17, %s6542
        $region104: #{spade_resblk_forward.1} parent=99 // pred_fallthru
          _
      $region100: #{spade_resblk_forward.1} parent=5 // pred_fallthru
        _
    $region6: #{spade_resblk_forward.1} parent=1 // loop_footer
      %s28 = sadd.s32 1, %s24
    $region7: #{spade_resblk_forward.1} parent=1 // loop_footer_branch
      %23 = sbr.rel target = $region3
    $region8: #{spade_resblk_forward.1} parent=1 // loop_exit
      _
    %6544 = vsyncpa [#allocation3], 1
    %s6545 = scalar_lea.sflag [#allocation3], 1
    %6546 = vsyncpa %s6545, 1

</llo_original>
